<compile_context>
chip_gen: v7x
topology: tpu7x:2x2x1
jax: 0.10.0
libtpu: 0.0.40
codegen_flags: <defaults>
</compile_context>

<pallas_src>
import functools

import jax
import jax.numpy as jnp
from jax.experimental import pallas as pl
from jax.experimental.pallas import tpu as pltpu


def _round_up(x, m):
    return ((x + m - 1) // m) * m


def _vmem_capacity_bytes():
    try:
        return int(pltpu.get_tpu_info().vmem_capacity_bytes)
    except Exception:
        return 64 * 1024 * 1024          # conservative fallback (v7x per-core)


def _choose_tm(m, k, cp):
    """Chip/K-aware M tile.

    Picks the largest power-of-two tile that (a) keeps >=2 grid steps so the
    grid can be megacore-sharded, and (b) keeps double-buffered A (bf16) +
    output (bf16) tiles plus the resident weight block under a conservative
    share of this chip's VMEM.  Returns (tm, vmem_limit_bytes).
    """
    vmem_cap = _vmem_capacity_bytes()
    budget = min(vmem_cap // 3, 40 << 20)
    tm = None
    for cand in (2048, 1024, 512, 256, 128):
        need = 2 * cand * (k + cp) * 2 + k * cp * 2 + cp * 4
        if m >= 2 * cand and need <= budget:
            tm = cand
            break
    if tm is None:                       # small feature maps: one covering tile
        tm = max(8, min(128, _round_up(m, 8)))
    need = 2 * tm * (k + cp) * 2 + k * cp * 2 + cp * 4
    vmem_limit = int(min(vmem_cap - (8 << 20), max(32 << 20, need + (4 << 20))))
    return tm, vmem_limit


def _choose_th(h):
    """Row-tile for the tail kernel: multiple of 8 dividing h, else h."""
    for th in (64, 56, 48, 40, 32, 24, 16, 8):
        if h % th == 0:
            return th
    return h


# ----------------------------------------------------------------------------
# Pallas kernels
# ----------------------------------------------------------------------------
def _mm_bias_relu_kernel(a_ref, w_ref, b_ref, o_ref):
    """One (tm, cp) tile of relu(A @ W + b). bf16 MXU inputs, f32 accumulation,
    bf16 store (activations stay bf16 in HBM)."""
    acc = jnp.dot(a_ref[...], w_ref[...], preferred_element_type=jnp.float32)
    acc = jnp.maximum(acc + b_ref[...], 0.0)          # (tm, cp) + (1, cp)
    o_ref[...] = acc.astype(o_ref.dtype)


def _fuse_conv_kernel(xc_ref, wf_ref, bf_ref, dm_ref):
    """Lane-dense 1x1 fuse conv + ReLU.

    xc_ref : (1, C, th, w) bf16   concat features, channels on a leading axis
    wf_ref : (1, C, 1, 1)  f32    fuse-conv weights (per-channel scalars)
    bf_ref : (1, 1)        f32    SMEM bias
    dm_ref : (1, th, w)    f32    low-res density output (w on lanes)
    """
    x = xc_ref[...].astype(jnp.float32)               # (1, C, th, w)
    d = jnp.sum(x * wf_ref[...], axis=1)              # VPU adds over C planes
    dm_ref[...] = jnp.maximum(d + bf_ref[0, 0], 0.0)


# ----------------------------------------------------------------------------
# Pallas wrappers
# ----------------------------------------------------------------------------
def matmul_bias_relu(a, w_mat, bias_row):
    """a: (M, K) bf16, w_mat: (K, cp) bf16, bias_row: (1, cp) f32 -> (M, cp) bf16."""
    m, k = a.shape
    cp = w_mat.shape[1]
    tm, vmem_limit = _choose_tm(m, k, cp)
    return pl.pallas_call(
        _mm_bias_relu_kernel,
        out_shape=jax.ShapeDtypeStruct((m, cp), jnp.bfloat16),
        grid_spec=pltpu.PrefetchScalarGridSpec(
            num_scalar_prefetch=0,
            grid=(pl.cdiv(m, tm),),
            in_specs=[
                pl.BlockSpec((tm, k), lambda i: (i, 0)),
                pl.BlockSpec((k, cp), lambda i: (0, 0)),
                pl.BlockSpec((1, cp), lambda i: (0, 0)),
            ],
            out_specs=pl.BlockSpec((tm, cp), lambda i: (i, 0)),
        ),
        compiler_params=pltpu.CompilerParams(
            dimension_semantics=("parallel",),
            vmem_limit_bytes=vmem_limit),
    )(a, w_mat, bias_row)


def fuse_upsample_mse(xc_nhwc, wf, bf, gt_map):
    """Fuse conv (Pallas) + implicit 4x nearest upsample + mean MSE (algebraic).

    xc_nhwc: (N, h, w, 30) bf16, wf: (1,1,30,1), bf: (1,), gt_map: (N, 4h, 4w).
    Returns (low-res density (N, h, w) f32, scalar loss f32).
    """
    n, h, w, c = xc_nhwc.shape
    xc = jnp.transpose(xc_nhwc, (0, 3, 1, 2))          # (N, C, h, w), w on lanes
    wf_b = wf.reshape(1, c, 1, 1).astype(jnp.float32)
    bf_s = bf.reshape(1, 1).astype(jnp.float32)
    th = _choose_th(h)

    d_low = pl.pallas_call(
        _fuse_conv_kernel,
        out_shape=jax.ShapeDtypeStruct((n, h, w), jnp.float32),
        grid=(n, h // th),
        in_specs=[
            pl.BlockSpec((1, c, th, w), lambda b, i: (b, 0, i, 0)),
            pl.BlockSpec((1, c, 1, 1), lambda b, i: (0, 0, 0, 0)),
            pl.BlockSpec(memory_space=pltpu.MemorySpace.SMEM),
        ],
        out_specs=pl.BlockSpec((1, th, w), lambda b, i: (b, i, 0)),
        compiler_params=pltpu.CompilerParams(
            dimension_semantics=("parallel", "parallel")),
    )(xc, wf_b, bf_s)

    # MSE vs. the x4 nearest-upsampled map without materializing it:
    # per low-res pixel: sum_{16 subpixels}(d - g_i)^2 = 16 d^2 - 2 d*Sg + Sg2.
    g = gt_map.astype(jnp.float32).reshape(n, h, 4, w, 4)
    sg = g.sum(axis=(2, 4))                            # (N, h, w)
    sg2 = jnp.square(g).sum(axis=(2, 4))               # (N, h, w)
    denom = float(n * (4 * h) * (4 * w))               # mean over (N,1,H,W)
    loss = (16.0 * jnp.sum(d_low * d_low)
            - 2.0 * jnp.sum(d_low * sg)
            + jnp.sum(sg2)) / denom
    return d_low, loss


# ----------------------------------------------------------------------------
# Conv / pool building blocks (im2col glue + Pallas GEMM)
# ----------------------------------------------------------------------------
def conv2d_same(x_nhwc, w, b):
    """'same' stride-1 conv + ReLU via bf16 im2col + Pallas GEMM.

    x: (N,H,W,Cin), w: (K,K,Cin,Cout) f32, b: (Cout,) f32.
    Returns (N,H,W,Cout) bf16 (lazy slice of the Cout-padded output).
    """
    n, h, ww, cin = x_nhwc.shape
    k = w.shape[0]
    cout = w.shape[3]
    p = k // 2
    cin_p = _round_up(cin, 8)            # K*K*cin_p % 8 == 0 (sublane alignment)
    cp = _round_up(cout, 32)             # per-layer output pad (was fixed 128)

    # Fused producer: spatial 'same' pad + channel pad + bf16 cast.
    xp = jnp.pad(x_nhwc, ((0, 0), (p, p), (p, p), (0, cin_p - cin)))
    xp = xp.astype(jnp.bfloat16)
    # TODO(synk): this XLA-side im2col replicates activation reads by K^2;
    # a halo-tiled in-kernel patch build would remove it (see header).
    cols = []
    for ky in range(k):
        for kx in range(k):
            cols.append(xp[:, ky:ky + h, kx:kx + ww, :])
    patches = jnp.concatenate(cols, axis=-1)           # (N,H,W,K*K*cin_p) bf16
    a = patches.reshape(n * h * ww, k * k * cin_p)

    # Zero-pad weights: extra Cin rows contribute 0; extra Cout lanes are
    # sliced away lazily below (fused into the consumer).
    w_p = jnp.pad(w, ((0, 0), (0, 0), (0, cin_p - cin), (0, cp - cout)))
    w_mat = w_p.reshape(k * k * cin_p, cp).astype(jnp.bfloat16)
    b_row = jnp.pad(b, (0, cp - cout)).reshape(1, cp).astype(jnp.float32)

    out = matmul_bias_relu(a, w_mat, b_row)             # (M, cp) bf16
    out = out.reshape(n, h, ww, cp)
    return out[..., :cout]


def maxpool2x2(x):
    # Cheap layout glue (2x2 / stride-2 max) on bf16; conv GEMMs dominate.
    n, h, w, c = x.shape
    return x.reshape(n, h // 2, 2, w // 2, 2, c).max(axis=(2, 4))


# ----------------------------------------------------------------------------
# MCNN backbone + CrowdCounter forward
# ----------------------------------------------------------------------------
_B1 = [(9, 3, 16), (7, 16, 32), (7, 32, 16), (7, 16, 8)]
_B2 = [(7, 3, 20), (5, 20, 40), (5, 40, 20), (5, 20, 10)]
_B3 = [(5, 3, 24), (3, 24, 48), (3, 48, 24), (3, 24, 12)]


def init_mcnn_params(key):
    """Deterministic synthetic init (normal std=0.01 weights, zero bias)."""
    params = {}

    def conv_init(kk, ksize, cin, cout):
        w = 0.01 * jax.random.normal(kk, (ksize, ksize, cin, cout), jnp.float32)
        b = jnp.zeros((cout,), jnp.float32)
        return (w, b)

    keys = iter(jax.random.split(key, 13))
    for name, cfg in (("b1", _B1), ("b2", _B2), ("b3", _B3)):
        params[name] = [conv_init(next(keys), *c) for c in cfg]
    params["fuse"] = conv_init(next(keys), 1, 30, 1)
    return params


def _pad_kernel_spatial(w, k_target):
    k = w.shape[0]
    d = (k_target - k) // 2
    return jnp.pad(w, ((d, d), (d, d), (0, 0), (0, 0)))


def mcnn_features(params, img_nchw):
    """MCNN trunk up to the 30-channel concat (low-res, NHWC, bf16)."""
    x = jnp.transpose(img_nchw, (0, 2, 3, 1))               # NCHW -> NHWC

    # The three first-layer convs share the input image: run ONE fused conv
    # with kernels zero-padded to 9x9 and Cout=60 (single full-res im2col).
    w1, b1 = params["b1"][0]
    w2, b2 = params["b2"][0]
    w3, b3 = params["b3"][0]
    w0 = jnp.concatenate([_pad_kernel_spatial(w1, 9),
                          _pad_kernel_spatial(w2, 9),
                          _pad_kernel_spatial(w3, 9)], axis=-1)   # (9,9,3,60)
    b0 = jnp.concatenate([b1, b2, b3], axis=0)                    # (60,)
    y0 = conv2d_same(x, w0, b0)                                   # (N,H,W,60) bf16
    c1, c2, c3 = w1.shape[3], w2.shape[3], w3.shape[3]
    ys = (y0[..., :c1], y0[..., c1:c1 + c2], y0[..., c1 + c2:c1 + c2 + c3])

    def branch_rest(y, layers):
        y = maxpool2x2(y)                                   # pool after layer 0
        for idx in range(1, len(layers)):
            w, b = layers[idx]
            y = conv2d_same(y, w, b)
            if idx < 2:                                     # pool after layer 1
                y = maxpool2x2(y)
        return y

    x1 = branch_rest(ys[0], params["b1"])                   # (N, H/4, W/4, 8)
    x2 = branch_rest(ys[1], params["b2"])                   # (N, H/4, W/4, 10)
    x3 = branch_rest(ys[2], params["b3"])                   # (N, H/4, W/4, 12)
    return jnp.concatenate([x1, x2, x3], axis=-1)           # (N, H/4, W/4, 30)


def crowd_counter_forward(params, img, gt_map):
    """CrowdCounter.forward: returns (density_map, loss_total)."""
    xc = mcnn_features(params, img)                          # self.CCN trunk
    wf, bf = params["fuse"]
    d_low, loss_total = fuse_upsample_mse(xc, wf, bf, gt_map)
    # x4 nearest upsample of the returned map only (the loss never reads it).
    dm = jnp.repeat(jnp.repeat(d_low, 4, axis=1), 4, axis=2)
    density_map = dm[:, None, :, :]                          # (N, 1, H, W) f32
    return density_map, loss_total

# TODO(synk): CSRNet_DM / VGG16_DM backbones and .cuda()/DataParallel device
# placement have no source / no TPU equivalent and are not translated.


# ----------------------------------------------------------------------------
if __name__ == "__main__":
    key = jax.random.PRNGKey(0)
    k_par, k_img, k_gt = jax.random.split(key, 3)

    params = init_mcnn_params(k_par)
    img = jax.random.normal(k_img, (2, 3, 16, 16), jnp.float32)      # NCHW
    gt_map = jax.random.uniform(k_gt, (2, 16, 16), jnp.float32)      # full-res GT

    fwd = jax.jit(functools.partial(crowd_counter_forward, params))
    density_map, loss = fwd(img, gt_map)
    jax.block_until_ready((density_map, loss))

    assert density_map.shape == (2, 1, 16, 16)
    assert density_map.dtype == jnp.float32
    assert loss.shape == ()
    assert bool(jnp.isfinite(loss))
    print("KERNEL_OK")
</pallas_src>

<mosaic_0001>
module attributes {stable_mosaic.version = 11 : i64} {
  func.func @_mm_bias_relu_kernel(%arg0: i32, %arg1: memref<256x648xbf16, #tpu.memory_space<vmem>>, %arg2: memref<648x64xbf16, #tpu.memory_space<vmem>>, %arg3: memref<1x64xf32, #tpu.memory_space<vmem>>, %arg4: memref<256x64xbf16, #tpu.memory_space<vmem>>) attributes {dimension_semantics = [#tpu.dimension_semantics<parallel>], iteration_bounds = array<i64: 2>, scalar_prefetch = 0 : i64, scratch_operands = 0 : i64, tpu.core_type = #tpu.core_type<tc>, window_params = [{transform_indices = @transform_0, window_bounds = array<i64: 256, 648>}, {pipeline_mode = #tpu.pipeline_mode<synchronous>, transform_indices = @transform_1, window_bounds = array<i64: 648, 64>}, {pipeline_mode = #tpu.pipeline_mode<synchronous>, transform_indices = @transform_2, window_bounds = array<i64: 1, 64>}, {transform_indices = @transform_3, window_bounds = array<i64: 256, 64>}]} {
    %c0 = arith.constant 0 : index
    %c0_0 = arith.constant 0 : index
    %0 = vector.load %arg1[%c0, %c0_0] : memref<256x648xbf16, #tpu.memory_space<vmem>>, vector<256x648xbf16>
    %c0_1 = arith.constant 0 : index
    %c0_2 = arith.constant 0 : index
    %1 = vector.load %arg2[%c0_1, %c0_2] : memref<648x64xbf16, #tpu.memory_space<vmem>>, vector<648x64xbf16>
    %cst = arith.constant dense<0.000000e+00> : vector<256x64xf32>
    %2 = tpu.matmul %0, %1, %cst {dimension_numbers = #tpu.dot_dimension_numbers<[1], [0], [0], [1], [0, 0, 1, 1], [], []>} : vector<256x648xbf16>, vector<648x64xbf16>, vector<256x64xf32> -> vector<256x64xf32>
    %c0_3 = arith.constant 0 : index
    %c0_4 = arith.constant 0 : index
    %3 = vector.load %arg3[%c0_3, %c0_4] : memref<1x64xf32, #tpu.memory_space<vmem>>, vector<1x64xf32>
    %4 = vector.broadcast %3 : vector<1x64xf32> to vector<256x64xf32>
    %5 = arith.addf %2, %4 : vector<256x64xf32>
    %cst_5 = arith.constant 0.000000e+00 : f32
    %6 = vector.broadcast %cst_5 : f32 to vector<256x64xf32>
    %7 = arith.maximumf %5, %6 : vector<256x64xf32>
    %8 = arith.truncf %7 : vector<256x64xf32> to vector<256x64xbf16>
    %c0_6 = arith.constant 0 : index
    %c0_7 = arith.constant 0 : index
    %9 = vector.load %arg4[%c0_6, %c0_7] : memref<256x64xbf16, #tpu.memory_space<vmem>>, vector<256x64xbf16>
    tpu.vector_store %arg4[%c0_6, %c0_7], %8 {strides = array<i32>} : memref<256x64xbf16, #tpu.memory_space<vmem>>, vector<256x64xbf16>,
    return
  }
  func.func @transform_0(%arg0: i32) -> (i32, i32) {
    %c0_i32 = arith.constant 0 : i32
    %c0_i32_0 = arith.constant 0 : i32
    return %arg0, %c0_i32 : i32, i32
  }
  func.func @transform_1(%arg0: i32) -> (i32, i32) {
    %c0_i32 = arith.constant 0 : i32
    %c0_i32_0 = arith.constant 0 : i32
    %c0_i32_1 = arith.constant 0 : i32
    return %c0_i32, %c0_i32_0 : i32, i32
  }
  func.func @transform_2(%arg0: i32) -> (i32, i32) {
    %c0_i32 = arith.constant 0 : i32
    %c0_i32_0 = arith.constant 0 : i32
    %c0_i32_1 = arith.constant 0 : i32
    return %c0_i32, %c0_i32_0 : i32, i32
  }
  func.func @transform_3(%arg0: i32) -> (i32, i32) {
    %c0_i32 = arith.constant 0 : i32
    %c0_i32_0 = arith.constant 0 : i32
    return %arg0, %c0_i32 : i32, i32
  }
}

module attributes {stable_mosaic.version = 11 : i64} {
  func.func @_mm_bias_relu_kernel(%arg0: i32, %arg1: memref<128x784xbf16, #tpu.memory_space<vmem>>, %arg2: memref<784x32xbf16, #tpu.memory_space<vmem>>, %arg3: memref<1x32xf32, #tpu.memory_space<vmem>>, %arg4: memref<128x32xbf16, #tpu.memory_space<vmem>>) attributes {dimension_semantics = [#tpu.dimension_semantics<parallel>], iteration_bounds = array<i64: 1>, scalar_prefetch = 0 : i64, scratch_operands = 0 : i64, tpu.core_type = #tpu.core_type<tc>, window_params = [{transform_indices = @transform_0, window_bounds = array<i64: 128, 784>}, {pipeline_mode = #tpu.pipeline_mode<synchronous>, transform_indices = @transform_1, window_bounds = array<i64: 784, 32>}, {pipeline_mode = #tpu.pipeline_mode<synchronous>, transform_indices = @transform_2, window_bounds = array<i64: 1, 32>}, {transform_indices = @transform_3, window_bounds = array<i64: 128, 32>}]} {
    %c0 = arith.constant 0 : index
    %c0_0 = arith.constant 0 : index
    %0 = vector.load %arg1[%c0, %c0_0] : memref<128x784xbf16, #tpu.memory_space<vmem>>, vector<128x784xbf16>
    %c0_1 = arith.constant 0 : index
    %c0_2 = arith.constant 0 : index
    %1 = vector.load %arg2[%c0_1, %c0_2] : memref<784x32xbf16, #tpu.memory_space<vmem>>, vector<784x32xbf16>
    %cst = arith.constant dense<0.000000e+00> : vector<128x32xf32>
    %2 = tpu.matmul %0, %1, %cst {dimension_numbers = #tpu.dot_dimension_numbers<[1], [0], [0], [1], [0, 0, 1, 1], [], []>} : vector<128x784xbf16>, vector<784x32xbf16>, vector<128x32xf32> -> vector<128x32xf32>
    %c0_3 = arith.constant 0 : index
    %c0_4 = arith.constant 0 : index
    %3 = vector.load %arg3[%c0_3, %c0_4] : memref<1x32xf32, #tpu.memory_space<vmem>>, vector<1x32xf32>
    %4 = vector.broadcast %3 : vector<1x32xf32> to vector<128x32xf32>
    %5 = arith.addf %2, %4 : vector<128x32xf32>
    %cst_5 = arith.constant 0.000000e+00 : f32
    %6 = vector.broadcast %cst_5 : f32 to vector<128x32xf32>
    %7 = arith.maximumf %5, %6 : vector<128x32xf32>
    %8 = arith.truncf %7 : vector<128x32xf32> to vector<128x32xbf16>
    %c0_6 = arith.constant 0 : index
    %c0_7 = arith.constant 0 : index
    %9 = vector.load %arg4[%c0_6, %c0_7] : memref<128x32xbf16, #tpu.memory_space<vmem>>, vector<128x32xbf16>
    tpu.vector_store %arg4[%c0_6, %c0_7], %8 {strides = array<i32>} : memref<128x32xbf16, #tpu.memory_space<vmem>>, vector<128x32xbf16>,
    return
  }
  func.func @transform_0(%arg0: i32) -> (i32, i32) {
    %c0_i32 = arith.constant 0 : i32
    %c0_i32_0 = arith.constant 0 : i32
    return %arg0, %c0_i32 : i32, i32
  }
  func.func @transform_1(%arg0: i32) -> (i32, i32) {
    %c0_i32 = arith.constant 0 : i32
    %c0_i32_0 = arith.constant 0 : i32
    %c0_i32_1 = arith.constant 0 : i32
    return %c0_i32, %c0_i32_0 : i32, i32
  }
  func.func @transform_2(%arg0: i32) -> (i32, i32) {
    %c0_i32 = arith.constant 0 : i32
    %c0_i32_0 = arith.constant 0 : i32
    %c0_i32_1 = arith.constant 0 : i32
    return %c0_i32, %c0_i32_0 : i32, i32
  }
  func.func @transform_3(%arg0: i32) -> (i32, i32) {
    %c0_i32 = arith.constant 0 : i32
    %c0_i32_0 = arith.constant 0 : i32
    return %arg0, %c0_i32 : i32, i32
  }
}

module attributes {stable_mosaic.version = 11 : i64} {
  func.func @_mm_bias_relu_kernel(%arg0: i32, %arg1: memref<32x1568xbf16, #tpu.memory_space<vmem>>, %arg2: memref<1568x32xbf16, #tpu.memory_space<vmem>>, %arg3: memref<1x32xf32, #tpu.memory_space<vmem>>, %arg4: memref<32x32xbf16, #tpu.memory_space<vmem>>) attributes {dimension_semantics = [#tpu.dimension_semantics<parallel>], iteration_bounds = array<i64: 1>, scalar_prefetch = 0 : i64, scratch_operands = 0 : i64, tpu.core_type = #tpu.core_type<tc>, window_params = [{transform_indices = @transform_0, window_bounds = array<i64: 32, 1568>}, {pipeline_mode = #tpu.pipeline_mode<synchronous>, transform_indices = @transform_1, window_bounds = array<i64: 1568, 32>}, {pipeline_mode = #tpu.pipeline_mode<synchronous>, transform_indices = @transform_2, window_bounds = array<i64: 1, 32>}, {transform_indices = @transform_3, window_bounds = array<i64: 32, 32>}]} {
    %c0 = arith.constant 0 : index
    %c0_0 = arith.constant 0 : index
    %0 = vector.load %arg1[%c0, %c0_0] : memref<32x1568xbf16, #tpu.memory_space<vmem>>, vector<32x1568xbf16>
    %c0_1 = arith.constant 0 : index
    %c0_2 = arith.constant 0 : index
    %1 = vector.load %arg2[%c0_1, %c0_2] : memref<1568x32xbf16, #tpu.memory_space<vmem>>, vector<1568x32xbf16>
    %cst = arith.constant dense<0.000000e+00> : vector<32x32xf32>
    %2 = tpu.matmul %0, %1, %cst {dimension_numbers = #tpu.dot_dimension_numbers<[1], [0], [0], [1], [0, 0, 1, 1], [], []>} : vector<32x1568xbf16>, vector<1568x32xbf16>, vector<32x32xf32> -> vector<32x32xf32>
    %c0_3 = arith.constant 0 : index
    %c0_4 = arith.constant 0 : index
    %3 = vector.load %arg3[%c0_3, %c0_4] : memref<1x32xf32, #tpu.memory_space<vmem>>, vector<1x32xf32>
    %4 = vector.broadcast %3 : vector<1x32xf32> to vector<32x32xf32>
    %5 = arith.addf %2, %4 : vector<32x32xf32>
    %cst_5 = arith.constant 0.000000e+00 : f32
    %6 = vector.broadcast %cst_5 : f32 to vector<32x32xf32>
    %7 = arith.maximumf %5, %6 : vector<32x32xf32>
    %8 = arith.truncf %7 : vector<32x32xf32> to vector<32x32xbf16>
    %c0_6 = arith.constant 0 : index
    %c0_7 = arith.constant 0 : index
    %9 = vector.load %arg4[%c0_6, %c0_7] : memref<32x32xbf16, #tpu.memory_space<vmem>>, vector<32x32xbf16>
    tpu.vector_store %arg4[%c0_6, %c0_7], %8 {strides = array<i32>} : memref<32x32xbf16, #tpu.memory_space<vmem>>, vector<32x32xbf16>,
    return
  }
  func.func @transform_0(%arg0: i32) -> (i32, i32) {
    %c0_i32 = arith.constant 0 : i32
    %c0_i32_0 = arith.constant 0 : i32
    return %arg0, %c0_i32 : i32, i32
  }
  func.func @transform_1(%arg0: i32) -> (i32, i32) {
    %c0_i32 = arith.constant 0 : i32
    %c0_i32_0 = arith.constant 0 : i32
    %c0_i32_1 = arith.constant 0 : i32
    return %c0_i32, %c0_i32_0 : i32, i32
  }
  func.func @transform_2(%arg0: i32) -> (i32, i32) {
    %c0_i32 = arith.constant 0 : i32
    %c0_i32_0 = arith.constant 0 : i32
    %c0_i32_1 = arith.constant 0 : i32
    return %c0_i32, %c0_i32_0 : i32, i32
  }
  func.func @transform_3(%arg0: i32) -> (i32, i32) {
    %c0_i32 = arith.constant 0 : i32
    %c0_i32_0 = arith.constant 0 : i32
    return %arg0, %c0_i32 : i32, i32
  }
}

module attributes {stable_mosaic.version = 11 : i64} {
  func.func @_mm_bias_relu_kernel(%arg0: i32, %arg1: memref<32x784xbf16, #tpu.memory_space<vmem>>, %arg2: memref<784x32xbf16, #tpu.memory_space<vmem>>, %arg3: memref<1x32xf32, #tpu.memory_space<vmem>>, %arg4: memref<32x32xbf16, #tpu.memory_space<vmem>>) attributes {dimension_semantics = [#tpu.dimension_semantics<parallel>], iteration_bounds = array<i64: 1>, scalar_prefetch = 0 : i64, scratch_operands = 0 : i64, tpu.core_type = #tpu.core_type<tc>, window_params = [{transform_indices = @transform_0, window_bounds = array<i64: 32, 784>}, {pipeline_mode = #tpu.pipeline_mode<synchronous>, transform_indices = @transform_1, window_bounds = array<i64: 784, 32>}, {pipeline_mode = #tpu.pipeline_mode<synchronous>, transform_indices = @transform_2, window_bounds = array<i64: 1, 32>}, {transform_indices = @transform_3, window_bounds = array<i64: 32, 32>}]} {
    %c0 = arith.constant 0 : index
    %c0_0 = arith.constant 0 : index
    %0 = vector.load %arg1[%c0, %c0_0] : memref<32x784xbf16, #tpu.memory_space<vmem>>, vector<32x784xbf16>
    %c0_1 = arith.constant 0 : index
    %c0_2 = arith.constant 0 : index
    %1 = vector.load %arg2[%c0_1, %c0_2] : memref<784x32xbf16, #tpu.memory_space<vmem>>, vector<784x32xbf16>
    %cst = arith.constant dense<0.000000e+00> : vector<32x32xf32>
    %2 = tpu.matmul %0, %1, %cst {dimension_numbers = #tpu.dot_dimension_numbers<[1], [0], [0], [1], [0, 0, 1, 1], [], []>} : vector<32x784xbf16>, vector<784x32xbf16>, vector<32x32xf32> -> vector<32x32xf32>
    %c0_3 = arith.constant 0 : index
    %c0_4 = arith.constant 0 : index
    %3 = vector.load %arg3[%c0_3, %c0_4] : memref<1x32xf32, #tpu.memory_space<vmem>>, vector<1x32xf32>
    %4 = vector.broadcast %3 : vector<1x32xf32> to vector<32x32xf32>
    %5 = arith.addf %2, %4 : vector<32x32xf32>
    %cst_5 = arith.constant 0.000000e+00 : f32
    %6 = vector.broadcast %cst_5 : f32 to vector<32x32xf32>
    %7 = arith.maximumf %5, %6 : vector<32x32xf32>
    %8 = arith.truncf %7 : vector<32x32xf32> to vector<32x32xbf16>
    %c0_6 = arith.constant 0 : index
    %c0_7 = arith.constant 0 : index
    %9 = vector.load %arg4[%c0_6, %c0_7] : memref<32x32xbf16, #tpu.memory_space<vmem>>, vector<32x32xbf16>
    tpu.vector_store %arg4[%c0_6, %c0_7], %8 {strides = array<i32>} : memref<32x32xbf16, #tpu.memory_space<vmem>>, vector<32x32xbf16>,
    return
  }
  func.func @transform_0(%arg0: i32) -> (i32, i32) {
    %c0_i32 = arith.constant 0 : i32
    %c0_i32_0 = arith.constant 0 : i32
    return %arg0, %c0_i32 : i32, i32
  }
  func.func @transform_1(%arg0: i32) -> (i32, i32) {
    %c0_i32 = arith.constant 0 : i32
    %c0_i32_0 = arith.constant 0 : i32
    %c0_i32_1 = arith.constant 0 : i32
    return %c0_i32, %c0_i32_0 : i32, i32
  }
  func.func @transform_2(%arg0: i32) -> (i32, i32) {
    %c0_i32 = arith.constant 0 : i32
    %c0_i32_0 = arith.constant 0 : i32
    %c0_i32_1 = arith.constant 0 : i32
    return %c0_i32, %c0_i32_0 : i32, i32
  }
  func.func @transform_3(%arg0: i32) -> (i32, i32) {
    %c0_i32 = arith.constant 0 : i32
    %c0_i32_0 = arith.constant 0 : i32
    return %arg0, %c0_i32 : i32, i32
  }
}

module attributes {stable_mosaic.version = 11 : i64} {
  func.func @_mm_bias_relu_kernel(%arg0: i32, %arg1: memref<128x600xbf16, #tpu.memory_space<vmem>>, %arg2: memref<600x64xbf16, #tpu.memory_space<vmem>>, %arg3: memref<1x64xf32, #tpu.memory_space<vmem>>, %arg4: memref<128x64xbf16, #tpu.memory_space<vmem>>) attributes {dimension_semantics = [#tpu.dimension_semantics<parallel>], iteration_bounds = array<i64: 1>, scalar_prefetch = 0 : i64, scratch_operands = 0 : i64, tpu.core_type = #tpu.core_type<tc>, window_params = [{transform_indices = @transform_0, window_bounds = array<i64: 128, 600>}, {pipeline_mode = #tpu.pipeline_mode<synchronous>, transform_indices = @transform_1, window_bounds = array<i64: 600, 64>}, {pipeline_mode = #tpu.pipeline_mode<synchronous>, transform_indices = @transform_2, window_bounds = array<i64: 1, 64>}, {transform_indices = @transform_3, window_bounds = array<i64: 128, 64>}]} {
    %c0 = arith.constant 0 : index
    %c0_0 = arith.constant 0 : index
    %0 = vector.load %arg1[%c0, %c0_0] : memref<128x600xbf16, #tpu.memory_space<vmem>>, vector<128x600xbf16>
    %c0_1 = arith.constant 0 : index
    %c0_2 = arith.constant 0 : index
    %1 = vector.load %arg2[%c0_1, %c0_2] : memref<600x64xbf16, #tpu.memory_space<vmem>>, vector<600x64xbf16>
    %cst = arith.constant dense<0.000000e+00> : vector<128x64xf32>
    %2 = tpu.matmul %0, %1, %cst {dimension_numbers = #tpu.dot_dimension_numbers<[1], [0], [0], [1], [0, 0, 1, 1], [], []>} : vector<128x600xbf16>, vector<600x64xbf16>, vector<128x64xf32> -> vector<128x64xf32>
    %c0_3 = arith.constant 0 : index
    %c0_4 = arith.constant 0 : index
    %3 = vector.load %arg3[%c0_3, %c0_4] : memref<1x64xf32, #tpu.memory_space<vmem>>, vector<1x64xf32>
    %4 = vector.broadcast %3 : vector<1x64xf32> to vector<128x64xf32>
    %5 = arith.addf %2, %4 : vector<128x64xf32>
    %cst_5 = arith.constant 0.000000e+00 : f32
    %6 = vector.broadcast %cst_5 : f32 to vector<128x64xf32>
    %7 = arith.maximumf %5, %6 : vector<128x64xf32>
    %8 = arith.truncf %7 : vector<128x64xf32> to vector<128x64xbf16>
    %c0_6 = arith.constant 0 : index
    %c0_7 = arith.constant 0 : index
    %9 = vector.load %arg4[%c0_6, %c0_7] : memref<128x64xbf16, #tpu.memory_space<vmem>>, vector<128x64xbf16>
    tpu.vector_store %arg4[%c0_6, %c0_7], %8 {strides = array<i32>} : memref<128x64xbf16, #tpu.memory_space<vmem>>, vector<128x64xbf16>,
    return
  }
  func.func @transform_0(%arg0: i32) -> (i32, i32) {
    %c0_i32 = arith.constant 0 : i32
    %c0_i32_0 = arith.constant 0 : i32
    return %arg0, %c0_i32 : i32, i32
  }
  func.func @transform_1(%arg0: i32) -> (i32, i32) {
    %c0_i32 = arith.constant 0 : i32
    %c0_i32_0 = arith.constant 0 : i32
    %c0_i32_1 = arith.constant 0 : i32
    return %c0_i32, %c0_i32_0 : i32, i32
  }
  func.func @transform_2(%arg0: i32) -> (i32, i32) {
    %c0_i32 = arith.constant 0 : i32
    %c0_i32_0 = arith.constant 0 : i32
    %c0_i32_1 = arith.constant 0 : i32
    return %c0_i32, %c0_i32_0 : i32, i32
  }
  func.func @transform_3(%arg0: i32) -> (i32, i32) {
    %c0_i32 = arith.constant 0 : i32
    %c0_i32_0 = arith.constant 0 : i32
    return %arg0, %c0_i32 : i32, i32
  }
}

module attributes {stable_mosaic.version = 11 : i64} {
  func.func @_mm_bias_relu_kernel(%arg0: i32, %arg1: memref<32x1000xbf16, #tpu.memory_space<vmem>>, %arg2: memref<1000x32xbf16, #tpu.memory_space<vmem>>, %arg3: memref<1x32xf32, #tpu.memory_space<vmem>>, %arg4: memref<32x32xbf16, #tpu.memory_space<vmem>>) attributes {dimension_semantics = [#tpu.dimension_semantics<parallel>], iteration_bounds = array<i64: 1>, scalar_prefetch = 0 : i64, scratch_operands = 0 : i64, tpu.core_type = #tpu.core_type<tc>, window_params = [{transform_indices = @transform_0, window_bounds = array<i64: 32, 1000>}, {pipeline_mode = #tpu.pipeline_mode<synchronous>, transform_indices = @transform_1, window_bounds = array<i64: 1000, 32>}, {pipeline_mode = #tpu.pipeline_mode<synchronous>, transform_indices = @transform_2, window_bounds = array<i64: 1, 32>}, {transform_indices = @transform_3, window_bounds = array<i64: 32, 32>}]} {
    %c0 = arith.constant 0 : index
    %c0_0 = arith.constant 0 : index
    %0 = vector.load %arg1[%c0, %c0_0] : memref<32x1000xbf16, #tpu.memory_space<vmem>>, vector<32x1000xbf16>
    %c0_1 = arith.constant 0 : index
    %c0_2 = arith.constant 0 : index
    %1 = vector.load %arg2[%c0_1, %c0_2] : memref<1000x32xbf16, #tpu.memory_space<vmem>>, vector<1000x32xbf16>
    %cst = arith.constant dense<0.000000e+00> : vector<32x32xf32>
    %2 = tpu.matmul %0, %1, %cst {dimension_numbers = #tpu.dot_dimension_numbers<[1], [0], [0], [1], [0, 0, 1, 1], [], []>} : vector<32x1000xbf16>, vector<1000x32xbf16>, vector<32x32xf32> -> vector<32x32xf32>
    %c0_3 = arith.constant 0 : index
    %c0_4 = arith.constant 0 : index
    %3 = vector.load %arg3[%c0_3, %c0_4] : memref<1x32xf32, #tpu.memory_space<vmem>>, vector<1x32xf32>
    %4 = vector.broadcast %3 : vector<1x32xf32> to vector<32x32xf32>
    %5 = arith.addf %2, %4 : vector<32x32xf32>
    %cst_5 = arith.constant 0.000000e+00 : f32
    %6 = vector.broadcast %cst_5 : f32 to vector<32x32xf32>
    %7 = arith.maximumf %5, %6 : vector<32x32xf32>
    %8 = arith.truncf %7 : vector<32x32xf32> to vector<32x32xbf16>
    %c0_6 = arith.constant 0 : index
    %c0_7 = arith.constant 0 : index
    %9 = vector.load %arg4[%c0_6, %c0_7] : memref<32x32xbf16, #tpu.memory_space<vmem>>, vector<32x32xbf16>
    tpu.vector_store %arg4[%c0_6, %c0_7], %8 {strides = array<i32>} : memref<32x32xbf16, #tpu.memory_space<vmem>>, vector<32x32xbf16>,
    return
  }
  func.func @transform_0(%arg0: i32) -> (i32, i32) {
    %c0_i32 = arith.constant 0 : i32
    %c0_i32_0 = arith.constant 0 : i32
    return %arg0, %c0_i32 : i32, i32
  }
  func.func @transform_1(%arg0: i32) -> (i32, i32) {
    %c0_i32 = arith.constant 0 : i32
    %c0_i32_0 = arith.constant 0 : i32
    %c0_i32_1 = arith.constant 0 : i32
    return %c0_i32, %c0_i32_0 : i32, i32
  }
  func.func @transform_2(%arg0: i32) -> (i32, i32) {
    %c0_i32 = arith.constant 0 : i32
    %c0_i32_0 = arith.constant 0 : i32
    %c0_i32_1 = arith.constant 0 : i32
    return %c0_i32, %c0_i32_0 : i32, i32
  }
  func.func @transform_3(%arg0: i32) -> (i32, i32) {
    %c0_i32 = arith.constant 0 : i32
    %c0_i32_0 = arith.constant 0 : i32
    return %arg0, %c0_i32 : i32, i32
  }
}

module attributes {stable_mosaic.version = 11 : i64} {
  func.func @_mm_bias_relu_kernel(%arg0: i32, %arg1: memref<32x600xbf16, #tpu.memory_space<vmem>>, %arg2: memref<600x32xbf16, #tpu.memory_space<vmem>>, %arg3: memref<1x32xf32, #tpu.memory_space<vmem>>, %arg4: memref<32x32xbf16, #tpu.memory_space<vmem>>) attributes {dimension_semantics = [#tpu.dimension_semantics<parallel>], iteration_bounds = array<i64: 1>, scalar_prefetch = 0 : i64, scratch_operands = 0 : i64, tpu.core_type = #tpu.core_type<tc>, window_params = [{transform_indices = @transform_0, window_bounds = array<i64: 32, 600>}, {pipeline_mode = #tpu.pipeline_mode<synchronous>, transform_indices = @transform_1, window_bounds = array<i64: 600, 32>}, {pipeline_mode = #tpu.pipeline_mode<synchronous>, transform_indices = @transform_2, window_bounds = array<i64: 1, 32>}, {transform_indices = @transform_3, window_bounds = array<i64: 32, 32>}]} {
    %c0 = arith.constant 0 : index
    %c0_0 = arith.constant 0 : index
    %0 = vector.load %arg1[%c0, %c0_0] : memref<32x600xbf16, #tpu.memory_space<vmem>>, vector<32x600xbf16>
    %c0_1 = arith.constant 0 : index
    %c0_2 = arith.constant 0 : index
    %1 = vector.load %arg2[%c0_1, %c0_2] : memref<600x32xbf16, #tpu.memory_space<vmem>>, vector<600x32xbf16>
    %cst = arith.constant dense<0.000000e+00> : vector<32x32xf32>
    %2 = tpu.matmul %0, %1, %cst {dimension_numbers = #tpu.dot_dimension_numbers<[1], [0], [0], [1], [0, 0, 1, 1], [], []>} : vector<32x600xbf16>, vector<600x32xbf16>, vector<32x32xf32> -> vector<32x32xf32>
    %c0_3 = arith.constant 0 : index
    %c0_4 = arith.constant 0 : index
    %3 = vector.load %arg3[%c0_3, %c0_4] : memref<1x32xf32, #tpu.memory_space<vmem>>, vector<1x32xf32>
    %4 = vector.broadcast %3 : vector<1x32xf32> to vector<32x32xf32>
    %5 = arith.addf %2, %4 : vector<32x32xf32>
    %cst_5 = arith.constant 0.000000e+00 : f32
    %6 = vector.broadcast %cst_5 : f32 to vector<32x32xf32>
    %7 = arith.maximumf %5, %6 : vector<32x32xf32>
    %8 = arith.truncf %7 : vector<32x32xf32> to vector<32x32xbf16>
    %c0_6 = arith.constant 0 : index
    %c0_7 = arith.constant 0 : index
    %9 = vector.load %arg4[%c0_6, %c0_7] : memref<32x32xbf16, #tpu.memory_space<vmem>>, vector<32x32xbf16>
    tpu.vector_store %arg4[%c0_6, %c0_7], %8 {strides = array<i32>} : memref<32x32xbf16, #tpu.memory_space<vmem>>, vector<32x32xbf16>,
    return
  }
  func.func @transform_0(%arg0: i32) -> (i32, i32) {
    %c0_i32 = arith.constant 0 : i32
    %c0_i32_0 = arith.constant 0 : i32
    return %arg0, %c0_i32 : i32, i32
  }
  func.func @transform_1(%arg0: i32) -> (i32, i32) {
    %c0_i32 = arith.constant 0 : i32
    %c0_i32_0 = arith.constant 0 : i32
    %c0_i32_1 = arith.constant 0 : i32
    return %c0_i32, %c0_i32_0 : i32, i32
  }
  func.func @transform_2(%arg0: i32) -> (i32, i32) {
    %c0_i32 = arith.constant 0 : i32
    %c0_i32_0 = arith.constant 0 : i32
    %c0_i32_1 = arith.constant 0 : i32
    return %c0_i32, %c0_i32_0 : i32, i32
  }
  func.func @transform_3(%arg0: i32) -> (i32, i32) {
    %c0_i32 = arith.constant 0 : i32
    %c0_i32_0 = arith.constant 0 : i32
    return %arg0, %c0_i32 : i32, i32
  }
}

module attributes {stable_mosaic.version = 11 : i64} {
  func.func @_mm_bias_relu_kernel(%arg0: i32, %arg1: memref<128x216xbf16, #tpu.memory_space<vmem>>, %arg2: memref<216x64xbf16, #tpu.memory_space<vmem>>, %arg3: memref<1x64xf32, #tpu.memory_space<vmem>>, %arg4: memref<128x64xbf16, #tpu.memory_space<vmem>>) attributes {dimension_semantics = [#tpu.dimension_semantics<parallel>], iteration_bounds = array<i64: 1>, scalar_prefetch = 0 : i64, scratch_operands = 0 : i64, tpu.core_type = #tpu.core_type<tc>, window_params = [{transform_indices = @transform_0, window_bounds = array<i64: 128, 216>}, {pipeline_mode = #tpu.pipeline_mode<synchronous>, transform_indices = @transform_1, window_bounds = array<i64: 216, 64>}, {pipeline_mode = #tpu.pipeline_mode<synchronous>, transform_indices = @transform_2, window_bounds = array<i64: 1, 64>}, {transform_indices = @transform_3, window_bounds = array<i64: 128, 64>}]} {
    %c0 = arith.constant 0 : index
    %c0_0 = arith.constant 0 : index
    %0 = vector.load %arg1[%c0, %c0_0] : memref<128x216xbf16, #tpu.memory_space<vmem>>, vector<128x216xbf16>
    %c0_1 = arith.constant 0 : index
    %c0_2 = arith.constant 0 : index
    %1 = vector.load %arg2[%c0_1, %c0_2] : memref<216x64xbf16, #tpu.memory_space<vmem>>, vector<216x64xbf16>
    %cst = arith.constant dense<0.000000e+00> : vector<128x64xf32>
    %2 = tpu.matmul %0, %1, %cst {dimension_numbers = #tpu.dot_dimension_numbers<[1], [0], [0], [1], [0, 0, 1, 1], [], []>} : vector<128x216xbf16>, vector<216x64xbf16>, vector<128x64xf32> -> vector<128x64xf32>
    %c0_3 = arith.constant 0 : index
    %c0_4 = arith.constant 0 : index
    %3 = vector.load %arg3[%c0_3, %c0_4] : memref<1x64xf32, #tpu.memory_space<vmem>>, vector<1x64xf32>
    %4 = vector.broadcast %3 : vector<1x64xf32> to vector<128x64xf32>
    %5 = arith.addf %2, %4 : vector<128x64xf32>
    %cst_5 = arith.constant 0.000000e+00 : f32
    %6 = vector.broadcast %cst_5 : f32 to vector<128x64xf32>
    %7 = arith.maximumf %5, %6 : vector<128x64xf32>
    %8 = arith.truncf %7 : vector<128x64xf32> to vector<128x64xbf16>
    %c0_6 = arith.constant 0 : index
    %c0_7 = arith.constant 0 : index
    %9 = vector.load %arg4[%c0_6, %c0_7] : memref<128x64xbf16, #tpu.memory_space<vmem>>, vector<128x64xbf16>
    tpu.vector_store %arg4[%c0_6, %c0_7], %8 {strides = array<i32>} : memref<128x64xbf16, #tpu.memory_space<vmem>>, vector<128x64xbf16>,
    return
  }
  func.func @transform_0(%arg0: i32) -> (i32, i32) {
    %c0_i32 = arith.constant 0 : i32
    %c0_i32_0 = arith.constant 0 : i32
    return %arg0, %c0_i32 : i32, i32
  }
  func.func @transform_1(%arg0: i32) -> (i32, i32) {
    %c0_i32 = arith.constant 0 : i32
    %c0_i32_0 = arith.constant 0 : i32
    %c0_i32_1 = arith.constant 0 : i32
    return %c0_i32, %c0_i32_0 : i32, i32
  }
  func.func @transform_2(%arg0: i32) -> (i32, i32) {
    %c0_i32 = arith.constant 0 : i32
    %c0_i32_0 = arith.constant 0 : i32
    %c0_i32_1 = arith.constant 0 : i32
    return %c0_i32, %c0_i32_0 : i32, i32
  }
  func.func @transform_3(%arg0: i32) -> (i32, i32) {
    %c0_i32 = arith.constant 0 : i32
    %c0_i32_0 = arith.constant 0 : i32
    return %arg0, %c0_i32 : i32, i32
  }
}

module attributes {stable_mosaic.version = 11 : i64} {
  func.func @_mm_bias_relu_kernel(%arg0: i32, %arg1: memref<32x432xbf16, #tpu.memory_space<vmem>>, %arg2: memref<432x32xbf16, #tpu.memory_space<vmem>>, %arg3: memref<1x32xf32, #tpu.memory_space<vmem>>, %arg4: memref<32x32xbf16, #tpu.memory_space<vmem>>) attributes {dimension_semantics = [#tpu.dimension_semantics<parallel>], iteration_bounds = array<i64: 1>, scalar_prefetch = 0 : i64, scratch_operands = 0 : i64, tpu.core_type = #tpu.core_type<tc>, window_params = [{transform_indices = @transform_0, window_bounds = array<i64: 32, 432>}, {pipeline_mode = #tpu.pipeline_mode<synchronous>, transform_indices = @transform_1, window_bounds = array<i64: 432, 32>}, {pipeline_mode = #tpu.pipeline_mode<synchronous>, transform_indices = @transform_2, window_bounds = array<i64: 1, 32>}, {transform_indices = @transform_3, window_bounds = array<i64: 32, 32>}]} {
    %c0 = arith.constant 0 : index
    %c0_0 = arith.constant 0 : index
    %0 = vector.load %arg1[%c0, %c0_0] : memref<32x432xbf16, #tpu.memory_space<vmem>>, vector<32x432xbf16>
    %c0_1 = arith.constant 0 : index
    %c0_2 = arith.constant 0 : index
    %1 = vector.load %arg2[%c0_1, %c0_2] : memref<432x32xbf16, #tpu.memory_space<vmem>>, vector<432x32xbf16>
    %cst = arith.constant dense<0.000000e+00> : vector<32x32xf32>
    %2 = tpu.matmul %0, %1, %cst {dimension_numbers = #tpu.dot_dimension_numbers<[1], [0], [0], [1], [0, 0, 1, 1], [], []>} : vector<32x432xbf16>, vector<432x32xbf16>, vector<32x32xf32> -> vector<32x32xf32>
    %c0_3 = arith.constant 0 : index
    %c0_4 = arith.constant 0 : index
    %3 = vector.load %arg3[%c0_3, %c0_4] : memref<1x32xf32, #tpu.memory_space<vmem>>, vector<1x32xf32>
    %4 = vector.broadcast %3 : vector<1x32xf32> to vector<32x32xf32>
    %5 = arith.addf %2, %4 : vector<32x32xf32>
    %cst_5 = arith.constant 0.000000e+00 : f32
    %6 = vector.broadcast %cst_5 : f32 to vector<32x32xf32>
    %7 = arith.maximumf %5, %6 : vector<32x32xf32>
    %8 = arith.truncf %7 : vector<32x32xf32> to vector<32x32xbf16>
    %c0_6 = arith.constant 0 : index
    %c0_7 = arith.constant 0 : index
    %9 = vector.load %arg4[%c0_6, %c0_7] : memref<32x32xbf16, #tpu.memory_space<vmem>>, vector<32x32xbf16>
    tpu.vector_store %arg4[%c0_6, %c0_7], %8 {strides = array<i32>} : memref<32x32xbf16, #tpu.memory_space<vmem>>, vector<32x32xbf16>,
    return
  }
  func.func @transform_0(%arg0: i32) -> (i32, i32) {
    %c0_i32 = arith.constant 0 : i32
    %c0_i32_0 = arith.constant 0 : i32
    return %arg0, %c0_i32 : i32, i32
  }
  func.func @transform_1(%arg0: i32) -> (i32, i32) {
    %c0_i32 = arith.constant 0 : i32
    %c0_i32_0 = arith.constant 0 : i32
    %c0_i32_1 = arith.constant 0 : i32
    return %c0_i32, %c0_i32_0 : i32, i32
  }
  func.func @transform_2(%arg0: i32) -> (i32, i32) {
    %c0_i32 = arith.constant 0 : i32
    %c0_i32_0 = arith.constant 0 : i32
    %c0_i32_1 = arith.constant 0 : i32
    return %c0_i32, %c0_i32_0 : i32, i32
  }
  func.func @transform_3(%arg0: i32) -> (i32, i32) {
    %c0_i32 = arith.constant 0 : i32
    %c0_i32_0 = arith.constant 0 : i32
    return %arg0, %c0_i32 : i32, i32
  }
}

module attributes {stable_mosaic.version = 11 : i64} {
  func.func @_mm_bias_relu_kernel(%arg0: i32, %arg1: memref<32x216xbf16, #tpu.memory_space<vmem>>, %arg2: memref<216x32xbf16, #tpu.memory_space<vmem>>, %arg3: memref<1x32xf32, #tpu.memory_space<vmem>>, %arg4: memref<32x32xbf16, #tpu.memory_space<vmem>>) attributes {dimension_semantics = [#tpu.dimension_semantics<parallel>], iteration_bounds = array<i64: 1>, scalar_prefetch = 0 : i64, scratch_operands = 0 : i64, tpu.core_type = #tpu.core_type<tc>, window_params = [{transform_indices = @transform_0, window_bounds = array<i64: 32, 216>}, {pipeline_mode = #tpu.pipeline_mode<synchronous>, transform_indices = @transform_1, window_bounds = array<i64: 216, 32>}, {pipeline_mode = #tpu.pipeline_mode<synchronous>, transform_indices = @transform_2, window_bounds = array<i64: 1, 32>}, {transform_indices = @transform_3, window_bounds = array<i64: 32, 32>}]} {
    %c0 = arith.constant 0 : index
    %c0_0 = arith.constant 0 : index
    %0 = vector.load %arg1[%c0, %c0_0] : memref<32x216xbf16, #tpu.memory_space<vmem>>, vector<32x216xbf16>
    %c0_1 = arith.constant 0 : index
    %c0_2 = arith.constant 0 : index
    %1 = vector.load %arg2[%c0_1, %c0_2] : memref<216x32xbf16, #tpu.memory_space<vmem>>, vector<216x32xbf16>
    %cst = arith.constant dense<0.000000e+00> : vector<32x32xf32>
    %2 = tpu.matmul %0, %1, %cst {dimension_numbers = #tpu.dot_dimension_numbers<[1], [0], [0], [1], [0, 0, 1, 1], [], []>} : vector<32x216xbf16>, vector<216x32xbf16>, vector<32x32xf32> -> vector<32x32xf32>
    %c0_3 = arith.constant 0 : index
    %c0_4 = arith.constant 0 : index
    %3 = vector.load %arg3[%c0_3, %c0_4] : memref<1x32xf32, #tpu.memory_space<vmem>>, vector<1x32xf32>
    %4 = vector.broadcast %3 : vector<1x32xf32> to vector<32x32xf32>
    %5 = arith.addf %2, %4 : vector<32x32xf32>
    %cst_5 = arith.constant 0.000000e+00 : f32
    %6 = vector.broadcast %cst_5 : f32 to vector<32x32xf32>
    %7 = arith.maximumf %5, %6 : vector<32x32xf32>
    %8 = arith.truncf %7 : vector<32x32xf32> to vector<32x32xbf16>
    %c0_6 = arith.constant 0 : index
    %c0_7 = arith.constant 0 : index
    %9 = vector.load %arg4[%c0_6, %c0_7] : memref<32x32xbf16, #tpu.memory_space<vmem>>, vector<32x32xbf16>
    tpu.vector_store %arg4[%c0_6, %c0_7], %8 {strides = array<i32>} : memref<32x32xbf16, #tpu.memory_space<vmem>>, vector<32x32xbf16>,
    return
  }
  func.func @transform_0(%arg0: i32) -> (i32, i32) {
    %c0_i32 = arith.constant 0 : i32
    %c0_i32_0 = arith.constant 0 : i32
    return %arg0, %c0_i32 : i32, i32
  }
  func.func @transform_1(%arg0: i32) -> (i32, i32) {
    %c0_i32 = arith.constant 0 : i32
    %c0_i32_0 = arith.constant 0 : i32
    %c0_i32_1 = arith.constant 0 : i32
    return %c0_i32, %c0_i32_0 : i32, i32
  }
  func.func @transform_2(%arg0: i32) -> (i32, i32) {
    %c0_i32 = arith.constant 0 : i32
    %c0_i32_0 = arith.constant 0 : i32
    %c0_i32_1 = arith.constant 0 : i32
    return %c0_i32, %c0_i32_0 : i32, i32
  }
  func.func @transform_3(%arg0: i32) -> (i32, i32) {
    %c0_i32 = arith.constant 0 : i32
    %c0_i32_0 = arith.constant 0 : i32
    return %arg0, %c0_i32 : i32, i32
  }
}

module attributes {stable_mosaic.version = 11 : i64} {
  func.func @_fuse_conv_kernel(%arg0: i32, %arg1: i32, %arg2: memref<1x30x4x4xbf16, #tpu.memory_space<vmem>>, %arg3: memref<1x30x1x1xf32, #tpu.memory_space<vmem>>, %arg4: memref<1x1xf32, #tpu.memory_space<smem>>, %arg5: memref<1x4x4xf32, #tpu.memory_space<vmem>>) attributes {dimension_semantics = [#tpu.dimension_semantics<parallel>, #tpu.dimension_semantics<parallel>], iteration_bounds = array<i64: 2, 1>, scalar_prefetch = 0 : i64, scratch_operands = 0 : i64, tpu.core_type = #tpu.core_type<tc>, window_params = [{transform_indices = @transform_0, window_bounds = array<i64: 1, 30, 4, 4>}, {pipeline_mode = #tpu.pipeline_mode<synchronous>, transform_indices = @transform_1, window_bounds = array<i64: 1, 30, 1, 1>}, {transform_indices = @transform_2, window_bounds = array<i64: 1, 1>}, {transform_indices = @transform_3, window_bounds = array<i64: 1, 4, 4>}]} {
    %c0 = arith.constant 0 : index
    %c0_0 = arith.constant 0 : index
    %c0_1 = arith.constant 0 : index
    %c0_2 = arith.constant 0 : index
    %0 = vector.load %arg2[%c0, %c0_0, %c0_1, %c0_2] : memref<1x30x4x4xbf16, #tpu.memory_space<vmem>>, vector<1x30x4x4xbf16>
    %1 = arith.extf %0 : vector<1x30x4x4xbf16> to vector<1x30x4x4xf32>
    %c0_3 = arith.constant 0 : index
    %c0_4 = arith.constant 0 : index
    %c0_5 = arith.constant 0 : index
    %c0_6 = arith.constant 0 : index
    %2 = vector.load %arg3[%c0_3, %c0_4, %c0_5, %c0_6] : memref<1x30x1x1xf32, #tpu.memory_space<vmem>>, vector<1x30x1x1xf32>
    %3 = vector.broadcast %2 : vector<1x30x1x1xf32> to vector<1x30x4x4xf32>
    %4 = arith.mulf %1, %3 : vector<1x30x4x4xf32>
    %cst = arith.constant dense<0.000000e+00> : vector<1x4x4xf32>
    %5 = vector.multi_reduction <add>, %4, %cst [1] : vector<1x30x4x4xf32> to vector<1x4x4xf32>
    %c0_7 = arith.constant 0 : index
    %c0_8 = arith.constant 0 : index
    %6 = memref.load %arg4[%c0_7, %c0_8] : memref<1x1xf32, #tpu.memory_space<smem>>
    %7 = vector.broadcast %6 : f32 to vector<1x4x4xf32>
    %8 = arith.addf %5, %7 : vector<1x4x4xf32>
    %cst_9 = arith.constant 0.000000e+00 : f32
    %9 = vector.broadcast %cst_9 : f32 to vector<1x4x4xf32>
    %10 = arith.maximumf %8, %9 : vector<1x4x4xf32>
    %c0_10 = arith.constant 0 : index
    %c0_11 = arith.constant 0 : index
    %c0_12 = arith.constant 0 : index
    %11 = vector.load %arg5[%c0_10, %c0_11, %c0_12] : memref<1x4x4xf32, #tpu.memory_space<vmem>>, vector<1x4x4xf32>
    tpu.vector_store %arg5[%c0_10, %c0_11, %c0_12], %10 {strides = array<i32>} : memref<1x4x4xf32, #tpu.memory_space<vmem>>, vector<1x4x4xf32>,
    return
  }
  func.func @transform_0(%arg0: i32, %arg1: i32) -> (i32, i32, i32, i32) {
    %c0_i32 = arith.constant 0 : i32
    %c0_i32_0 = arith.constant 0 : i32
    %c0_i32_1 = arith.constant 0 : i32
    return %arg0, %c0_i32, %arg1, %c0_i32_0 : i32, i32, i32, i32
  }
  func.func @transform_1(%arg0: i32, %arg1: i32) -> (i32, i32, i32, i32) {
    %c0_i32 = arith.constant 0 : i32
    %c0_i32_0 = arith.constant 0 : i32
    %c0_i32_1 = arith.constant 0 : i32
    %c0_i32_2 = arith.constant 0 : i32
    %c0_i32_3 = arith.constant 0 : i32
    return %c0_i32, %c0_i32_0, %c0_i32_1, %c0_i32_2 : i32, i32, i32, i32
  }
  func.func @transform_2(%arg0: i32, %arg1: i32) -> (i32, i32) {
    %c0_i32 = arith.constant 0 : i32
    %c0_i32_0 = arith.constant 0 : i32
    %c0_i32_1 = arith.constant 0 : i32
    return %c0_i32, %c0_i32_0 : i32, i32
  }
  func.func @transform_3(%arg0: i32, %arg1: i32) -> (i32, i32, i32) {
    %c0_i32 = arith.constant 0 : i32
    %c0_i32_0 = arith.constant 0 : i32
    return %arg0, %arg1, %c0_i32 : i32, i32, i32
  }
}

</mosaic_0001>

<llo_original>
// kernel: crowd_counter_forward.11
$region0: #{crowd_counter_forward.11}
  #allocation0 [shape = 'u32[]', space=smem, size = 0x4, offset = 0x4, fixed_abs, tag = 'smem constant byte address 0x4 - core index']
  #allocation1 [shape = 'u32[144,128]{1,0:T(1,128)}', space=vmem, size = 0x12000, scoped, tag = 'internal scratch']
  %s0 = inlined_call_operand.vmem [shape: bf16[512,648], index: 0, kind: input, shape index: {}]
  %s1 = inlined_call_operand.vmem [shape: bf16[648,64], index: 1, kind: input, shape index: {}]
  %s2 = inlined_call_operand.vmem [shape: f32[1,64], index: 2, kind: input, shape index: {}]
  %s3 = inlined_call_operand.vmem [shape: bf16[512,64], index: 3, kind: output, shape index: {}]
  %s4 = sld [smem:[#allocation0]]
  $region45: #{crowd_counter_forward.11} parent=0
    _
  %s6 = ssub.s32 1, %s4
  %s7 = scalar_select 0, %s6, %s4
  loop: start=0, step=1, limit=4
  $region2: #{crowd_counter_forward.11} parent=0 // loop_pre_header
    _
  $region3: #{crowd_counter_forward.11} parent=0 // loop_header
    %s9 = sphi 0, %s13
    %p10 = scmp.ge.s32.totalorder %s9, 4
    %s19 = sphi 0, %s21
    %s22 = sphi 0, %s19
    %s23 = sphi 0, %s22
    %s39 = sphi 0, %s23
    %s43 = sphi 0, %s43
    %s45 = sphi 0, %s43
    %s46 = sphi 0, %s45
    %s60 = sphi 0, %s46
    %s64 = sphi 0, %s64
    %s66 = sphi 0, %s64
    %s67 = sphi 0, %s66
    %s81 = sphi 0, %s67
    %s87 = sphi 0, %s89
    %s90 = sphi 0, %s87
    %s91 = sphi 0, %s90
    %s107 = sphi 0, %s91
  $region4: #{crowd_counter_forward.11} parent=0 // loop_header_branch
    %12 = sbr.rel (%p10) target = $region8
  $region5: #{crowd_counter_forward.11} parent=0 // loop_body
    %s14 = ssub.s32 %s9, 1
    %s15 = ssub.s32 %s9, 2
    %s16 = sadd.s32 %s9, 1
    %s17 = ssub.s32 %s9, %s16
    %p18 = scmp.eq.s32.totalorder %s17, 0
    %s20 = sadd.s32 %s19, 1
    %s21 = scalar_select %p18, %s19, %s20
    %p24 = pneg %p18
    %p25 = scmp.eq.s32.totalorder %s9, 1
    %p26 = por %p24, %p25
    %p27 = scmp.ne.s32.totalorder %s19, %s22
    %p28 = scmp.eq.s32.totalorder %s9, 0
    %p29 = por %p27, %p28
    %p30 = scmp.ne.s32.totalorder %s19, %s22
    %p31 = scmp.eq.s32.totalorder %s14, 1
    %p32 = por %p30, %p31
    %p33 = scmp.ne.s32.totalorder %s22, %s23
    %p34 = scmp.eq.s32.totalorder %s14, 0
    %p35 = por %p33, %p34
    %p36 = scmp.ne.s32.totalorder %s22, %s23
    %p37 = scmp.eq.s32.totalorder %s15, 1
    %p38 = por %p36, %p37
    %p40 = scmp.ne.s32.totalorder %s23, %s39
    %p41 = scmp.eq.s32.totalorder %s15, 0
    %p42 = por %p40, %p41
    %s44 = sadd.s32 %s43, 1
    %p47 = scmp.eq.s32.totalorder %s9, 1
    %p48 = scmp.ne.s32.totalorder %s43, %s45
    %p49 = scmp.eq.s32.totalorder %s9, 0
    %p50 = por %p48, %p49
    %p51 = scmp.ne.s32.totalorder %s43, %s45
    %p52 = scmp.eq.s32.totalorder %s14, 1
    %p53 = por %p51, %p52
    %p54 = scmp.ne.s32.totalorder %s45, %s46
    %p55 = scmp.eq.s32.totalorder %s14, 0
    %p56 = por %p54, %p55
    %p57 = scmp.ne.s32.totalorder %s45, %s46
    %p58 = scmp.eq.s32.totalorder %s15, 1
    %p59 = por %p57, %p58
    %p61 = scmp.ne.s32.totalorder %s46, %s60
    %p62 = scmp.eq.s32.totalorder %s15, 0
    %p63 = por %p61, %p62
    %s65 = sadd.s32 %s64, 1
    %p68 = scmp.eq.s32.totalorder %s9, 1
    %p69 = scmp.ne.s32.totalorder %s64, %s66
    %p70 = scmp.eq.s32.totalorder %s9, 0
    %p71 = por %p69, %p70
    %p72 = scmp.ne.s32.totalorder %s64, %s66
    %p73 = scmp.eq.s32.totalorder %s14, 1
    %p74 = por %p72, %p73
    %p75 = scmp.ne.s32.totalorder %s66, %s67
    %p76 = scmp.eq.s32.totalorder %s14, 0
    %p77 = por %p75, %p76
    %p78 = scmp.ne.s32.totalorder %s66, %s67
    %p79 = scmp.eq.s32.totalorder %s15, 1
    %p80 = por %p78, %p79
    %p82 = scmp.ne.s32.totalorder %s67, %s81
    %p83 = scmp.eq.s32.totalorder %s15, 0
    %p84 = por %p82, %p83
    %s85 = ssub.s32 %s9, %s16
    %p86 = scmp.eq.s32.totalorder %s85, 0
    %s88 = sadd.s32 %s87, 1
    %s89 = scalar_select %p86, %s87, %s88
    %p92 = pneg %p86
    %p93 = scmp.eq.s32.totalorder %s9, 1
    %p94 = por %p92, %p93
    %p95 = scmp.ne.s32.totalorder %s87, %s90
    %p96 = scmp.eq.s32.totalorder %s9, 0
    %p97 = por %p95, %p96
    %p98 = scmp.ne.s32.totalorder %s87, %s90
    %p99 = scmp.eq.s32.totalorder %s14, 1
    %p100 = por %p98, %p99
    %p101 = scmp.ne.s32.totalorder %s90, %s91
    %p102 = scmp.eq.s32.totalorder %s14, 0
    %p103 = por %p101, %p102
    %p104 = scmp.ne.s32.totalorder %s90, %s91
    %p105 = scmp.eq.s32.totalorder %s15, 1
    %p106 = por %p104, %p105
    %p108 = scmp.ne.s32.totalorder %s91, %s107
    %p109 = scmp.eq.s32.totalorder %s15, 0
    %p110 = por %p108, %p109
    %p111 = scmp.le.s32.totalorder 1, %s9
    %p112 = scmp.lt.s32.totalorder %s9, 3
    %p113 = pnand %p111, %p112
    %p114 = pneg %p113
    // Predicated region
    $region9: #{crowd_counter_forward.11} parent=5 // pred_check
      _
    $region10: #{crowd_counter_forward.11} parent=5 // pred_check_branch
      %116 = sbr.rel (%p113) target = $region12
    $region11: #{crowd_counter_forward.11} parent=5 // pred_region
      %s117 = ssub.s32 %s9, 1
      // Predicated region
      $region13: #{crowd_counter_forward.11} parent=11 // pred_check
        %p118 = pneg %p56
      $region14: #{crowd_counter_forward.11} parent=11 // pred_check_branch
        %120 = sbr.rel (%p118) target = $region16
      $region15: #{crowd_counter_forward.11} parent=11 // pred_region
        _
      $region16: #{crowd_counter_forward.11} parent=11 // pred_fallthru
        _
      // Predicated region
      $region17: #{crowd_counter_forward.11} parent=11 // pred_check
        %p121 = pneg %p77
      $region18: #{crowd_counter_forward.11} parent=11 // pred_check_branch
        %123 = sbr.rel (%p121) target = $region20
      $region19: #{crowd_counter_forward.11} parent=11 // pred_region
        _
      $region20: #{crowd_counter_forward.11} parent=11 // pred_fallthru
        _
    $region12: #{crowd_counter_forward.11} parent=5 // pred_fallthru
      _
    %p124 = scmp.lt.s32.totalorder %s9, 2
    // Predicated region
    $region21: #{crowd_counter_forward.11} parent=5 // pred_check
      %p125 = pneg %p124
    $region22: #{crowd_counter_forward.11} parent=5 // pred_check_branch
      %127 = sbr.rel (%p125) target = $region24
    $region23: #{crowd_counter_forward.11} parent=5 // pred_region
      // Predicated region
      $region25: #{crowd_counter_forward.11} parent=23 // pred_check
        %p128 = pneg %p29
      $region26: #{crowd_counter_forward.11} parent=23 // pred_check_branch
        %130 = sbr.rel (%p128) target = $region28
      $region27: #{crowd_counter_forward.11} parent=23 // pred_region
        %s131 = smul.u32 32, %s9
        %p132 = scmp.lt.s32.totalorder %s131, 63
        %s133 = scalar_select %p132, %s131, 63
        %s134 = smul.addr %s133, 6
        %s135 = smul.addr %s134, 4
        %s136 = scalar_lea.vmem %s0, %s135
        %s137 = smul.u32 32, %s9
      $region28: #{crowd_counter_forward.11} parent=23 // pred_fallthru
        _
    $region24: #{crowd_counter_forward.11} parent=5 // pred_fallthru
      _
    %p138 = scmp.le.s32.totalorder 1, %s9
    %p139 = scmp.lt.s32.totalorder %s9, 3
    %p140 = pnand %p138, %p139
    %p141 = pneg %p140
    // Predicated region
    $region29: #{crowd_counter_forward.11} parent=5 // pred_check
      _
    $region30: #{crowd_counter_forward.11} parent=5 // pred_check_branch
      %143 = sbr.rel (%p140) target = $region32
    $region31: #{crowd_counter_forward.11} parent=5 // pred_region
      %s144 = ssub.s32 %s9, 1
      %s145 = smul.u32 32, %s14
      %p146 = scmp.lt.s32.totalorder %s145, 63
      %s147 = scalar_select %p146, %s145, 63
      %s148 = smul.addr %s147, 6
      %s149 = smul.addr %s148, 4
      %s150 = scalar_lea.vmem %s0, %s149
      %p151 = pneg %p35
      %p152 = pneg %p32
      %p153 = pneg %p56
      %p154 = pneg %p53
      %p155 = pneg %p77
      %p156 = pneg %p74
      %p157 = pneg %p103
      %p158 = pneg %p100
      %s159 = smul.u32 32, %s14
      %p160 = scmp.lt.s32.totalorder %s159, 63
      %s161 = scalar_select %p160, %s159, 63
      %s162 = smul.addr %s161, 4
      %s163 = scalar_lea.vmem %s3, %s162
      %s164 = smul.u32 32, %s14
      %p165 = scmp.lt.s32.totalorder %s164, 63
      %s166 = scalar_select %p165, %s164, 63
      %s167 = smul.addr %s166, 6
      %s168 = smul.addr %s167, 4
      %s169 = scalar_lea.vmem %s0, %s168
      %s170 = smul.u32 32, %s14
      %s171 = smul.u32 32, %s14
      %p172 = scmp.lt.s32.totalorder %s171, 63
      %s173 = scalar_select %p172, %s171, 63
      %s174 = smul.addr %s173, 4
      %s175 = scalar_lea.vmem %s3, %s174
      %s176 = smul.u32 32, %s14
      %v178 = vld [vmem:[%s169] sm:$0xff]
      %v179 = vld [vmem:[%s169 + $0x8] sm:$0xff]
      %v180 = vld [vmem:[%s169 + $0x10] sm:$0xff]
      %v181 = vld [vmem:[%s169 + $0x18] sm:$0xff]
      %v182 = vld [vmem:[%s169 + $0x20] sm:$0xff]
      %v183 = vld [vmem:[%s169 + $0x28] sm:$0xff]
      %v184 = vld [vmem:[%s169 + $0x30] sm:$0xff]
      %v185 = vld [vmem:[%s169 + $0x38] sm:$0xff]
      %v186 = vld [vmem:[%s169 + $0x40] sm:$0xff]
      %v187 = vld [vmem:[%s169 + $0x48] sm:$0xff]
      %v188 = vld [vmem:[%s169 + $0x50] sm:$0xff]
      %v189 = vld [vmem:[%s169 + $0x58] sm:$0xff]
      %v190 = vld [vmem:[%s169 + $0x60] sm:$0xff]
      %v191 = vld [vmem:[%s169 + $0x68] sm:$0xff]
      %v192 = vld [vmem:[%s169 + $0x70] sm:$0xff]
      %v193 = vld [vmem:[%s169 + $0x78] sm:$0xff]
      %v194 = vld [vmem:[%s169 + $0x80] sm:$0xff]
      %v195 = vld [vmem:[%s169 + $0x88] sm:$0xff]
      %v196 = vld [vmem:[%s169 + $0x90] sm:$0xff]
      %v197 = vld [vmem:[%s169 + $0x98] sm:$0xff]
      %v198 = vld [vmem:[%s169 + $0xa0] sm:$0xff]
      %v199 = vld [vmem:[%s169 + $0xa8] sm:$0xff]
      %v200 = vld [vmem:[%s169 + $0xb0] sm:$0xff]
      %v201 = vld [vmem:[%s169 + $0xb8] sm:$0xff]
      %v202 = vld [vmem:[%s169 + $0xc0] sm:$0xff]
      %v203 = vld [vmem:[%s169 + $0xc8] sm:$0xff]
      %v204 = vld [vmem:[%s169 + $0xd0] sm:$0xff]
      %v205 = vld [vmem:[%s169 + $0xd8] sm:$0xff]
      %v206 = vld [vmem:[%s169 + $0xe0] sm:$0xff]
      %v207 = vld [vmem:[%s169 + $0xe8] sm:$0xff]
      %v208 = vld [vmem:[%s169 + $0xf0] sm:$0xff]
      %v209 = vld [vmem:[%s169 + $0xf8] sm:$0xff]
      %v210 = vld [vmem:[%s169 + $0x100] sm:$0xff]
      %v211 = vld [vmem:[%s169 + $0x108] sm:$0xff]
      %v212 = vld [vmem:[%s169 + $0x110] sm:$0xff]
      %v213 = vld [vmem:[%s169 + $0x118] sm:$0xff]
      %v214 = vld [vmem:[%s169 + $0x120] sm:$0xff]
      %v215 = vld [vmem:[%s169 + $0x128] sm:$0xff]
      %v216 = vld [vmem:[%s169 + $0x130] sm:$0xff]
      %v217 = vld [vmem:[%s169 + $0x138] sm:$0xff]
      %v218 = vld [vmem:[%s169 + $0x140] sm:$0xff]
      %v219 = vld [vmem:[%s169 + $0x148] sm:$0xff]
      %v220 = vld [vmem:[%s169 + $0x150] sm:$0xff]
      %v221 = vld [vmem:[%s169 + $0x158] sm:$0xff]
      %v222 = vld [vmem:[%s169 + $0x160] sm:$0xff]
      %v223 = vld [vmem:[%s169 + $0x168] sm:$0xff]
      %v224 = vld [vmem:[%s169 + $0x170] sm:$0xff]
      %v225 = vld [vmem:[%s169 + $0x178] sm:$0xff]
      %v226 = vld [vmem:[%s169 + $0x180] sm:$0xff]
      %v227 = vld [vmem:[%s169 + $0x188] sm:$0xff]
      %v228 = vld [vmem:[%s169 + $0x190] sm:$0xff]
      %v229 = vld [vmem:[%s169 + $0x198] sm:$0xff]
      %v230 = vld [vmem:[%s169 + $0x1a0] sm:$0xff]
      %v231 = vld [vmem:[%s169 + $0x1a8] sm:$0xff]
      %v232 = vld [vmem:[%s169 + $0x1b0] sm:$0xff]
      %v233 = vld [vmem:[%s169 + $0x1b8] sm:$0xff]
      %v234 = vld [vmem:[%s169 + $0x1c0] sm:$0xff]
      %v235 = vld [vmem:[%s169 + $0x1c8] sm:$0xff]
      %v236 = vld [vmem:[%s169 + $0x1d0] sm:$0xff]
      %v237 = vld [vmem:[%s169 + $0x1d8] sm:$0xff]
      %v238 = vld [vmem:[%s169 + $0x1e0] sm:$0xff]
      %v239 = vld [vmem:[%s169 + $0x1e8] sm:$0xff]
      %v240 = vld [vmem:[%s169 + $0x1f0] sm:$0xff]
      %v241 = vld [vmem:[%s169 + $0x1f8] sm:$0xff]
      %v242 = vld [vmem:[%s169 + $0x200] sm:$0xff]
      %v243 = vld [vmem:[%s169 + $0x208] sm:$0xff]
      %v244 = vld [vmem:[%s169 + $0x210] sm:$0xff]
      %v245 = vld [vmem:[%s169 + $0x218] sm:$0xff]
      %v246 = vld [vmem:[%s169 + $0x220] sm:$0xff]
      %v247 = vld [vmem:[%s169 + $0x228] sm:$0xff]
      %v248 = vld [vmem:[%s169 + $0x230] sm:$0xff]
      %v249 = vld [vmem:[%s169 + $0x238] sm:$0xff]
      %v250 = vld [vmem:[%s169 + $0x240] sm:$0xff]
      %v251 = vld [vmem:[%s169 + $0x248] sm:$0xff]
      %v252 = vld [vmem:[%s169 + $0x250] sm:$0xff]
      %v253 = vld [vmem:[%s169 + $0x258] sm:$0xff]
      %v254 = vld [vmem:[%s169 + $0x260] sm:$0xff]
      %v255 = vld [vmem:[%s169 + $0x268] sm:$0xff]
      %v256 = vld [vmem:[%s169 + $0x270] sm:$0xff]
      %v257 = vld [vmem:[%s169 + $0x278] sm:$0xff]
      %v258 = vld [vmem:[%s169 + $0x280] sm:$0xff]
      %v259 = vld [vmem:[%s169 + $0x288] sm:$0xff]
      %v260 = vld [vmem:[%s169 + $0x290] sm:$0xff]
      %v261 = vld [vmem:[%s169 + $0x298] sm:$0xff]
      %v262 = vld [vmem:[%s169 + $0x2a0] sm:$0xff]
      %v263 = vld [vmem:[%s169 + $0x2a8] sm:$0xff]
      %v264 = vld [vmem:[%s169 + $0x2b0] sm:$0xff]
      %v265 = vld [vmem:[%s169 + $0x2b8] sm:$0xff]
      %v266 = vld [vmem:[%s169 + $0x2c0] sm:$0xff]
      %v267 = vld [vmem:[%s169 + $0x2c8] sm:$0xff]
      %v268 = vld [vmem:[%s169 + $0x2d0] sm:$0xff]
      %v269 = vld [vmem:[%s169 + $0x2d8] sm:$0xff]
      %v270 = vld [vmem:[%s169 + $0x2e0] sm:$0xff]
      %v271 = vld [vmem:[%s169 + $0x2e8] sm:$0xff]
      %v272 = vld [vmem:[%s169 + $0x2f0] sm:$0xff]
      %v273 = vld [vmem:[%s169 + $0x2f8] sm:$0xff]
      %v274 = vld [vmem:[%s1] sm:$0xf]
      %v275 = vld [vmem:[%s1 + $0x4] sm:$0xf]
      %v276 = vld [vmem:[%s1 + $0x8] sm:$0xf]
      %v277 = vld [vmem:[%s1 + $0xc] sm:$0xf]
      %v278 = vld [vmem:[%s1 + $0x10] sm:$0xf]
      %v279 = vld [vmem:[%s1 + $0x14] sm:$0xf]
      %v280 = vld [vmem:[%s1 + $0x18] sm:$0xf]
      %v281 = vld [vmem:[%s1 + $0x1c] sm:$0xf]
      %v282 = vld [vmem:[%s1 + $0x20] sm:$0xf]
      %v283 = vld [vmem:[%s1 + $0x24] sm:$0xf]
      %v284 = vld [vmem:[%s1 + $0x28] sm:$0xf]
      %v285 = vld [vmem:[%s1 + $0x2c] sm:$0xf]
      %v286 = vld [vmem:[%s1 + $0x30] sm:$0xf]
      %v287 = vld [vmem:[%s1 + $0x34] sm:$0xf]
      %v288 = vld [vmem:[%s1 + $0x38] sm:$0xf]
      %v289 = vld [vmem:[%s1 + $0x3c] sm:$0xf]
      %v290 = vld [vmem:[%s1 + $0x40] sm:$0xf]
      %v291 = vld [vmem:[%s1 + $0x44] sm:$0xf]
      %v292 = vld [vmem:[%s1 + $0x48] sm:$0xf]
      %v293 = vld [vmem:[%s1 + $0x4c] sm:$0xf]
      %v294 = vld [vmem:[%s1 + $0x50] sm:$0xf]
      %v295 = vld [vmem:[%s1 + $0x54] sm:$0xf]
      %v296 = vld [vmem:[%s1 + $0x58] sm:$0xf]
      %v297 = vld [vmem:[%s1 + $0x5c] sm:$0xf]
      %v298 = vld [vmem:[%s1 + $0x60] sm:$0xf]
      %v299 = vld [vmem:[%s1 + $0x64] sm:$0xf]
      %v300 = vld [vmem:[%s1 + $0x68] sm:$0xf]
      %v301 = vld [vmem:[%s1 + $0x6c] sm:$0xf]
      %v302 = vld [vmem:[%s1 + $0x70] sm:$0xf]
      %v303 = vld [vmem:[%s1 + $0x74] sm:$0xf]
      %v304 = vld [vmem:[%s1 + $0x78] sm:$0xf]
      %v305 = vld [vmem:[%s1 + $0x7c] sm:$0xf]
      %v306 = vld [vmem:[%s1 + $0x80] sm:$0xf]
      %v307 = vld [vmem:[%s1 + $0x84] sm:$0xf]
      %v308 = vld [vmem:[%s1 + $0x88] sm:$0xf]
      %v309 = vld [vmem:[%s1 + $0x8c] sm:$0xf]
      %v310 = vld [vmem:[%s1 + $0x90] sm:$0xf]
      %v311 = vld [vmem:[%s1 + $0x94] sm:$0xf]
      %v312 = vld [vmem:[%s1 + $0x98] sm:$0xf]
      %v313 = vld [vmem:[%s1 + $0x9c] sm:$0xf]
      %v314 = vld [vmem:[%s1 + $0xa0] sm:$0xf]
      %v315 = vld [vmem:[%s1 + $0xa4] sm:$0xf]
      %v316 = vld [vmem:[%s1 + $0xa8] sm:$0xf]
      %v317 = vld [vmem:[%s1 + $0xac] sm:$0xf]
      %v318 = vld [vmem:[%s1 + $0xb0] sm:$0xf]
      %v319 = vld [vmem:[%s1 + $0xb4] sm:$0xf]
      %v320 = vld [vmem:[%s1 + $0xb8] sm:$0xf]
      %v321 = vld [vmem:[%s1 + $0xbc] sm:$0xf]
      %v322 = vld [vmem:[%s1 + $0xc0] sm:$0xf]
      %v323 = vld [vmem:[%s1 + $0xc4] sm:$0xf]
      %v324 = vld [vmem:[%s1 + $0xc8] sm:$0xf]
      %v325 = vld [vmem:[%s1 + $0xcc] sm:$0xf]
      %v326 = vld [vmem:[%s1 + $0xd0] sm:$0xf]
      %v327 = vld [vmem:[%s1 + $0xd4] sm:$0xf]
      %v328 = vld [vmem:[%s1 + $0xd8] sm:$0xf]
      %v329 = vld [vmem:[%s1 + $0xdc] sm:$0xf]
      %v330 = vld [vmem:[%s1 + $0xe0] sm:$0xf]
      %v331 = vld [vmem:[%s1 + $0xe4] sm:$0xf]
      %v332 = vld [vmem:[%s1 + $0xe8] sm:$0xf]
      %v333 = vld [vmem:[%s1 + $0xec] sm:$0xf]
      %v334 = vld [vmem:[%s1 + $0xf0] sm:$0xf]
      %v335 = vld [vmem:[%s1 + $0xf4] sm:$0xf]
      %v336 = vld [vmem:[%s1 + $0xf8] sm:$0xf]
      %v337 = vld [vmem:[%s1 + $0xfc] sm:$0xf]
      %v338 = vld [vmem:[%s1 + $0x100] sm:$0xf]
      %v339 = vld [vmem:[%s1 + $0x104] sm:$0xf]
      %v340 = vld [vmem:[%s1 + $0x108] sm:$0xf]
      %v341 = vld [vmem:[%s1 + $0x10c] sm:$0xf]
      %v342 = vld [vmem:[%s1 + $0x110] sm:$0xf]
      %v343 = vld [vmem:[%s1 + $0x114] sm:$0xf]
      %v344 = vld [vmem:[%s1 + $0x118] sm:$0xf]
      %v345 = vld [vmem:[%s1 + $0x11c] sm:$0xf]
      %v346 = vld [vmem:[%s1 + $0x120] sm:$0xf]
      %v347 = vld [vmem:[%s1 + $0x124] sm:$0xf]
      %v348 = vld [vmem:[%s1 + $0x128] sm:$0xf]
      %v349 = vld [vmem:[%s1 + $0x12c] sm:$0xf]
      %v350 = vld [vmem:[%s1 + $0x130] sm:$0xf]
      %v351 = vld [vmem:[%s1 + $0x134] sm:$0xf]
      %v352 = vld [vmem:[%s1 + $0x138] sm:$0xf]
      %v353 = vld [vmem:[%s1 + $0x13c] sm:$0xf]
      %v354 = vld [vmem:[%s1 + $0x140] sm:$0xf]
      %v355 = vld [vmem:[%s2] sm:$0x1]
      %v357 = vlaneseq
      %v358 = vshrl.u32 %v357, 7
      %v359 = vsub.s32 0, %v358
      %v360 = vrot.slane %v355, %v359
      %v458 = vunpack.c.l.b16 %v178
      %v459 = vunpack.c.h.b16 %v178
      %v460 = vunpack.c.l.b16 %v179
      %v461 = vunpack.c.h.b16 %v179
      %v462 = vunpack.c.l.b16 %v180
      %v463 = vunpack.c.h.b16 %v180
      %v464 = vunpack.c.l.b16 %v181
      %v465 = vunpack.c.h.b16 %v181
      %v466 = vunpack.c.l.b16 %v182
      %v467 = vunpack.c.h.b16 %v182
      %v468 = vunpack.c.l.b16 %v183
      %v469 = vunpack.c.h.b16 %v183
      %v470 = vunpack.c.l.b16 %v184
      %v471 = vunpack.c.h.b16 %v184
      %v472 = vunpack.c.l.b16 %v185
      %v473 = vunpack.c.h.b16 %v185
      %v474 = vunpack.c.l.b16 %v186
      %v475 = vunpack.c.h.b16 %v186
      %v476 = vunpack.c.l.b16 %v187
      %v477 = vunpack.c.h.b16 %v187
      %v478 = vunpack.c.l.b16 %v188
      %v479 = vunpack.c.h.b16 %v188
      %v480 = vunpack.c.l.b16 %v189
      %v481 = vunpack.c.h.b16 %v189
      %v482 = vunpack.c.l.b16 %v190
      %v483 = vunpack.c.h.b16 %v190
      %v484 = vunpack.c.l.b16 %v191
      %v485 = vunpack.c.h.b16 %v191
      %v486 = vunpack.c.l.b16 %v192
      %v487 = vunpack.c.h.b16 %v192
      %v488 = vunpack.c.l.b16 %v193
      %v489 = vunpack.c.h.b16 %v193
      %v490 = vunpack.c.l.b16 %v194
      %v491 = vunpack.c.h.b16 %v194
      %v492 = vunpack.c.l.b16 %v195
      %v493 = vunpack.c.h.b16 %v195
      %v494 = vunpack.c.l.b16 %v196
      %v495 = vunpack.c.h.b16 %v196
      %v496 = vunpack.c.l.b16 %v197
      %v497 = vunpack.c.h.b16 %v197
      %v498 = vunpack.c.l.b16 %v198
      %v499 = vunpack.c.h.b16 %v198
      %v500 = vunpack.c.l.b16 %v199
      %v501 = vunpack.c.h.b16 %v199
      %v502 = vunpack.c.l.b16 %v200
      %v503 = vunpack.c.h.b16 %v200
      %v504 = vunpack.c.l.b16 %v201
      %v505 = vunpack.c.h.b16 %v201
      %v506 = vunpack.c.l.b16 %v202
      %v507 = vunpack.c.h.b16 %v202
      %v508 = vunpack.c.l.b16 %v203
      %v509 = vunpack.c.h.b16 %v203
      %v510 = vunpack.c.l.b16 %v204
      %v511 = vunpack.c.h.b16 %v204
      %v512 = vunpack.c.l.b16 %v205
      %v513 = vunpack.c.h.b16 %v205
      %v514 = vunpack.c.l.b16 %v206
      %v515 = vunpack.c.h.b16 %v206
      %v516 = vunpack.c.l.b16 %v207
      %v517 = vunpack.c.h.b16 %v207
      %v518 = vunpack.c.l.b16 %v208
      %v519 = vunpack.c.h.b16 %v208
      %v520 = vunpack.c.l.b16 %v209
      %v521 = vunpack.c.h.b16 %v209
      %v522 = vunpack.c.l.b16 %v210
      %v523 = vunpack.c.h.b16 %v210
      %v524 = vunpack.c.l.b16 %v211
      %v525 = vunpack.c.h.b16 %v211
      %v526 = vunpack.c.l.b16 %v212
      %v527 = vunpack.c.h.b16 %v212
      %v528 = vunpack.c.l.b16 %v213
      %v529 = vunpack.c.h.b16 %v213
      %v530 = vunpack.c.l.b16 %v214
      %v531 = vunpack.c.h.b16 %v214
      %v532 = vunpack.c.l.b16 %v215
      %v533 = vunpack.c.h.b16 %v215
      %v534 = vunpack.c.l.b16 %v216
      %v535 = vunpack.c.h.b16 %v216
      %v536 = vunpack.c.l.b16 %v217
      %v537 = vunpack.c.h.b16 %v217
      %v538 = vunpack.c.l.b16 %v218
      %v539 = vunpack.c.h.b16 %v218
      %v540 = vunpack.c.l.b16 %v219
      %v541 = vunpack.c.h.b16 %v219
      %v542 = vunpack.c.l.b16 %v220
      %v543 = vunpack.c.h.b16 %v220
      %v544 = vunpack.c.l.b16 %v221
      %v545 = vunpack.c.h.b16 %v221
      %v546 = vunpack.c.l.b16 %v222
      %v547 = vunpack.c.h.b16 %v222
      %v548 = vunpack.c.l.b16 %v223
      %v549 = vunpack.c.h.b16 %v223
      %v550 = vunpack.c.l.b16 %v224
      %v551 = vunpack.c.h.b16 %v224
      %v552 = vunpack.c.l.b16 %v225
      %v553 = vunpack.c.h.b16 %v225
      %v554 = vunpack.c.l.b16 %v226
      %v555 = vunpack.c.h.b16 %v226
      %v556 = vunpack.c.l.b16 %v227
      %v557 = vunpack.c.h.b16 %v227
      %v558 = vunpack.c.l.b16 %v228
      %v559 = vunpack.c.h.b16 %v228
      %v560 = vunpack.c.l.b16 %v229
      %v561 = vunpack.c.h.b16 %v229
      %v562 = vunpack.c.l.b16 %v230
      %v563 = vunpack.c.h.b16 %v230
      %v564 = vunpack.c.l.b16 %v231
      %v565 = vunpack.c.h.b16 %v231
      %v566 = vunpack.c.l.b16 %v232
      %v567 = vunpack.c.h.b16 %v232
      %v568 = vunpack.c.l.b16 %v233
      %v569 = vunpack.c.h.b16 %v233
      %v570 = vunpack.c.l.b16 %v234
      %v571 = vunpack.c.h.b16 %v234
      %v572 = vunpack.c.l.b16 %v235
      %v573 = vunpack.c.h.b16 %v235
      %v574 = vunpack.c.l.b16 %v236
      %v575 = vunpack.c.h.b16 %v236
      %v576 = vunpack.c.l.b16 %v237
      %v577 = vunpack.c.h.b16 %v237
      %v578 = vunpack.c.l.b16 %v238
      %v579 = vunpack.c.h.b16 %v238
      %v580 = vunpack.c.l.b16 %v239
      %v581 = vunpack.c.h.b16 %v239
      %v582 = vunpack.c.l.b16 %v240
      %v583 = vunpack.c.h.b16 %v240
      %v584 = vunpack.c.l.b16 %v241
      %v585 = vunpack.c.h.b16 %v241
      %v586 = vunpack.c.l.b16 %v242
      %v587 = vunpack.c.h.b16 %v242
      %v588 = vunpack.c.l.b16 %v243
      %v589 = vunpack.c.h.b16 %v243
      %v590 = vunpack.c.l.b16 %v244
      %v591 = vunpack.c.h.b16 %v244
      %v592 = vunpack.c.l.b16 %v245
      %v593 = vunpack.c.h.b16 %v245
      %v594 = vunpack.c.l.b16 %v246
      %v595 = vunpack.c.h.b16 %v246
      %v596 = vunpack.c.l.b16 %v247
      %v597 = vunpack.c.h.b16 %v247
      %v598 = vunpack.c.l.b16 %v248
      %v599 = vunpack.c.h.b16 %v248
      %v600 = vunpack.c.l.b16 %v249
      %v601 = vunpack.c.h.b16 %v249
      %v602 = vunpack.c.l.b16 %v250
      %v603 = vunpack.c.h.b16 %v250
      %v604 = vunpack.c.l.b16 %v251
      %v605 = vunpack.c.h.b16 %v251
      %v606 = vunpack.c.l.b16 %v252
      %v607 = vunpack.c.h.b16 %v252
      %v608 = vunpack.c.l.b16 %v253
      %v609 = vunpack.c.h.b16 %v253
      %v610 = vunpack.c.l.b16 %v254
      %v611 = vunpack.c.h.b16 %v254
      %v612 = vunpack.c.l.b16 %v255
      %v613 = vunpack.c.h.b16 %v255
      %v614 = vunpack.c.l.b16 %v256
      %v615 = vunpack.c.h.b16 %v256
      %v616 = vunpack.c.l.b16 %v257
      %v617 = vunpack.c.h.b16 %v257
      %v618 = vunpack.c.l.b16 %v258
      %v619 = vunpack.c.h.b16 %v258
      %v620 = vunpack.c.l.b16 %v259
      %v621 = vunpack.c.h.b16 %v259
      %v622 = vunpack.c.l.b16 %v260
      %v623 = vunpack.c.h.b16 %v260
      %v624 = vunpack.c.l.b16 %v261
      %v625 = vunpack.c.h.b16 %v261
      %v626 = vunpack.c.l.b16 %v262
      %v627 = vunpack.c.h.b16 %v262
      %v628 = vunpack.c.l.b16 %v263
      %v629 = vunpack.c.h.b16 %v263
      %v630 = vunpack.c.l.b16 %v264
      %v631 = vunpack.c.h.b16 %v264
      %v632 = vunpack.c.l.b16 %v265
      %v633 = vunpack.c.h.b16 %v265
      %v634 = vunpack.c.l.b16 %v266
      %v635 = vunpack.c.h.b16 %v266
      %v636 = vunpack.c.l.b16 %v267
      %v637 = vunpack.c.h.b16 %v267
      %v638 = vunpack.c.l.b16 %v268
      %v639 = vunpack.c.h.b16 %v268
      %v640 = vunpack.c.l.b16 %v269
      %v641 = vunpack.c.h.b16 %v269
      %v642 = vunpack.c.l.b16 %v270
      %v643 = vunpack.c.h.b16 %v270
      %v644 = vunpack.c.l.b16 %v271
      %v645 = vunpack.c.h.b16 %v271
      %v646 = vunpack.c.l.b16 %v272
      %v647 = vunpack.c.h.b16 %v272
      %v648 = vunpack.c.l.b16 %v273
      %v649 = vunpack.c.h.b16 %v273
      %v650 = vpack.c.b16 %v464, %v458
      %v651 = vpack.c.b16 %v465, %v459
      %v652 = vpack.c.b16 %v466, %v460
      %v653 = vpack.c.b16 %v467, %v461
      %v654 = vpack.c.b16 %v468, %v462
      %v655 = vpack.c.b16 %v469, %v463
      %v656 = vpack.c.b16 %v476, %v470
      %v657 = vpack.c.b16 %v477, %v471
      %v658 = vpack.c.b16 %v478, %v472
      %v659 = vpack.c.b16 %v479, %v473
      %v660 = vpack.c.b16 %v480, %v474
      %v661 = vpack.c.b16 %v481, %v475
      %v662 = vpack.c.b16 %v488, %v482
      %v663 = vpack.c.b16 %v489, %v483
      %v664 = vpack.c.b16 %v490, %v484
      %v665 = vpack.c.b16 %v491, %v485
      %v666 = vpack.c.b16 %v492, %v486
      %v667 = vpack.c.b16 %v493, %v487
      %v668 = vpack.c.b16 %v500, %v494
      %v669 = vpack.c.b16 %v501, %v495
      %v670 = vpack.c.b16 %v502, %v496
      %v671 = vpack.c.b16 %v503, %v497
      %v672 = vpack.c.b16 %v504, %v498
      %v673 = vpack.c.b16 %v505, %v499
      %v674 = vpack.c.b16 %v512, %v506
      %v675 = vpack.c.b16 %v513, %v507
      %v676 = vpack.c.b16 %v514, %v508
      %v677 = vpack.c.b16 %v515, %v509
      %v678 = vpack.c.b16 %v516, %v510
      %v679 = vpack.c.b16 %v517, %v511
      %v680 = vpack.c.b16 %v524, %v518
      %v681 = vpack.c.b16 %v525, %v519
      %v682 = vpack.c.b16 %v526, %v520
      %v683 = vpack.c.b16 %v527, %v521
      %v684 = vpack.c.b16 %v528, %v522
      %v685 = vpack.c.b16 %v529, %v523
      %v686 = vpack.c.b16 %v536, %v530
      %v687 = vpack.c.b16 %v537, %v531
      %v688 = vpack.c.b16 %v538, %v532
      %v689 = vpack.c.b16 %v539, %v533
      %v690 = vpack.c.b16 %v540, %v534
      %v691 = vpack.c.b16 %v541, %v535
      %v692 = vpack.c.b16 %v548, %v542
      %v693 = vpack.c.b16 %v549, %v543
      %v694 = vpack.c.b16 %v550, %v544
      %v695 = vpack.c.b16 %v551, %v545
      %v696 = vpack.c.b16 %v552, %v546
      %v697 = vpack.c.b16 %v553, %v547
      %v698 = vpack.c.b16 %v560, %v554
      %v699 = vpack.c.b16 %v561, %v555
      %v700 = vpack.c.b16 %v562, %v556
      %v701 = vpack.c.b16 %v563, %v557
      %v702 = vpack.c.b16 %v564, %v558
      %v703 = vpack.c.b16 %v565, %v559
      %v704 = vpack.c.b16 %v572, %v566
      %v705 = vpack.c.b16 %v573, %v567
      %v706 = vpack.c.b16 %v574, %v568
      %v707 = vpack.c.b16 %v575, %v569
      %v708 = vpack.c.b16 %v576, %v570
      %v709 = vpack.c.b16 %v577, %v571
      %v710 = vpack.c.b16 %v584, %v578
      %v711 = vpack.c.b16 %v585, %v579
      %v712 = vpack.c.b16 %v586, %v580
      %v713 = vpack.c.b16 %v587, %v581
      %v714 = vpack.c.b16 %v588, %v582
      %v715 = vpack.c.b16 %v589, %v583
      %v716 = vpack.c.b16 %v596, %v590
      %v717 = vpack.c.b16 %v597, %v591
      %v718 = vpack.c.b16 %v598, %v592
      %v719 = vpack.c.b16 %v599, %v593
      %v720 = vpack.c.b16 %v600, %v594
      %v721 = vpack.c.b16 %v601, %v595
      %v722 = vpack.c.b16 %v608, %v602
      %v723 = vpack.c.b16 %v609, %v603
      %v724 = vpack.c.b16 %v610, %v604
      %v725 = vpack.c.b16 %v611, %v605
      %v726 = vpack.c.b16 %v612, %v606
      %v727 = vpack.c.b16 %v613, %v607
      %v728 = vpack.c.b16 %v620, %v614
      %v729 = vpack.c.b16 %v621, %v615
      %v730 = vpack.c.b16 %v622, %v616
      %v731 = vpack.c.b16 %v623, %v617
      %v732 = vpack.c.b16 %v624, %v618
      %v733 = vpack.c.b16 %v625, %v619
      %v734 = vpack.c.b16 %v632, %v626
      %v735 = vpack.c.b16 %v633, %v627
      %v736 = vpack.c.b16 %v634, %v628
      %v737 = vpack.c.b16 %v635, %v629
      %v738 = vpack.c.b16 %v636, %v630
      %v739 = vpack.c.b16 %v637, %v631
      %v740 = vpack.c.b16 %v644, %v638
      %v741 = vpack.c.b16 %v645, %v639
      %v742 = vpack.c.b16 %v646, %v640
      %v743 = vpack.c.b16 %v647, %v641
      %v744 = vpack.c.b16 %v648, %v642
      %v745 = vpack.c.b16 %v649, %v643
      %v907 = vunpack.c.l.b16 %v274
      %v908 = vunpack.c.l.b16 %v275
      %v909 = vunpack.c.l.b16 %v276
      %v910 = vunpack.c.l.b16 %v277
      %v911 = vunpack.c.l.b16 %v278
      %v912 = vunpack.c.l.b16 %v279
      %v913 = vunpack.c.l.b16 %v280
      %v914 = vunpack.c.l.b16 %v281
      %v915 = vunpack.c.l.b16 %v282
      %v916 = vunpack.c.l.b16 %v283
      %v917 = vunpack.c.l.b16 %v284
      %v918 = vunpack.c.l.b16 %v285
      %v919 = vunpack.c.l.b16 %v286
      %v920 = vunpack.c.l.b16 %v287
      %v921 = vunpack.c.l.b16 %v288
      %v922 = vunpack.c.l.b16 %v289
      %v923 = vunpack.c.l.b16 %v290
      %v924 = vunpack.c.l.b16 %v291
      %v925 = vunpack.c.l.b16 %v292
      %v926 = vunpack.c.l.b16 %v293
      %v927 = vunpack.c.l.b16 %v294
      %v928 = vunpack.c.l.b16 %v295
      %v929 = vunpack.c.l.b16 %v296
      %v930 = vunpack.c.l.b16 %v297
      %v931 = vunpack.c.l.b16 %v298
      %v932 = vunpack.c.l.b16 %v299
      %v933 = vunpack.c.l.b16 %v300
      %v934 = vunpack.c.l.b16 %v301
      %v935 = vunpack.c.l.b16 %v302
      %v936 = vunpack.c.l.b16 %v303
      %v937 = vunpack.c.l.b16 %v304
      %v938 = vunpack.c.l.b16 %v305
      %v939 = vunpack.c.l.b16 %v306
      %v940 = vunpack.c.l.b16 %v307
      %v941 = vunpack.c.l.b16 %v308
      %v942 = vunpack.c.l.b16 %v309
      %v943 = vunpack.c.l.b16 %v310
      %v944 = vunpack.c.l.b16 %v311
      %v945 = vunpack.c.l.b16 %v312
      %v946 = vunpack.c.l.b16 %v313
      %v947 = vunpack.c.l.b16 %v314
      %v948 = vunpack.c.l.b16 %v315
      %v949 = vunpack.c.l.b16 %v316
      %v950 = vunpack.c.l.b16 %v317
      %v951 = vunpack.c.l.b16 %v318
      %v952 = vunpack.c.l.b16 %v319
      %v953 = vunpack.c.l.b16 %v320
      %v954 = vunpack.c.l.b16 %v321
      %v955 = vunpack.c.l.b16 %v322
      %v956 = vunpack.c.l.b16 %v323
      %v957 = vunpack.c.l.b16 %v324
      %v958 = vunpack.c.l.b16 %v325
      %v959 = vunpack.c.l.b16 %v326
      %v960 = vunpack.c.l.b16 %v327
      %v961 = vunpack.c.l.b16 %v328
      %v962 = vunpack.c.l.b16 %v329
      %v963 = vunpack.c.l.b16 %v330
      %v964 = vunpack.c.l.b16 %v331
      %v965 = vunpack.c.l.b16 %v332
      %v966 = vunpack.c.l.b16 %v333
      %v967 = vunpack.c.l.b16 %v334
      %v968 = vunpack.c.l.b16 %v335
      %v969 = vunpack.c.l.b16 %v336
      %v970 = vunpack.c.l.b16 %v337
      %v971 = vunpack.c.l.b16 %v338
      %v972 = vunpack.c.l.b16 %v339
      %v973 = vunpack.c.l.b16 %v340
      %v974 = vunpack.c.l.b16 %v341
      %v975 = vunpack.c.l.b16 %v342
      %v976 = vunpack.c.l.b16 %v343
      %v977 = vunpack.c.l.b16 %v344
      %v978 = vunpack.c.l.b16 %v345
      %v979 = vunpack.c.l.b16 %v346
      %v980 = vunpack.c.l.b16 %v347
      %v981 = vunpack.c.l.b16 %v348
      %v982 = vunpack.c.l.b16 %v349
      %v983 = vunpack.c.l.b16 %v350
      %v984 = vunpack.c.l.b16 %v351
      %v985 = vunpack.c.l.b16 %v352
      %v986 = vunpack.c.l.b16 %v353
      %v987 = vunpack.c.l.b16 %v354
      %v988 = vpack.c.b16 %v908, %v907
      %v989 = vpack.c.b16 %v910, %v909
      %v990 = vpack.c.b16 %v912, %v911
      %v991 = vpack.c.b16 %v914, %v913
      %v992 = vpack.c.b16 %v916, %v915
      %v993 = vpack.c.b16 %v918, %v917
      %v994 = vpack.c.b16 %v920, %v919
      %v995 = vpack.c.b16 %v922, %v921
      %v996 = vpack.c.b16 %v924, %v923
      %v997 = vpack.c.b16 %v926, %v925
      %v998 = vpack.c.b16 %v928, %v927
      %v999 = vpack.c.b16 %v930, %v929
      %v1000 = vpack.c.b16 %v932, %v931
      %v1001 = vpack.c.b16 %v934, %v933
      %v1002 = vpack.c.b16 %v936, %v935
      %v1003 = vpack.c.b16 %v938, %v937
      %v1004 = vpack.c.b16 %v940, %v939
      %v1005 = vpack.c.b16 %v942, %v941
      %v1006 = vpack.c.b16 %v944, %v943
      %v1007 = vpack.c.b16 %v946, %v945
      %v1008 = vpack.c.b16 %v948, %v947
      %v1009 = vpack.c.b16 %v950, %v949
      %v1010 = vpack.c.b16 %v952, %v951
      %v1011 = vpack.c.b16 %v954, %v953
      %v1012 = vpack.c.b16 %v956, %v955
      %v1013 = vpack.c.b16 %v958, %v957
      %v1014 = vpack.c.b16 %v960, %v959
      %v1015 = vpack.c.b16 %v962, %v961
      %v1016 = vpack.c.b16 %v964, %v963
      %v1017 = vpack.c.b16 %v966, %v965
      %v1018 = vpack.c.b16 %v968, %v967
      %v1019 = vpack.c.b16 %v970, %v969
      %v1020 = vpack.c.b16 %v972, %v971
      %v1021 = vpack.c.b16 %v974, %v973
      %v1022 = vpack.c.b16 %v976, %v975
      %v1023 = vpack.c.b16 %v978, %v977
      %v1024 = vpack.c.b16 %v980, %v979
      %v1025 = vpack.c.b16 %v982, %v981
      %v1026 = vpack.c.b16 %v984, %v983
      %v1027 = vpack.c.b16 %v986, %v985
      %v1028 = vpack.c.b16 %v987, %v987
      %vm1069 = vcmask 64512
      %v1071 = vsel %vm1069, %v655, 0
      %v1074 = vsel %vm1069, %v661, 0
      %v1077 = vsel %vm1069, %v667, 0
      %v1080 = vsel %vm1069, %v673, 0
      %v1083 = vsel %vm1069, %v679, 0
      %v1086 = vsel %vm1069, %v685, 0
      %v1089 = vsel %vm1069, %v691, 0
      %v1092 = vsel %vm1069, %v697, 0
      %v1095 = vsel %vm1069, %v703, 0
      %v1098 = vsel %vm1069, %v709, 0
      %v1101 = vsel %vm1069, %v715, 0
      %v1104 = vsel %vm1069, %v721, 0
      %v1107 = vsel %vm1069, %v727, 0
      %v1110 = vsel %vm1069, %v733, 0
      %v1113 = vsel %vm1069, %v739, 0
      %v1116 = vsel %vm1069, %v745, 0
      %vm1118 = vcmask 1043456
      %v1120 = vsel %vm1118, %v1028, 0
      %1122 = vmatprep.subr.bf16.mxu0 0
      %1123 = vmatpush1.bf16.msra.mxu0 %v988
      %1124 = vmatprep.subr.bf16.mxu0 0
      %1125 = vmatpush1.bf16.msra.mxu0 %v989
      %1126 = vmatprep.subr.bf16.mxu0 0
      %1127 = vmatpush1.bf16.msra.mxu0 %v990
      %1128 = vmatprep.subr.bf16.mxu0 0
      %1129 = vmatpush1.bf16.msra.mxu0 %v991
      %1130 = vmatprep.subr.bf16.mxu0 0
      %1131 = vmatpush1.bf16.msra.mxu0 %v992
      %1132 = vmatprep.subr.bf16.mxu0 0
      %1133 = vmatpush1.bf16.msra.mxu0 %v993
      %1134 = vmatprep.subr.bf16.mxu0 0
      %1135 = vmatpush1.bf16.msra.mxu0 %v994
      %1136 = vmatprep.subr.bf16.mxu0 0
      %1137 = vmatpush1.bf16.msra.mxu0 %v995
      %1138 = vmatprep.subr.bf16.mxu0 0
      %1139 = vmatpush1.bf16.msra.mxu0 %v996
      %1140 = vmatprep.subr.bf16.mxu0 0
      %1141 = vmatpush1.bf16.msra.mxu0 %v997
      %1142 = vmatprep.subr.bf16.mxu0 0
      %1143 = vmatpush1.bf16.msra.mxu0 %v998
      %1144 = vmatprep.subr.bf16.mxu0 0
      %1145 = vmatpush1.bf16.msra.mxu0 %v999
      %1146 = vmatprep.subr.bf16.mxu0 0
      %1147 = vmatpush1.bf16.msra.mxu0 %v1000
      %1148 = vmatprep.subr.bf16.mxu0 0
      %1149 = vmatpush1.bf16.msra.mxu0 %v1001
      %1150 = vmatprep.subr.bf16.mxu0 0
      %1151 = vmatpush1.bf16.msra.mxu0 %v1002
      %1152 = vmatprep.subr.bf16.mxu0 0
      %1153 = vmatpush1.bf16.msra.mxu0 %v1003
      %1154 = vmatprep.mubr.bf16.mxu0 %v651
      %1155 = vmatmul.mubr.bf16.gmra.mrb[0].mxu0 %v650
      %v1156 = vpop.f32.mrb[0].mxu0
      %v1157 = vadd.f32 %v360, %v1156
      %v1158 = vpop.f32.mrb[0].mxu0
      %v1159 = vpop.f32.mrb[0].mxu0
      %v1160 = vadd.f32 %v360, %v1159
      %v1161 = vpop.f32.mrb[0].mxu0
      %1162 = vmatprep.mubr.bf16.mxu0 %v657
      %1163 = vmatmul.mubr.bf16.gmra.mrb[0].mxu0 %v656
      %v1164 = vpop.f32.mrb[0].mxu0
      %v1165 = vadd.f32 %v360, %v1164
      %v1166 = vpop.f32.mrb[0].mxu0
      %v1167 = vpop.f32.mrb[0].mxu0
      %v1168 = vadd.f32 %v360, %v1167
      %v1169 = vpop.f32.mrb[0].mxu0
      %1170 = vmatprep.mubr.bf16.mxu0 %v663
      %1171 = vmatmul.mubr.bf16.gmra.mrb[0].mxu0 %v662
      %v1172 = vpop.f32.mrb[0].mxu0
      %v1173 = vadd.f32 %v360, %v1172
      %v1174 = vpop.f32.mrb[0].mxu0
      %v1175 = vpop.f32.mrb[0].mxu0
      %v1176 = vadd.f32 %v360, %v1175
      %v1177 = vpop.f32.mrb[0].mxu0
      %1178 = vmatprep.mubr.bf16.mxu0 %v669
      %1179 = vmatmul.mubr.bf16.gmra.mrb[0].mxu0 %v668
      %v1180 = vpop.f32.mrb[0].mxu0
      %v1181 = vadd.f32 %v360, %v1180
      %v1182 = vpop.f32.mrb[0].mxu0
      %v1183 = vpop.f32.mrb[0].mxu0
      %v1184 = vadd.f32 %v360, %v1183
      %v1185 = vpop.f32.mrb[0].mxu0
      %1186 = vmatprep.mubr.bf16.mxu0 %v675
      %1187 = vmatmul.mubr.bf16.gmra.mrb[0].mxu0 %v674
      %v1188 = vpop.f32.mrb[0].mxu0
      %v1189 = vadd.f32 %v360, %v1188
      %v1190 = vpop.f32.mrb[0].mxu0
      %v1191 = vpop.f32.mrb[0].mxu0
      %v1192 = vadd.f32 %v360, %v1191
      %v1193 = vpop.f32.mrb[0].mxu0
      %1194 = vmatprep.mubr.bf16.mxu0 %v681
      %1195 = vmatmul.mubr.bf16.gmra.mrb[0].mxu0 %v680
      %v1196 = vpop.f32.mrb[0].mxu0
      %v1197 = vadd.f32 %v360, %v1196
      %v1198 = vpop.f32.mrb[0].mxu0
      %v1199 = vpop.f32.mrb[0].mxu0
      %v1200 = vadd.f32 %v360, %v1199
      %v1201 = vpop.f32.mrb[0].mxu0
      %1202 = vmatprep.mubr.bf16.mxu0 %v687
      %1203 = vmatmul.mubr.bf16.gmra.mrb[0].mxu0 %v686
      %v1204 = vpop.f32.mrb[0].mxu0
      %v1205 = vadd.f32 %v360, %v1204
      %v1206 = vpop.f32.mrb[0].mxu0
      %v1207 = vpop.f32.mrb[0].mxu0
      %v1208 = vadd.f32 %v360, %v1207
      %v1209 = vpop.f32.mrb[0].mxu0
      %1210 = vmatprep.mubr.bf16.mxu0 %v693
      %1211 = vmatmul.mubr.bf16.gmra.mrb[0].mxu0 %v692
      %v1212 = vpop.f32.mrb[0].mxu0
      %v1213 = vadd.f32 %v360, %v1212
      %v1214 = vpop.f32.mrb[0].mxu0
      %v1215 = vpop.f32.mrb[0].mxu0
      %v1216 = vadd.f32 %v360, %v1215
      %v1217 = vpop.f32.mrb[0].mxu0
      %1218 = vmatprep.mubr.bf16.mxu0 %v699
      %1219 = vmatmul.mubr.bf16.gmra.mrb[0].mxu0 %v698
      %v1220 = vpop.f32.mrb[0].mxu0
      %v1221 = vadd.f32 %v360, %v1220
      %v1222 = vpop.f32.mrb[0].mxu0
      %v1223 = vpop.f32.mrb[0].mxu0
      %v1224 = vadd.f32 %v360, %v1223
      %v1225 = vpop.f32.mrb[0].mxu0
      %1226 = vmatprep.mubr.bf16.mxu0 %v705
      %1227 = vmatmul.mubr.bf16.gmra.mrb[0].mxu0 %v704
      %v1228 = vpop.f32.mrb[0].mxu0
      %v1229 = vadd.f32 %v360, %v1228
      %v1230 = vpop.f32.mrb[0].mxu0
      %v1231 = vpop.f32.mrb[0].mxu0
      %v1232 = vadd.f32 %v360, %v1231
      %v1233 = vpop.f32.mrb[0].mxu0
      %1234 = vmatprep.mubr.bf16.mxu0 %v711
      %1235 = vmatmul.mubr.bf16.gmra.mrb[0].mxu0 %v710
      %v1236 = vpop.f32.mrb[0].mxu0
      %v1237 = vadd.f32 %v360, %v1236
      %v1238 = vpop.f32.mrb[0].mxu0
      %v1239 = vpop.f32.mrb[0].mxu0
      %v1240 = vadd.f32 %v360, %v1239
      %v1241 = vpop.f32.mrb[0].mxu0
      %1242 = vmatprep.mubr.bf16.mxu0 %v717
      %1243 = vmatmul.mubr.bf16.gmra.mrb[0].mxu0 %v716
      %v1244 = vpop.f32.mrb[0].mxu0
      %v1245 = vadd.f32 %v360, %v1244
      %v1246 = vpop.f32.mrb[0].mxu0
      %v1247 = vpop.f32.mrb[0].mxu0
      %v1248 = vadd.f32 %v360, %v1247
      %v1249 = vpop.f32.mrb[0].mxu0
      %1250 = vmatprep.mubr.bf16.mxu0 %v723
      %1251 = vmatmul.mubr.bf16.gmra.mrb[0].mxu0 %v722
      %v1252 = vpop.f32.mrb[0].mxu0
      %v1253 = vadd.f32 %v360, %v1252
      %v1254 = vpop.f32.mrb[0].mxu0
      %v1255 = vpop.f32.mrb[0].mxu0
      %v1256 = vadd.f32 %v360, %v1255
      %v1257 = vpop.f32.mrb[0].mxu0
      %1258 = vmatprep.mubr.bf16.mxu0 %v729
      %1259 = vmatmul.mubr.bf16.gmra.mrb[0].mxu0 %v728
      %v1260 = vpop.f32.mrb[0].mxu0
      %v1261 = vadd.f32 %v360, %v1260
      %v1262 = vpop.f32.mrb[0].mxu0
      %v1263 = vpop.f32.mrb[0].mxu0
      %v1264 = vadd.f32 %v360, %v1263
      %v1265 = vpop.f32.mrb[0].mxu0
      %1266 = vmatprep.mubr.bf16.mxu0 %v735
      %1267 = vmatmul.mubr.bf16.gmra.mrb[0].mxu0 %v734
      %v1268 = vpop.f32.mrb[0].mxu0
      %v1269 = vadd.f32 %v360, %v1268
      %v1270 = vpop.f32.mrb[0].mxu0
      %v1271 = vpop.f32.mrb[0].mxu0
      %v1272 = vadd.f32 %v360, %v1271
      %v1273 = vpop.f32.mrb[0].mxu0
      %1274 = vmatprep.mubr.bf16.mxu0 %v741
      %1275 = vmatmul.mubr.bf16.gmra.mrb[0].mxu0 %v740
      %v1276 = vpop.f32.mrb[0].mxu0
      %v1277 = vadd.f32 %v360, %v1276
      %v1278 = vpop.f32.mrb[0].mxu0
      %v1279 = vpop.f32.mrb[0].mxu0
      %v1280 = vadd.f32 %v360, %v1279
      %v1281 = vpop.f32.mrb[0].mxu0
      %1282 = vdwg.mxu0
      %1283 = vmatprep.subr.bf16.mxu0 0
      %1284 = vmatpush1.bf16.msra.mxu0 %v1004
      %1285 = vmatprep.subr.bf16.mxu0 0
      %1286 = vmatpush1.bf16.msra.mxu0 %v1005
      %1287 = vmatprep.subr.bf16.mxu0 0
      %1288 = vmatpush1.bf16.msra.mxu0 %v1006
      %1289 = vmatprep.subr.bf16.mxu0 0
      %1290 = vmatpush1.bf16.msra.mxu0 %v1007
      %1291 = vmatprep.subr.bf16.mxu0 0
      %1292 = vmatpush1.bf16.msra.mxu0 %v1008
      %1293 = vmatprep.subr.bf16.mxu0 0
      %1294 = vmatpush1.bf16.msra.mxu0 %v1009
      %1295 = vmatprep.subr.bf16.mxu0 0
      %1296 = vmatpush1.bf16.msra.mxu0 %v1010
      %1297 = vmatprep.subr.bf16.mxu0 0
      %1298 = vmatpush1.bf16.msra.mxu0 %v1011
      %1299 = vmatprep.subr.bf16.mxu0 0
      %1300 = vmatpush1.bf16.msra.mxu0 %v1012
      %1301 = vmatprep.subr.bf16.mxu0 0
      %1302 = vmatpush1.bf16.msra.mxu0 %v1013
      %1303 = vmatprep.subr.bf16.mxu0 0
      %1304 = vmatpush1.bf16.msra.mxu0 %v1014
      %1305 = vmatprep.subr.bf16.mxu0 0
      %1306 = vmatpush1.bf16.msra.mxu0 %v1015
      %1307 = vmatprep.subr.bf16.mxu0 0
      %1308 = vmatpush1.bf16.msra.mxu0 %v1016
      %1309 = vmatprep.subr.bf16.mxu0 0
      %1310 = vmatpush1.bf16.msra.mxu0 %v1017
      %1311 = vmatprep.subr.bf16.mxu0 0
      %1312 = vmatpush1.bf16.msra.mxu0 %v1018
      %1313 = vmatprep.subr.bf16.mxu0 0
      %1314 = vmatpush1.bf16.msra.mxu0 %v1019
      %1315 = vmatprep.mubr.bf16.mxu0 %v653
      %1316 = vmatmul.mubr.bf16.gmra.mrb[0].mxu0 %v652
      %v1317 = vpop.f32.mrb[0].mxu0
      %v1318 = vadd.f32 %v1157, %v1317
      %v1319 = vpop.f32.mrb[0].mxu0
      %v1320 = vpop.f32.mrb[0].mxu0
      %v1321 = vadd.f32 %v1160, %v1320
      %v1322 = vpop.f32.mrb[0].mxu0
      %1323 = vmatprep.mubr.bf16.mxu0 %v659
      %1324 = vmatmul.mubr.bf16.gmra.mrb[0].mxu0 %v658
      %v1325 = vpop.f32.mrb[0].mxu0
      %v1326 = vadd.f32 %v1165, %v1325
      %v1327 = vpop.f32.mrb[0].mxu0
      %v1328 = vpop.f32.mrb[0].mxu0
      %v1329 = vadd.f32 %v1168, %v1328
      %v1330 = vpop.f32.mrb[0].mxu0
      %1331 = vmatprep.mubr.bf16.mxu0 %v665
      %1332 = vmatmul.mubr.bf16.gmra.mrb[0].mxu0 %v664
      %v1333 = vpop.f32.mrb[0].mxu0
      %v1334 = vadd.f32 %v1173, %v1333
      %v1335 = vpop.f32.mrb[0].mxu0
      %v1336 = vpop.f32.mrb[0].mxu0
      %v1337 = vadd.f32 %v1176, %v1336
      %v1338 = vpop.f32.mrb[0].mxu0
      %1339 = vmatprep.mubr.bf16.mxu0 %v671
      %1340 = vmatmul.mubr.bf16.gmra.mrb[0].mxu0 %v670
      %v1341 = vpop.f32.mrb[0].mxu0
      %v1342 = vadd.f32 %v1181, %v1341
      %v1343 = vpop.f32.mrb[0].mxu0
      %v1344 = vpop.f32.mrb[0].mxu0
      %v1345 = vadd.f32 %v1184, %v1344
      %v1346 = vpop.f32.mrb[0].mxu0
      %1347 = vmatprep.mubr.bf16.mxu0 %v677
      %1348 = vmatmul.mubr.bf16.gmra.mrb[0].mxu0 %v676
      %v1349 = vpop.f32.mrb[0].mxu0
      %v1350 = vadd.f32 %v1189, %v1349
      %v1351 = vpop.f32.mrb[0].mxu0
      %v1352 = vpop.f32.mrb[0].mxu0
      %v1353 = vadd.f32 %v1192, %v1352
      %v1354 = vpop.f32.mrb[0].mxu0
      %1355 = vmatprep.mubr.bf16.mxu0 %v683
      %1356 = vmatmul.mubr.bf16.gmra.mrb[0].mxu0 %v682
      %v1357 = vpop.f32.mrb[0].mxu0
      %v1358 = vadd.f32 %v1197, %v1357
      %v1359 = vpop.f32.mrb[0].mxu0
      %v1360 = vpop.f32.mrb[0].mxu0
      %v1361 = vadd.f32 %v1200, %v1360
      %v1362 = vpop.f32.mrb[0].mxu0
      %1363 = vmatprep.mubr.bf16.mxu0 %v689
      %1364 = vmatmul.mubr.bf16.gmra.mrb[0].mxu0 %v688
      %v1365 = vpop.f32.mrb[0].mxu0
      %v1366 = vadd.f32 %v1205, %v1365
      %v1367 = vpop.f32.mrb[0].mxu0
      %v1368 = vpop.f32.mrb[0].mxu0
      %v1369 = vadd.f32 %v1208, %v1368
      %v1370 = vpop.f32.mrb[0].mxu0
      %1371 = vmatprep.mubr.bf16.mxu0 %v695
      %1372 = vmatmul.mubr.bf16.gmra.mrb[0].mxu0 %v694
      %v1373 = vpop.f32.mrb[0].mxu0
      %v1374 = vadd.f32 %v1213, %v1373
      %v1375 = vpop.f32.mrb[0].mxu0
      %v1376 = vpop.f32.mrb[0].mxu0
      %v1377 = vadd.f32 %v1216, %v1376
      %v1378 = vpop.f32.mrb[0].mxu0
      %1379 = vmatprep.mubr.bf16.mxu0 %v701
      %1380 = vmatmul.mubr.bf16.gmra.mrb[0].mxu0 %v700
      %v1381 = vpop.f32.mrb[0].mxu0
      %v1382 = vadd.f32 %v1221, %v1381
      %v1383 = vpop.f32.mrb[0].mxu0
      %v1384 = vpop.f32.mrb[0].mxu0
      %v1385 = vadd.f32 %v1224, %v1384
      %v1386 = vpop.f32.mrb[0].mxu0
      %1387 = vmatprep.mubr.bf16.mxu0 %v707
      %1388 = vmatmul.mubr.bf16.gmra.mrb[0].mxu0 %v706
      %v1389 = vpop.f32.mrb[0].mxu0
      %v1390 = vadd.f32 %v1229, %v1389
      %v1391 = vpop.f32.mrb[0].mxu0
      %v1392 = vpop.f32.mrb[0].mxu0
      %v1393 = vadd.f32 %v1232, %v1392
      %v1394 = vpop.f32.mrb[0].mxu0
      %1395 = vmatprep.mubr.bf16.mxu0 %v713
      %1396 = vmatmul.mubr.bf16.gmra.mrb[0].mxu0 %v712
      %v1397 = vpop.f32.mrb[0].mxu0
      %v1398 = vadd.f32 %v1237, %v1397
      %v1399 = vpop.f32.mrb[0].mxu0
      %v1400 = vpop.f32.mrb[0].mxu0
      %v1401 = vadd.f32 %v1240, %v1400
      %v1402 = vpop.f32.mrb[0].mxu0
      %1403 = vmatprep.mubr.bf16.mxu0 %v719
      %1404 = vmatmul.mubr.bf16.gmra.mrb[0].mxu0 %v718
      %v1405 = vpop.f32.mrb[0].mxu0
      %v1406 = vadd.f32 %v1245, %v1405
      %v1407 = vpop.f32.mrb[0].mxu0
      %v1408 = vpop.f32.mrb[0].mxu0
      %v1409 = vadd.f32 %v1248, %v1408
      %v1410 = vpop.f32.mrb[0].mxu0
      %1411 = vmatprep.mubr.bf16.mxu0 %v725
      %1412 = vmatmul.mubr.bf16.gmra.mrb[0].mxu0 %v724
      %v1413 = vpop.f32.mrb[0].mxu0
      %v1414 = vadd.f32 %v1253, %v1413
      %v1415 = vpop.f32.mrb[0].mxu0
      %v1416 = vpop.f32.mrb[0].mxu0
      %v1417 = vadd.f32 %v1256, %v1416
      %v1418 = vpop.f32.mrb[0].mxu0
      %1419 = vmatprep.mubr.bf16.mxu0 %v731
      %1420 = vmatmul.mubr.bf16.gmra.mrb[0].mxu0 %v730
      %v1421 = vpop.f32.mrb[0].mxu0
      %v1422 = vadd.f32 %v1261, %v1421
      %v1423 = vpop.f32.mrb[0].mxu0
      %v1424 = vpop.f32.mrb[0].mxu0
      %v1425 = vadd.f32 %v1264, %v1424
      %v1426 = vpop.f32.mrb[0].mxu0
      %1427 = vmatprep.mubr.bf16.mxu0 %v737
      %1428 = vmatmul.mubr.bf16.gmra.mrb[0].mxu0 %v736
      %v1429 = vpop.f32.mrb[0].mxu0
      %v1430 = vadd.f32 %v1269, %v1429
      %v1431 = vpop.f32.mrb[0].mxu0
      %v1432 = vpop.f32.mrb[0].mxu0
      %v1433 = vadd.f32 %v1272, %v1432
      %v1434 = vpop.f32.mrb[0].mxu0
      %1435 = vmatprep.mubr.bf16.mxu0 %v743
      %1436 = vmatmul.mubr.bf16.gmra.mrb[0].mxu0 %v742
      %v1437 = vpop.f32.mrb[0].mxu0
      %v1438 = vadd.f32 %v1277, %v1437
      %v1439 = vpop.f32.mrb[0].mxu0
      %v1440 = vpop.f32.mrb[0].mxu0
      %v1441 = vadd.f32 %v1280, %v1440
      %v1442 = vpop.f32.mrb[0].mxu0
      %1443 = vdwg.mxu0
      %1444 = vmatprep.subr.bf16.mxu0 0
      %1445 = vmatpush1.bf16.msra.mxu0 %v1020
      %1446 = vmatprep.subr.bf16.mxu0 0
      %1447 = vmatpush1.bf16.msra.mxu0 %v1021
      %1448 = vmatprep.subr.bf16.mxu0 0
      %1449 = vmatpush1.bf16.msra.mxu0 %v1022
      %1450 = vmatprep.subr.bf16.mxu0 0
      %1451 = vmatpush1.bf16.msra.mxu0 %v1023
      %1452 = vmatprep.subr.bf16.mxu0 0
      %1453 = vmatpush1.bf16.msra.mxu0 %v1024
      %1454 = vmatprep.subr.bf16.mxu0 0
      %1455 = vmatpush1.bf16.msra.mxu0 %v1025
      %1456 = vmatprep.subr.bf16.mxu0 0
      %1457 = vmatpush1.bf16.msra.mxu0 %v1026
      %1458 = vmatprep.subr.bf16.mxu0 0
      %1459 = vmatpush1.bf16.msra.mxu0 %v1027
      %1460 = vmatprep.subr.bf16.mxu0 0
      %1461 = vmatpush1.bf16.msra.mxu0 %v1120
      %1462 = vmatprep.subr.bf16.mxu0 0
      %1463 = vmatpush1.bf16.msra.mxu0 0
      %1464 = vmatprep.subr.bf16.mxu0 0
      %1465 = vmatpush1.bf16.msra.mxu0 0
      %1466 = vmatprep.subr.bf16.mxu0 0
      %1467 = vmatpush1.bf16.msra.mxu0 0
      %1468 = vmatprep.subr.bf16.mxu0 0
      %1469 = vmatpush1.bf16.msra.mxu0 0
      %1470 = vmatprep.subr.bf16.mxu0 0
      %1471 = vmatpush1.bf16.msra.mxu0 0
      %1472 = vmatprep.subr.bf16.mxu0 0
      %1473 = vmatpush1.bf16.msra.mxu0 0
      %1474 = vmatprep.subr.bf16.mxu0 0
      %1475 = vmatpush1.bf16.msra.mxu0 0
      %1476 = vmatprep.mubr.bf16.mxu0 %v1071
      %1477 = vmatmul.mubr.bf16.gmra.mrb[0].mxu0 %v654
      %v1478 = vpop.f32.mrb[0].mxu0
      %v1479 = vadd.f32 %v1318, %v1478
      %v1480 = vpop.f32.mrb[0].mxu0
      %v1481 = vpop.f32.mrb[0].mxu0
      %v1482 = vadd.f32 %v1321, %v1481
      %v1483 = vpop.f32.mrb[0].mxu0
      %1484 = vmatprep.mubr.bf16.mxu0 %v1074
      %1485 = vmatmul.mubr.bf16.gmra.mrb[0].mxu0 %v660
      %v1486 = vpop.f32.mrb[0].mxu0
      %v1487 = vadd.f32 %v1326, %v1486
      %v1488 = vpop.f32.mrb[0].mxu0
      %v1489 = vpop.f32.mrb[0].mxu0
      %v1490 = vadd.f32 %v1329, %v1489
      %v1491 = vpop.f32.mrb[0].mxu0
      %1492 = vmatprep.mubr.bf16.mxu0 %v1077
      %1493 = vmatmul.mubr.bf16.gmra.mrb[0].mxu0 %v666
      %v1494 = vpop.f32.mrb[0].mxu0
      %v1495 = vadd.f32 %v1334, %v1494
      %v1496 = vpop.f32.mrb[0].mxu0
      %v1497 = vpop.f32.mrb[0].mxu0
      %v1498 = vadd.f32 %v1337, %v1497
      %v1499 = vpop.f32.mrb[0].mxu0
      %1500 = vmatprep.mubr.bf16.mxu0 %v1080
      %1501 = vmatmul.mubr.bf16.gmra.mrb[0].mxu0 %v672
      %v1502 = vpop.f32.mrb[0].mxu0
      %v1503 = vadd.f32 %v1342, %v1502
      %v1504 = vpop.f32.mrb[0].mxu0
      %v1505 = vpop.f32.mrb[0].mxu0
      %v1506 = vadd.f32 %v1345, %v1505
      %v1507 = vpop.f32.mrb[0].mxu0
      %1508 = vmatprep.mubr.bf16.mxu0 %v1083
      %1509 = vmatmul.mubr.bf16.gmra.mrb[0].mxu0 %v678
      %v1510 = vpop.f32.mrb[0].mxu0
      %v1511 = vadd.f32 %v1350, %v1510
      %v1512 = vpop.f32.mrb[0].mxu0
      %v1513 = vpop.f32.mrb[0].mxu0
      %v1514 = vadd.f32 %v1353, %v1513
      %v1515 = vpop.f32.mrb[0].mxu0
      %1516 = vmatprep.mubr.bf16.mxu0 %v1086
      %1517 = vmatmul.mubr.bf16.gmra.mrb[0].mxu0 %v684
      %v1518 = vpop.f32.mrb[0].mxu0
      %v1519 = vadd.f32 %v1358, %v1518
      %v1520 = vpop.f32.mrb[0].mxu0
      %v1521 = vpop.f32.mrb[0].mxu0
      %v1522 = vadd.f32 %v1361, %v1521
      %v1523 = vpop.f32.mrb[0].mxu0
      %1524 = vmatprep.mubr.bf16.mxu0 %v1089
      %1525 = vmatmul.mubr.bf16.gmra.mrb[0].mxu0 %v690
      %v1526 = vpop.f32.mrb[0].mxu0
      %v1527 = vadd.f32 %v1366, %v1526
      %v1528 = vpop.f32.mrb[0].mxu0
      %v1529 = vpop.f32.mrb[0].mxu0
      %v1530 = vadd.f32 %v1369, %v1529
      %v1531 = vpop.f32.mrb[0].mxu0
      %1532 = vmatprep.mubr.bf16.mxu0 %v1092
      %1533 = vmatmul.mubr.bf16.gmra.mrb[0].mxu0 %v696
      %v1534 = vpop.f32.mrb[0].mxu0
      %v1535 = vadd.f32 %v1374, %v1534
      %v1536 = vpop.f32.mrb[0].mxu0
      %v1537 = vpop.f32.mrb[0].mxu0
      %v1538 = vadd.f32 %v1377, %v1537
      %v1539 = vpop.f32.mrb[0].mxu0
      %1540 = vmatprep.mubr.bf16.mxu0 %v1095
      %1541 = vmatmul.mubr.bf16.gmra.mrb[0].mxu0 %v702
      %v1542 = vpop.f32.mrb[0].mxu0
      %v1543 = vadd.f32 %v1382, %v1542
      %v1544 = vpop.f32.mrb[0].mxu0
      %v1545 = vpop.f32.mrb[0].mxu0
      %v1546 = vadd.f32 %v1385, %v1545
      %v1547 = vpop.f32.mrb[0].mxu0
      %1548 = vmatprep.mubr.bf16.mxu0 %v1098
      %1549 = vmatmul.mubr.bf16.gmra.mrb[0].mxu0 %v708
      %v1550 = vpop.f32.mrb[0].mxu0
      %v1551 = vadd.f32 %v1390, %v1550
      %v1552 = vpop.f32.mrb[0].mxu0
      %v1553 = vpop.f32.mrb[0].mxu0
      %v1554 = vadd.f32 %v1393, %v1553
      %v1555 = vpop.f32.mrb[0].mxu0
      %1556 = vmatprep.mubr.bf16.mxu0 %v1101
      %1557 = vmatmul.mubr.bf16.gmra.mrb[0].mxu0 %v714
      %v1558 = vpop.f32.mrb[0].mxu0
      %v1559 = vadd.f32 %v1398, %v1558
      %v1560 = vpop.f32.mrb[0].mxu0
      %v1561 = vpop.f32.mrb[0].mxu0
      %v1562 = vadd.f32 %v1401, %v1561
      %v1563 = vpop.f32.mrb[0].mxu0
      %1564 = vmatprep.mubr.bf16.mxu0 %v1104
      %1565 = vmatmul.mubr.bf16.gmra.mrb[0].mxu0 %v720
      %v1566 = vpop.f32.mrb[0].mxu0
      %v1567 = vadd.f32 %v1406, %v1566
      %v1568 = vpop.f32.mrb[0].mxu0
      %v1569 = vpop.f32.mrb[0].mxu0
      %v1570 = vadd.f32 %v1409, %v1569
      %v1571 = vpop.f32.mrb[0].mxu0
      %1572 = vmatprep.mubr.bf16.mxu0 %v1107
      %1573 = vmatmul.mubr.bf16.gmra.mrb[0].mxu0 %v726
      %v1574 = vpop.f32.mrb[0].mxu0
      %v1575 = vadd.f32 %v1414, %v1574
      %v1576 = vpop.f32.mrb[0].mxu0
      %v1577 = vpop.f32.mrb[0].mxu0
      %v1578 = vadd.f32 %v1417, %v1577
      %v1579 = vpop.f32.mrb[0].mxu0
      %1580 = vmatprep.mubr.bf16.mxu0 %v1110
      %1581 = vmatmul.mubr.bf16.gmra.mrb[0].mxu0 %v732
      %v1582 = vpop.f32.mrb[0].mxu0
      %v1583 = vadd.f32 %v1422, %v1582
      %v1584 = vpop.f32.mrb[0].mxu0
      %v1585 = vpop.f32.mrb[0].mxu0
      %v1586 = vadd.f32 %v1425, %v1585
      %v1587 = vpop.f32.mrb[0].mxu0
      %1588 = vmatprep.mubr.bf16.mxu0 %v1113
      %1589 = vmatmul.mubr.bf16.gmra.mrb[0].mxu0 %v738
      %v1590 = vpop.f32.mrb[0].mxu0
      %v1591 = vadd.f32 %v1430, %v1590
      %v1592 = vpop.f32.mrb[0].mxu0
      %v1593 = vpop.f32.mrb[0].mxu0
      %v1594 = vadd.f32 %v1433, %v1593
      %v1595 = vpop.f32.mrb[0].mxu0
      %1596 = vmatprep.mubr.bf16.mxu0 %v1116
      %1597 = vmatmul.mubr.bf16.gmra.mrb[0].mxu0 %v744
      %v1598 = vpop.f32.mrb[0].mxu0
      %v1599 = vadd.f32 %v1438, %v1598
      %v1600 = vpop.f32.mrb[0].mxu0
      %v1601 = vpop.f32.mrb[0].mxu0
      %v1602 = vadd.f32 %v1441, %v1601
      %v1603 = vpop.f32.mrb[0].mxu0
      %1604 = vdwg.mxu0
      %v1605 = vmax.f32 %v1479, 0.0
      %v1606 = vmax.f32 %v1482, 0.0
      %v1607 = vmax.f32 %v1487, 0.0
      %v1608 = vmax.f32 %v1490, 0.0
      %v1609 = vmax.f32 %v1495, 0.0
      %v1610 = vmax.f32 %v1498, 0.0
      %v1611 = vmax.f32 %v1503, 0.0
      %v1612 = vmax.f32 %v1506, 0.0
      %v1613 = vmax.f32 %v1511, 0.0
      %v1614 = vmax.f32 %v1514, 0.0
      %v1615 = vmax.f32 %v1519, 0.0
      %v1616 = vmax.f32 %v1522, 0.0
      %v1617 = vmax.f32 %v1527, 0.0
      %v1618 = vmax.f32 %v1530, 0.0
      %v1619 = vmax.f32 %v1535, 0.0
      %v1620 = vmax.f32 %v1538, 0.0
      %v1621 = vmax.f32 %v1543, 0.0
      %v1622 = vmax.f32 %v1546, 0.0
      %v1623 = vmax.f32 %v1551, 0.0
      %v1624 = vmax.f32 %v1554, 0.0
      %v1625 = vmax.f32 %v1559, 0.0
      %v1626 = vmax.f32 %v1562, 0.0
      %v1627 = vmax.f32 %v1567, 0.0
      %v1628 = vmax.f32 %v1570, 0.0
      %v1629 = vmax.f32 %v1575, 0.0
      %v1630 = vmax.f32 %v1578, 0.0
      %v1631 = vmax.f32 %v1583, 0.0
      %v1632 = vmax.f32 %v1586, 0.0
      %v1633 = vmax.f32 %v1591, 0.0
      %v1634 = vmax.f32 %v1594, 0.0
      %v1635 = vmax.f32 %v1599, 0.0
      %v1636 = vmax.f32 %v1602, 0.0
      %v1637 = vpack.c.bf16 %v1606, %v1605
      %v1638 = vpack.c.bf16 %v1608, %v1607
      %v1639 = vpack.c.bf16 %v1610, %v1609
      %v1640 = vpack.c.bf16 %v1612, %v1611
      %v1641 = vpack.c.bf16 %v1614, %v1613
      %v1642 = vpack.c.bf16 %v1616, %v1615
      %v1643 = vpack.c.bf16 %v1618, %v1617
      %v1644 = vpack.c.bf16 %v1620, %v1619
      %v1645 = vpack.c.bf16 %v1622, %v1621
      %v1646 = vpack.c.bf16 %v1624, %v1623
      %v1647 = vpack.c.bf16 %v1626, %v1625
      %v1648 = vpack.c.bf16 %v1628, %v1627
      %v1649 = vpack.c.bf16 %v1630, %v1629
      %v1650 = vpack.c.bf16 %v1632, %v1631
      %v1651 = vpack.c.bf16 %v1634, %v1633
      %v1652 = vpack.c.bf16 %v1636, %v1635
      %v1669 = vunpack.c.l.b16 %v1637
      %v1670 = vunpack.c.h.b16 %v1637
      %v1671 = vunpack.c.l.b16 %v1638
      %v1672 = vunpack.c.h.b16 %v1638
      %v1673 = vunpack.c.l.b16 %v1639
      %v1674 = vunpack.c.h.b16 %v1639
      %v1675 = vunpack.c.l.b16 %v1640
      %v1676 = vunpack.c.h.b16 %v1640
      %v1677 = vunpack.c.l.b16 %v1641
      %v1678 = vunpack.c.h.b16 %v1641
      %v1679 = vunpack.c.l.b16 %v1642
      %v1680 = vunpack.c.h.b16 %v1642
      %v1681 = vunpack.c.l.b16 %v1643
      %v1682 = vunpack.c.h.b16 %v1643
      %v1683 = vunpack.c.l.b16 %v1644
      %v1684 = vunpack.c.h.b16 %v1644
      %v1685 = vunpack.c.l.b16 %v1645
      %v1686 = vunpack.c.h.b16 %v1645
      %v1687 = vunpack.c.l.b16 %v1646
      %v1688 = vunpack.c.h.b16 %v1646
      %v1689 = vunpack.c.l.b16 %v1647
      %v1690 = vunpack.c.h.b16 %v1647
      %v1691 = vunpack.c.l.b16 %v1648
      %v1692 = vunpack.c.h.b16 %v1648
      %v1693 = vunpack.c.l.b16 %v1649
      %v1694 = vunpack.c.h.b16 %v1649
      %v1695 = vunpack.c.l.b16 %v1650
      %v1696 = vunpack.c.h.b16 %v1650
      %v1697 = vunpack.c.l.b16 %v1651
      %v1698 = vunpack.c.h.b16 %v1651
      %v1699 = vunpack.c.l.b16 %v1652
      %v1700 = vunpack.c.h.b16 %v1652
      %v1701 = vpack.c.b16 %v1669, %v1669
      %v1702 = vpack.c.b16 %v1670, %v1670
      %v1703 = vpack.c.b16 %v1671, %v1671
      %v1704 = vpack.c.b16 %v1672, %v1672
      %v1705 = vpack.c.b16 %v1673, %v1673
      %v1706 = vpack.c.b16 %v1674, %v1674
      %v1707 = vpack.c.b16 %v1675, %v1675
      %v1708 = vpack.c.b16 %v1676, %v1676
      %v1709 = vpack.c.b16 %v1677, %v1677
      %v1710 = vpack.c.b16 %v1678, %v1678
      %v1711 = vpack.c.b16 %v1679, %v1679
      %v1712 = vpack.c.b16 %v1680, %v1680
      %v1713 = vpack.c.b16 %v1681, %v1681
      %v1714 = vpack.c.b16 %v1682, %v1682
      %v1715 = vpack.c.b16 %v1683, %v1683
      %v1716 = vpack.c.b16 %v1684, %v1684
      %v1717 = vpack.c.b16 %v1685, %v1685
      %v1718 = vpack.c.b16 %v1686, %v1686
      %v1719 = vpack.c.b16 %v1687, %v1687
      %v1720 = vpack.c.b16 %v1688, %v1688
      %v1721 = vpack.c.b16 %v1689, %v1689
      %v1722 = vpack.c.b16 %v1690, %v1690
      %v1723 = vpack.c.b16 %v1691, %v1691
      %v1724 = vpack.c.b16 %v1692, %v1692
      %v1725 = vpack.c.b16 %v1693, %v1693
      %v1726 = vpack.c.b16 %v1694, %v1694
      %v1727 = vpack.c.b16 %v1695, %v1695
      %v1728 = vpack.c.b16 %v1696, %v1696
      %v1729 = vpack.c.b16 %v1697, %v1697
      %v1730 = vpack.c.b16 %v1698, %v1698
      %v1731 = vpack.c.b16 %v1699, %v1699
      %v1732 = vpack.c.b16 %v1700, %v1700
      %vm1765 = vcmask 519168
      %1766 = vst.msk [vmem:[%s175] sm:$0xf] %vm1765, %v1701
      %1767 = vst.msk [vmem:[%s175 + $0x4] sm:$0xf] %vm1765, %v1702
      %1768 = vst.msk [vmem:[%s175 + $0x8] sm:$0xf] %vm1765, %v1703
      %1769 = vst.msk [vmem:[%s175 + $0xc] sm:$0xf] %vm1765, %v1704
      %1770 = vst.msk [vmem:[%s175 + $0x10] sm:$0xf] %vm1765, %v1705
      %1771 = vst.msk [vmem:[%s175 + $0x14] sm:$0xf] %vm1765, %v1706
      %1772 = vst.msk [vmem:[%s175 + $0x18] sm:$0xf] %vm1765, %v1707
      %1773 = vst.msk [vmem:[%s175 + $0x1c] sm:$0xf] %vm1765, %v1708
      %1774 = vst.msk [vmem:[%s175 + $0x20] sm:$0xf] %vm1765, %v1709
      %1775 = vst.msk [vmem:[%s175 + $0x24] sm:$0xf] %vm1765, %v1710
      %1776 = vst.msk [vmem:[%s175 + $0x28] sm:$0xf] %vm1765, %v1711
      %1777 = vst.msk [vmem:[%s175 + $0x2c] sm:$0xf] %vm1765, %v1712
      %1778 = vst.msk [vmem:[%s175 + $0x30] sm:$0xf] %vm1765, %v1713
      %1779 = vst.msk [vmem:[%s175 + $0x34] sm:$0xf] %vm1765, %v1714
      %1780 = vst.msk [vmem:[%s175 + $0x38] sm:$0xf] %vm1765, %v1715
      %1781 = vst.msk [vmem:[%s175 + $0x3c] sm:$0xf] %vm1765, %v1716
      %1782 = vst.msk [vmem:[%s175 + $0x40] sm:$0xf] %vm1765, %v1717
      %1783 = vst.msk [vmem:[%s175 + $0x44] sm:$0xf] %vm1765, %v1718
      %1784 = vst.msk [vmem:[%s175 + $0x48] sm:$0xf] %vm1765, %v1719
      %1785 = vst.msk [vmem:[%s175 + $0x4c] sm:$0xf] %vm1765, %v1720
      %1786 = vst.msk [vmem:[%s175 + $0x50] sm:$0xf] %vm1765, %v1721
      %1787 = vst.msk [vmem:[%s175 + $0x54] sm:$0xf] %vm1765, %v1722
      %1788 = vst.msk [vmem:[%s175 + $0x58] sm:$0xf] %vm1765, %v1723
      %1789 = vst.msk [vmem:[%s175 + $0x5c] sm:$0xf] %vm1765, %v1724
      %1790 = vst.msk [vmem:[%s175 + $0x60] sm:$0xf] %vm1765, %v1725
      %1791 = vst.msk [vmem:[%s175 + $0x64] sm:$0xf] %vm1765, %v1726
      %1792 = vst.msk [vmem:[%s175 + $0x68] sm:$0xf] %vm1765, %v1727
      %1793 = vst.msk [vmem:[%s175 + $0x6c] sm:$0xf] %vm1765, %v1728
      %1794 = vst.msk [vmem:[%s175 + $0x70] sm:$0xf] %vm1765, %v1729
      %1795 = vst.msk [vmem:[%s175 + $0x74] sm:$0xf] %vm1765, %v1730
      %1796 = vst.msk [vmem:[%s175 + $0x78] sm:$0xf] %vm1765, %v1731
      %1797 = vst.msk [vmem:[%s175 + $0x7c] sm:$0xf] %vm1765, %v1732
      %s1798 = smul.u32 32, %s14
      %p1799 = scmp.lt.s32.totalorder %s1798, 63
      %s1800 = scalar_select %p1799, %s1798, 63
      %s1801 = smul.addr %s1800, 4
      %s1802 = scalar_lea.vmem %s3, %s1801
      // Predicated region
      $region33: #{crowd_counter_forward.11} parent=31 // pred_check
        %p1803 = pneg %p100
      $region34: #{crowd_counter_forward.11} parent=31 // pred_check_branch
        %1805 = sbr.rel (%p1803) target = $region36
      $region35: #{crowd_counter_forward.11} parent=31 // pred_region
        %s1806 = smul.u32 32, %s14
      $region36: #{crowd_counter_forward.11} parent=31 // pred_fallthru
        _
    $region32: #{crowd_counter_forward.11} parent=5 // pred_fallthru
      _
    %p1807 = scmp.le.s32.totalorder 2, %s9
    // Predicated region
    $region37: #{crowd_counter_forward.11} parent=5 // pred_check
      %p1808 = pneg %p1807
    $region38: #{crowd_counter_forward.11} parent=5 // pred_check_branch
      %1810 = sbr.rel (%p1808) target = $region40
    $region39: #{crowd_counter_forward.11} parent=5 // pred_region
      %s1811 = ssub.s32 %s9, 2
      // Predicated region
      $region41: #{crowd_counter_forward.11} parent=39 // pred_check
        %p1812 = pneg %p106
      $region42: #{crowd_counter_forward.11} parent=39 // pred_check_branch
        %1814 = sbr.rel (%p1812) target = $region44
      $region43: #{crowd_counter_forward.11} parent=39 // pred_region
        %s1815 = smul.u32 32, %s15
        %p1816 = scmp.lt.s32.totalorder %s1815, 63
        %s1817 = scalar_select %p1816, %s1815, 63
        %s1818 = smul.addr %s1817, 4
        %s1819 = scalar_lea.vmem %s3, %s1818
      $region44: #{crowd_counter_forward.11} parent=39 // pred_fallthru
        _
    $region40: #{crowd_counter_forward.11} parent=5 // pred_fallthru
      _
  $region6: #{crowd_counter_forward.11} parent=0 // loop_footer
    %s13 = sadd.s32 1, %s9
  $region7: #{crowd_counter_forward.11} parent=0 // loop_footer_branch
    %8 = sbr.rel target = $region3
  $region8: #{crowd_counter_forward.11} parent=0 // loop_exit
    _

// kernel: crowd_counter_forward.12
$region0: #{crowd_counter_forward.12}
  #allocation0 [shape = 'u32[]', space=smem, size = 0x4, offset = 0x4, fixed_abs, tag = 'smem constant byte address 0x4 - core index']
  #allocation1 [shape = 'u32[144,128]{1,0:T(1,128)}', space=vmem, size = 0x12000, scoped, tag = 'internal scratch']
  %s0 = inlined_call_operand.vmem [shape: bf16[128,784], index: 0, kind: input, shape index: {}]
  %s1 = inlined_call_operand.vmem [shape: bf16[784,32], index: 1, kind: input, shape index: {}]
  %s2 = inlined_call_operand.vmem [shape: f32[1,32], index: 2, kind: input, shape index: {}]
  %s3 = inlined_call_operand.vmem [shape: bf16[128,32], index: 3, kind: output, shape index: {}]
  %s4 = sld [smem:[#allocation0]]
  $region22: #{crowd_counter_forward.12} parent=0
    _
  %s6 = ssub.s32 1, %s4
  %s7 = scalar_select 0, %s6, %s4
  // Predicated region
  $region2: #{crowd_counter_forward.12} parent=0 // pred_check
    _
  $region3: #{crowd_counter_forward.12} parent=0 // pred_check_branch
    %9 = sbr.rel (0) target = $region5
  $region4: #{crowd_counter_forward.12} parent=0 // pred_region
    _
  $region5: #{crowd_counter_forward.12} parent=0 // pred_fallthru
    _
  // Predicated region
  $region6: #{crowd_counter_forward.12} parent=0 // pred_check
    _
  $region7: #{crowd_counter_forward.12} parent=0 // pred_check_branch
    %11 = sbr.rel (0) target = $region9
  $region8: #{crowd_counter_forward.12} parent=0 // pred_region
    _
  $region9: #{crowd_counter_forward.12} parent=0 // pred_fallthru
    _
  // Predicated region
  $region10: #{crowd_counter_forward.12} parent=0 // pred_check
    _
  $region11: #{crowd_counter_forward.12} parent=0 // pred_check_branch
    %13 = sbr.rel (0) target = $region13
  $region12: #{crowd_counter_forward.12} parent=0 // pred_region
    _
  $region13: #{crowd_counter_forward.12} parent=0 // pred_fallthru
    _
  %v15 = vld [vmem:[%s0] sm:$0xff]
  %v16 = vld [vmem:[%s0 + $0x8] sm:$0xff]
  %v17 = vld [vmem:[%s0 + $0x10] sm:$0xff]
  %v18 = vld [vmem:[%s0 + $0x18] sm:$0xf]
  %v19 = vld [vmem:[%s0 + $0x1c] sm:$0xff]
  %v20 = vld [vmem:[%s0 + $0x24] sm:$0xff]
  %v21 = vld [vmem:[%s0 + $0x2c] sm:$0xff]
  %v22 = vld [vmem:[%s0 + $0x34] sm:$0xf]
  %v23 = vld [vmem:[%s0 + $0x38] sm:$0xff]
  %v24 = vld [vmem:[%s0 + $0x40] sm:$0xff]
  %v25 = vld [vmem:[%s0 + $0x48] sm:$0xff]
  %v26 = vld [vmem:[%s0 + $0x50] sm:$0xf]
  %v27 = vld [vmem:[%s0 + $0x54] sm:$0xff]
  %v28 = vld [vmem:[%s0 + $0x5c] sm:$0xff]
  %v29 = vld [vmem:[%s0 + $0x64] sm:$0xff]
  %v30 = vld [vmem:[%s0 + $0x6c] sm:$0xf]
  %v31 = vld [vmem:[%s0 + $0x70] sm:$0xff]
  %v32 = vld [vmem:[%s0 + $0x78] sm:$0xff]
  %v33 = vld [vmem:[%s0 + $0x80] sm:$0xff]
  %v34 = vld [vmem:[%s0 + $0x88] sm:$0xf]
  %v35 = vld [vmem:[%s0 + $0x8c] sm:$0xff]
  %v36 = vld [vmem:[%s0 + $0x94] sm:$0xff]
  %v37 = vld [vmem:[%s0 + $0x9c] sm:$0xff]
  %v38 = vld [vmem:[%s0 + $0xa4] sm:$0xf]
  %v39 = vld [vmem:[%s0 + $0xa8] sm:$0xff]
  %v40 = vld [vmem:[%s0 + $0xb0] sm:$0xff]
  %v41 = vld [vmem:[%s0 + $0xb8] sm:$0xff]
  %v42 = vld [vmem:[%s0 + $0xc0] sm:$0xf]
  %v43 = vld [vmem:[%s0 + $0xc4] sm:$0xff]
  %v44 = vld [vmem:[%s0 + $0xcc] sm:$0xff]
  %v45 = vld [vmem:[%s0 + $0xd4] sm:$0xff]
  %v46 = vld [vmem:[%s0 + $0xdc] sm:$0xf]
  %v47 = vld [vmem:[%s0 + $0xe0] sm:$0xff]
  %v48 = vld [vmem:[%s0 + $0xe8] sm:$0xff]
  %v49 = vld [vmem:[%s0 + $0xf0] sm:$0xff]
  %v50 = vld [vmem:[%s0 + $0xf8] sm:$0xf]
  %v51 = vld [vmem:[%s0 + $0xfc] sm:$0xff]
  %v52 = vld [vmem:[%s0 + $0x104] sm:$0xff]
  %v53 = vld [vmem:[%s0 + $0x10c] sm:$0xff]
  %v54 = vld [vmem:[%s0 + $0x114] sm:$0xf]
  %v55 = vld [vmem:[%s0 + $0x118] sm:$0xff]
  %v56 = vld [vmem:[%s0 + $0x120] sm:$0xff]
  %v57 = vld [vmem:[%s0 + $0x128] sm:$0xff]
  %v58 = vld [vmem:[%s0 + $0x130] sm:$0xf]
  %v59 = vld [vmem:[%s0 + $0x134] sm:$0xff]
  %v60 = vld [vmem:[%s0 + $0x13c] sm:$0xff]
  %v61 = vld [vmem:[%s0 + $0x144] sm:$0xff]
  %v62 = vld [vmem:[%s0 + $0x14c] sm:$0xf]
  %v63 = vld [vmem:[%s0 + $0x150] sm:$0xff]
  %v64 = vld [vmem:[%s0 + $0x158] sm:$0xff]
  %v65 = vld [vmem:[%s0 + $0x160] sm:$0xff]
  %v66 = vld [vmem:[%s0 + $0x168] sm:$0xf]
  %v67 = vld [vmem:[%s0 + $0x16c] sm:$0xff]
  %v68 = vld [vmem:[%s0 + $0x174] sm:$0xff]
  %v69 = vld [vmem:[%s0 + $0x17c] sm:$0xff]
  %v70 = vld [vmem:[%s0 + $0x184] sm:$0xf]
  %v71 = vld [vmem:[%s0 + $0x188] sm:$0xff]
  %v72 = vld [vmem:[%s0 + $0x190] sm:$0xff]
  %v73 = vld [vmem:[%s0 + $0x198] sm:$0xff]
  %v74 = vld [vmem:[%s0 + $0x1a0] sm:$0xf]
  %v75 = vld [vmem:[%s0 + $0x1a4] sm:$0xff]
  %v76 = vld [vmem:[%s0 + $0x1ac] sm:$0xff]
  %v77 = vld [vmem:[%s0 + $0x1b4] sm:$0xff]
  %v78 = vld [vmem:[%s0 + $0x1bc] sm:$0xf]
  %v79 = vld [vmem:[%s1] sm:$0xf]
  %v80 = vld [vmem:[%s1 + $0x4] sm:$0xf]
  %v81 = vld [vmem:[%s1 + $0x8] sm:$0xf]
  %v82 = vld [vmem:[%s1 + $0xc] sm:$0xf]
  %v83 = vld [vmem:[%s1 + $0x10] sm:$0xf]
  %v84 = vld [vmem:[%s1 + $0x14] sm:$0xf]
  %v85 = vld [vmem:[%s1 + $0x18] sm:$0xf]
  %v86 = vld [vmem:[%s1 + $0x1c] sm:$0xf]
  %v87 = vld [vmem:[%s1 + $0x20] sm:$0xf]
  %v88 = vld [vmem:[%s1 + $0x24] sm:$0xf]
  %v89 = vld [vmem:[%s1 + $0x28] sm:$0xf]
  %v90 = vld [vmem:[%s1 + $0x2c] sm:$0xf]
  %v91 = vld [vmem:[%s1 + $0x30] sm:$0xf]
  %v92 = vld [vmem:[%s1 + $0x34] sm:$0xf]
  %v93 = vld [vmem:[%s1 + $0x38] sm:$0xf]
  %v94 = vld [vmem:[%s1 + $0x3c] sm:$0xf]
  %v95 = vld [vmem:[%s1 + $0x40] sm:$0xf]
  %v96 = vld [vmem:[%s1 + $0x44] sm:$0xf]
  %v97 = vld [vmem:[%s1 + $0x48] sm:$0xf]
  %v98 = vld [vmem:[%s1 + $0x4c] sm:$0xf]
  %v99 = vld [vmem:[%s1 + $0x50] sm:$0xf]
  %v100 = vld [vmem:[%s1 + $0x54] sm:$0xf]
  %v101 = vld [vmem:[%s1 + $0x58] sm:$0xf]
  %v102 = vld [vmem:[%s1 + $0x5c] sm:$0xf]
  %v103 = vld [vmem:[%s1 + $0x60] sm:$0xf]
  %v104 = vld [vmem:[%s1 + $0x64] sm:$0xf]
  %v105 = vld [vmem:[%s1 + $0x68] sm:$0xf]
  %v106 = vld [vmem:[%s1 + $0x6c] sm:$0xf]
  %v107 = vld [vmem:[%s1 + $0x70] sm:$0xf]
  %v108 = vld [vmem:[%s1 + $0x74] sm:$0xf]
  %v109 = vld [vmem:[%s1 + $0x78] sm:$0xf]
  %v110 = vld [vmem:[%s1 + $0x7c] sm:$0xf]
  %v111 = vld [vmem:[%s1 + $0x80] sm:$0xf]
  %v112 = vld [vmem:[%s1 + $0x84] sm:$0xf]
  %v113 = vld [vmem:[%s1 + $0x88] sm:$0xf]
  %v114 = vld [vmem:[%s1 + $0x8c] sm:$0xf]
  %v115 = vld [vmem:[%s1 + $0x90] sm:$0xf]
  %v116 = vld [vmem:[%s1 + $0x94] sm:$0xf]
  %v117 = vld [vmem:[%s1 + $0x98] sm:$0xf]
  %v118 = vld [vmem:[%s1 + $0x9c] sm:$0xf]
  %v119 = vld [vmem:[%s1 + $0xa0] sm:$0xf]
  %v120 = vld [vmem:[%s1 + $0xa4] sm:$0xf]
  %v121 = vld [vmem:[%s1 + $0xa8] sm:$0xf]
  %v122 = vld [vmem:[%s1 + $0xac] sm:$0xf]
  %v123 = vld [vmem:[%s1 + $0xb0] sm:$0xf]
  %v124 = vld [vmem:[%s1 + $0xb4] sm:$0xf]
  %v125 = vld [vmem:[%s1 + $0xb8] sm:$0xf]
  %v126 = vld [vmem:[%s1 + $0xbc] sm:$0xf]
  %v127 = vld [vmem:[%s1 + $0xc0] sm:$0xf]
  %v128 = vld [vmem:[%s1 + $0xc4] sm:$0xf]
  %v129 = vld [vmem:[%s1 + $0xc8] sm:$0xf]
  %v130 = vld [vmem:[%s1 + $0xcc] sm:$0xf]
  %v131 = vld [vmem:[%s1 + $0xd0] sm:$0xf]
  %v132 = vld [vmem:[%s1 + $0xd4] sm:$0xf]
  %v133 = vld [vmem:[%s1 + $0xd8] sm:$0xf]
  %v134 = vld [vmem:[%s1 + $0xdc] sm:$0xf]
  %v135 = vld [vmem:[%s1 + $0xe0] sm:$0xf]
  %v136 = vld [vmem:[%s1 + $0xe4] sm:$0xf]
  %v137 = vld [vmem:[%s1 + $0xe8] sm:$0xf]
  %v138 = vld [vmem:[%s1 + $0xec] sm:$0xf]
  %v139 = vld [vmem:[%s1 + $0xf0] sm:$0xf]
  %v140 = vld [vmem:[%s1 + $0xf4] sm:$0xf]
  %v141 = vld [vmem:[%s1 + $0xf8] sm:$0xf]
  %v142 = vld [vmem:[%s1 + $0xfc] sm:$0xf]
  %v143 = vld [vmem:[%s1 + $0x100] sm:$0xf]
  %v144 = vld [vmem:[%s1 + $0x104] sm:$0xf]
  %v145 = vld [vmem:[%s1 + $0x108] sm:$0xf]
  %v146 = vld [vmem:[%s1 + $0x10c] sm:$0xf]
  %v147 = vld [vmem:[%s1 + $0x110] sm:$0xf]
  %v148 = vld [vmem:[%s1 + $0x114] sm:$0xf]
  %v149 = vld [vmem:[%s1 + $0x118] sm:$0xf]
  %v150 = vld [vmem:[%s1 + $0x11c] sm:$0xf]
  %v151 = vld [vmem:[%s1 + $0x120] sm:$0xf]
  %v152 = vld [vmem:[%s1 + $0x124] sm:$0xf]
  %v153 = vld [vmem:[%s1 + $0x128] sm:$0xf]
  %v154 = vld [vmem:[%s1 + $0x12c] sm:$0xf]
  %v155 = vld [vmem:[%s1 + $0x130] sm:$0xf]
  %v156 = vld [vmem:[%s1 + $0x134] sm:$0xf]
  %v157 = vld [vmem:[%s1 + $0x138] sm:$0xf]
  %v158 = vld [vmem:[%s1 + $0x13c] sm:$0xf]
  %v159 = vld [vmem:[%s1 + $0x140] sm:$0xf]
  %v160 = vld [vmem:[%s1 + $0x144] sm:$0xf]
  %v161 = vld [vmem:[%s1 + $0x148] sm:$0xf]
  %v162 = vld [vmem:[%s1 + $0x14c] sm:$0xf]
  %v163 = vld [vmem:[%s1 + $0x150] sm:$0xf]
  %v164 = vld [vmem:[%s1 + $0x154] sm:$0xf]
  %v165 = vld [vmem:[%s1 + $0x158] sm:$0xf]
  %v166 = vld [vmem:[%s1 + $0x15c] sm:$0xf]
  %v167 = vld [vmem:[%s1 + $0x160] sm:$0xf]
  %v168 = vld [vmem:[%s1 + $0x164] sm:$0xf]
  %v169 = vld [vmem:[%s1 + $0x168] sm:$0xf]
  %v170 = vld [vmem:[%s1 + $0x16c] sm:$0xf]
  %v171 = vld [vmem:[%s1 + $0x170] sm:$0xf]
  %v172 = vld [vmem:[%s1 + $0x174] sm:$0xf]
  %v173 = vld [vmem:[%s1 + $0x178] sm:$0xf]
  %v174 = vld [vmem:[%s1 + $0x17c] sm:$0xf]
  %v175 = vld [vmem:[%s1 + $0x180] sm:$0xf]
  %v176 = vld [vmem:[%s1 + $0x184] sm:$0xf]
  %v177 = vld [vmem:[%s2] sm:$0x1]
  %v179 = vlaneseq
  %v180 = vshrl.u32 %v179, 7
  %v181 = vsub.s32 0, %v180
  %v182 = vrot.slane %v177, %v181
  %v248 = vunpack.c.l.b16 %v15
  %v249 = vunpack.c.h.b16 %v15
  %v250 = vunpack.c.l.b16 %v16
  %v251 = vunpack.c.h.b16 %v16
  %v252 = vunpack.c.l.b16 %v17
  %v253 = vunpack.c.h.b16 %v17
  %v254 = vunpack.c.l.b16 %v18
  %v255 = vunpack.c.l.b16 %v19
  %v256 = vunpack.c.h.b16 %v19
  %v257 = vunpack.c.l.b16 %v20
  %v258 = vunpack.c.h.b16 %v20
  %v259 = vunpack.c.l.b16 %v21
  %v260 = vunpack.c.h.b16 %v21
  %v261 = vunpack.c.l.b16 %v22
  %v262 = vunpack.c.l.b16 %v23
  %v263 = vunpack.c.h.b16 %v23
  %v264 = vunpack.c.l.b16 %v24
  %v265 = vunpack.c.h.b16 %v24
  %v266 = vunpack.c.l.b16 %v25
  %v267 = vunpack.c.h.b16 %v25
  %v268 = vunpack.c.l.b16 %v26
  %v269 = vunpack.c.l.b16 %v27
  %v270 = vunpack.c.h.b16 %v27
  %v271 = vunpack.c.l.b16 %v28
  %v272 = vunpack.c.h.b16 %v28
  %v273 = vunpack.c.l.b16 %v29
  %v274 = vunpack.c.h.b16 %v29
  %v275 = vunpack.c.l.b16 %v30
  %v276 = vunpack.c.l.b16 %v31
  %v277 = vunpack.c.h.b16 %v31
  %v278 = vunpack.c.l.b16 %v32
  %v279 = vunpack.c.h.b16 %v32
  %v280 = vunpack.c.l.b16 %v33
  %v281 = vunpack.c.h.b16 %v33
  %v282 = vunpack.c.l.b16 %v34
  %v283 = vunpack.c.l.b16 %v35
  %v284 = vunpack.c.h.b16 %v35
  %v285 = vunpack.c.l.b16 %v36
  %v286 = vunpack.c.h.b16 %v36
  %v287 = vunpack.c.l.b16 %v37
  %v288 = vunpack.c.h.b16 %v37
  %v289 = vunpack.c.l.b16 %v38
  %v290 = vunpack.c.l.b16 %v39
  %v291 = vunpack.c.h.b16 %v39
  %v292 = vunpack.c.l.b16 %v40
  %v293 = vunpack.c.h.b16 %v40
  %v294 = vunpack.c.l.b16 %v41
  %v295 = vunpack.c.h.b16 %v41
  %v296 = vunpack.c.l.b16 %v42
  %v297 = vunpack.c.l.b16 %v43
  %v298 = vunpack.c.h.b16 %v43
  %v299 = vunpack.c.l.b16 %v44
  %v300 = vunpack.c.h.b16 %v44
  %v301 = vunpack.c.l.b16 %v45
  %v302 = vunpack.c.h.b16 %v45
  %v303 = vunpack.c.l.b16 %v46
  %v304 = vunpack.c.l.b16 %v47
  %v305 = vunpack.c.h.b16 %v47
  %v306 = vunpack.c.l.b16 %v48
  %v307 = vunpack.c.h.b16 %v48
  %v308 = vunpack.c.l.b16 %v49
  %v309 = vunpack.c.h.b16 %v49
  %v310 = vunpack.c.l.b16 %v50
  %v311 = vunpack.c.l.b16 %v51
  %v312 = vunpack.c.h.b16 %v51
  %v313 = vunpack.c.l.b16 %v52
  %v314 = vunpack.c.h.b16 %v52
  %v315 = vunpack.c.l.b16 %v53
  %v316 = vunpack.c.h.b16 %v53
  %v317 = vunpack.c.l.b16 %v54
  %v318 = vunpack.c.l.b16 %v55
  %v319 = vunpack.c.h.b16 %v55
  %v320 = vunpack.c.l.b16 %v56
  %v321 = vunpack.c.h.b16 %v56
  %v322 = vunpack.c.l.b16 %v57
  %v323 = vunpack.c.h.b16 %v57
  %v324 = vunpack.c.l.b16 %v58
  %v325 = vunpack.c.l.b16 %v59
  %v326 = vunpack.c.h.b16 %v59
  %v327 = vunpack.c.l.b16 %v60
  %v328 = vunpack.c.h.b16 %v60
  %v329 = vunpack.c.l.b16 %v61
  %v330 = vunpack.c.h.b16 %v61
  %v331 = vunpack.c.l.b16 %v62
  %v332 = vunpack.c.l.b16 %v63
  %v333 = vunpack.c.h.b16 %v63
  %v334 = vunpack.c.l.b16 %v64
  %v335 = vunpack.c.h.b16 %v64
  %v336 = vunpack.c.l.b16 %v65
  %v337 = vunpack.c.h.b16 %v65
  %v338 = vunpack.c.l.b16 %v66
  %v339 = vunpack.c.l.b16 %v67
  %v340 = vunpack.c.h.b16 %v67
  %v341 = vunpack.c.l.b16 %v68
  %v342 = vunpack.c.h.b16 %v68
  %v343 = vunpack.c.l.b16 %v69
  %v344 = vunpack.c.h.b16 %v69
  %v345 = vunpack.c.l.b16 %v70
  %v346 = vunpack.c.l.b16 %v71
  %v347 = vunpack.c.h.b16 %v71
  %v348 = vunpack.c.l.b16 %v72
  %v349 = vunpack.c.h.b16 %v72
  %v350 = vunpack.c.l.b16 %v73
  %v351 = vunpack.c.h.b16 %v73
  %v352 = vunpack.c.l.b16 %v74
  %v353 = vunpack.c.l.b16 %v75
  %v354 = vunpack.c.h.b16 %v75
  %v355 = vunpack.c.l.b16 %v76
  %v356 = vunpack.c.h.b16 %v76
  %v357 = vunpack.c.l.b16 %v77
  %v358 = vunpack.c.h.b16 %v77
  %v359 = vunpack.c.l.b16 %v78
  %v360 = vpack.c.b16 %v255, %v248
  %v361 = vpack.c.b16 %v256, %v249
  %v362 = vpack.c.b16 %v257, %v250
  %v363 = vpack.c.b16 %v258, %v251
  %v364 = vpack.c.b16 %v259, %v252
  %v365 = vpack.c.b16 %v260, %v253
  %v366 = vpack.c.b16 %v261, %v254
  %v367 = vpack.c.b16 %v269, %v262
  %v368 = vpack.c.b16 %v270, %v263
  %v369 = vpack.c.b16 %v271, %v264
  %v370 = vpack.c.b16 %v272, %v265
  %v371 = vpack.c.b16 %v273, %v266
  %v372 = vpack.c.b16 %v274, %v267
  %v373 = vpack.c.b16 %v275, %v268
  %v374 = vpack.c.b16 %v283, %v276
  %v375 = vpack.c.b16 %v284, %v277
  %v376 = vpack.c.b16 %v285, %v278
  %v377 = vpack.c.b16 %v286, %v279
  %v378 = vpack.c.b16 %v287, %v280
  %v379 = vpack.c.b16 %v288, %v281
  %v380 = vpack.c.b16 %v289, %v282
  %v381 = vpack.c.b16 %v297, %v290
  %v382 = vpack.c.b16 %v298, %v291
  %v383 = vpack.c.b16 %v299, %v292
  %v384 = vpack.c.b16 %v300, %v293
  %v385 = vpack.c.b16 %v301, %v294
  %v386 = vpack.c.b16 %v302, %v295
  %v387 = vpack.c.b16 %v303, %v296
  %v388 = vpack.c.b16 %v311, %v304
  %v389 = vpack.c.b16 %v312, %v305
  %v390 = vpack.c.b16 %v313, %v306
  %v391 = vpack.c.b16 %v314, %v307
  %v392 = vpack.c.b16 %v315, %v308
  %v393 = vpack.c.b16 %v316, %v309
  %v394 = vpack.c.b16 %v317, %v310
  %v395 = vpack.c.b16 %v325, %v318
  %v396 = vpack.c.b16 %v326, %v319
  %v397 = vpack.c.b16 %v327, %v320
  %v398 = vpack.c.b16 %v328, %v321
  %v399 = vpack.c.b16 %v329, %v322
  %v400 = vpack.c.b16 %v330, %v323
  %v401 = vpack.c.b16 %v331, %v324
  %v402 = vpack.c.b16 %v339, %v332
  %v403 = vpack.c.b16 %v340, %v333
  %v404 = vpack.c.b16 %v341, %v334
  %v405 = vpack.c.b16 %v342, %v335
  %v406 = vpack.c.b16 %v343, %v336
  %v407 = vpack.c.b16 %v344, %v337
  %v408 = vpack.c.b16 %v345, %v338
  %v409 = vpack.c.b16 %v353, %v346
  %v410 = vpack.c.b16 %v354, %v347
  %v411 = vpack.c.b16 %v355, %v348
  %v412 = vpack.c.b16 %v356, %v349
  %v413 = vpack.c.b16 %v357, %v350
  %v414 = vpack.c.b16 %v358, %v351
  %v415 = vpack.c.b16 %v359, %v352
  %v562 = vunpack.c.l.b16 %v79
  %v563 = vunpack.c.l.b16 %v80
  %v564 = vunpack.c.l.b16 %v81
  %v565 = vunpack.c.l.b16 %v82
  %v566 = vunpack.c.l.b16 %v83
  %v567 = vunpack.c.l.b16 %v84
  %v568 = vunpack.c.l.b16 %v85
  %v569 = vunpack.c.l.b16 %v86
  %v570 = vunpack.c.l.b16 %v87
  %v571 = vunpack.c.l.b16 %v88
  %v572 = vunpack.c.l.b16 %v89
  %v573 = vunpack.c.l.b16 %v90
  %v574 = vunpack.c.l.b16 %v91
  %v575 = vunpack.c.l.b16 %v92
  %v576 = vunpack.c.l.b16 %v93
  %v577 = vunpack.c.l.b16 %v94
  %v578 = vunpack.c.l.b16 %v95
  %v579 = vunpack.c.l.b16 %v96
  %v580 = vunpack.c.l.b16 %v97
  %v581 = vunpack.c.l.b16 %v98
  %v582 = vunpack.c.l.b16 %v99
  %v583 = vunpack.c.l.b16 %v100
  %v584 = vunpack.c.l.b16 %v101
  %v585 = vunpack.c.l.b16 %v102
  %v586 = vunpack.c.l.b16 %v103
  %v587 = vunpack.c.l.b16 %v104
  %v588 = vunpack.c.l.b16 %v105
  %v589 = vunpack.c.l.b16 %v106
  %v590 = vunpack.c.l.b16 %v107
  %v591 = vunpack.c.l.b16 %v108
  %v592 = vunpack.c.l.b16 %v109
  %v593 = vunpack.c.l.b16 %v110
  %v594 = vunpack.c.l.b16 %v111
  %v595 = vunpack.c.l.b16 %v112
  %v596 = vunpack.c.l.b16 %v113
  %v597 = vunpack.c.l.b16 %v114
  %v598 = vunpack.c.l.b16 %v115
  %v599 = vunpack.c.l.b16 %v116
  %v600 = vunpack.c.l.b16 %v117
  %v601 = vunpack.c.l.b16 %v118
  %v602 = vunpack.c.l.b16 %v119
  %v603 = vunpack.c.l.b16 %v120
  %v604 = vunpack.c.l.b16 %v121
  %v605 = vunpack.c.l.b16 %v122
  %v606 = vunpack.c.l.b16 %v123
  %v607 = vunpack.c.l.b16 %v124
  %v608 = vunpack.c.l.b16 %v125
  %v609 = vunpack.c.l.b16 %v126
  %v610 = vunpack.c.l.b16 %v127
  %v611 = vunpack.c.l.b16 %v128
  %v612 = vunpack.c.l.b16 %v129
  %v613 = vunpack.c.l.b16 %v130
  %v614 = vunpack.c.l.b16 %v131
  %v615 = vunpack.c.l.b16 %v132
  %v616 = vunpack.c.l.b16 %v133
  %v617 = vunpack.c.l.b16 %v134
  %v618 = vunpack.c.l.b16 %v135
  %v619 = vunpack.c.l.b16 %v136
  %v620 = vunpack.c.l.b16 %v137
  %v621 = vunpack.c.l.b16 %v138
  %v622 = vunpack.c.l.b16 %v139
  %v623 = vunpack.c.l.b16 %v140
  %v624 = vunpack.c.l.b16 %v141
  %v625 = vunpack.c.l.b16 %v142
  %v626 = vunpack.c.l.b16 %v143
  %v627 = vunpack.c.l.b16 %v144
  %v628 = vunpack.c.l.b16 %v145
  %v629 = vunpack.c.l.b16 %v146
  %v630 = vunpack.c.l.b16 %v147
  %v631 = vunpack.c.l.b16 %v148
  %v632 = vunpack.c.l.b16 %v149
  %v633 = vunpack.c.l.b16 %v150
  %v634 = vunpack.c.l.b16 %v151
  %v635 = vunpack.c.l.b16 %v152
  %v636 = vunpack.c.l.b16 %v153
  %v637 = vunpack.c.l.b16 %v154
  %v638 = vunpack.c.l.b16 %v155
  %v639 = vunpack.c.l.b16 %v156
  %v640 = vunpack.c.l.b16 %v157
  %v641 = vunpack.c.l.b16 %v158
  %v642 = vunpack.c.l.b16 %v159
  %v643 = vunpack.c.l.b16 %v160
  %v644 = vunpack.c.l.b16 %v161
  %v645 = vunpack.c.l.b16 %v162
  %v646 = vunpack.c.l.b16 %v163
  %v647 = vunpack.c.l.b16 %v164
  %v648 = vunpack.c.l.b16 %v165
  %v649 = vunpack.c.l.b16 %v166
  %v650 = vunpack.c.l.b16 %v167
  %v651 = vunpack.c.l.b16 %v168
  %v652 = vunpack.c.l.b16 %v169
  %v653 = vunpack.c.l.b16 %v170
  %v654 = vunpack.c.l.b16 %v171
  %v655 = vunpack.c.l.b16 %v172
  %v656 = vunpack.c.l.b16 %v173
  %v657 = vunpack.c.l.b16 %v174
  %v658 = vunpack.c.l.b16 %v175
  %v659 = vunpack.c.l.b16 %v176
  %v660 = vpack.c.b16 %v563, %v562
  %v661 = vpack.c.b16 %v565, %v564
  %v662 = vpack.c.b16 %v567, %v566
  %v663 = vpack.c.b16 %v569, %v568
  %v664 = vpack.c.b16 %v571, %v570
  %v665 = vpack.c.b16 %v573, %v572
  %v666 = vpack.c.b16 %v575, %v574
  %v667 = vpack.c.b16 %v577, %v576
  %v668 = vpack.c.b16 %v579, %v578
  %v669 = vpack.c.b16 %v581, %v580
  %v670 = vpack.c.b16 %v583, %v582
  %v671 = vpack.c.b16 %v585, %v584
  %v672 = vpack.c.b16 %v587, %v586
  %v673 = vpack.c.b16 %v589, %v588
  %v674 = vpack.c.b16 %v591, %v590
  %v675 = vpack.c.b16 %v593, %v592
  %v676 = vpack.c.b16 %v595, %v594
  %v677 = vpack.c.b16 %v597, %v596
  %v678 = vpack.c.b16 %v599, %v598
  %v679 = vpack.c.b16 %v601, %v600
  %v680 = vpack.c.b16 %v603, %v602
  %v681 = vpack.c.b16 %v605, %v604
  %v682 = vpack.c.b16 %v607, %v606
  %v683 = vpack.c.b16 %v609, %v608
  %v684 = vpack.c.b16 %v611, %v610
  %v685 = vpack.c.b16 %v613, %v612
  %v686 = vpack.c.b16 %v615, %v614
  %v687 = vpack.c.b16 %v617, %v616
  %v688 = vpack.c.b16 %v619, %v618
  %v689 = vpack.c.b16 %v621, %v620
  %v690 = vpack.c.b16 %v623, %v622
  %v691 = vpack.c.b16 %v625, %v624
  %v692 = vpack.c.b16 %v627, %v626
  %v693 = vpack.c.b16 %v629, %v628
  %v694 = vpack.c.b16 %v631, %v630
  %v695 = vpack.c.b16 %v633, %v632
  %v696 = vpack.c.b16 %v635, %v634
  %v697 = vpack.c.b16 %v637, %v636
  %v698 = vpack.c.b16 %v639, %v638
  %v699 = vpack.c.b16 %v641, %v640
  %v700 = vpack.c.b16 %v643, %v642
  %v701 = vpack.c.b16 %v645, %v644
  %v702 = vpack.c.b16 %v647, %v646
  %v703 = vpack.c.b16 %v649, %v648
  %v704 = vpack.c.b16 %v651, %v650
  %v705 = vpack.c.b16 %v653, %v652
  %v706 = vpack.c.b16 %v655, %v654
  %v707 = vpack.c.b16 %v657, %v656
  %v708 = vpack.c.b16 %v659, %v658
  %vm758 = vcmask 130048
  %v760 = vsel %vm758, %v366, 0
  %v763 = vsel %vm758, %v373, 0
  %v766 = vsel %vm758, %v380, 0
  %v769 = vsel %vm758, %v387, 0
  %v772 = vsel %vm758, %v394, 0
  %v775 = vsel %vm758, %v401, 0
  %v778 = vsel %vm758, %v408, 0
  %v781 = vsel %vm758, %v415, 0
  %783 = vmatprep.subr.bf16.mxu0 0
  %784 = vmatpush1.bf16.msra.mxu0 %v660
  %785 = vmatprep.subr.bf16.mxu0 0
  %786 = vmatpush1.bf16.msra.mxu0 %v661
  %787 = vmatprep.subr.bf16.mxu0 0
  %788 = vmatpush1.bf16.msra.mxu0 %v662
  %789 = vmatprep.subr.bf16.mxu0 0
  %790 = vmatpush1.bf16.msra.mxu0 %v663
  %791 = vmatprep.subr.bf16.mxu0 0
  %792 = vmatpush1.bf16.msra.mxu0 %v664
  %793 = vmatprep.subr.bf16.mxu0 0
  %794 = vmatpush1.bf16.msra.mxu0 %v665
  %795 = vmatprep.subr.bf16.mxu0 0
  %796 = vmatpush1.bf16.msra.mxu0 %v666
  %797 = vmatprep.subr.bf16.mxu0 0
  %798 = vmatpush1.bf16.msra.mxu0 %v667
  %799 = vmatprep.subr.bf16.mxu0 0
  %800 = vmatpush1.bf16.msra.mxu0 %v668
  %801 = vmatprep.subr.bf16.mxu0 0
  %802 = vmatpush1.bf16.msra.mxu0 %v669
  %803 = vmatprep.subr.bf16.mxu0 0
  %804 = vmatpush1.bf16.msra.mxu0 %v670
  %805 = vmatprep.subr.bf16.mxu0 0
  %806 = vmatpush1.bf16.msra.mxu0 %v671
  %807 = vmatprep.subr.bf16.mxu0 0
  %808 = vmatpush1.bf16.msra.mxu0 %v672
  %809 = vmatprep.subr.bf16.mxu0 0
  %810 = vmatpush1.bf16.msra.mxu0 %v673
  %811 = vmatprep.subr.bf16.mxu0 0
  %812 = vmatpush1.bf16.msra.mxu0 %v674
  %813 = vmatprep.subr.bf16.mxu0 0
  %814 = vmatpush1.bf16.msra.mxu0 %v675
  %815 = vmatprep.mubr.bf16.mxu0 %v361
  %816 = vmatmul.mubr.bf16.gmra.mrb[0].mxu0 %v360
  %v817 = vpop.f32.mrb[0].mxu0
  %v818 = vadd.f32 %v182, %v817
  %v819 = vpop.f32.mrb[0].mxu0
  %v820 = vpop.f32.mrb[0].mxu0
  %v821 = vadd.f32 %v182, %v820
  %v822 = vpop.f32.mrb[0].mxu0
  %823 = vmatprep.mubr.bf16.mxu0 %v368
  %824 = vmatmul.mubr.bf16.gmra.mrb[0].mxu0 %v367
  %v825 = vpop.f32.mrb[0].mxu0
  %v826 = vadd.f32 %v182, %v825
  %v827 = vpop.f32.mrb[0].mxu0
  %v828 = vpop.f32.mrb[0].mxu0
  %v829 = vadd.f32 %v182, %v828
  %v830 = vpop.f32.mrb[0].mxu0
  %831 = vmatprep.mubr.bf16.mxu0 %v375
  %832 = vmatmul.mubr.bf16.gmra.mrb[0].mxu0 %v374
  %v833 = vpop.f32.mrb[0].mxu0
  %v834 = vadd.f32 %v182, %v833
  %v835 = vpop.f32.mrb[0].mxu0
  %v836 = vpop.f32.mrb[0].mxu0
  %v837 = vadd.f32 %v182, %v836
  %v838 = vpop.f32.mrb[0].mxu0
  %839 = vmatprep.mubr.bf16.mxu0 %v382
  %840 = vmatmul.mubr.bf16.gmra.mrb[0].mxu0 %v381
  %v841 = vpop.f32.mrb[0].mxu0
  %v842 = vadd.f32 %v182, %v841
  %v843 = vpop.f32.mrb[0].mxu0
  %v844 = vpop.f32.mrb[0].mxu0
  %v845 = vadd.f32 %v182, %v844
  %v846 = vpop.f32.mrb[0].mxu0
  %847 = vmatprep.mubr.bf16.mxu0 %v389
  %848 = vmatmul.mubr.bf16.gmra.mrb[0].mxu0 %v388
  %v849 = vpop.f32.mrb[0].mxu0
  %v850 = vadd.f32 %v182, %v849
  %v851 = vpop.f32.mrb[0].mxu0
  %v852 = vpop.f32.mrb[0].mxu0
  %v853 = vadd.f32 %v182, %v852
  %v854 = vpop.f32.mrb[0].mxu0
  %855 = vmatprep.mubr.bf16.mxu0 %v396
  %856 = vmatmul.mubr.bf16.gmra.mrb[0].mxu0 %v395
  %v857 = vpop.f32.mrb[0].mxu0
  %v858 = vadd.f32 %v182, %v857
  %v859 = vpop.f32.mrb[0].mxu0
  %v860 = vpop.f32.mrb[0].mxu0
  %v861 = vadd.f32 %v182, %v860
  %v862 = vpop.f32.mrb[0].mxu0
  %863 = vmatprep.mubr.bf16.mxu0 %v403
  %864 = vmatmul.mubr.bf16.gmra.mrb[0].mxu0 %v402
  %v865 = vpop.f32.mrb[0].mxu0
  %v866 = vadd.f32 %v182, %v865
  %v867 = vpop.f32.mrb[0].mxu0
  %v868 = vpop.f32.mrb[0].mxu0
  %v869 = vadd.f32 %v182, %v868
  %v870 = vpop.f32.mrb[0].mxu0
  %871 = vmatprep.mubr.bf16.mxu0 %v410
  %872 = vmatmul.mubr.bf16.gmra.mrb[0].mxu0 %v409
  %v873 = vpop.f32.mrb[0].mxu0
  %v874 = vadd.f32 %v182, %v873
  %v875 = vpop.f32.mrb[0].mxu0
  %v876 = vpop.f32.mrb[0].mxu0
  %v877 = vadd.f32 %v182, %v876
  %v878 = vpop.f32.mrb[0].mxu0
  %879 = vdwg.mxu0
  %880 = vmatprep.subr.bf16.mxu0 0
  %881 = vmatpush1.bf16.msra.mxu0 %v676
  %882 = vmatprep.subr.bf16.mxu0 0
  %883 = vmatpush1.bf16.msra.mxu0 %v677
  %884 = vmatprep.subr.bf16.mxu0 0
  %885 = vmatpush1.bf16.msra.mxu0 %v678
  %886 = vmatprep.subr.bf16.mxu0 0
  %887 = vmatpush1.bf16.msra.mxu0 %v679
  %888 = vmatprep.subr.bf16.mxu0 0
  %889 = vmatpush1.bf16.msra.mxu0 %v680
  %890 = vmatprep.subr.bf16.mxu0 0
  %891 = vmatpush1.bf16.msra.mxu0 %v681
  %892 = vmatprep.subr.bf16.mxu0 0
  %893 = vmatpush1.bf16.msra.mxu0 %v682
  %894 = vmatprep.subr.bf16.mxu0 0
  %895 = vmatpush1.bf16.msra.mxu0 %v683
  %896 = vmatprep.subr.bf16.mxu0 0
  %897 = vmatpush1.bf16.msra.mxu0 %v684
  %898 = vmatprep.subr.bf16.mxu0 0
  %899 = vmatpush1.bf16.msra.mxu0 %v685
  %900 = vmatprep.subr.bf16.mxu0 0
  %901 = vmatpush1.bf16.msra.mxu0 %v686
  %902 = vmatprep.subr.bf16.mxu0 0
  %903 = vmatpush1.bf16.msra.mxu0 %v687
  %904 = vmatprep.subr.bf16.mxu0 0
  %905 = vmatpush1.bf16.msra.mxu0 %v688
  %906 = vmatprep.subr.bf16.mxu0 0
  %907 = vmatpush1.bf16.msra.mxu0 %v689
  %908 = vmatprep.subr.bf16.mxu0 0
  %909 = vmatpush1.bf16.msra.mxu0 %v690
  %910 = vmatprep.subr.bf16.mxu0 0
  %911 = vmatpush1.bf16.msra.mxu0 %v691
  %912 = vmatprep.mubr.bf16.mxu0 %v363
  %913 = vmatmul.mubr.bf16.gmra.mrb[0].mxu0 %v362
  %v914 = vpop.f32.mrb[0].mxu0
  %v915 = vadd.f32 %v818, %v914
  %v916 = vpop.f32.mrb[0].mxu0
  %v917 = vpop.f32.mrb[0].mxu0
  %v918 = vadd.f32 %v821, %v917
  %v919 = vpop.f32.mrb[0].mxu0
  %920 = vmatprep.mubr.bf16.mxu0 %v370
  %921 = vmatmul.mubr.bf16.gmra.mrb[0].mxu0 %v369
  %v922 = vpop.f32.mrb[0].mxu0
  %v923 = vadd.f32 %v826, %v922
  %v924 = vpop.f32.mrb[0].mxu0
  %v925 = vpop.f32.mrb[0].mxu0
  %v926 = vadd.f32 %v829, %v925
  %v927 = vpop.f32.mrb[0].mxu0
  %928 = vmatprep.mubr.bf16.mxu0 %v377
  %929 = vmatmul.mubr.bf16.gmra.mrb[0].mxu0 %v376
  %v930 = vpop.f32.mrb[0].mxu0
  %v931 = vadd.f32 %v834, %v930
  %v932 = vpop.f32.mrb[0].mxu0
  %v933 = vpop.f32.mrb[0].mxu0
  %v934 = vadd.f32 %v837, %v933
  %v935 = vpop.f32.mrb[0].mxu0
  %936 = vmatprep.mubr.bf16.mxu0 %v384
  %937 = vmatmul.mubr.bf16.gmra.mrb[0].mxu0 %v383
  %v938 = vpop.f32.mrb[0].mxu0
  %v939 = vadd.f32 %v842, %v938
  %v940 = vpop.f32.mrb[0].mxu0
  %v941 = vpop.f32.mrb[0].mxu0
  %v942 = vadd.f32 %v845, %v941
  %v943 = vpop.f32.mrb[0].mxu0
  %944 = vmatprep.mubr.bf16.mxu0 %v391
  %945 = vmatmul.mubr.bf16.gmra.mrb[0].mxu0 %v390
  %v946 = vpop.f32.mrb[0].mxu0
  %v947 = vadd.f32 %v850, %v946
  %v948 = vpop.f32.mrb[0].mxu0
  %v949 = vpop.f32.mrb[0].mxu0
  %v950 = vadd.f32 %v853, %v949
  %v951 = vpop.f32.mrb[0].mxu0
  %952 = vmatprep.mubr.bf16.mxu0 %v398
  %953 = vmatmul.mubr.bf16.gmra.mrb[0].mxu0 %v397
  %v954 = vpop.f32.mrb[0].mxu0
  %v955 = vadd.f32 %v858, %v954
  %v956 = vpop.f32.mrb[0].mxu0
  %v957 = vpop.f32.mrb[0].mxu0
  %v958 = vadd.f32 %v861, %v957
  %v959 = vpop.f32.mrb[0].mxu0
  %960 = vmatprep.mubr.bf16.mxu0 %v405
  %961 = vmatmul.mubr.bf16.gmra.mrb[0].mxu0 %v404
  %v962 = vpop.f32.mrb[0].mxu0
  %v963 = vadd.f32 %v866, %v962
  %v964 = vpop.f32.mrb[0].mxu0
  %v965 = vpop.f32.mrb[0].mxu0
  %v966 = vadd.f32 %v869, %v965
  %v967 = vpop.f32.mrb[0].mxu0
  %968 = vmatprep.mubr.bf16.mxu0 %v412
  %969 = vmatmul.mubr.bf16.gmra.mrb[0].mxu0 %v411
  %v970 = vpop.f32.mrb[0].mxu0
  %v971 = vadd.f32 %v874, %v970
  %v972 = vpop.f32.mrb[0].mxu0
  %v973 = vpop.f32.mrb[0].mxu0
  %v974 = vadd.f32 %v877, %v973
  %v975 = vpop.f32.mrb[0].mxu0
  %976 = vdwg.mxu0
  %977 = vmatprep.subr.bf16.mxu0 0
  %978 = vmatpush1.bf16.msra.mxu0 %v692
  %979 = vmatprep.subr.bf16.mxu0 0
  %980 = vmatpush1.bf16.msra.mxu0 %v693
  %981 = vmatprep.subr.bf16.mxu0 0
  %982 = vmatpush1.bf16.msra.mxu0 %v694
  %983 = vmatprep.subr.bf16.mxu0 0
  %984 = vmatpush1.bf16.msra.mxu0 %v695
  %985 = vmatprep.subr.bf16.mxu0 0
  %986 = vmatpush1.bf16.msra.mxu0 %v696
  %987 = vmatprep.subr.bf16.mxu0 0
  %988 = vmatpush1.bf16.msra.mxu0 %v697
  %989 = vmatprep.subr.bf16.mxu0 0
  %990 = vmatpush1.bf16.msra.mxu0 %v698
  %991 = vmatprep.subr.bf16.mxu0 0
  %992 = vmatpush1.bf16.msra.mxu0 %v699
  %993 = vmatprep.subr.bf16.mxu0 0
  %994 = vmatpush1.bf16.msra.mxu0 %v700
  %995 = vmatprep.subr.bf16.mxu0 0
  %996 = vmatpush1.bf16.msra.mxu0 %v701
  %997 = vmatprep.subr.bf16.mxu0 0
  %998 = vmatpush1.bf16.msra.mxu0 %v702
  %999 = vmatprep.subr.bf16.mxu0 0
  %1000 = vmatpush1.bf16.msra.mxu0 %v703
  %1001 = vmatprep.subr.bf16.mxu0 0
  %1002 = vmatpush1.bf16.msra.mxu0 %v704
  %1003 = vmatprep.subr.bf16.mxu0 0
  %1004 = vmatpush1.bf16.msra.mxu0 %v705
  %1005 = vmatprep.subr.bf16.mxu0 0
  %1006 = vmatpush1.bf16.msra.mxu0 %v706
  %1007 = vmatprep.subr.bf16.mxu0 0
  %1008 = vmatpush1.bf16.msra.mxu0 %v707
  %1009 = vmatprep.mubr.bf16.mxu0 %v365
  %1010 = vmatmul.mubr.bf16.gmra.mrb[0].mxu0 %v364
  %v1011 = vpop.f32.mrb[0].mxu0
  %v1012 = vadd.f32 %v915, %v1011
  %v1013 = vpop.f32.mrb[0].mxu0
  %v1014 = vpop.f32.mrb[0].mxu0
  %v1015 = vadd.f32 %v918, %v1014
  %v1016 = vpop.f32.mrb[0].mxu0
  %1017 = vmatprep.mubr.bf16.mxu0 %v372
  %1018 = vmatmul.mubr.bf16.gmra.mrb[0].mxu0 %v371
  %v1019 = vpop.f32.mrb[0].mxu0
  %v1020 = vadd.f32 %v923, %v1019
  %v1021 = vpop.f32.mrb[0].mxu0
  %v1022 = vpop.f32.mrb[0].mxu0
  %v1023 = vadd.f32 %v926, %v1022
  %v1024 = vpop.f32.mrb[0].mxu0
  %1025 = vmatprep.mubr.bf16.mxu0 %v379
  %1026 = vmatmul.mubr.bf16.gmra.mrb[0].mxu0 %v378
  %v1027 = vpop.f32.mrb[0].mxu0
  %v1028 = vadd.f32 %v931, %v1027
  %v1029 = vpop.f32.mrb[0].mxu0
  %v1030 = vpop.f32.mrb[0].mxu0
  %v1031 = vadd.f32 %v934, %v1030
  %v1032 = vpop.f32.mrb[0].mxu0
  %1033 = vmatprep.mubr.bf16.mxu0 %v386
  %1034 = vmatmul.mubr.bf16.gmra.mrb[0].mxu0 %v385
  %v1035 = vpop.f32.mrb[0].mxu0
  %v1036 = vadd.f32 %v939, %v1035
  %v1037 = vpop.f32.mrb[0].mxu0
  %v1038 = vpop.f32.mrb[0].mxu0
  %v1039 = vadd.f32 %v942, %v1038
  %v1040 = vpop.f32.mrb[0].mxu0
  %1041 = vmatprep.mubr.bf16.mxu0 %v393
  %1042 = vmatmul.mubr.bf16.gmra.mrb[0].mxu0 %v392
  %v1043 = vpop.f32.mrb[0].mxu0
  %v1044 = vadd.f32 %v947, %v1043
  %v1045 = vpop.f32.mrb[0].mxu0
  %v1046 = vpop.f32.mrb[0].mxu0
  %v1047 = vadd.f32 %v950, %v1046
  %v1048 = vpop.f32.mrb[0].mxu0
  %1049 = vmatprep.mubr.bf16.mxu0 %v400
  %1050 = vmatmul.mubr.bf16.gmra.mrb[0].mxu0 %v399
  %v1051 = vpop.f32.mrb[0].mxu0
  %v1052 = vadd.f32 %v955, %v1051
  %v1053 = vpop.f32.mrb[0].mxu0
  %v1054 = vpop.f32.mrb[0].mxu0
  %v1055 = vadd.f32 %v958, %v1054
  %v1056 = vpop.f32.mrb[0].mxu0
  %1057 = vmatprep.mubr.bf16.mxu0 %v407
  %1058 = vmatmul.mubr.bf16.gmra.mrb[0].mxu0 %v406
  %v1059 = vpop.f32.mrb[0].mxu0
  %v1060 = vadd.f32 %v963, %v1059
  %v1061 = vpop.f32.mrb[0].mxu0
  %v1062 = vpop.f32.mrb[0].mxu0
  %v1063 = vadd.f32 %v966, %v1062
  %v1064 = vpop.f32.mrb[0].mxu0
  %1065 = vmatprep.mubr.bf16.mxu0 %v414
  %1066 = vmatmul.mubr.bf16.gmra.mrb[0].mxu0 %v413
  %v1067 = vpop.f32.mrb[0].mxu0
  %v1068 = vadd.f32 %v971, %v1067
  %v1069 = vpop.f32.mrb[0].mxu0
  %v1070 = vpop.f32.mrb[0].mxu0
  %v1071 = vadd.f32 %v974, %v1070
  %v1072 = vpop.f32.mrb[0].mxu0
  %1073 = vdwg.mxu0
  %1074 = vmatprep.subr.bf16.mxu0 0
  %1075 = vmatpush1.bf16.msra.mxu0 %v708
  %1076 = vmatprep.subr.bf16.mxu0 0
  %1077 = vmatpush1.bf16.msra.mxu0 0
  %1078 = vmatprep.subr.bf16.mxu0 0
  %1079 = vmatpush1.bf16.msra.mxu0 0
  %1080 = vmatprep.subr.bf16.mxu0 0
  %1081 = vmatpush1.bf16.msra.mxu0 0
  %1082 = vmatprep.subr.bf16.mxu0 0
  %1083 = vmatpush1.bf16.msra.mxu0 0
  %1084 = vmatprep.subr.bf16.mxu0 0
  %1085 = vmatpush1.bf16.msra.mxu0 0
  %1086 = vmatprep.subr.bf16.mxu0 0
  %1087 = vmatpush1.bf16.msra.mxu0 0
  %1088 = vmatprep.subr.bf16.mxu0 0
  %1089 = vmatpush1.bf16.msra.mxu0 0
  %1090 = vmatprep.subr.bf16.mxu0 0
  %1091 = vmatpush1.bf16.msra.mxu0 0
  %1092 = vmatprep.subr.bf16.mxu0 0
  %1093 = vmatpush1.bf16.msra.mxu0 0
  %1094 = vmatprep.subr.bf16.mxu0 0
  %1095 = vmatpush1.bf16.msra.mxu0 0
  %1096 = vmatprep.subr.bf16.mxu0 0
  %1097 = vmatpush1.bf16.msra.mxu0 0
  %1098 = vmatprep.subr.bf16.mxu0 0
  %1099 = vmatpush1.bf16.msra.mxu0 0
  %1100 = vmatprep.subr.bf16.mxu0 0
  %1101 = vmatpush1.bf16.msra.mxu0 0
  %1102 = vmatprep.subr.bf16.mxu0 0
  %1103 = vmatpush1.bf16.msra.mxu0 0
  %1104 = vmatprep.subr.bf16.mxu0 0
  %1105 = vmatpush1.bf16.msra.mxu0 0
  %1106 = vmatprep.mubr.bf16.mxu0 0
  %1107 = vmatmul.mubr.bf16.gmra.mrb[0].mxu0 %v760
  %v1108 = vpop.f32.mrb[0].mxu0
  %v1109 = vadd.f32 %v1012, %v1108
  %v1110 = vpop.f32.mrb[0].mxu0
  %v1111 = vpop.f32.mrb[0].mxu0
  %v1112 = vadd.f32 %v1015, %v1111
  %v1113 = vpop.f32.mrb[0].mxu0
  %1114 = vmatprep.mubr.bf16.mxu0 0
  %1115 = vmatmul.mubr.bf16.gmra.mrb[0].mxu0 %v763
  %v1116 = vpop.f32.mrb[0].mxu0
  %v1117 = vadd.f32 %v1020, %v1116
  %v1118 = vpop.f32.mrb[0].mxu0
  %v1119 = vpop.f32.mrb[0].mxu0
  %v1120 = vadd.f32 %v1023, %v1119
  %v1121 = vpop.f32.mrb[0].mxu0
  %1122 = vmatprep.mubr.bf16.mxu0 0
  %1123 = vmatmul.mubr.bf16.gmra.mrb[0].mxu0 %v766
  %v1124 = vpop.f32.mrb[0].mxu0
  %v1125 = vadd.f32 %v1028, %v1124
  %v1126 = vpop.f32.mrb[0].mxu0
  %v1127 = vpop.f32.mrb[0].mxu0
  %v1128 = vadd.f32 %v1031, %v1127
  %v1129 = vpop.f32.mrb[0].mxu0
  %1130 = vmatprep.mubr.bf16.mxu0 0
  %1131 = vmatmul.mubr.bf16.gmra.mrb[0].mxu0 %v769
  %v1132 = vpop.f32.mrb[0].mxu0
  %v1133 = vadd.f32 %v1036, %v1132
  %v1134 = vpop.f32.mrb[0].mxu0
  %v1135 = vpop.f32.mrb[0].mxu0
  %v1136 = vadd.f32 %v1039, %v1135
  %v1137 = vpop.f32.mrb[0].mxu0
  %1138 = vmatprep.mubr.bf16.mxu0 0
  %1139 = vmatmul.mubr.bf16.gmra.mrb[0].mxu0 %v772
  %v1140 = vpop.f32.mrb[0].mxu0
  %v1141 = vadd.f32 %v1044, %v1140
  %v1142 = vpop.f32.mrb[0].mxu0
  %v1143 = vpop.f32.mrb[0].mxu0
  %v1144 = vadd.f32 %v1047, %v1143
  %v1145 = vpop.f32.mrb[0].mxu0
  %1146 = vmatprep.mubr.bf16.mxu0 0
  %1147 = vmatmul.mubr.bf16.gmra.mrb[0].mxu0 %v775
  %v1148 = vpop.f32.mrb[0].mxu0
  %v1149 = vadd.f32 %v1052, %v1148
  %v1150 = vpop.f32.mrb[0].mxu0
  %v1151 = vpop.f32.mrb[0].mxu0
  %v1152 = vadd.f32 %v1055, %v1151
  %v1153 = vpop.f32.mrb[0].mxu0
  %1154 = vmatprep.mubr.bf16.mxu0 0
  %1155 = vmatmul.mubr.bf16.gmra.mrb[0].mxu0 %v778
  %v1156 = vpop.f32.mrb[0].mxu0
  %v1157 = vadd.f32 %v1060, %v1156
  %v1158 = vpop.f32.mrb[0].mxu0
  %v1159 = vpop.f32.mrb[0].mxu0
  %v1160 = vadd.f32 %v1063, %v1159
  %v1161 = vpop.f32.mrb[0].mxu0
  %1162 = vmatprep.mubr.bf16.mxu0 0
  %1163 = vmatmul.mubr.bf16.gmra.mrb[0].mxu0 %v781
  %v1164 = vpop.f32.mrb[0].mxu0
  %v1165 = vadd.f32 %v1068, %v1164
  %v1166 = vpop.f32.mrb[0].mxu0
  %v1167 = vpop.f32.mrb[0].mxu0
  %v1168 = vadd.f32 %v1071, %v1167
  %v1169 = vpop.f32.mrb[0].mxu0
  %1170 = vdwg.mxu0
  %v1171 = vmax.f32 %v1109, 0.0
  %v1172 = vmax.f32 %v1112, 0.0
  %v1173 = vmax.f32 %v1117, 0.0
  %v1174 = vmax.f32 %v1120, 0.0
  %v1175 = vmax.f32 %v1125, 0.0
  %v1176 = vmax.f32 %v1128, 0.0
  %v1177 = vmax.f32 %v1133, 0.0
  %v1178 = vmax.f32 %v1136, 0.0
  %v1179 = vmax.f32 %v1141, 0.0
  %v1180 = vmax.f32 %v1144, 0.0
  %v1181 = vmax.f32 %v1149, 0.0
  %v1182 = vmax.f32 %v1152, 0.0
  %v1183 = vmax.f32 %v1157, 0.0
  %v1184 = vmax.f32 %v1160, 0.0
  %v1185 = vmax.f32 %v1165, 0.0
  %v1186 = vmax.f32 %v1168, 0.0
  %v1187 = vpack.c.bf16 %v1172, %v1171
  %v1188 = vpack.c.bf16 %v1174, %v1173
  %v1189 = vpack.c.bf16 %v1176, %v1175
  %v1190 = vpack.c.bf16 %v1178, %v1177
  %v1191 = vpack.c.bf16 %v1180, %v1179
  %v1192 = vpack.c.bf16 %v1182, %v1181
  %v1193 = vpack.c.bf16 %v1184, %v1183
  %v1194 = vpack.c.bf16 %v1186, %v1185
  %v1203 = vunpack.c.l.b16 %v1187
  %v1204 = vunpack.c.h.b16 %v1187
  %v1205 = vunpack.c.l.b16 %v1188
  %v1206 = vunpack.c.h.b16 %v1188
  %v1207 = vunpack.c.l.b16 %v1189
  %v1208 = vunpack.c.h.b16 %v1189
  %v1209 = vunpack.c.l.b16 %v1190
  %v1210 = vunpack.c.h.b16 %v1190
  %v1211 = vunpack.c.l.b16 %v1191
  %v1212 = vunpack.c.h.b16 %v1191
  %v1213 = vunpack.c.l.b16 %v1192
  %v1214 = vunpack.c.h.b16 %v1192
  %v1215 = vunpack.c.l.b16 %v1193
  %v1216 = vunpack.c.h.b16 %v1193
  %v1217 = vunpack.c.l.b16 %v1194
  %v1218 = vunpack.c.h.b16 %v1194
  %v1219 = vpack.c.b16 %v1203, %v1203
  %v1220 = vpack.c.b16 %v1204, %v1204
  %v1221 = vpack.c.b16 %v1205, %v1205
  %v1222 = vpack.c.b16 %v1206, %v1206
  %v1223 = vpack.c.b16 %v1207, %v1207
  %v1224 = vpack.c.b16 %v1208, %v1208
  %v1225 = vpack.c.b16 %v1209, %v1209
  %v1226 = vpack.c.b16 %v1210, %v1210
  %v1227 = vpack.c.b16 %v1211, %v1211
  %v1228 = vpack.c.b16 %v1212, %v1212
  %v1229 = vpack.c.b16 %v1213, %v1213
  %v1230 = vpack.c.b16 %v1214, %v1214
  %v1231 = vpack.c.b16 %v1215, %v1215
  %v1232 = vpack.c.b16 %v1216, %v1216
  %v1233 = vpack.c.b16 %v1217, %v1217
  %v1234 = vpack.c.b16 %v1218, %v1218
  %vm1251 = vcmask 257024
  %1252 = vst.msk [vmem:[%s3] sm:$0xf] %vm1251, %v1219
  %1253 = vst.msk [vmem:[%s3 + $0x4] sm:$0xf] %vm1251, %v1220
  %1254 = vst.msk [vmem:[%s3 + $0x8] sm:$0xf] %vm1251, %v1221
  %1255 = vst.msk [vmem:[%s3 + $0xc] sm:$0xf] %vm1251, %v1222
  %1256 = vst.msk [vmem:[%s3 + $0x10] sm:$0xf] %vm1251, %v1223
  %1257 = vst.msk [vmem:[%s3 + $0x14] sm:$0xf] %vm1251, %v1224
  %1258 = vst.msk [vmem:[%s3 + $0x18] sm:$0xf] %vm1251, %v1225
  %1259 = vst.msk [vmem:[%s3 + $0x1c] sm:$0xf] %vm1251, %v1226
  %1260 = vst.msk [vmem:[%s3 + $0x20] sm:$0xf] %vm1251, %v1227
  %1261 = vst.msk [vmem:[%s3 + $0x24] sm:$0xf] %vm1251, %v1228
  %1262 = vst.msk [vmem:[%s3 + $0x28] sm:$0xf] %vm1251, %v1229
  %1263 = vst.msk [vmem:[%s3 + $0x2c] sm:$0xf] %vm1251, %v1230
  %1264 = vst.msk [vmem:[%s3 + $0x30] sm:$0xf] %vm1251, %v1231
  %1265 = vst.msk [vmem:[%s3 + $0x34] sm:$0xf] %vm1251, %v1232
  %1266 = vst.msk [vmem:[%s3 + $0x38] sm:$0xf] %vm1251, %v1233
  %1267 = vst.msk [vmem:[%s3 + $0x3c] sm:$0xf] %vm1251, %v1234
  // Predicated region
  $region14: #{crowd_counter_forward.12} parent=0 // pred_check
    _
  $region15: #{crowd_counter_forward.12} parent=0 // pred_check_branch
    %1269 = sbr.rel (0) target = $region17
  $region16: #{crowd_counter_forward.12} parent=0 // pred_region
    _
  $region17: #{crowd_counter_forward.12} parent=0 // pred_fallthru
    _
  // Predicated region
  $region18: #{crowd_counter_forward.12} parent=0 // pred_check
    _
  $region19: #{crowd_counter_forward.12} parent=0 // pred_check_branch
    %1271 = sbr.rel (0) target = $region21
  $region20: #{crowd_counter_forward.12} parent=0 // pred_region
    _
  $region21: #{crowd_counter_forward.12} parent=0 // pred_fallthru
    _

// kernel: crowd_counter_forward.13
$region0: #{crowd_counter_forward.13}
  #allocation0 [shape = 'u32[]', space=smem, size = 0x4, offset = 0x4, fixed_abs, tag = 'smem constant byte address 0x4 - core index']
  #allocation1 [shape = 'u32[144,128]{1,0:T(1,128)}', space=vmem, size = 0x12000, scoped, tag = 'internal scratch']
  %s0 = inlined_call_operand.vmem [shape: bf16[32,1568], index: 0, kind: input, shape index: {}]
  %s1 = inlined_call_operand.vmem [shape: bf16[1568,32], index: 1, kind: input, shape index: {}]
  %s2 = inlined_call_operand.vmem [shape: f32[1,32], index: 2, kind: input, shape index: {}]
  %s3 = inlined_call_operand.vmem [shape: bf16[32,32], index: 3, kind: output, shape index: {}]
  %s4 = sld [smem:[#allocation0]]
  $region22: #{crowd_counter_forward.13} parent=0
    _
  %s6 = ssub.s32 1, %s4
  %s7 = scalar_select 0, %s6, %s4
  // Predicated region
  $region2: #{crowd_counter_forward.13} parent=0 // pred_check
    _
  $region3: #{crowd_counter_forward.13} parent=0 // pred_check_branch
    %9 = sbr.rel (0) target = $region5
  $region4: #{crowd_counter_forward.13} parent=0 // pred_region
    _
  $region5: #{crowd_counter_forward.13} parent=0 // pred_fallthru
    _
  // Predicated region
  $region6: #{crowd_counter_forward.13} parent=0 // pred_check
    _
  $region7: #{crowd_counter_forward.13} parent=0 // pred_check_branch
    %11 = sbr.rel (0) target = $region9
  $region8: #{crowd_counter_forward.13} parent=0 // pred_region
    _
  $region9: #{crowd_counter_forward.13} parent=0 // pred_fallthru
    _
  // Predicated region
  $region10: #{crowd_counter_forward.13} parent=0 // pred_check
    _
  $region11: #{crowd_counter_forward.13} parent=0 // pred_check_branch
    %13 = sbr.rel (0) target = $region13
  $region12: #{crowd_counter_forward.13} parent=0 // pred_region
    _
  $region13: #{crowd_counter_forward.13} parent=0 // pred_fallthru
    _
  %v15 = vld [vmem:[%s0] sm:$0xff]
  %v16 = vld [vmem:[%s0 + $0x8] sm:$0xff]
  %v17 = vld [vmem:[%s0 + $0x10] sm:$0xff]
  %v18 = vld [vmem:[%s0 + $0x18] sm:$0xff]
  %v19 = vld [vmem:[%s0 + $0x20] sm:$0xff]
  %v20 = vld [vmem:[%s0 + $0x28] sm:$0xff]
  %v21 = vld [vmem:[%s0 + $0x30] sm:$0xf]
  %v22 = vld [vmem:[%s0 + $0x34] sm:$0xff]
  %v23 = vld [vmem:[%s0 + $0x3c] sm:$0xff]
  %v24 = vld [vmem:[%s0 + $0x44] sm:$0xff]
  %v25 = vld [vmem:[%s0 + $0x4c] sm:$0xff]
  %v26 = vld [vmem:[%s0 + $0x54] sm:$0xff]
  %v27 = vld [vmem:[%s0 + $0x5c] sm:$0xff]
  %v28 = vld [vmem:[%s0 + $0x64] sm:$0xf]
  %v29 = vld [vmem:[%s0 + $0x68] sm:$0xff]
  %v30 = vld [vmem:[%s0 + $0x70] sm:$0xff]
  %v31 = vld [vmem:[%s0 + $0x78] sm:$0xff]
  %v32 = vld [vmem:[%s0 + $0x80] sm:$0xff]
  %v33 = vld [vmem:[%s0 + $0x88] sm:$0xff]
  %v34 = vld [vmem:[%s0 + $0x90] sm:$0xff]
  %v35 = vld [vmem:[%s0 + $0x98] sm:$0xf]
  %v36 = vld [vmem:[%s0 + $0x9c] sm:$0xff]
  %v37 = vld [vmem:[%s0 + $0xa4] sm:$0xff]
  %v38 = vld [vmem:[%s0 + $0xac] sm:$0xff]
  %v39 = vld [vmem:[%s0 + $0xb4] sm:$0xff]
  %v40 = vld [vmem:[%s0 + $0xbc] sm:$0xff]
  %v41 = vld [vmem:[%s0 + $0xc4] sm:$0xff]
  %v42 = vld [vmem:[%s0 + $0xcc] sm:$0xf]
  %v43 = vld [vmem:[%s1] sm:$0xf]
  %v44 = vld [vmem:[%s1 + $0x4] sm:$0xf]
  %v45 = vld [vmem:[%s1 + $0x8] sm:$0xf]
  %v46 = vld [vmem:[%s1 + $0xc] sm:$0xf]
  %v47 = vld [vmem:[%s1 + $0x10] sm:$0xf]
  %v48 = vld [vmem:[%s1 + $0x14] sm:$0xf]
  %v49 = vld [vmem:[%s1 + $0x18] sm:$0xf]
  %v50 = vld [vmem:[%s1 + $0x1c] sm:$0xf]
  %v51 = vld [vmem:[%s1 + $0x20] sm:$0xf]
  %v52 = vld [vmem:[%s1 + $0x24] sm:$0xf]
  %v53 = vld [vmem:[%s1 + $0x28] sm:$0xf]
  %v54 = vld [vmem:[%s1 + $0x2c] sm:$0xf]
  %v55 = vld [vmem:[%s1 + $0x30] sm:$0xf]
  %v56 = vld [vmem:[%s1 + $0x34] sm:$0xf]
  %v57 = vld [vmem:[%s1 + $0x38] sm:$0xf]
  %v58 = vld [vmem:[%s1 + $0x3c] sm:$0xf]
  %v59 = vld [vmem:[%s1 + $0x40] sm:$0xf]
  %v60 = vld [vmem:[%s1 + $0x44] sm:$0xf]
  %v61 = vld [vmem:[%s1 + $0x48] sm:$0xf]
  %v62 = vld [vmem:[%s1 + $0x4c] sm:$0xf]
  %v63 = vld [vmem:[%s1 + $0x50] sm:$0xf]
  %v64 = vld [vmem:[%s1 + $0x54] sm:$0xf]
  %v65 = vld [vmem:[%s1 + $0x58] sm:$0xf]
  %v66 = vld [vmem:[%s1 + $0x5c] sm:$0xf]
  %v67 = vld [vmem:[%s1 + $0x60] sm:$0xf]
  %v68 = vld [vmem:[%s1 + $0x64] sm:$0xf]
  %v69 = vld [vmem:[%s1 + $0x68] sm:$0xf]
  %v70 = vld [vmem:[%s1 + $0x6c] sm:$0xf]
  %v71 = vld [vmem:[%s1 + $0x70] sm:$0xf]
  %v72 = vld [vmem:[%s1 + $0x74] sm:$0xf]
  %v73 = vld [vmem:[%s1 + $0x78] sm:$0xf]
  %v74 = vld [vmem:[%s1 + $0x7c] sm:$0xf]
  %v75 = vld [vmem:[%s1 + $0x80] sm:$0xf]
  %v76 = vld [vmem:[%s1 + $0x84] sm:$0xf]
  %v77 = vld [vmem:[%s1 + $0x88] sm:$0xf]
  %v78 = vld [vmem:[%s1 + $0x8c] sm:$0xf]
  %v79 = vld [vmem:[%s1 + $0x90] sm:$0xf]
  %v80 = vld [vmem:[%s1 + $0x94] sm:$0xf]
  %v81 = vld [vmem:[%s1 + $0x98] sm:$0xf]
  %v82 = vld [vmem:[%s1 + $0x9c] sm:$0xf]
  %v83 = vld [vmem:[%s1 + $0xa0] sm:$0xf]
  %v84 = vld [vmem:[%s1 + $0xa4] sm:$0xf]
  %v85 = vld [vmem:[%s1 + $0xa8] sm:$0xf]
  %v86 = vld [vmem:[%s1 + $0xac] sm:$0xf]
  %v87 = vld [vmem:[%s1 + $0xb0] sm:$0xf]
  %v88 = vld [vmem:[%s1 + $0xb4] sm:$0xf]
  %v89 = vld [vmem:[%s1 + $0xb8] sm:$0xf]
  %v90 = vld [vmem:[%s1 + $0xbc] sm:$0xf]
  %v91 = vld [vmem:[%s1 + $0xc0] sm:$0xf]
  %v92 = vld [vmem:[%s1 + $0xc4] sm:$0xf]
  %v93 = vld [vmem:[%s1 + $0xc8] sm:$0xf]
  %v94 = vld [vmem:[%s1 + $0xcc] sm:$0xf]
  %v95 = vld [vmem:[%s1 + $0xd0] sm:$0xf]
  %v96 = vld [vmem:[%s1 + $0xd4] sm:$0xf]
  %v97 = vld [vmem:[%s1 + $0xd8] sm:$0xf]
  %v98 = vld [vmem:[%s1 + $0xdc] sm:$0xf]
  %v99 = vld [vmem:[%s1 + $0xe0] sm:$0xf]
  %v100 = vld [vmem:[%s1 + $0xe4] sm:$0xf]
  %v101 = vld [vmem:[%s1 + $0xe8] sm:$0xf]
  %v102 = vld [vmem:[%s1 + $0xec] sm:$0xf]
  %v103 = vld [vmem:[%s1 + $0xf0] sm:$0xf]
  %v104 = vld [vmem:[%s1 + $0xf4] sm:$0xf]
  %v105 = vld [vmem:[%s1 + $0xf8] sm:$0xf]
  %v106 = vld [vmem:[%s1 + $0xfc] sm:$0xf]
  %v107 = vld [vmem:[%s1 + $0x100] sm:$0xf]
  %v108 = vld [vmem:[%s1 + $0x104] sm:$0xf]
  %v109 = vld [vmem:[%s1 + $0x108] sm:$0xf]
  %v110 = vld [vmem:[%s1 + $0x10c] sm:$0xf]
  %v111 = vld [vmem:[%s1 + $0x110] sm:$0xf]
  %v112 = vld [vmem:[%s1 + $0x114] sm:$0xf]
  %v113 = vld [vmem:[%s1 + $0x118] sm:$0xf]
  %v114 = vld [vmem:[%s1 + $0x11c] sm:$0xf]
  %v115 = vld [vmem:[%s1 + $0x120] sm:$0xf]
  %v116 = vld [vmem:[%s1 + $0x124] sm:$0xf]
  %v117 = vld [vmem:[%s1 + $0x128] sm:$0xf]
  %v118 = vld [vmem:[%s1 + $0x12c] sm:$0xf]
  %v119 = vld [vmem:[%s1 + $0x130] sm:$0xf]
  %v120 = vld [vmem:[%s1 + $0x134] sm:$0xf]
  %v121 = vld [vmem:[%s1 + $0x138] sm:$0xf]
  %v122 = vld [vmem:[%s1 + $0x13c] sm:$0xf]
  %v123 = vld [vmem:[%s1 + $0x140] sm:$0xf]
  %v124 = vld [vmem:[%s1 + $0x144] sm:$0xf]
  %v125 = vld [vmem:[%s1 + $0x148] sm:$0xf]
  %v126 = vld [vmem:[%s1 + $0x14c] sm:$0xf]
  %v127 = vld [vmem:[%s1 + $0x150] sm:$0xf]
  %v128 = vld [vmem:[%s1 + $0x154] sm:$0xf]
  %v129 = vld [vmem:[%s1 + $0x158] sm:$0xf]
  %v130 = vld [vmem:[%s1 + $0x15c] sm:$0xf]
  %v131 = vld [vmem:[%s1 + $0x160] sm:$0xf]
  %v132 = vld [vmem:[%s1 + $0x164] sm:$0xf]
  %v133 = vld [vmem:[%s1 + $0x168] sm:$0xf]
  %v134 = vld [vmem:[%s1 + $0x16c] sm:$0xf]
  %v135 = vld [vmem:[%s1 + $0x170] sm:$0xf]
  %v136 = vld [vmem:[%s1 + $0x174] sm:$0xf]
  %v137 = vld [vmem:[%s1 + $0x178] sm:$0xf]
  %v138 = vld [vmem:[%s1 + $0x17c] sm:$0xf]
  %v139 = vld [vmem:[%s1 + $0x180] sm:$0xf]
  %v140 = vld [vmem:[%s1 + $0x184] sm:$0xf]
  %v141 = vld [vmem:[%s1 + $0x188] sm:$0xf]
  %v142 = vld [vmem:[%s1 + $0x18c] sm:$0xf]
  %v143 = vld [vmem:[%s1 + $0x190] sm:$0xf]
  %v144 = vld [vmem:[%s1 + $0x194] sm:$0xf]
  %v145 = vld [vmem:[%s1 + $0x198] sm:$0xf]
  %v146 = vld [vmem:[%s1 + $0x19c] sm:$0xf]
  %v147 = vld [vmem:[%s1 + $0x1a0] sm:$0xf]
  %v148 = vld [vmem:[%s1 + $0x1a4] sm:$0xf]
  %v149 = vld [vmem:[%s1 + $0x1a8] sm:$0xf]
  %v150 = vld [vmem:[%s1 + $0x1ac] sm:$0xf]
  %v151 = vld [vmem:[%s1 + $0x1b0] sm:$0xf]
  %v152 = vld [vmem:[%s1 + $0x1b4] sm:$0xf]
  %v153 = vld [vmem:[%s1 + $0x1b8] sm:$0xf]
  %v154 = vld [vmem:[%s1 + $0x1bc] sm:$0xf]
  %v155 = vld [vmem:[%s1 + $0x1c0] sm:$0xf]
  %v156 = vld [vmem:[%s1 + $0x1c4] sm:$0xf]
  %v157 = vld [vmem:[%s1 + $0x1c8] sm:$0xf]
  %v158 = vld [vmem:[%s1 + $0x1cc] sm:$0xf]
  %v159 = vld [vmem:[%s1 + $0x1d0] sm:$0xf]
  %v160 = vld [vmem:[%s1 + $0x1d4] sm:$0xf]
  %v161 = vld [vmem:[%s1 + $0x1d8] sm:$0xf]
  %v162 = vld [vmem:[%s1 + $0x1dc] sm:$0xf]
  %v163 = vld [vmem:[%s1 + $0x1e0] sm:$0xf]
  %v164 = vld [vmem:[%s1 + $0x1e4] sm:$0xf]
  %v165 = vld [vmem:[%s1 + $0x1e8] sm:$0xf]
  %v166 = vld [vmem:[%s1 + $0x1ec] sm:$0xf]
  %v167 = vld [vmem:[%s1 + $0x1f0] sm:$0xf]
  %v168 = vld [vmem:[%s1 + $0x1f4] sm:$0xf]
  %v169 = vld [vmem:[%s1 + $0x1f8] sm:$0xf]
  %v170 = vld [vmem:[%s1 + $0x1fc] sm:$0xf]
  %v171 = vld [vmem:[%s1 + $0x200] sm:$0xf]
  %v172 = vld [vmem:[%s1 + $0x204] sm:$0xf]
  %v173 = vld [vmem:[%s1 + $0x208] sm:$0xf]
  %v174 = vld [vmem:[%s1 + $0x20c] sm:$0xf]
  %v175 = vld [vmem:[%s1 + $0x210] sm:$0xf]
  %v176 = vld [vmem:[%s1 + $0x214] sm:$0xf]
  %v177 = vld [vmem:[%s1 + $0x218] sm:$0xf]
  %v178 = vld [vmem:[%s1 + $0x21c] sm:$0xf]
  %v179 = vld [vmem:[%s1 + $0x220] sm:$0xf]
  %v180 = vld [vmem:[%s1 + $0x224] sm:$0xf]
  %v181 = vld [vmem:[%s1 + $0x228] sm:$0xf]
  %v182 = vld [vmem:[%s1 + $0x22c] sm:$0xf]
  %v183 = vld [vmem:[%s1 + $0x230] sm:$0xf]
  %v184 = vld [vmem:[%s1 + $0x234] sm:$0xf]
  %v185 = vld [vmem:[%s1 + $0x238] sm:$0xf]
  %v186 = vld [vmem:[%s1 + $0x23c] sm:$0xf]
  %v187 = vld [vmem:[%s1 + $0x240] sm:$0xf]
  %v188 = vld [vmem:[%s1 + $0x244] sm:$0xf]
  %v189 = vld [vmem:[%s1 + $0x248] sm:$0xf]
  %v190 = vld [vmem:[%s1 + $0x24c] sm:$0xf]
  %v191 = vld [vmem:[%s1 + $0x250] sm:$0xf]
  %v192 = vld [vmem:[%s1 + $0x254] sm:$0xf]
  %v193 = vld [vmem:[%s1 + $0x258] sm:$0xf]
  %v194 = vld [vmem:[%s1 + $0x25c] sm:$0xf]
  %v195 = vld [vmem:[%s1 + $0x260] sm:$0xf]
  %v196 = vld [vmem:[%s1 + $0x264] sm:$0xf]
  %v197 = vld [vmem:[%s1 + $0x268] sm:$0xf]
  %v198 = vld [vmem:[%s1 + $0x26c] sm:$0xf]
  %v199 = vld [vmem:[%s1 + $0x270] sm:$0xf]
  %v200 = vld [vmem:[%s1 + $0x274] sm:$0xf]
  %v201 = vld [vmem:[%s1 + $0x278] sm:$0xf]
  %v202 = vld [vmem:[%s1 + $0x27c] sm:$0xf]
  %v203 = vld [vmem:[%s1 + $0x280] sm:$0xf]
  %v204 = vld [vmem:[%s1 + $0x284] sm:$0xf]
  %v205 = vld [vmem:[%s1 + $0x288] sm:$0xf]
  %v206 = vld [vmem:[%s1 + $0x28c] sm:$0xf]
  %v207 = vld [vmem:[%s1 + $0x290] sm:$0xf]
  %v208 = vld [vmem:[%s1 + $0x294] sm:$0xf]
  %v209 = vld [vmem:[%s1 + $0x298] sm:$0xf]
  %v210 = vld [vmem:[%s1 + $0x29c] sm:$0xf]
  %v211 = vld [vmem:[%s1 + $0x2a0] sm:$0xf]
  %v212 = vld [vmem:[%s1 + $0x2a4] sm:$0xf]
  %v213 = vld [vmem:[%s1 + $0x2a8] sm:$0xf]
  %v214 = vld [vmem:[%s1 + $0x2ac] sm:$0xf]
  %v215 = vld [vmem:[%s1 + $0x2b0] sm:$0xf]
  %v216 = vld [vmem:[%s1 + $0x2b4] sm:$0xf]
  %v217 = vld [vmem:[%s1 + $0x2b8] sm:$0xf]
  %v218 = vld [vmem:[%s1 + $0x2bc] sm:$0xf]
  %v219 = vld [vmem:[%s1 + $0x2c0] sm:$0xf]
  %v220 = vld [vmem:[%s1 + $0x2c4] sm:$0xf]
  %v221 = vld [vmem:[%s1 + $0x2c8] sm:$0xf]
  %v222 = vld [vmem:[%s1 + $0x2cc] sm:$0xf]
  %v223 = vld [vmem:[%s1 + $0x2d0] sm:$0xf]
  %v224 = vld [vmem:[%s1 + $0x2d4] sm:$0xf]
  %v225 = vld [vmem:[%s1 + $0x2d8] sm:$0xf]
  %v226 = vld [vmem:[%s1 + $0x2dc] sm:$0xf]
  %v227 = vld [vmem:[%s1 + $0x2e0] sm:$0xf]
  %v228 = vld [vmem:[%s1 + $0x2e4] sm:$0xf]
  %v229 = vld [vmem:[%s1 + $0x2e8] sm:$0xf]
  %v230 = vld [vmem:[%s1 + $0x2ec] sm:$0xf]
  %v231 = vld [vmem:[%s1 + $0x2f0] sm:$0xf]
  %v232 = vld [vmem:[%s1 + $0x2f4] sm:$0xf]
  %v233 = vld [vmem:[%s1 + $0x2f8] sm:$0xf]
  %v234 = vld [vmem:[%s1 + $0x2fc] sm:$0xf]
  %v235 = vld [vmem:[%s1 + $0x300] sm:$0xf]
  %v236 = vld [vmem:[%s1 + $0x304] sm:$0xf]
  %v237 = vld [vmem:[%s1 + $0x308] sm:$0xf]
  %v238 = vld [vmem:[%s1 + $0x30c] sm:$0xf]
  %v239 = vld [vmem:[%s2] sm:$0x1]
  %v241 = vlaneseq
  %v242 = vshrl.u32 %v241, 7
  %v243 = vsub.s32 0, %v242
  %v244 = vrot.slane %v239, %v243
  %v274 = vunpack.c.l.b16 %v15
  %v275 = vunpack.c.h.b16 %v15
  %v276 = vunpack.c.l.b16 %v16
  %v277 = vunpack.c.h.b16 %v16
  %v278 = vunpack.c.l.b16 %v17
  %v279 = vunpack.c.h.b16 %v17
  %v280 = vunpack.c.l.b16 %v18
  %v281 = vunpack.c.h.b16 %v18
  %v282 = vunpack.c.l.b16 %v19
  %v283 = vunpack.c.h.b16 %v19
  %v284 = vunpack.c.l.b16 %v20
  %v285 = vunpack.c.h.b16 %v20
  %v286 = vunpack.c.l.b16 %v21
  %v287 = vunpack.c.l.b16 %v22
  %v288 = vunpack.c.h.b16 %v22
  %v289 = vunpack.c.l.b16 %v23
  %v290 = vunpack.c.h.b16 %v23
  %v291 = vunpack.c.l.b16 %v24
  %v292 = vunpack.c.h.b16 %v24
  %v293 = vunpack.c.l.b16 %v25
  %v294 = vunpack.c.h.b16 %v25
  %v295 = vunpack.c.l.b16 %v26
  %v296 = vunpack.c.h.b16 %v26
  %v297 = vunpack.c.l.b16 %v27
  %v298 = vunpack.c.h.b16 %v27
  %v299 = vunpack.c.l.b16 %v28
  %v300 = vunpack.c.l.b16 %v29
  %v301 = vunpack.c.h.b16 %v29
  %v302 = vunpack.c.l.b16 %v30
  %v303 = vunpack.c.h.b16 %v30
  %v304 = vunpack.c.l.b16 %v31
  %v305 = vunpack.c.h.b16 %v31
  %v306 = vunpack.c.l.b16 %v32
  %v307 = vunpack.c.h.b16 %v32
  %v308 = vunpack.c.l.b16 %v33
  %v309 = vunpack.c.h.b16 %v33
  %v310 = vunpack.c.l.b16 %v34
  %v311 = vunpack.c.h.b16 %v34
  %v312 = vunpack.c.l.b16 %v35
  %v313 = vunpack.c.l.b16 %v36
  %v314 = vunpack.c.h.b16 %v36
  %v315 = vunpack.c.l.b16 %v37
  %v316 = vunpack.c.h.b16 %v37
  %v317 = vunpack.c.l.b16 %v38
  %v318 = vunpack.c.h.b16 %v38
  %v319 = vunpack.c.l.b16 %v39
  %v320 = vunpack.c.h.b16 %v39
  %v321 = vunpack.c.l.b16 %v40
  %v322 = vunpack.c.h.b16 %v40
  %v323 = vunpack.c.l.b16 %v41
  %v324 = vunpack.c.h.b16 %v41
  %v325 = vunpack.c.l.b16 %v42
  %v326 = vpack.c.b16 %v287, %v274
  %v327 = vpack.c.b16 %v288, %v275
  %v328 = vpack.c.b16 %v289, %v276
  %v329 = vpack.c.b16 %v290, %v277
  %v330 = vpack.c.b16 %v291, %v278
  %v331 = vpack.c.b16 %v292, %v279
  %v332 = vpack.c.b16 %v293, %v280
  %v333 = vpack.c.b16 %v294, %v281
  %v334 = vpack.c.b16 %v295, %v282
  %v335 = vpack.c.b16 %v296, %v283
  %v336 = vpack.c.b16 %v297, %v284
  %v337 = vpack.c.b16 %v298, %v285
  %v338 = vpack.c.b16 %v299, %v286
  %v339 = vpack.c.b16 %v313, %v300
  %v340 = vpack.c.b16 %v314, %v301
  %v341 = vpack.c.b16 %v315, %v302
  %v342 = vpack.c.b16 %v316, %v303
  %v343 = vpack.c.b16 %v317, %v304
  %v344 = vpack.c.b16 %v318, %v305
  %v345 = vpack.c.b16 %v319, %v306
  %v346 = vpack.c.b16 %v320, %v307
  %v347 = vpack.c.b16 %v321, %v308
  %v348 = vpack.c.b16 %v322, %v309
  %v349 = vpack.c.b16 %v323, %v310
  %v350 = vpack.c.b16 %v324, %v311
  %v351 = vpack.c.b16 %v325, %v312
  %v572 = vunpack.c.l.b16 %v43
  %v573 = vunpack.c.l.b16 %v44
  %v574 = vunpack.c.l.b16 %v45
  %v575 = vunpack.c.l.b16 %v46
  %v576 = vunpack.c.l.b16 %v47
  %v577 = vunpack.c.l.b16 %v48
  %v578 = vunpack.c.l.b16 %v49
  %v579 = vunpack.c.l.b16 %v50
  %v580 = vunpack.c.l.b16 %v51
  %v581 = vunpack.c.l.b16 %v52
  %v582 = vunpack.c.l.b16 %v53
  %v583 = vunpack.c.l.b16 %v54
  %v584 = vunpack.c.l.b16 %v55
  %v585 = vunpack.c.l.b16 %v56
  %v586 = vunpack.c.l.b16 %v57
  %v587 = vunpack.c.l.b16 %v58
  %v588 = vunpack.c.l.b16 %v59
  %v589 = vunpack.c.l.b16 %v60
  %v590 = vunpack.c.l.b16 %v61
  %v591 = vunpack.c.l.b16 %v62
  %v592 = vunpack.c.l.b16 %v63
  %v593 = vunpack.c.l.b16 %v64
  %v594 = vunpack.c.l.b16 %v65
  %v595 = vunpack.c.l.b16 %v66
  %v596 = vunpack.c.l.b16 %v67
  %v597 = vunpack.c.l.b16 %v68
  %v598 = vunpack.c.l.b16 %v69
  %v599 = vunpack.c.l.b16 %v70
  %v600 = vunpack.c.l.b16 %v71
  %v601 = vunpack.c.l.b16 %v72
  %v602 = vunpack.c.l.b16 %v73
  %v603 = vunpack.c.l.b16 %v74
  %v604 = vunpack.c.l.b16 %v75
  %v605 = vunpack.c.l.b16 %v76
  %v606 = vunpack.c.l.b16 %v77
  %v607 = vunpack.c.l.b16 %v78
  %v608 = vunpack.c.l.b16 %v79
  %v609 = vunpack.c.l.b16 %v80
  %v610 = vunpack.c.l.b16 %v81
  %v611 = vunpack.c.l.b16 %v82
  %v612 = vunpack.c.l.b16 %v83
  %v613 = vunpack.c.l.b16 %v84
  %v614 = vunpack.c.l.b16 %v85
  %v615 = vunpack.c.l.b16 %v86
  %v616 = vunpack.c.l.b16 %v87
  %v617 = vunpack.c.l.b16 %v88
  %v618 = vunpack.c.l.b16 %v89
  %v619 = vunpack.c.l.b16 %v90
  %v620 = vunpack.c.l.b16 %v91
  %v621 = vunpack.c.l.b16 %v92
  %v622 = vunpack.c.l.b16 %v93
  %v623 = vunpack.c.l.b16 %v94
  %v624 = vunpack.c.l.b16 %v95
  %v625 = vunpack.c.l.b16 %v96
  %v626 = vunpack.c.l.b16 %v97
  %v627 = vunpack.c.l.b16 %v98
  %v628 = vunpack.c.l.b16 %v99
  %v629 = vunpack.c.l.b16 %v100
  %v630 = vunpack.c.l.b16 %v101
  %v631 = vunpack.c.l.b16 %v102
  %v632 = vunpack.c.l.b16 %v103
  %v633 = vunpack.c.l.b16 %v104
  %v634 = vunpack.c.l.b16 %v105
  %v635 = vunpack.c.l.b16 %v106
  %v636 = vunpack.c.l.b16 %v107
  %v637 = vunpack.c.l.b16 %v108
  %v638 = vunpack.c.l.b16 %v109
  %v639 = vunpack.c.l.b16 %v110
  %v640 = vunpack.c.l.b16 %v111
  %v641 = vunpack.c.l.b16 %v112
  %v642 = vunpack.c.l.b16 %v113
  %v643 = vunpack.c.l.b16 %v114
  %v644 = vunpack.c.l.b16 %v115
  %v645 = vunpack.c.l.b16 %v116
  %v646 = vunpack.c.l.b16 %v117
  %v647 = vunpack.c.l.b16 %v118
  %v648 = vunpack.c.l.b16 %v119
  %v649 = vunpack.c.l.b16 %v120
  %v650 = vunpack.c.l.b16 %v121
  %v651 = vunpack.c.l.b16 %v122
  %v652 = vunpack.c.l.b16 %v123
  %v653 = vunpack.c.l.b16 %v124
  %v654 = vunpack.c.l.b16 %v125
  %v655 = vunpack.c.l.b16 %v126
  %v656 = vunpack.c.l.b16 %v127
  %v657 = vunpack.c.l.b16 %v128
  %v658 = vunpack.c.l.b16 %v129
  %v659 = vunpack.c.l.b16 %v130
  %v660 = vunpack.c.l.b16 %v131
  %v661 = vunpack.c.l.b16 %v132
  %v662 = vunpack.c.l.b16 %v133
  %v663 = vunpack.c.l.b16 %v134
  %v664 = vunpack.c.l.b16 %v135
  %v665 = vunpack.c.l.b16 %v136
  %v666 = vunpack.c.l.b16 %v137
  %v667 = vunpack.c.l.b16 %v138
  %v668 = vunpack.c.l.b16 %v139
  %v669 = vunpack.c.l.b16 %v140
  %v670 = vunpack.c.l.b16 %v141
  %v671 = vunpack.c.l.b16 %v142
  %v672 = vunpack.c.l.b16 %v143
  %v673 = vunpack.c.l.b16 %v144
  %v674 = vunpack.c.l.b16 %v145
  %v675 = vunpack.c.l.b16 %v146
  %v676 = vunpack.c.l.b16 %v147
  %v677 = vunpack.c.l.b16 %v148
  %v678 = vunpack.c.l.b16 %v149
  %v679 = vunpack.c.l.b16 %v150
  %v680 = vunpack.c.l.b16 %v151
  %v681 = vunpack.c.l.b16 %v152
  %v682 = vunpack.c.l.b16 %v153
  %v683 = vunpack.c.l.b16 %v154
  %v684 = vunpack.c.l.b16 %v155
  %v685 = vunpack.c.l.b16 %v156
  %v686 = vunpack.c.l.b16 %v157
  %v687 = vunpack.c.l.b16 %v158
  %v688 = vunpack.c.l.b16 %v159
  %v689 = vunpack.c.l.b16 %v160
  %v690 = vunpack.c.l.b16 %v161
  %v691 = vunpack.c.l.b16 %v162
  %v692 = vunpack.c.l.b16 %v163
  %v693 = vunpack.c.l.b16 %v164
  %v694 = vunpack.c.l.b16 %v165
  %v695 = vunpack.c.l.b16 %v166
  %v696 = vunpack.c.l.b16 %v167
  %v697 = vunpack.c.l.b16 %v168
  %v698 = vunpack.c.l.b16 %v169
  %v699 = vunpack.c.l.b16 %v170
  %v700 = vunpack.c.l.b16 %v171
  %v701 = vunpack.c.l.b16 %v172
  %v702 = vunpack.c.l.b16 %v173
  %v703 = vunpack.c.l.b16 %v174
  %v704 = vunpack.c.l.b16 %v175
  %v705 = vunpack.c.l.b16 %v176
  %v706 = vunpack.c.l.b16 %v177
  %v707 = vunpack.c.l.b16 %v178
  %v708 = vunpack.c.l.b16 %v179
  %v709 = vunpack.c.l.b16 %v180
  %v710 = vunpack.c.l.b16 %v181
  %v711 = vunpack.c.l.b16 %v182
  %v712 = vunpack.c.l.b16 %v183
  %v713 = vunpack.c.l.b16 %v184
  %v714 = vunpack.c.l.b16 %v185
  %v715 = vunpack.c.l.b16 %v186
  %v716 = vunpack.c.l.b16 %v187
  %v717 = vunpack.c.l.b16 %v188
  %v718 = vunpack.c.l.b16 %v189
  %v719 = vunpack.c.l.b16 %v190
  %v720 = vunpack.c.l.b16 %v191
  %v721 = vunpack.c.l.b16 %v192
  %v722 = vunpack.c.l.b16 %v193
  %v723 = vunpack.c.l.b16 %v194
  %v724 = vunpack.c.l.b16 %v195
  %v725 = vunpack.c.l.b16 %v196
  %v726 = vunpack.c.l.b16 %v197
  %v727 = vunpack.c.l.b16 %v198
  %v728 = vunpack.c.l.b16 %v199
  %v729 = vunpack.c.l.b16 %v200
  %v730 = vunpack.c.l.b16 %v201
  %v731 = vunpack.c.l.b16 %v202
  %v732 = vunpack.c.l.b16 %v203
  %v733 = vunpack.c.l.b16 %v204
  %v734 = vunpack.c.l.b16 %v205
  %v735 = vunpack.c.l.b16 %v206
  %v736 = vunpack.c.l.b16 %v207
  %v737 = vunpack.c.l.b16 %v208
  %v738 = vunpack.c.l.b16 %v209
  %v739 = vunpack.c.l.b16 %v210
  %v740 = vunpack.c.l.b16 %v211
  %v741 = vunpack.c.l.b16 %v212
  %v742 = vunpack.c.l.b16 %v213
  %v743 = vunpack.c.l.b16 %v214
  %v744 = vunpack.c.l.b16 %v215
  %v745 = vunpack.c.l.b16 %v216
  %v746 = vunpack.c.l.b16 %v217
  %v747 = vunpack.c.l.b16 %v218
  %v748 = vunpack.c.l.b16 %v219
  %v749 = vunpack.c.l.b16 %v220
  %v750 = vunpack.c.l.b16 %v221
  %v751 = vunpack.c.l.b16 %v222
  %v752 = vunpack.c.l.b16 %v223
  %v753 = vunpack.c.l.b16 %v224
  %v754 = vunpack.c.l.b16 %v225
  %v755 = vunpack.c.l.b16 %v226
  %v756 = vunpack.c.l.b16 %v227
  %v757 = vunpack.c.l.b16 %v228
  %v758 = vunpack.c.l.b16 %v229
  %v759 = vunpack.c.l.b16 %v230
  %v760 = vunpack.c.l.b16 %v231
  %v761 = vunpack.c.l.b16 %v232
  %v762 = vunpack.c.l.b16 %v233
  %v763 = vunpack.c.l.b16 %v234
  %v764 = vunpack.c.l.b16 %v235
  %v765 = vunpack.c.l.b16 %v236
  %v766 = vunpack.c.l.b16 %v237
  %v767 = vunpack.c.l.b16 %v238
  %v768 = vpack.c.b16 %v573, %v572
  %v769 = vpack.c.b16 %v575, %v574
  %v770 = vpack.c.b16 %v577, %v576
  %v771 = vpack.c.b16 %v579, %v578
  %v772 = vpack.c.b16 %v581, %v580
  %v773 = vpack.c.b16 %v583, %v582
  %v774 = vpack.c.b16 %v585, %v584
  %v775 = vpack.c.b16 %v587, %v586
  %v776 = vpack.c.b16 %v589, %v588
  %v777 = vpack.c.b16 %v591, %v590
  %v778 = vpack.c.b16 %v593, %v592
  %v779 = vpack.c.b16 %v595, %v594
  %v780 = vpack.c.b16 %v597, %v596
  %v781 = vpack.c.b16 %v599, %v598
  %v782 = vpack.c.b16 %v601, %v600
  %v783 = vpack.c.b16 %v603, %v602
  %v784 = vpack.c.b16 %v605, %v604
  %v785 = vpack.c.b16 %v607, %v606
  %v786 = vpack.c.b16 %v609, %v608
  %v787 = vpack.c.b16 %v611, %v610
  %v788 = vpack.c.b16 %v613, %v612
  %v789 = vpack.c.b16 %v615, %v614
  %v790 = vpack.c.b16 %v617, %v616
  %v791 = vpack.c.b16 %v619, %v618
  %v792 = vpack.c.b16 %v621, %v620
  %v793 = vpack.c.b16 %v623, %v622
  %v794 = vpack.c.b16 %v625, %v624
  %v795 = vpack.c.b16 %v627, %v626
  %v796 = vpack.c.b16 %v629, %v628
  %v797 = vpack.c.b16 %v631, %v630
  %v798 = vpack.c.b16 %v633, %v632
  %v799 = vpack.c.b16 %v635, %v634
  %v800 = vpack.c.b16 %v637, %v636
  %v801 = vpack.c.b16 %v639, %v638
  %v802 = vpack.c.b16 %v641, %v640
  %v803 = vpack.c.b16 %v643, %v642
  %v804 = vpack.c.b16 %v645, %v644
  %v805 = vpack.c.b16 %v647, %v646
  %v806 = vpack.c.b16 %v649, %v648
  %v807 = vpack.c.b16 %v651, %v650
  %v808 = vpack.c.b16 %v653, %v652
  %v809 = vpack.c.b16 %v655, %v654
  %v810 = vpack.c.b16 %v657, %v656
  %v811 = vpack.c.b16 %v659, %v658
  %v812 = vpack.c.b16 %v661, %v660
  %v813 = vpack.c.b16 %v663, %v662
  %v814 = vpack.c.b16 %v665, %v664
  %v815 = vpack.c.b16 %v667, %v666
  %v816 = vpack.c.b16 %v669, %v668
  %v817 = vpack.c.b16 %v671, %v670
  %v818 = vpack.c.b16 %v673, %v672
  %v819 = vpack.c.b16 %v675, %v674
  %v820 = vpack.c.b16 %v677, %v676
  %v821 = vpack.c.b16 %v679, %v678
  %v822 = vpack.c.b16 %v681, %v680
  %v823 = vpack.c.b16 %v683, %v682
  %v824 = vpack.c.b16 %v685, %v684
  %v825 = vpack.c.b16 %v687, %v686
  %v826 = vpack.c.b16 %v689, %v688
  %v827 = vpack.c.b16 %v691, %v690
  %v828 = vpack.c.b16 %v693, %v692
  %v829 = vpack.c.b16 %v695, %v694
  %v830 = vpack.c.b16 %v697, %v696
  %v831 = vpack.c.b16 %v699, %v698
  %v832 = vpack.c.b16 %v701, %v700
  %v833 = vpack.c.b16 %v703, %v702
  %v834 = vpack.c.b16 %v705, %v704
  %v835 = vpack.c.b16 %v707, %v706
  %v836 = vpack.c.b16 %v709, %v708
  %v837 = vpack.c.b16 %v711, %v710
  %v838 = vpack.c.b16 %v713, %v712
  %v839 = vpack.c.b16 %v715, %v714
  %v840 = vpack.c.b16 %v717, %v716
  %v841 = vpack.c.b16 %v719, %v718
  %v842 = vpack.c.b16 %v721, %v720
  %v843 = vpack.c.b16 %v723, %v722
  %v844 = vpack.c.b16 %v725, %v724
  %v845 = vpack.c.b16 %v727, %v726
  %v846 = vpack.c.b16 %v729, %v728
  %v847 = vpack.c.b16 %v731, %v730
  %v848 = vpack.c.b16 %v733, %v732
  %v849 = vpack.c.b16 %v735, %v734
  %v850 = vpack.c.b16 %v737, %v736
  %v851 = vpack.c.b16 %v739, %v738
  %v852 = vpack.c.b16 %v741, %v740
  %v853 = vpack.c.b16 %v743, %v742
  %v854 = vpack.c.b16 %v745, %v744
  %v855 = vpack.c.b16 %v747, %v746
  %v856 = vpack.c.b16 %v749, %v748
  %v857 = vpack.c.b16 %v751, %v750
  %v858 = vpack.c.b16 %v753, %v752
  %v859 = vpack.c.b16 %v755, %v754
  %v860 = vpack.c.b16 %v757, %v756
  %v861 = vpack.c.b16 %v759, %v758
  %v862 = vpack.c.b16 %v761, %v760
  %v863 = vpack.c.b16 %v763, %v762
  %v864 = vpack.c.b16 %v765, %v764
  %v865 = vpack.c.b16 %v767, %v766
  %vm964 = vcmask 261120
  %v966 = vsel %vm964, %v338, 0
  %v969 = vsel %vm964, %v351, 0
  %971 = vmatprep.subr.bf16.mxu0 0
  %972 = vmatpush1.bf16.msra.mxu0 %v768
  %973 = vmatprep.subr.bf16.mxu0 0
  %974 = vmatpush1.bf16.msra.mxu0 %v769
  %975 = vmatprep.subr.bf16.mxu0 0
  %976 = vmatpush1.bf16.msra.mxu0 %v770
  %977 = vmatprep.subr.bf16.mxu0 0
  %978 = vmatpush1.bf16.msra.mxu0 %v771
  %979 = vmatprep.subr.bf16.mxu0 0
  %980 = vmatpush1.bf16.msra.mxu0 %v772
  %981 = vmatprep.subr.bf16.mxu0 0
  %982 = vmatpush1.bf16.msra.mxu0 %v773
  %983 = vmatprep.subr.bf16.mxu0 0
  %984 = vmatpush1.bf16.msra.mxu0 %v774
  %985 = vmatprep.subr.bf16.mxu0 0
  %986 = vmatpush1.bf16.msra.mxu0 %v775
  %987 = vmatprep.subr.bf16.mxu0 0
  %988 = vmatpush1.bf16.msra.mxu0 %v776
  %989 = vmatprep.subr.bf16.mxu0 0
  %990 = vmatpush1.bf16.msra.mxu0 %v777
  %991 = vmatprep.subr.bf16.mxu0 0
  %992 = vmatpush1.bf16.msra.mxu0 %v778
  %993 = vmatprep.subr.bf16.mxu0 0
  %994 = vmatpush1.bf16.msra.mxu0 %v779
  %995 = vmatprep.subr.bf16.mxu0 0
  %996 = vmatpush1.bf16.msra.mxu0 %v780
  %997 = vmatprep.subr.bf16.mxu0 0
  %998 = vmatpush1.bf16.msra.mxu0 %v781
  %999 = vmatprep.subr.bf16.mxu0 0
  %1000 = vmatpush1.bf16.msra.mxu0 %v782
  %1001 = vmatprep.subr.bf16.mxu0 0
  %1002 = vmatpush1.bf16.msra.mxu0 %v783
  %1003 = vmatprep.mubr.bf16.mxu0 %v327
  %1004 = vmatmul.mubr.bf16.gmra.mrb[0].mxu0 %v326
  %v1005 = vpop.f32.mrb[0].mxu0
  %v1006 = vadd.f32 %v244, %v1005
  %v1007 = vpop.f32.mrb[0].mxu0
  %v1008 = vpop.f32.mrb[0].mxu0
  %v1009 = vadd.f32 %v244, %v1008
  %v1010 = vpop.f32.mrb[0].mxu0
  %1011 = vmatprep.mubr.bf16.mxu0 %v340
  %1012 = vmatmul.mubr.bf16.gmra.mrb[0].mxu0 %v339
  %v1013 = vpop.f32.mrb[0].mxu0
  %v1014 = vadd.f32 %v244, %v1013
  %v1015 = vpop.f32.mrb[0].mxu0
  %v1016 = vpop.f32.mrb[0].mxu0
  %v1017 = vadd.f32 %v244, %v1016
  %v1018 = vpop.f32.mrb[0].mxu0
  %1019 = vdwg.mxu0
  %1020 = vmatprep.subr.bf16.mxu0 0
  %1021 = vmatpush1.bf16.msra.mxu0 %v784
  %1022 = vmatprep.subr.bf16.mxu0 0
  %1023 = vmatpush1.bf16.msra.mxu0 %v785
  %1024 = vmatprep.subr.bf16.mxu0 0
  %1025 = vmatpush1.bf16.msra.mxu0 %v786
  %1026 = vmatprep.subr.bf16.mxu0 0
  %1027 = vmatpush1.bf16.msra.mxu0 %v787
  %1028 = vmatprep.subr.bf16.mxu0 0
  %1029 = vmatpush1.bf16.msra.mxu0 %v788
  %1030 = vmatprep.subr.bf16.mxu0 0
  %1031 = vmatpush1.bf16.msra.mxu0 %v789
  %1032 = vmatprep.subr.bf16.mxu0 0
  %1033 = vmatpush1.bf16.msra.mxu0 %v790
  %1034 = vmatprep.subr.bf16.mxu0 0
  %1035 = vmatpush1.bf16.msra.mxu0 %v791
  %1036 = vmatprep.subr.bf16.mxu0 0
  %1037 = vmatpush1.bf16.msra.mxu0 %v792
  %1038 = vmatprep.subr.bf16.mxu0 0
  %1039 = vmatpush1.bf16.msra.mxu0 %v793
  %1040 = vmatprep.subr.bf16.mxu0 0
  %1041 = vmatpush1.bf16.msra.mxu0 %v794
  %1042 = vmatprep.subr.bf16.mxu0 0
  %1043 = vmatpush1.bf16.msra.mxu0 %v795
  %1044 = vmatprep.subr.bf16.mxu0 0
  %1045 = vmatpush1.bf16.msra.mxu0 %v796
  %1046 = vmatprep.subr.bf16.mxu0 0
  %1047 = vmatpush1.bf16.msra.mxu0 %v797
  %1048 = vmatprep.subr.bf16.mxu0 0
  %1049 = vmatpush1.bf16.msra.mxu0 %v798
  %1050 = vmatprep.subr.bf16.mxu0 0
  %1051 = vmatpush1.bf16.msra.mxu0 %v799
  %1052 = vmatprep.mubr.bf16.mxu0 %v329
  %1053 = vmatmul.mubr.bf16.gmra.mrb[0].mxu0 %v328
  %v1054 = vpop.f32.mrb[0].mxu0
  %v1055 = vadd.f32 %v1006, %v1054
  %v1056 = vpop.f32.mrb[0].mxu0
  %v1057 = vpop.f32.mrb[0].mxu0
  %v1058 = vadd.f32 %v1009, %v1057
  %v1059 = vpop.f32.mrb[0].mxu0
  %1060 = vmatprep.mubr.bf16.mxu0 %v342
  %1061 = vmatmul.mubr.bf16.gmra.mrb[0].mxu0 %v341
  %v1062 = vpop.f32.mrb[0].mxu0
  %v1063 = vadd.f32 %v1014, %v1062
  %v1064 = vpop.f32.mrb[0].mxu0
  %v1065 = vpop.f32.mrb[0].mxu0
  %v1066 = vadd.f32 %v1017, %v1065
  %v1067 = vpop.f32.mrb[0].mxu0
  %1068 = vdwg.mxu0
  %1069 = vmatprep.subr.bf16.mxu0 0
  %1070 = vmatpush1.bf16.msra.mxu0 %v800
  %1071 = vmatprep.subr.bf16.mxu0 0
  %1072 = vmatpush1.bf16.msra.mxu0 %v801
  %1073 = vmatprep.subr.bf16.mxu0 0
  %1074 = vmatpush1.bf16.msra.mxu0 %v802
  %1075 = vmatprep.subr.bf16.mxu0 0
  %1076 = vmatpush1.bf16.msra.mxu0 %v803
  %1077 = vmatprep.subr.bf16.mxu0 0
  %1078 = vmatpush1.bf16.msra.mxu0 %v804
  %1079 = vmatprep.subr.bf16.mxu0 0
  %1080 = vmatpush1.bf16.msra.mxu0 %v805
  %1081 = vmatprep.subr.bf16.mxu0 0
  %1082 = vmatpush1.bf16.msra.mxu0 %v806
  %1083 = vmatprep.subr.bf16.mxu0 0
  %1084 = vmatpush1.bf16.msra.mxu0 %v807
  %1085 = vmatprep.subr.bf16.mxu0 0
  %1086 = vmatpush1.bf16.msra.mxu0 %v808
  %1087 = vmatprep.subr.bf16.mxu0 0
  %1088 = vmatpush1.bf16.msra.mxu0 %v809
  %1089 = vmatprep.subr.bf16.mxu0 0
  %1090 = vmatpush1.bf16.msra.mxu0 %v810
  %1091 = vmatprep.subr.bf16.mxu0 0
  %1092 = vmatpush1.bf16.msra.mxu0 %v811
  %1093 = vmatprep.subr.bf16.mxu0 0
  %1094 = vmatpush1.bf16.msra.mxu0 %v812
  %1095 = vmatprep.subr.bf16.mxu0 0
  %1096 = vmatpush1.bf16.msra.mxu0 %v813
  %1097 = vmatprep.subr.bf16.mxu0 0
  %1098 = vmatpush1.bf16.msra.mxu0 %v814
  %1099 = vmatprep.subr.bf16.mxu0 0
  %1100 = vmatpush1.bf16.msra.mxu0 %v815
  %1101 = vmatprep.mubr.bf16.mxu0 %v331
  %1102 = vmatmul.mubr.bf16.gmra.mrb[0].mxu0 %v330
  %v1103 = vpop.f32.mrb[0].mxu0
  %v1104 = vadd.f32 %v1055, %v1103
  %v1105 = vpop.f32.mrb[0].mxu0
  %v1106 = vpop.f32.mrb[0].mxu0
  %v1107 = vadd.f32 %v1058, %v1106
  %v1108 = vpop.f32.mrb[0].mxu0
  %1109 = vmatprep.mubr.bf16.mxu0 %v344
  %1110 = vmatmul.mubr.bf16.gmra.mrb[0].mxu0 %v343
  %v1111 = vpop.f32.mrb[0].mxu0
  %v1112 = vadd.f32 %v1063, %v1111
  %v1113 = vpop.f32.mrb[0].mxu0
  %v1114 = vpop.f32.mrb[0].mxu0
  %v1115 = vadd.f32 %v1066, %v1114
  %v1116 = vpop.f32.mrb[0].mxu0
  %1117 = vdwg.mxu0
  %1118 = vmatprep.subr.bf16.mxu0 0
  %1119 = vmatpush1.bf16.msra.mxu0 %v816
  %1120 = vmatprep.subr.bf16.mxu0 0
  %1121 = vmatpush1.bf16.msra.mxu0 %v817
  %1122 = vmatprep.subr.bf16.mxu0 0
  %1123 = vmatpush1.bf16.msra.mxu0 %v818
  %1124 = vmatprep.subr.bf16.mxu0 0
  %1125 = vmatpush1.bf16.msra.mxu0 %v819
  %1126 = vmatprep.subr.bf16.mxu0 0
  %1127 = vmatpush1.bf16.msra.mxu0 %v820
  %1128 = vmatprep.subr.bf16.mxu0 0
  %1129 = vmatpush1.bf16.msra.mxu0 %v821
  %1130 = vmatprep.subr.bf16.mxu0 0
  %1131 = vmatpush1.bf16.msra.mxu0 %v822
  %1132 = vmatprep.subr.bf16.mxu0 0
  %1133 = vmatpush1.bf16.msra.mxu0 %v823
  %1134 = vmatprep.subr.bf16.mxu0 0
  %1135 = vmatpush1.bf16.msra.mxu0 %v824
  %1136 = vmatprep.subr.bf16.mxu0 0
  %1137 = vmatpush1.bf16.msra.mxu0 %v825
  %1138 = vmatprep.subr.bf16.mxu0 0
  %1139 = vmatpush1.bf16.msra.mxu0 %v826
  %1140 = vmatprep.subr.bf16.mxu0 0
  %1141 = vmatpush1.bf16.msra.mxu0 %v827
  %1142 = vmatprep.subr.bf16.mxu0 0
  %1143 = vmatpush1.bf16.msra.mxu0 %v828
  %1144 = vmatprep.subr.bf16.mxu0 0
  %1145 = vmatpush1.bf16.msra.mxu0 %v829
  %1146 = vmatprep.subr.bf16.mxu0 0
  %1147 = vmatpush1.bf16.msra.mxu0 %v830
  %1148 = vmatprep.subr.bf16.mxu0 0
  %1149 = vmatpush1.bf16.msra.mxu0 %v831
  %1150 = vmatprep.mubr.bf16.mxu0 %v333
  %1151 = vmatmul.mubr.bf16.gmra.mrb[0].mxu0 %v332
  %v1152 = vpop.f32.mrb[0].mxu0
  %v1153 = vadd.f32 %v1104, %v1152
  %v1154 = vpop.f32.mrb[0].mxu0
  %v1155 = vpop.f32.mrb[0].mxu0
  %v1156 = vadd.f32 %v1107, %v1155
  %v1157 = vpop.f32.mrb[0].mxu0
  %1158 = vmatprep.mubr.bf16.mxu0 %v346
  %1159 = vmatmul.mubr.bf16.gmra.mrb[0].mxu0 %v345
  %v1160 = vpop.f32.mrb[0].mxu0
  %v1161 = vadd.f32 %v1112, %v1160
  %v1162 = vpop.f32.mrb[0].mxu0
  %v1163 = vpop.f32.mrb[0].mxu0
  %v1164 = vadd.f32 %v1115, %v1163
  %v1165 = vpop.f32.mrb[0].mxu0
  %1166 = vdwg.mxu0
  %1167 = vmatprep.subr.bf16.mxu0 0
  %1168 = vmatpush1.bf16.msra.mxu0 %v832
  %1169 = vmatprep.subr.bf16.mxu0 0
  %1170 = vmatpush1.bf16.msra.mxu0 %v833
  %1171 = vmatprep.subr.bf16.mxu0 0
  %1172 = vmatpush1.bf16.msra.mxu0 %v834
  %1173 = vmatprep.subr.bf16.mxu0 0
  %1174 = vmatpush1.bf16.msra.mxu0 %v835
  %1175 = vmatprep.subr.bf16.mxu0 0
  %1176 = vmatpush1.bf16.msra.mxu0 %v836
  %1177 = vmatprep.subr.bf16.mxu0 0
  %1178 = vmatpush1.bf16.msra.mxu0 %v837
  %1179 = vmatprep.subr.bf16.mxu0 0
  %1180 = vmatpush1.bf16.msra.mxu0 %v838
  %1181 = vmatprep.subr.bf16.mxu0 0
  %1182 = vmatpush1.bf16.msra.mxu0 %v839
  %1183 = vmatprep.subr.bf16.mxu0 0
  %1184 = vmatpush1.bf16.msra.mxu0 %v840
  %1185 = vmatprep.subr.bf16.mxu0 0
  %1186 = vmatpush1.bf16.msra.mxu0 %v841
  %1187 = vmatprep.subr.bf16.mxu0 0
  %1188 = vmatpush1.bf16.msra.mxu0 %v842
  %1189 = vmatprep.subr.bf16.mxu0 0
  %1190 = vmatpush1.bf16.msra.mxu0 %v843
  %1191 = vmatprep.subr.bf16.mxu0 0
  %1192 = vmatpush1.bf16.msra.mxu0 %v844
  %1193 = vmatprep.subr.bf16.mxu0 0
  %1194 = vmatpush1.bf16.msra.mxu0 %v845
  %1195 = vmatprep.subr.bf16.mxu0 0
  %1196 = vmatpush1.bf16.msra.mxu0 %v846
  %1197 = vmatprep.subr.bf16.mxu0 0
  %1198 = vmatpush1.bf16.msra.mxu0 %v847
  %1199 = vmatprep.mubr.bf16.mxu0 %v335
  %1200 = vmatmul.mubr.bf16.gmra.mrb[0].mxu0 %v334
  %v1201 = vpop.f32.mrb[0].mxu0
  %v1202 = vadd.f32 %v1153, %v1201
  %v1203 = vpop.f32.mrb[0].mxu0
  %v1204 = vpop.f32.mrb[0].mxu0
  %v1205 = vadd.f32 %v1156, %v1204
  %v1206 = vpop.f32.mrb[0].mxu0
  %1207 = vmatprep.mubr.bf16.mxu0 %v348
  %1208 = vmatmul.mubr.bf16.gmra.mrb[0].mxu0 %v347
  %v1209 = vpop.f32.mrb[0].mxu0
  %v1210 = vadd.f32 %v1161, %v1209
  %v1211 = vpop.f32.mrb[0].mxu0
  %v1212 = vpop.f32.mrb[0].mxu0
  %v1213 = vadd.f32 %v1164, %v1212
  %v1214 = vpop.f32.mrb[0].mxu0
  %1215 = vdwg.mxu0
  %1216 = vmatprep.subr.bf16.mxu0 0
  %1217 = vmatpush1.bf16.msra.mxu0 %v848
  %1218 = vmatprep.subr.bf16.mxu0 0
  %1219 = vmatpush1.bf16.msra.mxu0 %v849
  %1220 = vmatprep.subr.bf16.mxu0 0
  %1221 = vmatpush1.bf16.msra.mxu0 %v850
  %1222 = vmatprep.subr.bf16.mxu0 0
  %1223 = vmatpush1.bf16.msra.mxu0 %v851
  %1224 = vmatprep.subr.bf16.mxu0 0
  %1225 = vmatpush1.bf16.msra.mxu0 %v852
  %1226 = vmatprep.subr.bf16.mxu0 0
  %1227 = vmatpush1.bf16.msra.mxu0 %v853
  %1228 = vmatprep.subr.bf16.mxu0 0
  %1229 = vmatpush1.bf16.msra.mxu0 %v854
  %1230 = vmatprep.subr.bf16.mxu0 0
  %1231 = vmatpush1.bf16.msra.mxu0 %v855
  %1232 = vmatprep.subr.bf16.mxu0 0
  %1233 = vmatpush1.bf16.msra.mxu0 %v856
  %1234 = vmatprep.subr.bf16.mxu0 0
  %1235 = vmatpush1.bf16.msra.mxu0 %v857
  %1236 = vmatprep.subr.bf16.mxu0 0
  %1237 = vmatpush1.bf16.msra.mxu0 %v858
  %1238 = vmatprep.subr.bf16.mxu0 0
  %1239 = vmatpush1.bf16.msra.mxu0 %v859
  %1240 = vmatprep.subr.bf16.mxu0 0
  %1241 = vmatpush1.bf16.msra.mxu0 %v860
  %1242 = vmatprep.subr.bf16.mxu0 0
  %1243 = vmatpush1.bf16.msra.mxu0 %v861
  %1244 = vmatprep.subr.bf16.mxu0 0
  %1245 = vmatpush1.bf16.msra.mxu0 %v862
  %1246 = vmatprep.subr.bf16.mxu0 0
  %1247 = vmatpush1.bf16.msra.mxu0 %v863
  %1248 = vmatprep.mubr.bf16.mxu0 %v337
  %1249 = vmatmul.mubr.bf16.gmra.mrb[0].mxu0 %v336
  %v1250 = vpop.f32.mrb[0].mxu0
  %v1251 = vadd.f32 %v1202, %v1250
  %v1252 = vpop.f32.mrb[0].mxu0
  %v1253 = vpop.f32.mrb[0].mxu0
  %v1254 = vadd.f32 %v1205, %v1253
  %v1255 = vpop.f32.mrb[0].mxu0
  %1256 = vmatprep.mubr.bf16.mxu0 %v350
  %1257 = vmatmul.mubr.bf16.gmra.mrb[0].mxu0 %v349
  %v1258 = vpop.f32.mrb[0].mxu0
  %v1259 = vadd.f32 %v1210, %v1258
  %v1260 = vpop.f32.mrb[0].mxu0
  %v1261 = vpop.f32.mrb[0].mxu0
  %v1262 = vadd.f32 %v1213, %v1261
  %v1263 = vpop.f32.mrb[0].mxu0
  %1264 = vdwg.mxu0
  %1265 = vmatprep.subr.bf16.mxu0 0
  %1266 = vmatpush1.bf16.msra.mxu0 %v864
  %1267 = vmatprep.subr.bf16.mxu0 0
  %1268 = vmatpush1.bf16.msra.mxu0 %v865
  %1269 = vmatprep.subr.bf16.mxu0 0
  %1270 = vmatpush1.bf16.msra.mxu0 0
  %1271 = vmatprep.subr.bf16.mxu0 0
  %1272 = vmatpush1.bf16.msra.mxu0 0
  %1273 = vmatprep.subr.bf16.mxu0 0
  %1274 = vmatpush1.bf16.msra.mxu0 0
  %1275 = vmatprep.subr.bf16.mxu0 0
  %1276 = vmatpush1.bf16.msra.mxu0 0
  %1277 = vmatprep.subr.bf16.mxu0 0
  %1278 = vmatpush1.bf16.msra.mxu0 0
  %1279 = vmatprep.subr.bf16.mxu0 0
  %1280 = vmatpush1.bf16.msra.mxu0 0
  %1281 = vmatprep.subr.bf16.mxu0 0
  %1282 = vmatpush1.bf16.msra.mxu0 0
  %1283 = vmatprep.subr.bf16.mxu0 0
  %1284 = vmatpush1.bf16.msra.mxu0 0
  %1285 = vmatprep.subr.bf16.mxu0 0
  %1286 = vmatpush1.bf16.msra.mxu0 0
  %1287 = vmatprep.subr.bf16.mxu0 0
  %1288 = vmatpush1.bf16.msra.mxu0 0
  %1289 = vmatprep.subr.bf16.mxu0 0
  %1290 = vmatpush1.bf16.msra.mxu0 0
  %1291 = vmatprep.subr.bf16.mxu0 0
  %1292 = vmatpush1.bf16.msra.mxu0 0
  %1293 = vmatprep.subr.bf16.mxu0 0
  %1294 = vmatpush1.bf16.msra.mxu0 0
  %1295 = vmatprep.subr.bf16.mxu0 0
  %1296 = vmatpush1.bf16.msra.mxu0 0
  %1297 = vmatprep.mubr.bf16.mxu0 0
  %1298 = vmatmul.mubr.bf16.gmra.mrb[0].mxu0 %v966
  %v1299 = vpop.f32.mrb[0].mxu0
  %v1300 = vadd.f32 %v1251, %v1299
  %v1301 = vpop.f32.mrb[0].mxu0
  %v1302 = vpop.f32.mrb[0].mxu0
  %v1303 = vadd.f32 %v1254, %v1302
  %v1304 = vpop.f32.mrb[0].mxu0
  %1305 = vmatprep.mubr.bf16.mxu0 0
  %1306 = vmatmul.mubr.bf16.gmra.mrb[0].mxu0 %v969
  %v1307 = vpop.f32.mrb[0].mxu0
  %v1308 = vadd.f32 %v1259, %v1307
  %v1309 = vpop.f32.mrb[0].mxu0
  %v1310 = vpop.f32.mrb[0].mxu0
  %v1311 = vadd.f32 %v1262, %v1310
  %v1312 = vpop.f32.mrb[0].mxu0
  %1313 = vdwg.mxu0
  %v1314 = vmax.f32 %v1300, 0.0
  %v1315 = vmax.f32 %v1303, 0.0
  %v1316 = vmax.f32 %v1308, 0.0
  %v1317 = vmax.f32 %v1311, 0.0
  %v1318 = vpack.c.bf16 %v1315, %v1314
  %v1319 = vpack.c.bf16 %v1317, %v1316
  %v1322 = vunpack.c.l.b16 %v1318
  %v1323 = vunpack.c.h.b16 %v1318
  %v1324 = vunpack.c.l.b16 %v1319
  %v1325 = vunpack.c.h.b16 %v1319
  %v1326 = vpack.c.b16 %v1322, %v1322
  %v1327 = vpack.c.b16 %v1323, %v1323
  %v1328 = vpack.c.b16 %v1324, %v1324
  %v1329 = vpack.c.b16 %v1325, %v1325
  %vm1334 = vcmask 257024
  %1335 = vst.msk [vmem:[%s3] sm:$0xf] %vm1334, %v1326
  %1336 = vst.msk [vmem:[%s3 + $0x4] sm:$0xf] %vm1334, %v1327
  %1337 = vst.msk [vmem:[%s3 + $0x8] sm:$0xf] %vm1334, %v1328
  %1338 = vst.msk [vmem:[%s3 + $0xc] sm:$0xf] %vm1334, %v1329
  // Predicated region
  $region14: #{crowd_counter_forward.13} parent=0 // pred_check
    _
  $region15: #{crowd_counter_forward.13} parent=0 // pred_check_branch
    %1340 = sbr.rel (0) target = $region17
  $region16: #{crowd_counter_forward.13} parent=0 // pred_region
    _
  $region17: #{crowd_counter_forward.13} parent=0 // pred_fallthru
    _
  // Predicated region
  $region18: #{crowd_counter_forward.13} parent=0 // pred_check
    _
  $region19: #{crowd_counter_forward.13} parent=0 // pred_check_branch
    %1342 = sbr.rel (0) target = $region21
  $region20: #{crowd_counter_forward.13} parent=0 // pred_region
    _
  $region21: #{crowd_counter_forward.13} parent=0 // pred_fallthru
    _

// kernel: crowd_counter_forward.14
$region0: #{crowd_counter_forward.14}
  #allocation0 [shape = 'u32[]', space=smem, size = 0x4, offset = 0x4, fixed_abs, tag = 'smem constant byte address 0x4 - core index']
  #allocation1 [shape = 'u32[144,128]{1,0:T(1,128)}', space=vmem, size = 0x12000, scoped, tag = 'internal scratch']
  %s0 = inlined_call_operand.vmem [shape: bf16[32,784], index: 0, kind: input, shape index: {}]
  %s1 = inlined_call_operand.vmem [shape: bf16[784,32], index: 1, kind: input, shape index: {}]
  %s2 = inlined_call_operand.vmem [shape: f32[1,32], index: 2, kind: input, shape index: {}]
  %s3 = inlined_call_operand.vmem [shape: bf16[32,32], index: 3, kind: output, shape index: {}]
  %s4 = sld [smem:[#allocation0]]
  $region22: #{crowd_counter_forward.14} parent=0
    _
  %s6 = ssub.s32 1, %s4
  %s7 = scalar_select 0, %s6, %s4
  // Predicated region
  $region2: #{crowd_counter_forward.14} parent=0 // pred_check
    _
  $region3: #{crowd_counter_forward.14} parent=0 // pred_check_branch
    %9 = sbr.rel (0) target = $region5
  $region4: #{crowd_counter_forward.14} parent=0 // pred_region
    _
  $region5: #{crowd_counter_forward.14} parent=0 // pred_fallthru
    _
  // Predicated region
  $region6: #{crowd_counter_forward.14} parent=0 // pred_check
    _
  $region7: #{crowd_counter_forward.14} parent=0 // pred_check_branch
    %11 = sbr.rel (0) target = $region9
  $region8: #{crowd_counter_forward.14} parent=0 // pred_region
    _
  $region9: #{crowd_counter_forward.14} parent=0 // pred_fallthru
    _
  // Predicated region
  $region10: #{crowd_counter_forward.14} parent=0 // pred_check
    _
  $region11: #{crowd_counter_forward.14} parent=0 // pred_check_branch
    %13 = sbr.rel (0) target = $region13
  $region12: #{crowd_counter_forward.14} parent=0 // pred_region
    _
  $region13: #{crowd_counter_forward.14} parent=0 // pred_fallthru
    _
  %v15 = vld [vmem:[%s0] sm:$0xff]
  %v16 = vld [vmem:[%s0 + $0x8] sm:$0xff]
  %v17 = vld [vmem:[%s0 + $0x10] sm:$0xff]
  %v18 = vld [vmem:[%s0 + $0x18] sm:$0xf]
  %v19 = vld [vmem:[%s0 + $0x1c] sm:$0xff]
  %v20 = vld [vmem:[%s0 + $0x24] sm:$0xff]
  %v21 = vld [vmem:[%s0 + $0x2c] sm:$0xff]
  %v22 = vld [vmem:[%s0 + $0x34] sm:$0xf]
  %v23 = vld [vmem:[%s0 + $0x38] sm:$0xff]
  %v24 = vld [vmem:[%s0 + $0x40] sm:$0xff]
  %v25 = vld [vmem:[%s0 + $0x48] sm:$0xff]
  %v26 = vld [vmem:[%s0 + $0x50] sm:$0xf]
  %v27 = vld [vmem:[%s0 + $0x54] sm:$0xff]
  %v28 = vld [vmem:[%s0 + $0x5c] sm:$0xff]
  %v29 = vld [vmem:[%s0 + $0x64] sm:$0xff]
  %v30 = vld [vmem:[%s0 + $0x6c] sm:$0xf]
  %v31 = vld [vmem:[%s1] sm:$0xf]
  %v32 = vld [vmem:[%s1 + $0x4] sm:$0xf]
  %v33 = vld [vmem:[%s1 + $0x8] sm:$0xf]
  %v34 = vld [vmem:[%s1 + $0xc] sm:$0xf]
  %v35 = vld [vmem:[%s1 + $0x10] sm:$0xf]
  %v36 = vld [vmem:[%s1 + $0x14] sm:$0xf]
  %v37 = vld [vmem:[%s1 + $0x18] sm:$0xf]
  %v38 = vld [vmem:[%s1 + $0x1c] sm:$0xf]
  %v39 = vld [vmem:[%s1 + $0x20] sm:$0xf]
  %v40 = vld [vmem:[%s1 + $0x24] sm:$0xf]
  %v41 = vld [vmem:[%s1 + $0x28] sm:$0xf]
  %v42 = vld [vmem:[%s1 + $0x2c] sm:$0xf]
  %v43 = vld [vmem:[%s1 + $0x30] sm:$0xf]
  %v44 = vld [vmem:[%s1 + $0x34] sm:$0xf]
  %v45 = vld [vmem:[%s1 + $0x38] sm:$0xf]
  %v46 = vld [vmem:[%s1 + $0x3c] sm:$0xf]
  %v47 = vld [vmem:[%s1 + $0x40] sm:$0xf]
  %v48 = vld [vmem:[%s1 + $0x44] sm:$0xf]
  %v49 = vld [vmem:[%s1 + $0x48] sm:$0xf]
  %v50 = vld [vmem:[%s1 + $0x4c] sm:$0xf]
  %v51 = vld [vmem:[%s1 + $0x50] sm:$0xf]
  %v52 = vld [vmem:[%s1 + $0x54] sm:$0xf]
  %v53 = vld [vmem:[%s1 + $0x58] sm:$0xf]
  %v54 = vld [vmem:[%s1 + $0x5c] sm:$0xf]
  %v55 = vld [vmem:[%s1 + $0x60] sm:$0xf]
  %v56 = vld [vmem:[%s1 + $0x64] sm:$0xf]
  %v57 = vld [vmem:[%s1 + $0x68] sm:$0xf]
  %v58 = vld [vmem:[%s1 + $0x6c] sm:$0xf]
  %v59 = vld [vmem:[%s1 + $0x70] sm:$0xf]
  %v60 = vld [vmem:[%s1 + $0x74] sm:$0xf]
  %v61 = vld [vmem:[%s1 + $0x78] sm:$0xf]
  %v62 = vld [vmem:[%s1 + $0x7c] sm:$0xf]
  %v63 = vld [vmem:[%s1 + $0x80] sm:$0xf]
  %v64 = vld [vmem:[%s1 + $0x84] sm:$0xf]
  %v65 = vld [vmem:[%s1 + $0x88] sm:$0xf]
  %v66 = vld [vmem:[%s1 + $0x8c] sm:$0xf]
  %v67 = vld [vmem:[%s1 + $0x90] sm:$0xf]
  %v68 = vld [vmem:[%s1 + $0x94] sm:$0xf]
  %v69 = vld [vmem:[%s1 + $0x98] sm:$0xf]
  %v70 = vld [vmem:[%s1 + $0x9c] sm:$0xf]
  %v71 = vld [vmem:[%s1 + $0xa0] sm:$0xf]
  %v72 = vld [vmem:[%s1 + $0xa4] sm:$0xf]
  %v73 = vld [vmem:[%s1 + $0xa8] sm:$0xf]
  %v74 = vld [vmem:[%s1 + $0xac] sm:$0xf]
  %v75 = vld [vmem:[%s1 + $0xb0] sm:$0xf]
  %v76 = vld [vmem:[%s1 + $0xb4] sm:$0xf]
  %v77 = vld [vmem:[%s1 + $0xb8] sm:$0xf]
  %v78 = vld [vmem:[%s1 + $0xbc] sm:$0xf]
  %v79 = vld [vmem:[%s1 + $0xc0] sm:$0xf]
  %v80 = vld [vmem:[%s1 + $0xc4] sm:$0xf]
  %v81 = vld [vmem:[%s1 + $0xc8] sm:$0xf]
  %v82 = vld [vmem:[%s1 + $0xcc] sm:$0xf]
  %v83 = vld [vmem:[%s1 + $0xd0] sm:$0xf]
  %v84 = vld [vmem:[%s1 + $0xd4] sm:$0xf]
  %v85 = vld [vmem:[%s1 + $0xd8] sm:$0xf]
  %v86 = vld [vmem:[%s1 + $0xdc] sm:$0xf]
  %v87 = vld [vmem:[%s1 + $0xe0] sm:$0xf]
  %v88 = vld [vmem:[%s1 + $0xe4] sm:$0xf]
  %v89 = vld [vmem:[%s1 + $0xe8] sm:$0xf]
  %v90 = vld [vmem:[%s1 + $0xec] sm:$0xf]
  %v91 = vld [vmem:[%s1 + $0xf0] sm:$0xf]
  %v92 = vld [vmem:[%s1 + $0xf4] sm:$0xf]
  %v93 = vld [vmem:[%s1 + $0xf8] sm:$0xf]
  %v94 = vld [vmem:[%s1 + $0xfc] sm:$0xf]
  %v95 = vld [vmem:[%s1 + $0x100] sm:$0xf]
  %v96 = vld [vmem:[%s1 + $0x104] sm:$0xf]
  %v97 = vld [vmem:[%s1 + $0x108] sm:$0xf]
  %v98 = vld [vmem:[%s1 + $0x10c] sm:$0xf]
  %v99 = vld [vmem:[%s1 + $0x110] sm:$0xf]
  %v100 = vld [vmem:[%s1 + $0x114] sm:$0xf]
  %v101 = vld [vmem:[%s1 + $0x118] sm:$0xf]
  %v102 = vld [vmem:[%s1 + $0x11c] sm:$0xf]
  %v103 = vld [vmem:[%s1 + $0x120] sm:$0xf]
  %v104 = vld [vmem:[%s1 + $0x124] sm:$0xf]
  %v105 = vld [vmem:[%s1 + $0x128] sm:$0xf]
  %v106 = vld [vmem:[%s1 + $0x12c] sm:$0xf]
  %v107 = vld [vmem:[%s1 + $0x130] sm:$0xf]
  %v108 = vld [vmem:[%s1 + $0x134] sm:$0xf]
  %v109 = vld [vmem:[%s1 + $0x138] sm:$0xf]
  %v110 = vld [vmem:[%s1 + $0x13c] sm:$0xf]
  %v111 = vld [vmem:[%s1 + $0x140] sm:$0xf]
  %v112 = vld [vmem:[%s1 + $0x144] sm:$0xf]
  %v113 = vld [vmem:[%s1 + $0x148] sm:$0xf]
  %v114 = vld [vmem:[%s1 + $0x14c] sm:$0xf]
  %v115 = vld [vmem:[%s1 + $0x150] sm:$0xf]
  %v116 = vld [vmem:[%s1 + $0x154] sm:$0xf]
  %v117 = vld [vmem:[%s1 + $0x158] sm:$0xf]
  %v118 = vld [vmem:[%s1 + $0x15c] sm:$0xf]
  %v119 = vld [vmem:[%s1 + $0x160] sm:$0xf]
  %v120 = vld [vmem:[%s1 + $0x164] sm:$0xf]
  %v121 = vld [vmem:[%s1 + $0x168] sm:$0xf]
  %v122 = vld [vmem:[%s1 + $0x16c] sm:$0xf]
  %v123 = vld [vmem:[%s1 + $0x170] sm:$0xf]
  %v124 = vld [vmem:[%s1 + $0x174] sm:$0xf]
  %v125 = vld [vmem:[%s1 + $0x178] sm:$0xf]
  %v126 = vld [vmem:[%s1 + $0x17c] sm:$0xf]
  %v127 = vld [vmem:[%s1 + $0x180] sm:$0xf]
  %v128 = vld [vmem:[%s1 + $0x184] sm:$0xf]
  %v129 = vld [vmem:[%s2] sm:$0x1]
  %v131 = vlaneseq
  %v132 = vshrl.u32 %v131, 7
  %v133 = vsub.s32 0, %v132
  %v134 = vrot.slane %v129, %v133
  %v152 = vunpack.c.l.b16 %v15
  %v153 = vunpack.c.h.b16 %v15
  %v154 = vunpack.c.l.b16 %v16
  %v155 = vunpack.c.h.b16 %v16
  %v156 = vunpack.c.l.b16 %v17
  %v157 = vunpack.c.h.b16 %v17
  %v158 = vunpack.c.l.b16 %v18
  %v159 = vunpack.c.l.b16 %v19
  %v160 = vunpack.c.h.b16 %v19
  %v161 = vunpack.c.l.b16 %v20
  %v162 = vunpack.c.h.b16 %v20
  %v163 = vunpack.c.l.b16 %v21
  %v164 = vunpack.c.h.b16 %v21
  %v165 = vunpack.c.l.b16 %v22
  %v166 = vunpack.c.l.b16 %v23
  %v167 = vunpack.c.h.b16 %v23
  %v168 = vunpack.c.l.b16 %v24
  %v169 = vunpack.c.h.b16 %v24
  %v170 = vunpack.c.l.b16 %v25
  %v171 = vunpack.c.h.b16 %v25
  %v172 = vunpack.c.l.b16 %v26
  %v173 = vunpack.c.l.b16 %v27
  %v174 = vunpack.c.h.b16 %v27
  %v175 = vunpack.c.l.b16 %v28
  %v176 = vunpack.c.h.b16 %v28
  %v177 = vunpack.c.l.b16 %v29
  %v178 = vunpack.c.h.b16 %v29
  %v179 = vunpack.c.l.b16 %v30
  %v180 = vpack.c.b16 %v159, %v152
  %v181 = vpack.c.b16 %v160, %v153
  %v182 = vpack.c.b16 %v161, %v154
  %v183 = vpack.c.b16 %v162, %v155
  %v184 = vpack.c.b16 %v163, %v156
  %v185 = vpack.c.b16 %v164, %v157
  %v186 = vpack.c.b16 %v165, %v158
  %v187 = vpack.c.b16 %v173, %v166
  %v188 = vpack.c.b16 %v174, %v167
  %v189 = vpack.c.b16 %v175, %v168
  %v190 = vpack.c.b16 %v176, %v169
  %v191 = vpack.c.b16 %v177, %v170
  %v192 = vpack.c.b16 %v178, %v171
  %v193 = vpack.c.b16 %v179, %v172
  %v304 = vunpack.c.l.b16 %v31
  %v305 = vunpack.c.l.b16 %v32
  %v306 = vunpack.c.l.b16 %v33
  %v307 = vunpack.c.l.b16 %v34
  %v308 = vunpack.c.l.b16 %v35
  %v309 = vunpack.c.l.b16 %v36
  %v310 = vunpack.c.l.b16 %v37
  %v311 = vunpack.c.l.b16 %v38
  %v312 = vunpack.c.l.b16 %v39
  %v313 = vunpack.c.l.b16 %v40
  %v314 = vunpack.c.l.b16 %v41
  %v315 = vunpack.c.l.b16 %v42
  %v316 = vunpack.c.l.b16 %v43
  %v317 = vunpack.c.l.b16 %v44
  %v318 = vunpack.c.l.b16 %v45
  %v319 = vunpack.c.l.b16 %v46
  %v320 = vunpack.c.l.b16 %v47
  %v321 = vunpack.c.l.b16 %v48
  %v322 = vunpack.c.l.b16 %v49
  %v323 = vunpack.c.l.b16 %v50
  %v324 = vunpack.c.l.b16 %v51
  %v325 = vunpack.c.l.b16 %v52
  %v326 = vunpack.c.l.b16 %v53
  %v327 = vunpack.c.l.b16 %v54
  %v328 = vunpack.c.l.b16 %v55
  %v329 = vunpack.c.l.b16 %v56
  %v330 = vunpack.c.l.b16 %v57
  %v331 = vunpack.c.l.b16 %v58
  %v332 = vunpack.c.l.b16 %v59
  %v333 = vunpack.c.l.b16 %v60
  %v334 = vunpack.c.l.b16 %v61
  %v335 = vunpack.c.l.b16 %v62
  %v336 = vunpack.c.l.b16 %v63
  %v337 = vunpack.c.l.b16 %v64
  %v338 = vunpack.c.l.b16 %v65
  %v339 = vunpack.c.l.b16 %v66
  %v340 = vunpack.c.l.b16 %v67
  %v341 = vunpack.c.l.b16 %v68
  %v342 = vunpack.c.l.b16 %v69
  %v343 = vunpack.c.l.b16 %v70
  %v344 = vunpack.c.l.b16 %v71
  %v345 = vunpack.c.l.b16 %v72
  %v346 = vunpack.c.l.b16 %v73
  %v347 = vunpack.c.l.b16 %v74
  %v348 = vunpack.c.l.b16 %v75
  %v349 = vunpack.c.l.b16 %v76
  %v350 = vunpack.c.l.b16 %v77
  %v351 = vunpack.c.l.b16 %v78
  %v352 = vunpack.c.l.b16 %v79
  %v353 = vunpack.c.l.b16 %v80
  %v354 = vunpack.c.l.b16 %v81
  %v355 = vunpack.c.l.b16 %v82
  %v356 = vunpack.c.l.b16 %v83
  %v357 = vunpack.c.l.b16 %v84
  %v358 = vunpack.c.l.b16 %v85
  %v359 = vunpack.c.l.b16 %v86
  %v360 = vunpack.c.l.b16 %v87
  %v361 = vunpack.c.l.b16 %v88
  %v362 = vunpack.c.l.b16 %v89
  %v363 = vunpack.c.l.b16 %v90
  %v364 = vunpack.c.l.b16 %v91
  %v365 = vunpack.c.l.b16 %v92
  %v366 = vunpack.c.l.b16 %v93
  %v367 = vunpack.c.l.b16 %v94
  %v368 = vunpack.c.l.b16 %v95
  %v369 = vunpack.c.l.b16 %v96
  %v370 = vunpack.c.l.b16 %v97
  %v371 = vunpack.c.l.b16 %v98
  %v372 = vunpack.c.l.b16 %v99
  %v373 = vunpack.c.l.b16 %v100
  %v374 = vunpack.c.l.b16 %v101
  %v375 = vunpack.c.l.b16 %v102
  %v376 = vunpack.c.l.b16 %v103
  %v377 = vunpack.c.l.b16 %v104
  %v378 = vunpack.c.l.b16 %v105
  %v379 = vunpack.c.l.b16 %v106
  %v380 = vunpack.c.l.b16 %v107
  %v381 = vunpack.c.l.b16 %v108
  %v382 = vunpack.c.l.b16 %v109
  %v383 = vunpack.c.l.b16 %v110
  %v384 = vunpack.c.l.b16 %v111
  %v385 = vunpack.c.l.b16 %v112
  %v386 = vunpack.c.l.b16 %v113
  %v387 = vunpack.c.l.b16 %v114
  %v388 = vunpack.c.l.b16 %v115
  %v389 = vunpack.c.l.b16 %v116
  %v390 = vunpack.c.l.b16 %v117
  %v391 = vunpack.c.l.b16 %v118
  %v392 = vunpack.c.l.b16 %v119
  %v393 = vunpack.c.l.b16 %v120
  %v394 = vunpack.c.l.b16 %v121
  %v395 = vunpack.c.l.b16 %v122
  %v396 = vunpack.c.l.b16 %v123
  %v397 = vunpack.c.l.b16 %v124
  %v398 = vunpack.c.l.b16 %v125
  %v399 = vunpack.c.l.b16 %v126
  %v400 = vunpack.c.l.b16 %v127
  %v401 = vunpack.c.l.b16 %v128
  %v402 = vpack.c.b16 %v305, %v304
  %v403 = vpack.c.b16 %v307, %v306
  %v404 = vpack.c.b16 %v309, %v308
  %v405 = vpack.c.b16 %v311, %v310
  %v406 = vpack.c.b16 %v313, %v312
  %v407 = vpack.c.b16 %v315, %v314
  %v408 = vpack.c.b16 %v317, %v316
  %v409 = vpack.c.b16 %v319, %v318
  %v410 = vpack.c.b16 %v321, %v320
  %v411 = vpack.c.b16 %v323, %v322
  %v412 = vpack.c.b16 %v325, %v324
  %v413 = vpack.c.b16 %v327, %v326
  %v414 = vpack.c.b16 %v329, %v328
  %v415 = vpack.c.b16 %v331, %v330
  %v416 = vpack.c.b16 %v333, %v332
  %v417 = vpack.c.b16 %v335, %v334
  %v418 = vpack.c.b16 %v337, %v336
  %v419 = vpack.c.b16 %v339, %v338
  %v420 = vpack.c.b16 %v341, %v340
  %v421 = vpack.c.b16 %v343, %v342
  %v422 = vpack.c.b16 %v345, %v344
  %v423 = vpack.c.b16 %v347, %v346
  %v424 = vpack.c.b16 %v349, %v348
  %v425 = vpack.c.b16 %v351, %v350
  %v426 = vpack.c.b16 %v353, %v352
  %v427 = vpack.c.b16 %v355, %v354
  %v428 = vpack.c.b16 %v357, %v356
  %v429 = vpack.c.b16 %v359, %v358
  %v430 = vpack.c.b16 %v361, %v360
  %v431 = vpack.c.b16 %v363, %v362
  %v432 = vpack.c.b16 %v365, %v364
  %v433 = vpack.c.b16 %v367, %v366
  %v434 = vpack.c.b16 %v369, %v368
  %v435 = vpack.c.b16 %v371, %v370
  %v436 = vpack.c.b16 %v373, %v372
  %v437 = vpack.c.b16 %v375, %v374
  %v438 = vpack.c.b16 %v377, %v376
  %v439 = vpack.c.b16 %v379, %v378
  %v440 = vpack.c.b16 %v381, %v380
  %v441 = vpack.c.b16 %v383, %v382
  %v442 = vpack.c.b16 %v385, %v384
  %v443 = vpack.c.b16 %v387, %v386
  %v444 = vpack.c.b16 %v389, %v388
  %v445 = vpack.c.b16 %v391, %v390
  %v446 = vpack.c.b16 %v393, %v392
  %v447 = vpack.c.b16 %v395, %v394
  %v448 = vpack.c.b16 %v397, %v396
  %v449 = vpack.c.b16 %v399, %v398
  %v450 = vpack.c.b16 %v401, %v400
  %vm500 = vcmask 130048
  %v502 = vsel %vm500, %v186, 0
  %v505 = vsel %vm500, %v193, 0
  %507 = vmatprep.subr.bf16.mxu0 0
  %508 = vmatpush1.bf16.msra.mxu0 %v402
  %509 = vmatprep.subr.bf16.mxu0 0
  %510 = vmatpush1.bf16.msra.mxu0 %v403
  %511 = vmatprep.subr.bf16.mxu0 0
  %512 = vmatpush1.bf16.msra.mxu0 %v404
  %513 = vmatprep.subr.bf16.mxu0 0
  %514 = vmatpush1.bf16.msra.mxu0 %v405
  %515 = vmatprep.subr.bf16.mxu0 0
  %516 = vmatpush1.bf16.msra.mxu0 %v406
  %517 = vmatprep.subr.bf16.mxu0 0
  %518 = vmatpush1.bf16.msra.mxu0 %v407
  %519 = vmatprep.subr.bf16.mxu0 0
  %520 = vmatpush1.bf16.msra.mxu0 %v408
  %521 = vmatprep.subr.bf16.mxu0 0
  %522 = vmatpush1.bf16.msra.mxu0 %v409
  %523 = vmatprep.subr.bf16.mxu0 0
  %524 = vmatpush1.bf16.msra.mxu0 %v410
  %525 = vmatprep.subr.bf16.mxu0 0
  %526 = vmatpush1.bf16.msra.mxu0 %v411
  %527 = vmatprep.subr.bf16.mxu0 0
  %528 = vmatpush1.bf16.msra.mxu0 %v412
  %529 = vmatprep.subr.bf16.mxu0 0
  %530 = vmatpush1.bf16.msra.mxu0 %v413
  %531 = vmatprep.subr.bf16.mxu0 0
  %532 = vmatpush1.bf16.msra.mxu0 %v414
  %533 = vmatprep.subr.bf16.mxu0 0
  %534 = vmatpush1.bf16.msra.mxu0 %v415
  %535 = vmatprep.subr.bf16.mxu0 0
  %536 = vmatpush1.bf16.msra.mxu0 %v416
  %537 = vmatprep.subr.bf16.mxu0 0
  %538 = vmatpush1.bf16.msra.mxu0 %v417
  %539 = vmatprep.mubr.bf16.mxu0 %v181
  %540 = vmatmul.mubr.bf16.gmra.mrb[0].mxu0 %v180
  %v541 = vpop.f32.mrb[0].mxu0
  %v542 = vadd.f32 %v134, %v541
  %v543 = vpop.f32.mrb[0].mxu0
  %v544 = vpop.f32.mrb[0].mxu0
  %v545 = vadd.f32 %v134, %v544
  %v546 = vpop.f32.mrb[0].mxu0
  %547 = vmatprep.mubr.bf16.mxu0 %v188
  %548 = vmatmul.mubr.bf16.gmra.mrb[0].mxu0 %v187
  %v549 = vpop.f32.mrb[0].mxu0
  %v550 = vadd.f32 %v134, %v549
  %v551 = vpop.f32.mrb[0].mxu0
  %v552 = vpop.f32.mrb[0].mxu0
  %v553 = vadd.f32 %v134, %v552
  %v554 = vpop.f32.mrb[0].mxu0
  %555 = vdwg.mxu0
  %556 = vmatprep.subr.bf16.mxu0 0
  %557 = vmatpush1.bf16.msra.mxu0 %v418
  %558 = vmatprep.subr.bf16.mxu0 0
  %559 = vmatpush1.bf16.msra.mxu0 %v419
  %560 = vmatprep.subr.bf16.mxu0 0
  %561 = vmatpush1.bf16.msra.mxu0 %v420
  %562 = vmatprep.subr.bf16.mxu0 0
  %563 = vmatpush1.bf16.msra.mxu0 %v421
  %564 = vmatprep.subr.bf16.mxu0 0
  %565 = vmatpush1.bf16.msra.mxu0 %v422
  %566 = vmatprep.subr.bf16.mxu0 0
  %567 = vmatpush1.bf16.msra.mxu0 %v423
  %568 = vmatprep.subr.bf16.mxu0 0
  %569 = vmatpush1.bf16.msra.mxu0 %v424
  %570 = vmatprep.subr.bf16.mxu0 0
  %571 = vmatpush1.bf16.msra.mxu0 %v425
  %572 = vmatprep.subr.bf16.mxu0 0
  %573 = vmatpush1.bf16.msra.mxu0 %v426
  %574 = vmatprep.subr.bf16.mxu0 0
  %575 = vmatpush1.bf16.msra.mxu0 %v427
  %576 = vmatprep.subr.bf16.mxu0 0
  %577 = vmatpush1.bf16.msra.mxu0 %v428
  %578 = vmatprep.subr.bf16.mxu0 0
  %579 = vmatpush1.bf16.msra.mxu0 %v429
  %580 = vmatprep.subr.bf16.mxu0 0
  %581 = vmatpush1.bf16.msra.mxu0 %v430
  %582 = vmatprep.subr.bf16.mxu0 0
  %583 = vmatpush1.bf16.msra.mxu0 %v431
  %584 = vmatprep.subr.bf16.mxu0 0
  %585 = vmatpush1.bf16.msra.mxu0 %v432
  %586 = vmatprep.subr.bf16.mxu0 0
  %587 = vmatpush1.bf16.msra.mxu0 %v433
  %588 = vmatprep.mubr.bf16.mxu0 %v183
  %589 = vmatmul.mubr.bf16.gmra.mrb[0].mxu0 %v182
  %v590 = vpop.f32.mrb[0].mxu0
  %v591 = vadd.f32 %v542, %v590
  %v592 = vpop.f32.mrb[0].mxu0
  %v593 = vpop.f32.mrb[0].mxu0
  %v594 = vadd.f32 %v545, %v593
  %v595 = vpop.f32.mrb[0].mxu0
  %596 = vmatprep.mubr.bf16.mxu0 %v190
  %597 = vmatmul.mubr.bf16.gmra.mrb[0].mxu0 %v189
  %v598 = vpop.f32.mrb[0].mxu0
  %v599 = vadd.f32 %v550, %v598
  %v600 = vpop.f32.mrb[0].mxu0
  %v601 = vpop.f32.mrb[0].mxu0
  %v602 = vadd.f32 %v553, %v601
  %v603 = vpop.f32.mrb[0].mxu0
  %604 = vdwg.mxu0
  %605 = vmatprep.subr.bf16.mxu0 0
  %606 = vmatpush1.bf16.msra.mxu0 %v434
  %607 = vmatprep.subr.bf16.mxu0 0
  %608 = vmatpush1.bf16.msra.mxu0 %v435
  %609 = vmatprep.subr.bf16.mxu0 0
  %610 = vmatpush1.bf16.msra.mxu0 %v436
  %611 = vmatprep.subr.bf16.mxu0 0
  %612 = vmatpush1.bf16.msra.mxu0 %v437
  %613 = vmatprep.subr.bf16.mxu0 0
  %614 = vmatpush1.bf16.msra.mxu0 %v438
  %615 = vmatprep.subr.bf16.mxu0 0
  %616 = vmatpush1.bf16.msra.mxu0 %v439
  %617 = vmatprep.subr.bf16.mxu0 0
  %618 = vmatpush1.bf16.msra.mxu0 %v440
  %619 = vmatprep.subr.bf16.mxu0 0
  %620 = vmatpush1.bf16.msra.mxu0 %v441
  %621 = vmatprep.subr.bf16.mxu0 0
  %622 = vmatpush1.bf16.msra.mxu0 %v442
  %623 = vmatprep.subr.bf16.mxu0 0
  %624 = vmatpush1.bf16.msra.mxu0 %v443
  %625 = vmatprep.subr.bf16.mxu0 0
  %626 = vmatpush1.bf16.msra.mxu0 %v444
  %627 = vmatprep.subr.bf16.mxu0 0
  %628 = vmatpush1.bf16.msra.mxu0 %v445
  %629 = vmatprep.subr.bf16.mxu0 0
  %630 = vmatpush1.bf16.msra.mxu0 %v446
  %631 = vmatprep.subr.bf16.mxu0 0
  %632 = vmatpush1.bf16.msra.mxu0 %v447
  %633 = vmatprep.subr.bf16.mxu0 0
  %634 = vmatpush1.bf16.msra.mxu0 %v448
  %635 = vmatprep.subr.bf16.mxu0 0
  %636 = vmatpush1.bf16.msra.mxu0 %v449
  %637 = vmatprep.mubr.bf16.mxu0 %v185
  %638 = vmatmul.mubr.bf16.gmra.mrb[0].mxu0 %v184
  %v639 = vpop.f32.mrb[0].mxu0
  %v640 = vadd.f32 %v591, %v639
  %v641 = vpop.f32.mrb[0].mxu0
  %v642 = vpop.f32.mrb[0].mxu0
  %v643 = vadd.f32 %v594, %v642
  %v644 = vpop.f32.mrb[0].mxu0
  %645 = vmatprep.mubr.bf16.mxu0 %v192
  %646 = vmatmul.mubr.bf16.gmra.mrb[0].mxu0 %v191
  %v647 = vpop.f32.mrb[0].mxu0
  %v648 = vadd.f32 %v599, %v647
  %v649 = vpop.f32.mrb[0].mxu0
  %v650 = vpop.f32.mrb[0].mxu0
  %v651 = vadd.f32 %v602, %v650
  %v652 = vpop.f32.mrb[0].mxu0
  %653 = vdwg.mxu0
  %654 = vmatprep.subr.bf16.mxu0 0
  %655 = vmatpush1.bf16.msra.mxu0 %v450
  %656 = vmatprep.subr.bf16.mxu0 0
  %657 = vmatpush1.bf16.msra.mxu0 0
  %658 = vmatprep.subr.bf16.mxu0 0
  %659 = vmatpush1.bf16.msra.mxu0 0
  %660 = vmatprep.subr.bf16.mxu0 0
  %661 = vmatpush1.bf16.msra.mxu0 0
  %662 = vmatprep.subr.bf16.mxu0 0
  %663 = vmatpush1.bf16.msra.mxu0 0
  %664 = vmatprep.subr.bf16.mxu0 0
  %665 = vmatpush1.bf16.msra.mxu0 0
  %666 = vmatprep.subr.bf16.mxu0 0
  %667 = vmatpush1.bf16.msra.mxu0 0
  %668 = vmatprep.subr.bf16.mxu0 0
  %669 = vmatpush1.bf16.msra.mxu0 0
  %670 = vmatprep.subr.bf16.mxu0 0
  %671 = vmatpush1.bf16.msra.mxu0 0
  %672 = vmatprep.subr.bf16.mxu0 0
  %673 = vmatpush1.bf16.msra.mxu0 0
  %674 = vmatprep.subr.bf16.mxu0 0
  %675 = vmatpush1.bf16.msra.mxu0 0
  %676 = vmatprep.subr.bf16.mxu0 0
  %677 = vmatpush1.bf16.msra.mxu0 0
  %678 = vmatprep.subr.bf16.mxu0 0
  %679 = vmatpush1.bf16.msra.mxu0 0
  %680 = vmatprep.subr.bf16.mxu0 0
  %681 = vmatpush1.bf16.msra.mxu0 0
  %682 = vmatprep.subr.bf16.mxu0 0
  %683 = vmatpush1.bf16.msra.mxu0 0
  %684 = vmatprep.subr.bf16.mxu0 0
  %685 = vmatpush1.bf16.msra.mxu0 0
  %686 = vmatprep.mubr.bf16.mxu0 0
  %687 = vmatmul.mubr.bf16.gmra.mrb[0].mxu0 %v502
  %v688 = vpop.f32.mrb[0].mxu0
  %v689 = vadd.f32 %v640, %v688
  %v690 = vpop.f32.mrb[0].mxu0
  %v691 = vpop.f32.mrb[0].mxu0
  %v692 = vadd.f32 %v643, %v691
  %v693 = vpop.f32.mrb[0].mxu0
  %694 = vmatprep.mubr.bf16.mxu0 0
  %695 = vmatmul.mubr.bf16.gmra.mrb[0].mxu0 %v505
  %v696 = vpop.f32.mrb[0].mxu0
  %v697 = vadd.f32 %v648, %v696
  %v698 = vpop.f32.mrb[0].mxu0
  %v699 = vpop.f32.mrb[0].mxu0
  %v700 = vadd.f32 %v651, %v699
  %v701 = vpop.f32.mrb[0].mxu0
  %702 = vdwg.mxu0
  %v703 = vmax.f32 %v689, 0.0
  %v704 = vmax.f32 %v692, 0.0
  %v705 = vmax.f32 %v697, 0.0
  %v706 = vmax.f32 %v700, 0.0
  %v707 = vpack.c.bf16 %v704, %v703
  %v708 = vpack.c.bf16 %v706, %v705
  %v711 = vunpack.c.l.b16 %v707
  %v712 = vunpack.c.h.b16 %v707
  %v713 = vunpack.c.l.b16 %v708
  %v714 = vunpack.c.h.b16 %v708
  %v715 = vpack.c.b16 %v711, %v711
  %v716 = vpack.c.b16 %v712, %v712
  %v717 = vpack.c.b16 %v713, %v713
  %v718 = vpack.c.b16 %v714, %v714
  %vm723 = vcmask 257024
  %724 = vst.msk [vmem:[%s3] sm:$0xf] %vm723, %v715
  %725 = vst.msk [vmem:[%s3 + $0x4] sm:$0xf] %vm723, %v716
  %726 = vst.msk [vmem:[%s3 + $0x8] sm:$0xf] %vm723, %v717
  %727 = vst.msk [vmem:[%s3 + $0xc] sm:$0xf] %vm723, %v718
  // Predicated region
  $region14: #{crowd_counter_forward.14} parent=0 // pred_check
    _
  $region15: #{crowd_counter_forward.14} parent=0 // pred_check_branch
    %729 = sbr.rel (0) target = $region17
  $region16: #{crowd_counter_forward.14} parent=0 // pred_region
    _
  $region17: #{crowd_counter_forward.14} parent=0 // pred_fallthru
    _
  // Predicated region
  $region18: #{crowd_counter_forward.14} parent=0 // pred_check
    _
  $region19: #{crowd_counter_forward.14} parent=0 // pred_check_branch
    %731 = sbr.rel (0) target = $region21
  $region20: #{crowd_counter_forward.14} parent=0 // pred_region
    _
  $region21: #{crowd_counter_forward.14} parent=0 // pred_fallthru
    _

// kernel: crowd_counter_forward.15
$region0: #{crowd_counter_forward.15}
  #allocation0 [shape = 'u32[]', space=smem, size = 0x4, offset = 0x4, fixed_abs, tag = 'smem constant byte address 0x4 - core index']
  #allocation1 [shape = 'u32[144,128]{1,0:T(1,128)}', space=vmem, size = 0x12000, scoped, tag = 'internal scratch']
  %s0 = inlined_call_operand.vmem [shape: bf16[128,600], index: 0, kind: input, shape index: {}]
  %s1 = inlined_call_operand.vmem [shape: bf16[600,64], index: 1, kind: input, shape index: {}]
  %s2 = inlined_call_operand.vmem [shape: f32[1,64], index: 2, kind: input, shape index: {}]
  %s3 = inlined_call_operand.vmem [shape: bf16[128,64], index: 3, kind: output, shape index: {}]
  %s4 = sld [smem:[#allocation0]]
  $region22: #{crowd_counter_forward.15} parent=0
    _
  %s6 = ssub.s32 1, %s4
  %s7 = scalar_select 0, %s6, %s4
  // Predicated region
  $region2: #{crowd_counter_forward.15} parent=0 // pred_check
    _
  $region3: #{crowd_counter_forward.15} parent=0 // pred_check_branch
    %9 = sbr.rel (0) target = $region5
  $region4: #{crowd_counter_forward.15} parent=0 // pred_region
    _
  $region5: #{crowd_counter_forward.15} parent=0 // pred_fallthru
    _
  // Predicated region
  $region6: #{crowd_counter_forward.15} parent=0 // pred_check
    _
  $region7: #{crowd_counter_forward.15} parent=0 // pred_check_branch
    %11 = sbr.rel (0) target = $region9
  $region8: #{crowd_counter_forward.15} parent=0 // pred_region
    _
  $region9: #{crowd_counter_forward.15} parent=0 // pred_fallthru
    _
  // Predicated region
  $region10: #{crowd_counter_forward.15} parent=0 // pred_check
    _
  $region11: #{crowd_counter_forward.15} parent=0 // pred_check_branch
    %13 = sbr.rel (0) target = $region13
  $region12: #{crowd_counter_forward.15} parent=0 // pred_region
    _
  $region13: #{crowd_counter_forward.15} parent=0 // pred_fallthru
    _
  %v15 = vld [vmem:[%s0] sm:$0xff]
  %v16 = vld [vmem:[%s0 + $0x8] sm:$0xff]
  %v17 = vld [vmem:[%s0 + $0x10] sm:$0xf]
  %v18 = vld [vmem:[%s0 + $0x14] sm:$0xff]
  %v19 = vld [vmem:[%s0 + $0x1c] sm:$0xff]
  %v20 = vld [vmem:[%s0 + $0x24] sm:$0xf]
  %v21 = vld [vmem:[%s0 + $0x28] sm:$0xff]
  %v22 = vld [vmem:[%s0 + $0x30] sm:$0xff]
  %v23 = vld [vmem:[%s0 + $0x38] sm:$0xf]
  %v24 = vld [vmem:[%s0 + $0x3c] sm:$0xff]
  %v25 = vld [vmem:[%s0 + $0x44] sm:$0xff]
  %v26 = vld [vmem:[%s0 + $0x4c] sm:$0xf]
  %v27 = vld [vmem:[%s0 + $0x50] sm:$0xff]
  %v28 = vld [vmem:[%s0 + $0x58] sm:$0xff]
  %v29 = vld [vmem:[%s0 + $0x60] sm:$0xf]
  %v30 = vld [vmem:[%s0 + $0x64] sm:$0xff]
  %v31 = vld [vmem:[%s0 + $0x6c] sm:$0xff]
  %v32 = vld [vmem:[%s0 + $0x74] sm:$0xf]
  %v33 = vld [vmem:[%s0 + $0x78] sm:$0xff]
  %v34 = vld [vmem:[%s0 + $0x80] sm:$0xff]
  %v35 = vld [vmem:[%s0 + $0x88] sm:$0xf]
  %v36 = vld [vmem:[%s0 + $0x8c] sm:$0xff]
  %v37 = vld [vmem:[%s0 + $0x94] sm:$0xff]
  %v38 = vld [vmem:[%s0 + $0x9c] sm:$0xf]
  %v39 = vld [vmem:[%s0 + $0xa0] sm:$0xff]
  %v40 = vld [vmem:[%s0 + $0xa8] sm:$0xff]
  %v41 = vld [vmem:[%s0 + $0xb0] sm:$0xf]
  %v42 = vld [vmem:[%s0 + $0xb4] sm:$0xff]
  %v43 = vld [vmem:[%s0 + $0xbc] sm:$0xff]
  %v44 = vld [vmem:[%s0 + $0xc4] sm:$0xf]
  %v45 = vld [vmem:[%s0 + $0xc8] sm:$0xff]
  %v46 = vld [vmem:[%s0 + $0xd0] sm:$0xff]
  %v47 = vld [vmem:[%s0 + $0xd8] sm:$0xf]
  %v48 = vld [vmem:[%s0 + $0xdc] sm:$0xff]
  %v49 = vld [vmem:[%s0 + $0xe4] sm:$0xff]
  %v50 = vld [vmem:[%s0 + $0xec] sm:$0xf]
  %v51 = vld [vmem:[%s0 + $0xf0] sm:$0xff]
  %v52 = vld [vmem:[%s0 + $0xf8] sm:$0xff]
  %v53 = vld [vmem:[%s0 + $0x100] sm:$0xf]
  %v54 = vld [vmem:[%s0 + $0x104] sm:$0xff]
  %v55 = vld [vmem:[%s0 + $0x10c] sm:$0xff]
  %v56 = vld [vmem:[%s0 + $0x114] sm:$0xf]
  %v57 = vld [vmem:[%s0 + $0x118] sm:$0xff]
  %v58 = vld [vmem:[%s0 + $0x120] sm:$0xff]
  %v59 = vld [vmem:[%s0 + $0x128] sm:$0xf]
  %v60 = vld [vmem:[%s0 + $0x12c] sm:$0xff]
  %v61 = vld [vmem:[%s0 + $0x134] sm:$0xff]
  %v62 = vld [vmem:[%s0 + $0x13c] sm:$0xf]
  %v63 = vld [vmem:[%s1] sm:$0xf]
  %v64 = vld [vmem:[%s1 + $0x4] sm:$0xf]
  %v65 = vld [vmem:[%s1 + $0x8] sm:$0xf]
  %v66 = vld [vmem:[%s1 + $0xc] sm:$0xf]
  %v67 = vld [vmem:[%s1 + $0x10] sm:$0xf]
  %v68 = vld [vmem:[%s1 + $0x14] sm:$0xf]
  %v69 = vld [vmem:[%s1 + $0x18] sm:$0xf]
  %v70 = vld [vmem:[%s1 + $0x1c] sm:$0xf]
  %v71 = vld [vmem:[%s1 + $0x20] sm:$0xf]
  %v72 = vld [vmem:[%s1 + $0x24] sm:$0xf]
  %v73 = vld [vmem:[%s1 + $0x28] sm:$0xf]
  %v74 = vld [vmem:[%s1 + $0x2c] sm:$0xf]
  %v75 = vld [vmem:[%s1 + $0x30] sm:$0xf]
  %v76 = vld [vmem:[%s1 + $0x34] sm:$0xf]
  %v77 = vld [vmem:[%s1 + $0x38] sm:$0xf]
  %v78 = vld [vmem:[%s1 + $0x3c] sm:$0xf]
  %v79 = vld [vmem:[%s1 + $0x40] sm:$0xf]
  %v80 = vld [vmem:[%s1 + $0x44] sm:$0xf]
  %v81 = vld [vmem:[%s1 + $0x48] sm:$0xf]
  %v82 = vld [vmem:[%s1 + $0x4c] sm:$0xf]
  %v83 = vld [vmem:[%s1 + $0x50] sm:$0xf]
  %v84 = vld [vmem:[%s1 + $0x54] sm:$0xf]
  %v85 = vld [vmem:[%s1 + $0x58] sm:$0xf]
  %v86 = vld [vmem:[%s1 + $0x5c] sm:$0xf]
  %v87 = vld [vmem:[%s1 + $0x60] sm:$0xf]
  %v88 = vld [vmem:[%s1 + $0x64] sm:$0xf]
  %v89 = vld [vmem:[%s1 + $0x68] sm:$0xf]
  %v90 = vld [vmem:[%s1 + $0x6c] sm:$0xf]
  %v91 = vld [vmem:[%s1 + $0x70] sm:$0xf]
  %v92 = vld [vmem:[%s1 + $0x74] sm:$0xf]
  %v93 = vld [vmem:[%s1 + $0x78] sm:$0xf]
  %v94 = vld [vmem:[%s1 + $0x7c] sm:$0xf]
  %v95 = vld [vmem:[%s1 + $0x80] sm:$0xf]
  %v96 = vld [vmem:[%s1 + $0x84] sm:$0xf]
  %v97 = vld [vmem:[%s1 + $0x88] sm:$0xf]
  %v98 = vld [vmem:[%s1 + $0x8c] sm:$0xf]
  %v99 = vld [vmem:[%s1 + $0x90] sm:$0xf]
  %v100 = vld [vmem:[%s1 + $0x94] sm:$0xf]
  %v101 = vld [vmem:[%s1 + $0x98] sm:$0xf]
  %v102 = vld [vmem:[%s1 + $0x9c] sm:$0xf]
  %v103 = vld [vmem:[%s1 + $0xa0] sm:$0xf]
  %v104 = vld [vmem:[%s1 + $0xa4] sm:$0xf]
  %v105 = vld [vmem:[%s1 + $0xa8] sm:$0xf]
  %v106 = vld [vmem:[%s1 + $0xac] sm:$0xf]
  %v107 = vld [vmem:[%s1 + $0xb0] sm:$0xf]
  %v108 = vld [vmem:[%s1 + $0xb4] sm:$0xf]
  %v109 = vld [vmem:[%s1 + $0xb8] sm:$0xf]
  %v110 = vld [vmem:[%s1 + $0xbc] sm:$0xf]
  %v111 = vld [vmem:[%s1 + $0xc0] sm:$0xf]
  %v112 = vld [vmem:[%s1 + $0xc4] sm:$0xf]
  %v113 = vld [vmem:[%s1 + $0xc8] sm:$0xf]
  %v114 = vld [vmem:[%s1 + $0xcc] sm:$0xf]
  %v115 = vld [vmem:[%s1 + $0xd0] sm:$0xf]
  %v116 = vld [vmem:[%s1 + $0xd4] sm:$0xf]
  %v117 = vld [vmem:[%s1 + $0xd8] sm:$0xf]
  %v118 = vld [vmem:[%s1 + $0xdc] sm:$0xf]
  %v119 = vld [vmem:[%s1 + $0xe0] sm:$0xf]
  %v120 = vld [vmem:[%s1 + $0xe4] sm:$0xf]
  %v121 = vld [vmem:[%s1 + $0xe8] sm:$0xf]
  %v122 = vld [vmem:[%s1 + $0xec] sm:$0xf]
  %v123 = vld [vmem:[%s1 + $0xf0] sm:$0xf]
  %v124 = vld [vmem:[%s1 + $0xf4] sm:$0xf]
  %v125 = vld [vmem:[%s1 + $0xf8] sm:$0xf]
  %v126 = vld [vmem:[%s1 + $0xfc] sm:$0xf]
  %v127 = vld [vmem:[%s1 + $0x100] sm:$0xf]
  %v128 = vld [vmem:[%s1 + $0x104] sm:$0xf]
  %v129 = vld [vmem:[%s1 + $0x108] sm:$0xf]
  %v130 = vld [vmem:[%s1 + $0x10c] sm:$0xf]
  %v131 = vld [vmem:[%s1 + $0x110] sm:$0xf]
  %v132 = vld [vmem:[%s1 + $0x114] sm:$0xf]
  %v133 = vld [vmem:[%s1 + $0x118] sm:$0xf]
  %v134 = vld [vmem:[%s1 + $0x11c] sm:$0xf]
  %v135 = vld [vmem:[%s1 + $0x120] sm:$0xf]
  %v136 = vld [vmem:[%s1 + $0x124] sm:$0xf]
  %v137 = vld [vmem:[%s1 + $0x128] sm:$0xf]
  %v138 = vld [vmem:[%s2] sm:$0x1]
  %v140 = vlaneseq
  %v141 = vshrl.u32 %v140, 7
  %v142 = vsub.s32 0, %v141
  %v143 = vrot.slane %v138, %v142
  %v193 = vunpack.c.l.b16 %v15
  %v194 = vunpack.c.h.b16 %v15
  %v195 = vunpack.c.l.b16 %v16
  %v196 = vunpack.c.h.b16 %v16
  %v197 = vunpack.c.l.b16 %v17
  %v198 = vunpack.c.l.b16 %v18
  %v199 = vunpack.c.h.b16 %v18
  %v200 = vunpack.c.l.b16 %v19
  %v201 = vunpack.c.h.b16 %v19
  %v202 = vunpack.c.l.b16 %v20
  %v203 = vunpack.c.l.b16 %v21
  %v204 = vunpack.c.h.b16 %v21
  %v205 = vunpack.c.l.b16 %v22
  %v206 = vunpack.c.h.b16 %v22
  %v207 = vunpack.c.l.b16 %v23
  %v208 = vunpack.c.l.b16 %v24
  %v209 = vunpack.c.h.b16 %v24
  %v210 = vunpack.c.l.b16 %v25
  %v211 = vunpack.c.h.b16 %v25
  %v212 = vunpack.c.l.b16 %v26
  %v213 = vunpack.c.l.b16 %v27
  %v214 = vunpack.c.h.b16 %v27
  %v215 = vunpack.c.l.b16 %v28
  %v216 = vunpack.c.h.b16 %v28
  %v217 = vunpack.c.l.b16 %v29
  %v218 = vunpack.c.l.b16 %v30
  %v219 = vunpack.c.h.b16 %v30
  %v220 = vunpack.c.l.b16 %v31
  %v221 = vunpack.c.h.b16 %v31
  %v222 = vunpack.c.l.b16 %v32
  %v223 = vunpack.c.l.b16 %v33
  %v224 = vunpack.c.h.b16 %v33
  %v225 = vunpack.c.l.b16 %v34
  %v226 = vunpack.c.h.b16 %v34
  %v227 = vunpack.c.l.b16 %v35
  %v228 = vunpack.c.l.b16 %v36
  %v229 = vunpack.c.h.b16 %v36
  %v230 = vunpack.c.l.b16 %v37
  %v231 = vunpack.c.h.b16 %v37
  %v232 = vunpack.c.l.b16 %v38
  %v233 = vunpack.c.l.b16 %v39
  %v234 = vunpack.c.h.b16 %v39
  %v235 = vunpack.c.l.b16 %v40
  %v236 = vunpack.c.h.b16 %v40
  %v237 = vunpack.c.l.b16 %v41
  %v238 = vunpack.c.l.b16 %v42
  %v239 = vunpack.c.h.b16 %v42
  %v240 = vunpack.c.l.b16 %v43
  %v241 = vunpack.c.h.b16 %v43
  %v242 = vunpack.c.l.b16 %v44
  %v243 = vunpack.c.l.b16 %v45
  %v244 = vunpack.c.h.b16 %v45
  %v245 = vunpack.c.l.b16 %v46
  %v246 = vunpack.c.h.b16 %v46
  %v247 = vunpack.c.l.b16 %v47
  %v248 = vunpack.c.l.b16 %v48
  %v249 = vunpack.c.h.b16 %v48
  %v250 = vunpack.c.l.b16 %v49
  %v251 = vunpack.c.h.b16 %v49
  %v252 = vunpack.c.l.b16 %v50
  %v253 = vunpack.c.l.b16 %v51
  %v254 = vunpack.c.h.b16 %v51
  %v255 = vunpack.c.l.b16 %v52
  %v256 = vunpack.c.h.b16 %v52
  %v257 = vunpack.c.l.b16 %v53
  %v258 = vunpack.c.l.b16 %v54
  %v259 = vunpack.c.h.b16 %v54
  %v260 = vunpack.c.l.b16 %v55
  %v261 = vunpack.c.h.b16 %v55
  %v262 = vunpack.c.l.b16 %v56
  %v263 = vunpack.c.l.b16 %v57
  %v264 = vunpack.c.h.b16 %v57
  %v265 = vunpack.c.l.b16 %v58
  %v266 = vunpack.c.h.b16 %v58
  %v267 = vunpack.c.l.b16 %v59
  %v268 = vunpack.c.l.b16 %v60
  %v269 = vunpack.c.h.b16 %v60
  %v270 = vunpack.c.l.b16 %v61
  %v271 = vunpack.c.h.b16 %v61
  %v272 = vunpack.c.l.b16 %v62
  %v273 = vpack.c.b16 %v198, %v193
  %v274 = vpack.c.b16 %v199, %v194
  %v275 = vpack.c.b16 %v200, %v195
  %v276 = vpack.c.b16 %v201, %v196
  %v277 = vpack.c.b16 %v202, %v197
  %v278 = vpack.c.b16 %v208, %v203
  %v279 = vpack.c.b16 %v209, %v204
  %v280 = vpack.c.b16 %v210, %v205
  %v281 = vpack.c.b16 %v211, %v206
  %v282 = vpack.c.b16 %v212, %v207
  %v283 = vpack.c.b16 %v218, %v213
  %v284 = vpack.c.b16 %v219, %v214
  %v285 = vpack.c.b16 %v220, %v215
  %v286 = vpack.c.b16 %v221, %v216
  %v287 = vpack.c.b16 %v222, %v217
  %v288 = vpack.c.b16 %v228, %v223
  %v289 = vpack.c.b16 %v229, %v224
  %v290 = vpack.c.b16 %v230, %v225
  %v291 = vpack.c.b16 %v231, %v226
  %v292 = vpack.c.b16 %v232, %v227
  %v293 = vpack.c.b16 %v238, %v233
  %v294 = vpack.c.b16 %v239, %v234
  %v295 = vpack.c.b16 %v240, %v235
  %v296 = vpack.c.b16 %v241, %v236
  %v297 = vpack.c.b16 %v242, %v237
  %v298 = vpack.c.b16 %v248, %v243
  %v299 = vpack.c.b16 %v249, %v244
  %v300 = vpack.c.b16 %v250, %v245
  %v301 = vpack.c.b16 %v251, %v246
  %v302 = vpack.c.b16 %v252, %v247
  %v303 = vpack.c.b16 %v258, %v253
  %v304 = vpack.c.b16 %v259, %v254
  %v305 = vpack.c.b16 %v260, %v255
  %v306 = vpack.c.b16 %v261, %v256
  %v307 = vpack.c.b16 %v262, %v257
  %v308 = vpack.c.b16 %v268, %v263
  %v309 = vpack.c.b16 %v269, %v264
  %v310 = vpack.c.b16 %v270, %v265
  %v311 = vpack.c.b16 %v271, %v266
  %v312 = vpack.c.b16 %v272, %v267
  %v420 = vunpack.c.l.b16 %v63
  %v421 = vunpack.c.l.b16 %v64
  %v422 = vunpack.c.l.b16 %v65
  %v423 = vunpack.c.l.b16 %v66
  %v424 = vunpack.c.l.b16 %v67
  %v425 = vunpack.c.l.b16 %v68
  %v426 = vunpack.c.l.b16 %v69
  %v427 = vunpack.c.l.b16 %v70
  %v428 = vunpack.c.l.b16 %v71
  %v429 = vunpack.c.l.b16 %v72
  %v430 = vunpack.c.l.b16 %v73
  %v431 = vunpack.c.l.b16 %v74
  %v432 = vunpack.c.l.b16 %v75
  %v433 = vunpack.c.l.b16 %v76
  %v434 = vunpack.c.l.b16 %v77
  %v435 = vunpack.c.l.b16 %v78
  %v436 = vunpack.c.l.b16 %v79
  %v437 = vunpack.c.l.b16 %v80
  %v438 = vunpack.c.l.b16 %v81
  %v439 = vunpack.c.l.b16 %v82
  %v440 = vunpack.c.l.b16 %v83
  %v441 = vunpack.c.l.b16 %v84
  %v442 = vunpack.c.l.b16 %v85
  %v443 = vunpack.c.l.b16 %v86
  %v444 = vunpack.c.l.b16 %v87
  %v445 = vunpack.c.l.b16 %v88
  %v446 = vunpack.c.l.b16 %v89
  %v447 = vunpack.c.l.b16 %v90
  %v448 = vunpack.c.l.b16 %v91
  %v449 = vunpack.c.l.b16 %v92
  %v450 = vunpack.c.l.b16 %v93
  %v451 = vunpack.c.l.b16 %v94
  %v452 = vunpack.c.l.b16 %v95
  %v453 = vunpack.c.l.b16 %v96
  %v454 = vunpack.c.l.b16 %v97
  %v455 = vunpack.c.l.b16 %v98
  %v456 = vunpack.c.l.b16 %v99
  %v457 = vunpack.c.l.b16 %v100
  %v458 = vunpack.c.l.b16 %v101
  %v459 = vunpack.c.l.b16 %v102
  %v460 = vunpack.c.l.b16 %v103
  %v461 = vunpack.c.l.b16 %v104
  %v462 = vunpack.c.l.b16 %v105
  %v463 = vunpack.c.l.b16 %v106
  %v464 = vunpack.c.l.b16 %v107
  %v465 = vunpack.c.l.b16 %v108
  %v466 = vunpack.c.l.b16 %v109
  %v467 = vunpack.c.l.b16 %v110
  %v468 = vunpack.c.l.b16 %v111
  %v469 = vunpack.c.l.b16 %v112
  %v470 = vunpack.c.l.b16 %v113
  %v471 = vunpack.c.l.b16 %v114
  %v472 = vunpack.c.l.b16 %v115
  %v473 = vunpack.c.l.b16 %v116
  %v474 = vunpack.c.l.b16 %v117
  %v475 = vunpack.c.l.b16 %v118
  %v476 = vunpack.c.l.b16 %v119
  %v477 = vunpack.c.l.b16 %v120
  %v478 = vunpack.c.l.b16 %v121
  %v479 = vunpack.c.l.b16 %v122
  %v480 = vunpack.c.l.b16 %v123
  %v481 = vunpack.c.l.b16 %v124
  %v482 = vunpack.c.l.b16 %v125
  %v483 = vunpack.c.l.b16 %v126
  %v484 = vunpack.c.l.b16 %v127
  %v485 = vunpack.c.l.b16 %v128
  %v486 = vunpack.c.l.b16 %v129
  %v487 = vunpack.c.l.b16 %v130
  %v488 = vunpack.c.l.b16 %v131
  %v489 = vunpack.c.l.b16 %v132
  %v490 = vunpack.c.l.b16 %v133
  %v491 = vunpack.c.l.b16 %v134
  %v492 = vunpack.c.l.b16 %v135
  %v493 = vunpack.c.l.b16 %v136
  %v494 = vunpack.c.l.b16 %v137
  %v495 = vpack.c.b16 %v421, %v420
  %v496 = vpack.c.b16 %v423, %v422
  %v497 = vpack.c.b16 %v425, %v424
  %v498 = vpack.c.b16 %v427, %v426
  %v499 = vpack.c.b16 %v429, %v428
  %v500 = vpack.c.b16 %v431, %v430
  %v501 = vpack.c.b16 %v433, %v432
  %v502 = vpack.c.b16 %v435, %v434
  %v503 = vpack.c.b16 %v437, %v436
  %v504 = vpack.c.b16 %v439, %v438
  %v505 = vpack.c.b16 %v441, %v440
  %v506 = vpack.c.b16 %v443, %v442
  %v507 = vpack.c.b16 %v445, %v444
  %v508 = vpack.c.b16 %v447, %v446
  %v509 = vpack.c.b16 %v449, %v448
  %v510 = vpack.c.b16 %v451, %v450
  %v511 = vpack.c.b16 %v453, %v452
  %v512 = vpack.c.b16 %v455, %v454
  %v513 = vpack.c.b16 %v457, %v456
  %v514 = vpack.c.b16 %v459, %v458
  %v515 = vpack.c.b16 %v461, %v460
  %v516 = vpack.c.b16 %v463, %v462
  %v517 = vpack.c.b16 %v465, %v464
  %v518 = vpack.c.b16 %v467, %v466
  %v519 = vpack.c.b16 %v469, %v468
  %v520 = vpack.c.b16 %v471, %v470
  %v521 = vpack.c.b16 %v473, %v472
  %v522 = vpack.c.b16 %v475, %v474
  %v523 = vpack.c.b16 %v477, %v476
  %v524 = vpack.c.b16 %v479, %v478
  %v525 = vpack.c.b16 %v481, %v480
  %v526 = vpack.c.b16 %v483, %v482
  %v527 = vpack.c.b16 %v485, %v484
  %v528 = vpack.c.b16 %v487, %v486
  %v529 = vpack.c.b16 %v489, %v488
  %v530 = vpack.c.b16 %v491, %v490
  %v531 = vpack.c.b16 %v493, %v492
  %v532 = vpack.c.b16 %v494, %v494
  %vm570 = vcmask 719872
  %v572 = vsel %vm570, %v277, 0
  %v575 = vsel %vm570, %v282, 0
  %v578 = vsel %vm570, %v287, 0
  %v581 = vsel %vm570, %v292, 0
  %v584 = vsel %vm570, %v297, 0
  %v587 = vsel %vm570, %v302, 0
  %v590 = vsel %vm570, %v307, 0
  %v593 = vsel %vm570, %v312, 0
  %vm595 = vcmask 1043456
  %v597 = vsel %vm595, %v532, 0
  %599 = vmatprep.subr.bf16.mxu0 0
  %600 = vmatpush1.bf16.msra.mxu0 %v495
  %601 = vmatprep.subr.bf16.mxu0 0
  %602 = vmatpush1.bf16.msra.mxu0 %v496
  %603 = vmatprep.subr.bf16.mxu0 0
  %604 = vmatpush1.bf16.msra.mxu0 %v497
  %605 = vmatprep.subr.bf16.mxu0 0
  %606 = vmatpush1.bf16.msra.mxu0 %v498
  %607 = vmatprep.subr.bf16.mxu0 0
  %608 = vmatpush1.bf16.msra.mxu0 %v499
  %609 = vmatprep.subr.bf16.mxu0 0
  %610 = vmatpush1.bf16.msra.mxu0 %v500
  %611 = vmatprep.subr.bf16.mxu0 0
  %612 = vmatpush1.bf16.msra.mxu0 %v501
  %613 = vmatprep.subr.bf16.mxu0 0
  %614 = vmatpush1.bf16.msra.mxu0 %v502
  %615 = vmatprep.subr.bf16.mxu0 0
  %616 = vmatpush1.bf16.msra.mxu0 %v503
  %617 = vmatprep.subr.bf16.mxu0 0
  %618 = vmatpush1.bf16.msra.mxu0 %v504
  %619 = vmatprep.subr.bf16.mxu0 0
  %620 = vmatpush1.bf16.msra.mxu0 %v505
  %621 = vmatprep.subr.bf16.mxu0 0
  %622 = vmatpush1.bf16.msra.mxu0 %v506
  %623 = vmatprep.subr.bf16.mxu0 0
  %624 = vmatpush1.bf16.msra.mxu0 %v507
  %625 = vmatprep.subr.bf16.mxu0 0
  %626 = vmatpush1.bf16.msra.mxu0 %v508
  %627 = vmatprep.subr.bf16.mxu0 0
  %628 = vmatpush1.bf16.msra.mxu0 %v509
  %629 = vmatprep.subr.bf16.mxu0 0
  %630 = vmatpush1.bf16.msra.mxu0 %v510
  %631 = vmatprep.mubr.bf16.mxu0 %v274
  %632 = vmatmul.mubr.bf16.gmra.mrb[0].mxu0 %v273
  %v633 = vpop.f32.mrb[0].mxu0
  %v634 = vadd.f32 %v143, %v633
  %v635 = vpop.f32.mrb[0].mxu0
  %v636 = vpop.f32.mrb[0].mxu0
  %v637 = vadd.f32 %v143, %v636
  %v638 = vpop.f32.mrb[0].mxu0
  %639 = vmatprep.mubr.bf16.mxu0 %v279
  %640 = vmatmul.mubr.bf16.gmra.mrb[0].mxu0 %v278
  %v641 = vpop.f32.mrb[0].mxu0
  %v642 = vadd.f32 %v143, %v641
  %v643 = vpop.f32.mrb[0].mxu0
  %v644 = vpop.f32.mrb[0].mxu0
  %v645 = vadd.f32 %v143, %v644
  %v646 = vpop.f32.mrb[0].mxu0
  %647 = vmatprep.mubr.bf16.mxu0 %v284
  %648 = vmatmul.mubr.bf16.gmra.mrb[0].mxu0 %v283
  %v649 = vpop.f32.mrb[0].mxu0
  %v650 = vadd.f32 %v143, %v649
  %v651 = vpop.f32.mrb[0].mxu0
  %v652 = vpop.f32.mrb[0].mxu0
  %v653 = vadd.f32 %v143, %v652
  %v654 = vpop.f32.mrb[0].mxu0
  %655 = vmatprep.mubr.bf16.mxu0 %v289
  %656 = vmatmul.mubr.bf16.gmra.mrb[0].mxu0 %v288
  %v657 = vpop.f32.mrb[0].mxu0
  %v658 = vadd.f32 %v143, %v657
  %v659 = vpop.f32.mrb[0].mxu0
  %v660 = vpop.f32.mrb[0].mxu0
  %v661 = vadd.f32 %v143, %v660
  %v662 = vpop.f32.mrb[0].mxu0
  %663 = vmatprep.mubr.bf16.mxu0 %v294
  %664 = vmatmul.mubr.bf16.gmra.mrb[0].mxu0 %v293
  %v665 = vpop.f32.mrb[0].mxu0
  %v666 = vadd.f32 %v143, %v665
  %v667 = vpop.f32.mrb[0].mxu0
  %v668 = vpop.f32.mrb[0].mxu0
  %v669 = vadd.f32 %v143, %v668
  %v670 = vpop.f32.mrb[0].mxu0
  %671 = vmatprep.mubr.bf16.mxu0 %v299
  %672 = vmatmul.mubr.bf16.gmra.mrb[0].mxu0 %v298
  %v673 = vpop.f32.mrb[0].mxu0
  %v674 = vadd.f32 %v143, %v673
  %v675 = vpop.f32.mrb[0].mxu0
  %v676 = vpop.f32.mrb[0].mxu0
  %v677 = vadd.f32 %v143, %v676
  %v678 = vpop.f32.mrb[0].mxu0
  %679 = vmatprep.mubr.bf16.mxu0 %v304
  %680 = vmatmul.mubr.bf16.gmra.mrb[0].mxu0 %v303
  %v681 = vpop.f32.mrb[0].mxu0
  %v682 = vadd.f32 %v143, %v681
  %v683 = vpop.f32.mrb[0].mxu0
  %v684 = vpop.f32.mrb[0].mxu0
  %v685 = vadd.f32 %v143, %v684
  %v686 = vpop.f32.mrb[0].mxu0
  %687 = vmatprep.mubr.bf16.mxu0 %v309
  %688 = vmatmul.mubr.bf16.gmra.mrb[0].mxu0 %v308
  %v689 = vpop.f32.mrb[0].mxu0
  %v690 = vadd.f32 %v143, %v689
  %v691 = vpop.f32.mrb[0].mxu0
  %v692 = vpop.f32.mrb[0].mxu0
  %v693 = vadd.f32 %v143, %v692
  %v694 = vpop.f32.mrb[0].mxu0
  %695 = vdwg.mxu0
  %696 = vmatprep.subr.bf16.mxu0 0
  %697 = vmatpush1.bf16.msra.mxu0 %v511
  %698 = vmatprep.subr.bf16.mxu0 0
  %699 = vmatpush1.bf16.msra.mxu0 %v512
  %700 = vmatprep.subr.bf16.mxu0 0
  %701 = vmatpush1.bf16.msra.mxu0 %v513
  %702 = vmatprep.subr.bf16.mxu0 0
  %703 = vmatpush1.bf16.msra.mxu0 %v514
  %704 = vmatprep.subr.bf16.mxu0 0
  %705 = vmatpush1.bf16.msra.mxu0 %v515
  %706 = vmatprep.subr.bf16.mxu0 0
  %707 = vmatpush1.bf16.msra.mxu0 %v516
  %708 = vmatprep.subr.bf16.mxu0 0
  %709 = vmatpush1.bf16.msra.mxu0 %v517
  %710 = vmatprep.subr.bf16.mxu0 0
  %711 = vmatpush1.bf16.msra.mxu0 %v518
  %712 = vmatprep.subr.bf16.mxu0 0
  %713 = vmatpush1.bf16.msra.mxu0 %v519
  %714 = vmatprep.subr.bf16.mxu0 0
  %715 = vmatpush1.bf16.msra.mxu0 %v520
  %716 = vmatprep.subr.bf16.mxu0 0
  %717 = vmatpush1.bf16.msra.mxu0 %v521
  %718 = vmatprep.subr.bf16.mxu0 0
  %719 = vmatpush1.bf16.msra.mxu0 %v522
  %720 = vmatprep.subr.bf16.mxu0 0
  %721 = vmatpush1.bf16.msra.mxu0 %v523
  %722 = vmatprep.subr.bf16.mxu0 0
  %723 = vmatpush1.bf16.msra.mxu0 %v524
  %724 = vmatprep.subr.bf16.mxu0 0
  %725 = vmatpush1.bf16.msra.mxu0 %v525
  %726 = vmatprep.subr.bf16.mxu0 0
  %727 = vmatpush1.bf16.msra.mxu0 %v526
  %728 = vmatprep.mubr.bf16.mxu0 %v276
  %729 = vmatmul.mubr.bf16.gmra.mrb[0].mxu0 %v275
  %v730 = vpop.f32.mrb[0].mxu0
  %v731 = vadd.f32 %v634, %v730
  %v732 = vpop.f32.mrb[0].mxu0
  %v733 = vpop.f32.mrb[0].mxu0
  %v734 = vadd.f32 %v637, %v733
  %v735 = vpop.f32.mrb[0].mxu0
  %736 = vmatprep.mubr.bf16.mxu0 %v281
  %737 = vmatmul.mubr.bf16.gmra.mrb[0].mxu0 %v280
  %v738 = vpop.f32.mrb[0].mxu0
  %v739 = vadd.f32 %v642, %v738
  %v740 = vpop.f32.mrb[0].mxu0
  %v741 = vpop.f32.mrb[0].mxu0
  %v742 = vadd.f32 %v645, %v741
  %v743 = vpop.f32.mrb[0].mxu0
  %744 = vmatprep.mubr.bf16.mxu0 %v286
  %745 = vmatmul.mubr.bf16.gmra.mrb[0].mxu0 %v285
  %v746 = vpop.f32.mrb[0].mxu0
  %v747 = vadd.f32 %v650, %v746
  %v748 = vpop.f32.mrb[0].mxu0
  %v749 = vpop.f32.mrb[0].mxu0
  %v750 = vadd.f32 %v653, %v749
  %v751 = vpop.f32.mrb[0].mxu0
  %752 = vmatprep.mubr.bf16.mxu0 %v291
  %753 = vmatmul.mubr.bf16.gmra.mrb[0].mxu0 %v290
  %v754 = vpop.f32.mrb[0].mxu0
  %v755 = vadd.f32 %v658, %v754
  %v756 = vpop.f32.mrb[0].mxu0
  %v757 = vpop.f32.mrb[0].mxu0
  %v758 = vadd.f32 %v661, %v757
  %v759 = vpop.f32.mrb[0].mxu0
  %760 = vmatprep.mubr.bf16.mxu0 %v296
  %761 = vmatmul.mubr.bf16.gmra.mrb[0].mxu0 %v295
  %v762 = vpop.f32.mrb[0].mxu0
  %v763 = vadd.f32 %v666, %v762
  %v764 = vpop.f32.mrb[0].mxu0
  %v765 = vpop.f32.mrb[0].mxu0
  %v766 = vadd.f32 %v669, %v765
  %v767 = vpop.f32.mrb[0].mxu0
  %768 = vmatprep.mubr.bf16.mxu0 %v301
  %769 = vmatmul.mubr.bf16.gmra.mrb[0].mxu0 %v300
  %v770 = vpop.f32.mrb[0].mxu0
  %v771 = vadd.f32 %v674, %v770
  %v772 = vpop.f32.mrb[0].mxu0
  %v773 = vpop.f32.mrb[0].mxu0
  %v774 = vadd.f32 %v677, %v773
  %v775 = vpop.f32.mrb[0].mxu0
  %776 = vmatprep.mubr.bf16.mxu0 %v306
  %777 = vmatmul.mubr.bf16.gmra.mrb[0].mxu0 %v305
  %v778 = vpop.f32.mrb[0].mxu0
  %v779 = vadd.f32 %v682, %v778
  %v780 = vpop.f32.mrb[0].mxu0
  %v781 = vpop.f32.mrb[0].mxu0
  %v782 = vadd.f32 %v685, %v781
  %v783 = vpop.f32.mrb[0].mxu0
  %784 = vmatprep.mubr.bf16.mxu0 %v311
  %785 = vmatmul.mubr.bf16.gmra.mrb[0].mxu0 %v310
  %v786 = vpop.f32.mrb[0].mxu0
  %v787 = vadd.f32 %v690, %v786
  %v788 = vpop.f32.mrb[0].mxu0
  %v789 = vpop.f32.mrb[0].mxu0
  %v790 = vadd.f32 %v693, %v789
  %v791 = vpop.f32.mrb[0].mxu0
  %792 = vdwg.mxu0
  %793 = vmatprep.subr.bf16.mxu0 0
  %794 = vmatpush1.bf16.msra.mxu0 %v527
  %795 = vmatprep.subr.bf16.mxu0 0
  %796 = vmatpush1.bf16.msra.mxu0 %v528
  %797 = vmatprep.subr.bf16.mxu0 0
  %798 = vmatpush1.bf16.msra.mxu0 %v529
  %799 = vmatprep.subr.bf16.mxu0 0
  %800 = vmatpush1.bf16.msra.mxu0 %v530
  %801 = vmatprep.subr.bf16.mxu0 0
  %802 = vmatpush1.bf16.msra.mxu0 %v531
  %803 = vmatprep.subr.bf16.mxu0 0
  %804 = vmatpush1.bf16.msra.mxu0 %v597
  %805 = vmatprep.subr.bf16.mxu0 0
  %806 = vmatpush1.bf16.msra.mxu0 0
  %807 = vmatprep.subr.bf16.mxu0 0
  %808 = vmatpush1.bf16.msra.mxu0 0
  %809 = vmatprep.subr.bf16.mxu0 0
  %810 = vmatpush1.bf16.msra.mxu0 0
  %811 = vmatprep.subr.bf16.mxu0 0
  %812 = vmatpush1.bf16.msra.mxu0 0
  %813 = vmatprep.subr.bf16.mxu0 0
  %814 = vmatpush1.bf16.msra.mxu0 0
  %815 = vmatprep.subr.bf16.mxu0 0
  %816 = vmatpush1.bf16.msra.mxu0 0
  %817 = vmatprep.subr.bf16.mxu0 0
  %818 = vmatpush1.bf16.msra.mxu0 0
  %819 = vmatprep.subr.bf16.mxu0 0
  %820 = vmatpush1.bf16.msra.mxu0 0
  %821 = vmatprep.subr.bf16.mxu0 0
  %822 = vmatpush1.bf16.msra.mxu0 0
  %823 = vmatprep.subr.bf16.mxu0 0
  %824 = vmatpush1.bf16.msra.mxu0 0
  %825 = vmatprep.mubr.bf16.mxu0 0
  %826 = vmatmul.mubr.bf16.gmra.mrb[0].mxu0 %v572
  %v827 = vpop.f32.mrb[0].mxu0
  %v828 = vadd.f32 %v731, %v827
  %v829 = vpop.f32.mrb[0].mxu0
  %v830 = vpop.f32.mrb[0].mxu0
  %v831 = vadd.f32 %v734, %v830
  %v832 = vpop.f32.mrb[0].mxu0
  %833 = vmatprep.mubr.bf16.mxu0 0
  %834 = vmatmul.mubr.bf16.gmra.mrb[0].mxu0 %v575
  %v835 = vpop.f32.mrb[0].mxu0
  %v836 = vadd.f32 %v739, %v835
  %v837 = vpop.f32.mrb[0].mxu0
  %v838 = vpop.f32.mrb[0].mxu0
  %v839 = vadd.f32 %v742, %v838
  %v840 = vpop.f32.mrb[0].mxu0
  %841 = vmatprep.mubr.bf16.mxu0 0
  %842 = vmatmul.mubr.bf16.gmra.mrb[0].mxu0 %v578
  %v843 = vpop.f32.mrb[0].mxu0
  %v844 = vadd.f32 %v747, %v843
  %v845 = vpop.f32.mrb[0].mxu0
  %v846 = vpop.f32.mrb[0].mxu0
  %v847 = vadd.f32 %v750, %v846
  %v848 = vpop.f32.mrb[0].mxu0
  %849 = vmatprep.mubr.bf16.mxu0 0
  %850 = vmatmul.mubr.bf16.gmra.mrb[0].mxu0 %v581
  %v851 = vpop.f32.mrb[0].mxu0
  %v852 = vadd.f32 %v755, %v851
  %v853 = vpop.f32.mrb[0].mxu0
  %v854 = vpop.f32.mrb[0].mxu0
  %v855 = vadd.f32 %v758, %v854
  %v856 = vpop.f32.mrb[0].mxu0
  %857 = vmatprep.mubr.bf16.mxu0 0
  %858 = vmatmul.mubr.bf16.gmra.mrb[0].mxu0 %v584
  %v859 = vpop.f32.mrb[0].mxu0
  %v860 = vadd.f32 %v763, %v859
  %v861 = vpop.f32.mrb[0].mxu0
  %v862 = vpop.f32.mrb[0].mxu0
  %v863 = vadd.f32 %v766, %v862
  %v864 = vpop.f32.mrb[0].mxu0
  %865 = vmatprep.mubr.bf16.mxu0 0
  %866 = vmatmul.mubr.bf16.gmra.mrb[0].mxu0 %v587
  %v867 = vpop.f32.mrb[0].mxu0
  %v868 = vadd.f32 %v771, %v867
  %v869 = vpop.f32.mrb[0].mxu0
  %v870 = vpop.f32.mrb[0].mxu0
  %v871 = vadd.f32 %v774, %v870
  %v872 = vpop.f32.mrb[0].mxu0
  %873 = vmatprep.mubr.bf16.mxu0 0
  %874 = vmatmul.mubr.bf16.gmra.mrb[0].mxu0 %v590
  %v875 = vpop.f32.mrb[0].mxu0
  %v876 = vadd.f32 %v779, %v875
  %v877 = vpop.f32.mrb[0].mxu0
  %v878 = vpop.f32.mrb[0].mxu0
  %v879 = vadd.f32 %v782, %v878
  %v880 = vpop.f32.mrb[0].mxu0
  %881 = vmatprep.mubr.bf16.mxu0 0
  %882 = vmatmul.mubr.bf16.gmra.mrb[0].mxu0 %v593
  %v883 = vpop.f32.mrb[0].mxu0
  %v884 = vadd.f32 %v787, %v883
  %v885 = vpop.f32.mrb[0].mxu0
  %v886 = vpop.f32.mrb[0].mxu0
  %v887 = vadd.f32 %v790, %v886
  %v888 = vpop.f32.mrb[0].mxu0
  %889 = vdwg.mxu0
  %v890 = vmax.f32 %v828, 0.0
  %v891 = vmax.f32 %v831, 0.0
  %v892 = vmax.f32 %v836, 0.0
  %v893 = vmax.f32 %v839, 0.0
  %v894 = vmax.f32 %v844, 0.0
  %v895 = vmax.f32 %v847, 0.0
  %v896 = vmax.f32 %v852, 0.0
  %v897 = vmax.f32 %v855, 0.0
  %v898 = vmax.f32 %v860, 0.0
  %v899 = vmax.f32 %v863, 0.0
  %v900 = vmax.f32 %v868, 0.0
  %v901 = vmax.f32 %v871, 0.0
  %v902 = vmax.f32 %v876, 0.0
  %v903 = vmax.f32 %v879, 0.0
  %v904 = vmax.f32 %v884, 0.0
  %v905 = vmax.f32 %v887, 0.0
  %v906 = vpack.c.bf16 %v891, %v890
  %v907 = vpack.c.bf16 %v893, %v892
  %v908 = vpack.c.bf16 %v895, %v894
  %v909 = vpack.c.bf16 %v897, %v896
  %v910 = vpack.c.bf16 %v899, %v898
  %v911 = vpack.c.bf16 %v901, %v900
  %v912 = vpack.c.bf16 %v903, %v902
  %v913 = vpack.c.bf16 %v905, %v904
  %v922 = vunpack.c.l.b16 %v906
  %v923 = vunpack.c.h.b16 %v906
  %v924 = vunpack.c.l.b16 %v907
  %v925 = vunpack.c.h.b16 %v907
  %v926 = vunpack.c.l.b16 %v908
  %v927 = vunpack.c.h.b16 %v908
  %v928 = vunpack.c.l.b16 %v909
  %v929 = vunpack.c.h.b16 %v909
  %v930 = vunpack.c.l.b16 %v910
  %v931 = vunpack.c.h.b16 %v910
  %v932 = vunpack.c.l.b16 %v911
  %v933 = vunpack.c.h.b16 %v911
  %v934 = vunpack.c.l.b16 %v912
  %v935 = vunpack.c.h.b16 %v912
  %v936 = vunpack.c.l.b16 %v913
  %v937 = vunpack.c.h.b16 %v913
  %v938 = vpack.c.b16 %v922, %v922
  %v939 = vpack.c.b16 %v923, %v923
  %v940 = vpack.c.b16 %v924, %v924
  %v941 = vpack.c.b16 %v925, %v925
  %v942 = vpack.c.b16 %v926, %v926
  %v943 = vpack.c.b16 %v927, %v927
  %v944 = vpack.c.b16 %v928, %v928
  %v945 = vpack.c.b16 %v929, %v929
  %v946 = vpack.c.b16 %v930, %v930
  %v947 = vpack.c.b16 %v931, %v931
  %v948 = vpack.c.b16 %v932, %v932
  %v949 = vpack.c.b16 %v933, %v933
  %v950 = vpack.c.b16 %v934, %v934
  %v951 = vpack.c.b16 %v935, %v935
  %v952 = vpack.c.b16 %v936, %v936
  %v953 = vpack.c.b16 %v937, %v937
  %vm970 = vcmask 519168
  %971 = vst.msk [vmem:[%s3] sm:$0xf] %vm970, %v938
  %972 = vst.msk [vmem:[%s3 + $0x4] sm:$0xf] %vm970, %v939
  %973 = vst.msk [vmem:[%s3 + $0x8] sm:$0xf] %vm970, %v940
  %974 = vst.msk [vmem:[%s3 + $0xc] sm:$0xf] %vm970, %v941
  %975 = vst.msk [vmem:[%s3 + $0x10] sm:$0xf] %vm970, %v942
  %976 = vst.msk [vmem:[%s3 + $0x14] sm:$0xf] %vm970, %v943
  %977 = vst.msk [vmem:[%s3 + $0x18] sm:$0xf] %vm970, %v944
  %978 = vst.msk [vmem:[%s3 + $0x1c] sm:$0xf] %vm970, %v945
  %979 = vst.msk [vmem:[%s3 + $0x20] sm:$0xf] %vm970, %v946
  %980 = vst.msk [vmem:[%s3 + $0x24] sm:$0xf] %vm970, %v947
  %981 = vst.msk [vmem:[%s3 + $0x28] sm:$0xf] %vm970, %v948
  %982 = vst.msk [vmem:[%s3 + $0x2c] sm:$0xf] %vm970, %v949
  %983 = vst.msk [vmem:[%s3 + $0x30] sm:$0xf] %vm970, %v950
  %984 = vst.msk [vmem:[%s3 + $0x34] sm:$0xf] %vm970, %v951
  %985 = vst.msk [vmem:[%s3 + $0x38] sm:$0xf] %vm970, %v952
  %986 = vst.msk [vmem:[%s3 + $0x3c] sm:$0xf] %vm970, %v953
  // Predicated region
  $region14: #{crowd_counter_forward.15} parent=0 // pred_check
    _
  $region15: #{crowd_counter_forward.15} parent=0 // pred_check_branch
    %988 = sbr.rel (0) target = $region17
  $region16: #{crowd_counter_forward.15} parent=0 // pred_region
    _
  $region17: #{crowd_counter_forward.15} parent=0 // pred_fallthru
    _
  // Predicated region
  $region18: #{crowd_counter_forward.15} parent=0 // pred_check
    _
  $region19: #{crowd_counter_forward.15} parent=0 // pred_check_branch
    %990 = sbr.rel (0) target = $region21
  $region20: #{crowd_counter_forward.15} parent=0 // pred_region
    _
  $region21: #{crowd_counter_forward.15} parent=0 // pred_fallthru
    _

// kernel: crowd_counter_forward.16
$region0: #{crowd_counter_forward.16}
  #allocation0 [shape = 'u32[]', space=smem, size = 0x4, offset = 0x4, fixed_abs, tag = 'smem constant byte address 0x4 - core index']
  #allocation1 [shape = 'u32[144,128]{1,0:T(1,128)}', space=vmem, size = 0x12000, scoped, tag = 'internal scratch']
  %s0 = inlined_call_operand.vmem [shape: bf16[32,1000], index: 0, kind: input, shape index: {}]
  %s1 = inlined_call_operand.vmem [shape: bf16[1000,32], index: 1, kind: input, shape index: {}]
  %s2 = inlined_call_operand.vmem [shape: f32[1,32], index: 2, kind: input, shape index: {}]
  %s3 = inlined_call_operand.vmem [shape: bf16[32,32], index: 3, kind: output, shape index: {}]
  %s4 = sld [smem:[#allocation0]]
  $region22: #{crowd_counter_forward.16} parent=0
    _
  %s6 = ssub.s32 1, %s4
  %s7 = scalar_select 0, %s6, %s4
  // Predicated region
  $region2: #{crowd_counter_forward.16} parent=0 // pred_check
    _
  $region3: #{crowd_counter_forward.16} parent=0 // pred_check_branch
    %9 = sbr.rel (0) target = $region5
  $region4: #{crowd_counter_forward.16} parent=0 // pred_region
    _
  $region5: #{crowd_counter_forward.16} parent=0 // pred_fallthru
    _
  // Predicated region
  $region6: #{crowd_counter_forward.16} parent=0 // pred_check
    _
  $region7: #{crowd_counter_forward.16} parent=0 // pred_check_branch
    %11 = sbr.rel (0) target = $region9
  $region8: #{crowd_counter_forward.16} parent=0 // pred_region
    _
  $region9: #{crowd_counter_forward.16} parent=0 // pred_fallthru
    _
  // Predicated region
  $region10: #{crowd_counter_forward.16} parent=0 // pred_check
    _
  $region11: #{crowd_counter_forward.16} parent=0 // pred_check_branch
    %13 = sbr.rel (0) target = $region13
  $region12: #{crowd_counter_forward.16} parent=0 // pred_region
    _
  $region13: #{crowd_counter_forward.16} parent=0 // pred_fallthru
    _
  %v15 = vld [vmem:[%s0] sm:$0xff]
  %v16 = vld [vmem:[%s0 + $0x8] sm:$0xff]
  %v17 = vld [vmem:[%s0 + $0x10] sm:$0xff]
  %v18 = vld [vmem:[%s0 + $0x18] sm:$0xff]
  %v19 = vld [vmem:[%s0 + $0x20] sm:$0xff]
  %v20 = vld [vmem:[%s0 + $0x28] sm:$0xff]
  %v21 = vld [vmem:[%s0 + $0x30] sm:$0xff]
  %v22 = vld [vmem:[%s0 + $0x38] sm:$0xff]
  %v23 = vld [vmem:[%s0 + $0x40] sm:$0xff]
  %v24 = vld [vmem:[%s0 + $0x48] sm:$0xff]
  %v25 = vld [vmem:[%s0 + $0x50] sm:$0xff]
  %v26 = vld [vmem:[%s0 + $0x58] sm:$0xff]
  %v27 = vld [vmem:[%s0 + $0x60] sm:$0xff]
  %v28 = vld [vmem:[%s0 + $0x68] sm:$0xff]
  %v29 = vld [vmem:[%s0 + $0x70] sm:$0xff]
  %v30 = vld [vmem:[%s0 + $0x78] sm:$0xff]
  %v31 = vld [vmem:[%s1] sm:$0xf]
  %v32 = vld [vmem:[%s1 + $0x4] sm:$0xf]
  %v33 = vld [vmem:[%s1 + $0x8] sm:$0xf]
  %v34 = vld [vmem:[%s1 + $0xc] sm:$0xf]
  %v35 = vld [vmem:[%s1 + $0x10] sm:$0xf]
  %v36 = vld [vmem:[%s1 + $0x14] sm:$0xf]
  %v37 = vld [vmem:[%s1 + $0x18] sm:$0xf]
  %v38 = vld [vmem:[%s1 + $0x1c] sm:$0xf]
  %v39 = vld [vmem:[%s1 + $0x20] sm:$0xf]
  %v40 = vld [vmem:[%s1 + $0x24] sm:$0xf]
  %v41 = vld [vmem:[%s1 + $0x28] sm:$0xf]
  %v42 = vld [vmem:[%s1 + $0x2c] sm:$0xf]
  %v43 = vld [vmem:[%s1 + $0x30] sm:$0xf]
  %v44 = vld [vmem:[%s1 + $0x34] sm:$0xf]
  %v45 = vld [vmem:[%s1 + $0x38] sm:$0xf]
  %v46 = vld [vmem:[%s1 + $0x3c] sm:$0xf]
  %v47 = vld [vmem:[%s1 + $0x40] sm:$0xf]
  %v48 = vld [vmem:[%s1 + $0x44] sm:$0xf]
  %v49 = vld [vmem:[%s1 + $0x48] sm:$0xf]
  %v50 = vld [vmem:[%s1 + $0x4c] sm:$0xf]
  %v51 = vld [vmem:[%s1 + $0x50] sm:$0xf]
  %v52 = vld [vmem:[%s1 + $0x54] sm:$0xf]
  %v53 = vld [vmem:[%s1 + $0x58] sm:$0xf]
  %v54 = vld [vmem:[%s1 + $0x5c] sm:$0xf]
  %v55 = vld [vmem:[%s1 + $0x60] sm:$0xf]
  %v56 = vld [vmem:[%s1 + $0x64] sm:$0xf]
  %v57 = vld [vmem:[%s1 + $0x68] sm:$0xf]
  %v58 = vld [vmem:[%s1 + $0x6c] sm:$0xf]
  %v59 = vld [vmem:[%s1 + $0x70] sm:$0xf]
  %v60 = vld [vmem:[%s1 + $0x74] sm:$0xf]
  %v61 = vld [vmem:[%s1 + $0x78] sm:$0xf]
  %v62 = vld [vmem:[%s1 + $0x7c] sm:$0xf]
  %v63 = vld [vmem:[%s1 + $0x80] sm:$0xf]
  %v64 = vld [vmem:[%s1 + $0x84] sm:$0xf]
  %v65 = vld [vmem:[%s1 + $0x88] sm:$0xf]
  %v66 = vld [vmem:[%s1 + $0x8c] sm:$0xf]
  %v67 = vld [vmem:[%s1 + $0x90] sm:$0xf]
  %v68 = vld [vmem:[%s1 + $0x94] sm:$0xf]
  %v69 = vld [vmem:[%s1 + $0x98] sm:$0xf]
  %v70 = vld [vmem:[%s1 + $0x9c] sm:$0xf]
  %v71 = vld [vmem:[%s1 + $0xa0] sm:$0xf]
  %v72 = vld [vmem:[%s1 + $0xa4] sm:$0xf]
  %v73 = vld [vmem:[%s1 + $0xa8] sm:$0xf]
  %v74 = vld [vmem:[%s1 + $0xac] sm:$0xf]
  %v75 = vld [vmem:[%s1 + $0xb0] sm:$0xf]
  %v76 = vld [vmem:[%s1 + $0xb4] sm:$0xf]
  %v77 = vld [vmem:[%s1 + $0xb8] sm:$0xf]
  %v78 = vld [vmem:[%s1 + $0xbc] sm:$0xf]
  %v79 = vld [vmem:[%s1 + $0xc0] sm:$0xf]
  %v80 = vld [vmem:[%s1 + $0xc4] sm:$0xf]
  %v81 = vld [vmem:[%s1 + $0xc8] sm:$0xf]
  %v82 = vld [vmem:[%s1 + $0xcc] sm:$0xf]
  %v83 = vld [vmem:[%s1 + $0xd0] sm:$0xf]
  %v84 = vld [vmem:[%s1 + $0xd4] sm:$0xf]
  %v85 = vld [vmem:[%s1 + $0xd8] sm:$0xf]
  %v86 = vld [vmem:[%s1 + $0xdc] sm:$0xf]
  %v87 = vld [vmem:[%s1 + $0xe0] sm:$0xf]
  %v88 = vld [vmem:[%s1 + $0xe4] sm:$0xf]
  %v89 = vld [vmem:[%s1 + $0xe8] sm:$0xf]
  %v90 = vld [vmem:[%s1 + $0xec] sm:$0xf]
  %v91 = vld [vmem:[%s1 + $0xf0] sm:$0xf]
  %v92 = vld [vmem:[%s1 + $0xf4] sm:$0xf]
  %v93 = vld [vmem:[%s1 + $0xf8] sm:$0xf]
  %v94 = vld [vmem:[%s1 + $0xfc] sm:$0xf]
  %v95 = vld [vmem:[%s1 + $0x100] sm:$0xf]
  %v96 = vld [vmem:[%s1 + $0x104] sm:$0xf]
  %v97 = vld [vmem:[%s1 + $0x108] sm:$0xf]
  %v98 = vld [vmem:[%s1 + $0x10c] sm:$0xf]
  %v99 = vld [vmem:[%s1 + $0x110] sm:$0xf]
  %v100 = vld [vmem:[%s1 + $0x114] sm:$0xf]
  %v101 = vld [vmem:[%s1 + $0x118] sm:$0xf]
  %v102 = vld [vmem:[%s1 + $0x11c] sm:$0xf]
  %v103 = vld [vmem:[%s1 + $0x120] sm:$0xf]
  %v104 = vld [vmem:[%s1 + $0x124] sm:$0xf]
  %v105 = vld [vmem:[%s1 + $0x128] sm:$0xf]
  %v106 = vld [vmem:[%s1 + $0x12c] sm:$0xf]
  %v107 = vld [vmem:[%s1 + $0x130] sm:$0xf]
  %v108 = vld [vmem:[%s1 + $0x134] sm:$0xf]
  %v109 = vld [vmem:[%s1 + $0x138] sm:$0xf]
  %v110 = vld [vmem:[%s1 + $0x13c] sm:$0xf]
  %v111 = vld [vmem:[%s1 + $0x140] sm:$0xf]
  %v112 = vld [vmem:[%s1 + $0x144] sm:$0xf]
  %v113 = vld [vmem:[%s1 + $0x148] sm:$0xf]
  %v114 = vld [vmem:[%s1 + $0x14c] sm:$0xf]
  %v115 = vld [vmem:[%s1 + $0x150] sm:$0xf]
  %v116 = vld [vmem:[%s1 + $0x154] sm:$0xf]
  %v117 = vld [vmem:[%s1 + $0x158] sm:$0xf]
  %v118 = vld [vmem:[%s1 + $0x15c] sm:$0xf]
  %v119 = vld [vmem:[%s1 + $0x160] sm:$0xf]
  %v120 = vld [vmem:[%s1 + $0x164] sm:$0xf]
  %v121 = vld [vmem:[%s1 + $0x168] sm:$0xf]
  %v122 = vld [vmem:[%s1 + $0x16c] sm:$0xf]
  %v123 = vld [vmem:[%s1 + $0x170] sm:$0xf]
  %v124 = vld [vmem:[%s1 + $0x174] sm:$0xf]
  %v125 = vld [vmem:[%s1 + $0x178] sm:$0xf]
  %v126 = vld [vmem:[%s1 + $0x17c] sm:$0xf]
  %v127 = vld [vmem:[%s1 + $0x180] sm:$0xf]
  %v128 = vld [vmem:[%s1 + $0x184] sm:$0xf]
  %v129 = vld [vmem:[%s1 + $0x188] sm:$0xf]
  %v130 = vld [vmem:[%s1 + $0x18c] sm:$0xf]
  %v131 = vld [vmem:[%s1 + $0x190] sm:$0xf]
  %v132 = vld [vmem:[%s1 + $0x194] sm:$0xf]
  %v133 = vld [vmem:[%s1 + $0x198] sm:$0xf]
  %v134 = vld [vmem:[%s1 + $0x19c] sm:$0xf]
  %v135 = vld [vmem:[%s1 + $0x1a0] sm:$0xf]
  %v136 = vld [vmem:[%s1 + $0x1a4] sm:$0xf]
  %v137 = vld [vmem:[%s1 + $0x1a8] sm:$0xf]
  %v138 = vld [vmem:[%s1 + $0x1ac] sm:$0xf]
  %v139 = vld [vmem:[%s1 + $0x1b0] sm:$0xf]
  %v140 = vld [vmem:[%s1 + $0x1b4] sm:$0xf]
  %v141 = vld [vmem:[%s1 + $0x1b8] sm:$0xf]
  %v142 = vld [vmem:[%s1 + $0x1bc] sm:$0xf]
  %v143 = vld [vmem:[%s1 + $0x1c0] sm:$0xf]
  %v144 = vld [vmem:[%s1 + $0x1c4] sm:$0xf]
  %v145 = vld [vmem:[%s1 + $0x1c8] sm:$0xf]
  %v146 = vld [vmem:[%s1 + $0x1cc] sm:$0xf]
  %v147 = vld [vmem:[%s1 + $0x1d0] sm:$0xf]
  %v148 = vld [vmem:[%s1 + $0x1d4] sm:$0xf]
  %v149 = vld [vmem:[%s1 + $0x1d8] sm:$0xf]
  %v150 = vld [vmem:[%s1 + $0x1dc] sm:$0xf]
  %v151 = vld [vmem:[%s1 + $0x1e0] sm:$0xf]
  %v152 = vld [vmem:[%s1 + $0x1e4] sm:$0xf]
  %v153 = vld [vmem:[%s1 + $0x1e8] sm:$0xf]
  %v154 = vld [vmem:[%s1 + $0x1ec] sm:$0xf]
  %v155 = vld [vmem:[%s1 + $0x1f0] sm:$0xf]
  %v156 = vld [vmem:[%s2] sm:$0x1]
  %v158 = vlaneseq
  %v159 = vshrl.u32 %v158, 7
  %v160 = vsub.s32 0, %v159
  %v161 = vrot.slane %v156, %v160
  %v179 = vunpack.c.l.b16 %v15
  %v180 = vunpack.c.h.b16 %v15
  %v181 = vunpack.c.l.b16 %v16
  %v182 = vunpack.c.h.b16 %v16
  %v183 = vunpack.c.l.b16 %v17
  %v184 = vunpack.c.h.b16 %v17
  %v185 = vunpack.c.l.b16 %v18
  %v186 = vunpack.c.h.b16 %v18
  %v187 = vunpack.c.l.b16 %v19
  %v188 = vunpack.c.h.b16 %v19
  %v189 = vunpack.c.l.b16 %v20
  %v190 = vunpack.c.h.b16 %v20
  %v191 = vunpack.c.l.b16 %v21
  %v192 = vunpack.c.h.b16 %v21
  %v193 = vunpack.c.l.b16 %v22
  %v194 = vunpack.c.h.b16 %v22
  %v195 = vunpack.c.l.b16 %v23
  %v196 = vunpack.c.h.b16 %v23
  %v197 = vunpack.c.l.b16 %v24
  %v198 = vunpack.c.h.b16 %v24
  %v199 = vunpack.c.l.b16 %v25
  %v200 = vunpack.c.h.b16 %v25
  %v201 = vunpack.c.l.b16 %v26
  %v202 = vunpack.c.h.b16 %v26
  %v203 = vunpack.c.l.b16 %v27
  %v204 = vunpack.c.h.b16 %v27
  %v205 = vunpack.c.l.b16 %v28
  %v206 = vunpack.c.h.b16 %v28
  %v207 = vunpack.c.l.b16 %v29
  %v208 = vunpack.c.h.b16 %v29
  %v209 = vunpack.c.l.b16 %v30
  %v210 = vunpack.c.h.b16 %v30
  %v211 = vpack.c.b16 %v187, %v179
  %v212 = vpack.c.b16 %v188, %v180
  %v213 = vpack.c.b16 %v189, %v181
  %v214 = vpack.c.b16 %v190, %v182
  %v215 = vpack.c.b16 %v191, %v183
  %v216 = vpack.c.b16 %v192, %v184
  %v217 = vpack.c.b16 %v193, %v185
  %v218 = vpack.c.b16 %v194, %v186
  %v219 = vpack.c.b16 %v203, %v195
  %v220 = vpack.c.b16 %v204, %v196
  %v221 = vpack.c.b16 %v205, %v197
  %v222 = vpack.c.b16 %v206, %v198
  %v223 = vpack.c.b16 %v207, %v199
  %v224 = vpack.c.b16 %v208, %v200
  %v225 = vpack.c.b16 %v209, %v201
  %v226 = vpack.c.b16 %v210, %v202
  %v366 = vunpack.c.l.b16 %v31
  %v367 = vunpack.c.l.b16 %v32
  %v368 = vunpack.c.l.b16 %v33
  %v369 = vunpack.c.l.b16 %v34
  %v370 = vunpack.c.l.b16 %v35
  %v371 = vunpack.c.l.b16 %v36
  %v372 = vunpack.c.l.b16 %v37
  %v373 = vunpack.c.l.b16 %v38
  %v374 = vunpack.c.l.b16 %v39
  %v375 = vunpack.c.l.b16 %v40
  %v376 = vunpack.c.l.b16 %v41
  %v377 = vunpack.c.l.b16 %v42
  %v378 = vunpack.c.l.b16 %v43
  %v379 = vunpack.c.l.b16 %v44
  %v380 = vunpack.c.l.b16 %v45
  %v381 = vunpack.c.l.b16 %v46
  %v382 = vunpack.c.l.b16 %v47
  %v383 = vunpack.c.l.b16 %v48
  %v384 = vunpack.c.l.b16 %v49
  %v385 = vunpack.c.l.b16 %v50
  %v386 = vunpack.c.l.b16 %v51
  %v387 = vunpack.c.l.b16 %v52
  %v388 = vunpack.c.l.b16 %v53
  %v389 = vunpack.c.l.b16 %v54
  %v390 = vunpack.c.l.b16 %v55
  %v391 = vunpack.c.l.b16 %v56
  %v392 = vunpack.c.l.b16 %v57
  %v393 = vunpack.c.l.b16 %v58
  %v394 = vunpack.c.l.b16 %v59
  %v395 = vunpack.c.l.b16 %v60
  %v396 = vunpack.c.l.b16 %v61
  %v397 = vunpack.c.l.b16 %v62
  %v398 = vunpack.c.l.b16 %v63
  %v399 = vunpack.c.l.b16 %v64
  %v400 = vunpack.c.l.b16 %v65
  %v401 = vunpack.c.l.b16 %v66
  %v402 = vunpack.c.l.b16 %v67
  %v403 = vunpack.c.l.b16 %v68
  %v404 = vunpack.c.l.b16 %v69
  %v405 = vunpack.c.l.b16 %v70
  %v406 = vunpack.c.l.b16 %v71
  %v407 = vunpack.c.l.b16 %v72
  %v408 = vunpack.c.l.b16 %v73
  %v409 = vunpack.c.l.b16 %v74
  %v410 = vunpack.c.l.b16 %v75
  %v411 = vunpack.c.l.b16 %v76
  %v412 = vunpack.c.l.b16 %v77
  %v413 = vunpack.c.l.b16 %v78
  %v414 = vunpack.c.l.b16 %v79
  %v415 = vunpack.c.l.b16 %v80
  %v416 = vunpack.c.l.b16 %v81
  %v417 = vunpack.c.l.b16 %v82
  %v418 = vunpack.c.l.b16 %v83
  %v419 = vunpack.c.l.b16 %v84
  %v420 = vunpack.c.l.b16 %v85
  %v421 = vunpack.c.l.b16 %v86
  %v422 = vunpack.c.l.b16 %v87
  %v423 = vunpack.c.l.b16 %v88
  %v424 = vunpack.c.l.b16 %v89
  %v425 = vunpack.c.l.b16 %v90
  %v426 = vunpack.c.l.b16 %v91
  %v427 = vunpack.c.l.b16 %v92
  %v428 = vunpack.c.l.b16 %v93
  %v429 = vunpack.c.l.b16 %v94
  %v430 = vunpack.c.l.b16 %v95
  %v431 = vunpack.c.l.b16 %v96
  %v432 = vunpack.c.l.b16 %v97
  %v433 = vunpack.c.l.b16 %v98
  %v434 = vunpack.c.l.b16 %v99
  %v435 = vunpack.c.l.b16 %v100
  %v436 = vunpack.c.l.b16 %v101
  %v437 = vunpack.c.l.b16 %v102
  %v438 = vunpack.c.l.b16 %v103
  %v439 = vunpack.c.l.b16 %v104
  %v440 = vunpack.c.l.b16 %v105
  %v441 = vunpack.c.l.b16 %v106
  %v442 = vunpack.c.l.b16 %v107
  %v443 = vunpack.c.l.b16 %v108
  %v444 = vunpack.c.l.b16 %v109
  %v445 = vunpack.c.l.b16 %v110
  %v446 = vunpack.c.l.b16 %v111
  %v447 = vunpack.c.l.b16 %v112
  %v448 = vunpack.c.l.b16 %v113
  %v449 = vunpack.c.l.b16 %v114
  %v450 = vunpack.c.l.b16 %v115
  %v451 = vunpack.c.l.b16 %v116
  %v452 = vunpack.c.l.b16 %v117
  %v453 = vunpack.c.l.b16 %v118
  %v454 = vunpack.c.l.b16 %v119
  %v455 = vunpack.c.l.b16 %v120
  %v456 = vunpack.c.l.b16 %v121
  %v457 = vunpack.c.l.b16 %v122
  %v458 = vunpack.c.l.b16 %v123
  %v459 = vunpack.c.l.b16 %v124
  %v460 = vunpack.c.l.b16 %v125
  %v461 = vunpack.c.l.b16 %v126
  %v462 = vunpack.c.l.b16 %v127
  %v463 = vunpack.c.l.b16 %v128
  %v464 = vunpack.c.l.b16 %v129
  %v465 = vunpack.c.l.b16 %v130
  %v466 = vunpack.c.l.b16 %v131
  %v467 = vunpack.c.l.b16 %v132
  %v468 = vunpack.c.l.b16 %v133
  %v469 = vunpack.c.l.b16 %v134
  %v470 = vunpack.c.l.b16 %v135
  %v471 = vunpack.c.l.b16 %v136
  %v472 = vunpack.c.l.b16 %v137
  %v473 = vunpack.c.l.b16 %v138
  %v474 = vunpack.c.l.b16 %v139
  %v475 = vunpack.c.l.b16 %v140
  %v476 = vunpack.c.l.b16 %v141
  %v477 = vunpack.c.l.b16 %v142
  %v478 = vunpack.c.l.b16 %v143
  %v479 = vunpack.c.l.b16 %v144
  %v480 = vunpack.c.l.b16 %v145
  %v481 = vunpack.c.l.b16 %v146
  %v482 = vunpack.c.l.b16 %v147
  %v483 = vunpack.c.l.b16 %v148
  %v484 = vunpack.c.l.b16 %v149
  %v485 = vunpack.c.l.b16 %v150
  %v486 = vunpack.c.l.b16 %v151
  %v487 = vunpack.c.l.b16 %v152
  %v488 = vunpack.c.l.b16 %v153
  %v489 = vunpack.c.l.b16 %v154
  %v490 = vunpack.c.l.b16 %v155
  %v491 = vpack.c.b16 %v367, %v366
  %v492 = vpack.c.b16 %v369, %v368
  %v493 = vpack.c.b16 %v371, %v370
  %v494 = vpack.c.b16 %v373, %v372
  %v495 = vpack.c.b16 %v375, %v374
  %v496 = vpack.c.b16 %v377, %v376
  %v497 = vpack.c.b16 %v379, %v378
  %v498 = vpack.c.b16 %v381, %v380
  %v499 = vpack.c.b16 %v383, %v382
  %v500 = vpack.c.b16 %v385, %v384
  %v501 = vpack.c.b16 %v387, %v386
  %v502 = vpack.c.b16 %v389, %v388
  %v503 = vpack.c.b16 %v391, %v390
  %v504 = vpack.c.b16 %v393, %v392
  %v505 = vpack.c.b16 %v395, %v394
  %v506 = vpack.c.b16 %v397, %v396
  %v507 = vpack.c.b16 %v399, %v398
  %v508 = vpack.c.b16 %v401, %v400
  %v509 = vpack.c.b16 %v403, %v402
  %v510 = vpack.c.b16 %v405, %v404
  %v511 = vpack.c.b16 %v407, %v406
  %v512 = vpack.c.b16 %v409, %v408
  %v513 = vpack.c.b16 %v411, %v410
  %v514 = vpack.c.b16 %v413, %v412
  %v515 = vpack.c.b16 %v415, %v414
  %v516 = vpack.c.b16 %v417, %v416
  %v517 = vpack.c.b16 %v419, %v418
  %v518 = vpack.c.b16 %v421, %v420
  %v519 = vpack.c.b16 %v423, %v422
  %v520 = vpack.c.b16 %v425, %v424
  %v521 = vpack.c.b16 %v427, %v426
  %v522 = vpack.c.b16 %v429, %v428
  %v523 = vpack.c.b16 %v431, %v430
  %v524 = vpack.c.b16 %v433, %v432
  %v525 = vpack.c.b16 %v435, %v434
  %v526 = vpack.c.b16 %v437, %v436
  %v527 = vpack.c.b16 %v439, %v438
  %v528 = vpack.c.b16 %v441, %v440
  %v529 = vpack.c.b16 %v443, %v442
  %v530 = vpack.c.b16 %v445, %v444
  %v531 = vpack.c.b16 %v447, %v446
  %v532 = vpack.c.b16 %v449, %v448
  %v533 = vpack.c.b16 %v451, %v450
  %v534 = vpack.c.b16 %v453, %v452
  %v535 = vpack.c.b16 %v455, %v454
  %v536 = vpack.c.b16 %v457, %v456
  %v537 = vpack.c.b16 %v459, %v458
  %v538 = vpack.c.b16 %v461, %v460
  %v539 = vpack.c.b16 %v463, %v462
  %v540 = vpack.c.b16 %v465, %v464
  %v541 = vpack.c.b16 %v467, %v466
  %v542 = vpack.c.b16 %v469, %v468
  %v543 = vpack.c.b16 %v471, %v470
  %v544 = vpack.c.b16 %v473, %v472
  %v545 = vpack.c.b16 %v475, %v474
  %v546 = vpack.c.b16 %v477, %v476
  %v547 = vpack.c.b16 %v479, %v478
  %v548 = vpack.c.b16 %v481, %v480
  %v549 = vpack.c.b16 %v483, %v482
  %v550 = vpack.c.b16 %v485, %v484
  %v551 = vpack.c.b16 %v487, %v486
  %v552 = vpack.c.b16 %v489, %v488
  %v553 = vpack.c.b16 %v490, %v490
  %vm616 = vcmask 850944
  %v618 = vsel %vm616, %v218, 0
  %v621 = vsel %vm616, %v226, 0
  %vm623 = vcmask 1043456
  %v625 = vsel %vm623, %v553, 0
  %627 = vmatprep.subr.bf16.mxu0 0
  %628 = vmatpush1.bf16.msra.mxu0 %v491
  %629 = vmatprep.subr.bf16.mxu0 0
  %630 = vmatpush1.bf16.msra.mxu0 %v492
  %631 = vmatprep.subr.bf16.mxu0 0
  %632 = vmatpush1.bf16.msra.mxu0 %v493
  %633 = vmatprep.subr.bf16.mxu0 0
  %634 = vmatpush1.bf16.msra.mxu0 %v494
  %635 = vmatprep.subr.bf16.mxu0 0
  %636 = vmatpush1.bf16.msra.mxu0 %v495
  %637 = vmatprep.subr.bf16.mxu0 0
  %638 = vmatpush1.bf16.msra.mxu0 %v496
  %639 = vmatprep.subr.bf16.mxu0 0
  %640 = vmatpush1.bf16.msra.mxu0 %v497
  %641 = vmatprep.subr.bf16.mxu0 0
  %642 = vmatpush1.bf16.msra.mxu0 %v498
  %643 = vmatprep.subr.bf16.mxu0 0
  %644 = vmatpush1.bf16.msra.mxu0 %v499
  %645 = vmatprep.subr.bf16.mxu0 0
  %646 = vmatpush1.bf16.msra.mxu0 %v500
  %647 = vmatprep.subr.bf16.mxu0 0
  %648 = vmatpush1.bf16.msra.mxu0 %v501
  %649 = vmatprep.subr.bf16.mxu0 0
  %650 = vmatpush1.bf16.msra.mxu0 %v502
  %651 = vmatprep.subr.bf16.mxu0 0
  %652 = vmatpush1.bf16.msra.mxu0 %v503
  %653 = vmatprep.subr.bf16.mxu0 0
  %654 = vmatpush1.bf16.msra.mxu0 %v504
  %655 = vmatprep.subr.bf16.mxu0 0
  %656 = vmatpush1.bf16.msra.mxu0 %v505
  %657 = vmatprep.subr.bf16.mxu0 0
  %658 = vmatpush1.bf16.msra.mxu0 %v506
  %659 = vmatprep.mubr.bf16.mxu0 %v212
  %660 = vmatmul.mubr.bf16.gmra.mrb[0].mxu0 %v211
  %v661 = vpop.f32.mrb[0].mxu0
  %v662 = vadd.f32 %v161, %v661
  %v663 = vpop.f32.mrb[0].mxu0
  %v664 = vpop.f32.mrb[0].mxu0
  %v665 = vadd.f32 %v161, %v664
  %v666 = vpop.f32.mrb[0].mxu0
  %667 = vmatprep.mubr.bf16.mxu0 %v220
  %668 = vmatmul.mubr.bf16.gmra.mrb[0].mxu0 %v219
  %v669 = vpop.f32.mrb[0].mxu0
  %v670 = vadd.f32 %v161, %v669
  %v671 = vpop.f32.mrb[0].mxu0
  %v672 = vpop.f32.mrb[0].mxu0
  %v673 = vadd.f32 %v161, %v672
  %v674 = vpop.f32.mrb[0].mxu0
  %675 = vdwg.mxu0
  %676 = vmatprep.subr.bf16.mxu0 0
  %677 = vmatpush1.bf16.msra.mxu0 %v507
  %678 = vmatprep.subr.bf16.mxu0 0
  %679 = vmatpush1.bf16.msra.mxu0 %v508
  %680 = vmatprep.subr.bf16.mxu0 0
  %681 = vmatpush1.bf16.msra.mxu0 %v509
  %682 = vmatprep.subr.bf16.mxu0 0
  %683 = vmatpush1.bf16.msra.mxu0 %v510
  %684 = vmatprep.subr.bf16.mxu0 0
  %685 = vmatpush1.bf16.msra.mxu0 %v511
  %686 = vmatprep.subr.bf16.mxu0 0
  %687 = vmatpush1.bf16.msra.mxu0 %v512
  %688 = vmatprep.subr.bf16.mxu0 0
  %689 = vmatpush1.bf16.msra.mxu0 %v513
  %690 = vmatprep.subr.bf16.mxu0 0
  %691 = vmatpush1.bf16.msra.mxu0 %v514
  %692 = vmatprep.subr.bf16.mxu0 0
  %693 = vmatpush1.bf16.msra.mxu0 %v515
  %694 = vmatprep.subr.bf16.mxu0 0
  %695 = vmatpush1.bf16.msra.mxu0 %v516
  %696 = vmatprep.subr.bf16.mxu0 0
  %697 = vmatpush1.bf16.msra.mxu0 %v517
  %698 = vmatprep.subr.bf16.mxu0 0
  %699 = vmatpush1.bf16.msra.mxu0 %v518
  %700 = vmatprep.subr.bf16.mxu0 0
  %701 = vmatpush1.bf16.msra.mxu0 %v519
  %702 = vmatprep.subr.bf16.mxu0 0
  %703 = vmatpush1.bf16.msra.mxu0 %v520
  %704 = vmatprep.subr.bf16.mxu0 0
  %705 = vmatpush1.bf16.msra.mxu0 %v521
  %706 = vmatprep.subr.bf16.mxu0 0
  %707 = vmatpush1.bf16.msra.mxu0 %v522
  %708 = vmatprep.mubr.bf16.mxu0 %v214
  %709 = vmatmul.mubr.bf16.gmra.mrb[0].mxu0 %v213
  %v710 = vpop.f32.mrb[0].mxu0
  %v711 = vadd.f32 %v662, %v710
  %v712 = vpop.f32.mrb[0].mxu0
  %v713 = vpop.f32.mrb[0].mxu0
  %v714 = vadd.f32 %v665, %v713
  %v715 = vpop.f32.mrb[0].mxu0
  %716 = vmatprep.mubr.bf16.mxu0 %v222
  %717 = vmatmul.mubr.bf16.gmra.mrb[0].mxu0 %v221
  %v718 = vpop.f32.mrb[0].mxu0
  %v719 = vadd.f32 %v670, %v718
  %v720 = vpop.f32.mrb[0].mxu0
  %v721 = vpop.f32.mrb[0].mxu0
  %v722 = vadd.f32 %v673, %v721
  %v723 = vpop.f32.mrb[0].mxu0
  %724 = vdwg.mxu0
  %725 = vmatprep.subr.bf16.mxu0 0
  %726 = vmatpush1.bf16.msra.mxu0 %v523
  %727 = vmatprep.subr.bf16.mxu0 0
  %728 = vmatpush1.bf16.msra.mxu0 %v524
  %729 = vmatprep.subr.bf16.mxu0 0
  %730 = vmatpush1.bf16.msra.mxu0 %v525
  %731 = vmatprep.subr.bf16.mxu0 0
  %732 = vmatpush1.bf16.msra.mxu0 %v526
  %733 = vmatprep.subr.bf16.mxu0 0
  %734 = vmatpush1.bf16.msra.mxu0 %v527
  %735 = vmatprep.subr.bf16.mxu0 0
  %736 = vmatpush1.bf16.msra.mxu0 %v528
  %737 = vmatprep.subr.bf16.mxu0 0
  %738 = vmatpush1.bf16.msra.mxu0 %v529
  %739 = vmatprep.subr.bf16.mxu0 0
  %740 = vmatpush1.bf16.msra.mxu0 %v530
  %741 = vmatprep.subr.bf16.mxu0 0
  %742 = vmatpush1.bf16.msra.mxu0 %v531
  %743 = vmatprep.subr.bf16.mxu0 0
  %744 = vmatpush1.bf16.msra.mxu0 %v532
  %745 = vmatprep.subr.bf16.mxu0 0
  %746 = vmatpush1.bf16.msra.mxu0 %v533
  %747 = vmatprep.subr.bf16.mxu0 0
  %748 = vmatpush1.bf16.msra.mxu0 %v534
  %749 = vmatprep.subr.bf16.mxu0 0
  %750 = vmatpush1.bf16.msra.mxu0 %v535
  %751 = vmatprep.subr.bf16.mxu0 0
  %752 = vmatpush1.bf16.msra.mxu0 %v536
  %753 = vmatprep.subr.bf16.mxu0 0
  %754 = vmatpush1.bf16.msra.mxu0 %v537
  %755 = vmatprep.subr.bf16.mxu0 0
  %756 = vmatpush1.bf16.msra.mxu0 %v538
  %757 = vmatprep.mubr.bf16.mxu0 %v216
  %758 = vmatmul.mubr.bf16.gmra.mrb[0].mxu0 %v215
  %v759 = vpop.f32.mrb[0].mxu0
  %v760 = vadd.f32 %v711, %v759
  %v761 = vpop.f32.mrb[0].mxu0
  %v762 = vpop.f32.mrb[0].mxu0
  %v763 = vadd.f32 %v714, %v762
  %v764 = vpop.f32.mrb[0].mxu0
  %765 = vmatprep.mubr.bf16.mxu0 %v224
  %766 = vmatmul.mubr.bf16.gmra.mrb[0].mxu0 %v223
  %v767 = vpop.f32.mrb[0].mxu0
  %v768 = vadd.f32 %v719, %v767
  %v769 = vpop.f32.mrb[0].mxu0
  %v770 = vpop.f32.mrb[0].mxu0
  %v771 = vadd.f32 %v722, %v770
  %v772 = vpop.f32.mrb[0].mxu0
  %773 = vdwg.mxu0
  %774 = vmatprep.subr.bf16.mxu0 0
  %775 = vmatpush1.bf16.msra.mxu0 %v539
  %776 = vmatprep.subr.bf16.mxu0 0
  %777 = vmatpush1.bf16.msra.mxu0 %v540
  %778 = vmatprep.subr.bf16.mxu0 0
  %779 = vmatpush1.bf16.msra.mxu0 %v541
  %780 = vmatprep.subr.bf16.mxu0 0
  %781 = vmatpush1.bf16.msra.mxu0 %v542
  %782 = vmatprep.subr.bf16.mxu0 0
  %783 = vmatpush1.bf16.msra.mxu0 %v543
  %784 = vmatprep.subr.bf16.mxu0 0
  %785 = vmatpush1.bf16.msra.mxu0 %v544
  %786 = vmatprep.subr.bf16.mxu0 0
  %787 = vmatpush1.bf16.msra.mxu0 %v545
  %788 = vmatprep.subr.bf16.mxu0 0
  %789 = vmatpush1.bf16.msra.mxu0 %v546
  %790 = vmatprep.subr.bf16.mxu0 0
  %791 = vmatpush1.bf16.msra.mxu0 %v547
  %792 = vmatprep.subr.bf16.mxu0 0
  %793 = vmatpush1.bf16.msra.mxu0 %v548
  %794 = vmatprep.subr.bf16.mxu0 0
  %795 = vmatpush1.bf16.msra.mxu0 %v549
  %796 = vmatprep.subr.bf16.mxu0 0
  %797 = vmatpush1.bf16.msra.mxu0 %v550
  %798 = vmatprep.subr.bf16.mxu0 0
  %799 = vmatpush1.bf16.msra.mxu0 %v551
  %800 = vmatprep.subr.bf16.mxu0 0
  %801 = vmatpush1.bf16.msra.mxu0 %v552
  %802 = vmatprep.subr.bf16.mxu0 0
  %803 = vmatpush1.bf16.msra.mxu0 %v625
  %804 = vmatprep.subr.bf16.mxu0 0
  %805 = vmatpush1.bf16.msra.mxu0 0
  %806 = vmatprep.mubr.bf16.mxu0 %v618
  %807 = vmatmul.mubr.bf16.gmra.mrb[0].mxu0 %v217
  %v808 = vpop.f32.mrb[0].mxu0
  %v809 = vadd.f32 %v760, %v808
  %v810 = vpop.f32.mrb[0].mxu0
  %v811 = vpop.f32.mrb[0].mxu0
  %v812 = vadd.f32 %v763, %v811
  %v813 = vpop.f32.mrb[0].mxu0
  %814 = vmatprep.mubr.bf16.mxu0 %v621
  %815 = vmatmul.mubr.bf16.gmra.mrb[0].mxu0 %v225
  %v816 = vpop.f32.mrb[0].mxu0
  %v817 = vadd.f32 %v768, %v816
  %v818 = vpop.f32.mrb[0].mxu0
  %v819 = vpop.f32.mrb[0].mxu0
  %v820 = vadd.f32 %v771, %v819
  %v821 = vpop.f32.mrb[0].mxu0
  %822 = vdwg.mxu0
  %v823 = vmax.f32 %v809, 0.0
  %v824 = vmax.f32 %v812, 0.0
  %v825 = vmax.f32 %v817, 0.0
  %v826 = vmax.f32 %v820, 0.0
  %v827 = vpack.c.bf16 %v824, %v823
  %v828 = vpack.c.bf16 %v826, %v825
  %v831 = vunpack.c.l.b16 %v827
  %v832 = vunpack.c.h.b16 %v827
  %v833 = vunpack.c.l.b16 %v828
  %v834 = vunpack.c.h.b16 %v828
  %v835 = vpack.c.b16 %v831, %v831
  %v836 = vpack.c.b16 %v832, %v832
  %v837 = vpack.c.b16 %v833, %v833
  %v838 = vpack.c.b16 %v834, %v834
  %vm843 = vcmask 257024
  %844 = vst.msk [vmem:[%s3] sm:$0xf] %vm843, %v835
  %845 = vst.msk [vmem:[%s3 + $0x4] sm:$0xf] %vm843, %v836
  %846 = vst.msk [vmem:[%s3 + $0x8] sm:$0xf] %vm843, %v837
  %847 = vst.msk [vmem:[%s3 + $0xc] sm:$0xf] %vm843, %v838
  // Predicated region
  $region14: #{crowd_counter_forward.16} parent=0 // pred_check
    _
  $region15: #{crowd_counter_forward.16} parent=0 // pred_check_branch
    %849 = sbr.rel (0) target = $region17
  $region16: #{crowd_counter_forward.16} parent=0 // pred_region
    _
  $region17: #{crowd_counter_forward.16} parent=0 // pred_fallthru
    _
  // Predicated region
  $region18: #{crowd_counter_forward.16} parent=0 // pred_check
    _
  $region19: #{crowd_counter_forward.16} parent=0 // pred_check_branch
    %851 = sbr.rel (0) target = $region21
  $region20: #{crowd_counter_forward.16} parent=0 // pred_region
    _
  $region21: #{crowd_counter_forward.16} parent=0 // pred_fallthru
    _

// kernel: crowd_counter_forward.17
$region0: #{crowd_counter_forward.17}
  #allocation0 [shape = 'u32[]', space=smem, size = 0x4, offset = 0x4, fixed_abs, tag = 'smem constant byte address 0x4 - core index']
  #allocation1 [shape = 'u32[144,128]{1,0:T(1,128)}', space=vmem, size = 0x12000, scoped, tag = 'internal scratch']
  %s0 = inlined_call_operand.vmem [shape: bf16[32,600], index: 0, kind: input, shape index: {}]
  %s1 = inlined_call_operand.vmem [shape: bf16[600,32], index: 1, kind: input, shape index: {}]
  %s2 = inlined_call_operand.vmem [shape: f32[1,32], index: 2, kind: input, shape index: {}]
  %s3 = inlined_call_operand.vmem [shape: bf16[32,32], index: 3, kind: output, shape index: {}]
  %s4 = sld [smem:[#allocation0]]
  $region22: #{crowd_counter_forward.17} parent=0
    _
  %s6 = ssub.s32 1, %s4
  %s7 = scalar_select 0, %s6, %s4
  // Predicated region
  $region2: #{crowd_counter_forward.17} parent=0 // pred_check
    _
  $region3: #{crowd_counter_forward.17} parent=0 // pred_check_branch
    %9 = sbr.rel (0) target = $region5
  $region4: #{crowd_counter_forward.17} parent=0 // pred_region
    _
  $region5: #{crowd_counter_forward.17} parent=0 // pred_fallthru
    _
  // Predicated region
  $region6: #{crowd_counter_forward.17} parent=0 // pred_check
    _
  $region7: #{crowd_counter_forward.17} parent=0 // pred_check_branch
    %11 = sbr.rel (0) target = $region9
  $region8: #{crowd_counter_forward.17} parent=0 // pred_region
    _
  $region9: #{crowd_counter_forward.17} parent=0 // pred_fallthru
    _
  // Predicated region
  $region10: #{crowd_counter_forward.17} parent=0 // pred_check
    _
  $region11: #{crowd_counter_forward.17} parent=0 // pred_check_branch
    %13 = sbr.rel (0) target = $region13
  $region12: #{crowd_counter_forward.17} parent=0 // pred_region
    _
  $region13: #{crowd_counter_forward.17} parent=0 // pred_fallthru
    _
  %v15 = vld [vmem:[%s0] sm:$0xff]
  %v16 = vld [vmem:[%s0 + $0x8] sm:$0xff]
  %v17 = vld [vmem:[%s0 + $0x10] sm:$0xf]
  %v18 = vld [vmem:[%s0 + $0x14] sm:$0xff]
  %v19 = vld [vmem:[%s0 + $0x1c] sm:$0xff]
  %v20 = vld [vmem:[%s0 + $0x24] sm:$0xf]
  %v21 = vld [vmem:[%s0 + $0x28] sm:$0xff]
  %v22 = vld [vmem:[%s0 + $0x30] sm:$0xff]
  %v23 = vld [vmem:[%s0 + $0x38] sm:$0xf]
  %v24 = vld [vmem:[%s0 + $0x3c] sm:$0xff]
  %v25 = vld [vmem:[%s0 + $0x44] sm:$0xff]
  %v26 = vld [vmem:[%s0 + $0x4c] sm:$0xf]
  %v27 = vld [vmem:[%s1] sm:$0xf]
  %v28 = vld [vmem:[%s1 + $0x4] sm:$0xf]
  %v29 = vld [vmem:[%s1 + $0x8] sm:$0xf]
  %v30 = vld [vmem:[%s1 + $0xc] sm:$0xf]
  %v31 = vld [vmem:[%s1 + $0x10] sm:$0xf]
  %v32 = vld [vmem:[%s1 + $0x14] sm:$0xf]
  %v33 = vld [vmem:[%s1 + $0x18] sm:$0xf]
  %v34 = vld [vmem:[%s1 + $0x1c] sm:$0xf]
  %v35 = vld [vmem:[%s1 + $0x20] sm:$0xf]
  %v36 = vld [vmem:[%s1 + $0x24] sm:$0xf]
  %v37 = vld [vmem:[%s1 + $0x28] sm:$0xf]
  %v38 = vld [vmem:[%s1 + $0x2c] sm:$0xf]
  %v39 = vld [vmem:[%s1 + $0x30] sm:$0xf]
  %v40 = vld [vmem:[%s1 + $0x34] sm:$0xf]
  %v41 = vld [vmem:[%s1 + $0x38] sm:$0xf]
  %v42 = vld [vmem:[%s1 + $0x3c] sm:$0xf]
  %v43 = vld [vmem:[%s1 + $0x40] sm:$0xf]
  %v44 = vld [vmem:[%s1 + $0x44] sm:$0xf]
  %v45 = vld [vmem:[%s1 + $0x48] sm:$0xf]
  %v46 = vld [vmem:[%s1 + $0x4c] sm:$0xf]
  %v47 = vld [vmem:[%s1 + $0x50] sm:$0xf]
  %v48 = vld [vmem:[%s1 + $0x54] sm:$0xf]
  %v49 = vld [vmem:[%s1 + $0x58] sm:$0xf]
  %v50 = vld [vmem:[%s1 + $0x5c] sm:$0xf]
  %v51 = vld [vmem:[%s1 + $0x60] sm:$0xf]
  %v52 = vld [vmem:[%s1 + $0x64] sm:$0xf]
  %v53 = vld [vmem:[%s1 + $0x68] sm:$0xf]
  %v54 = vld [vmem:[%s1 + $0x6c] sm:$0xf]
  %v55 = vld [vmem:[%s1 + $0x70] sm:$0xf]
  %v56 = vld [vmem:[%s1 + $0x74] sm:$0xf]
  %v57 = vld [vmem:[%s1 + $0x78] sm:$0xf]
  %v58 = vld [vmem:[%s1 + $0x7c] sm:$0xf]
  %v59 = vld [vmem:[%s1 + $0x80] sm:$0xf]
  %v60 = vld [vmem:[%s1 + $0x84] sm:$0xf]
  %v61 = vld [vmem:[%s1 + $0x88] sm:$0xf]
  %v62 = vld [vmem:[%s1 + $0x8c] sm:$0xf]
  %v63 = vld [vmem:[%s1 + $0x90] sm:$0xf]
  %v64 = vld [vmem:[%s1 + $0x94] sm:$0xf]
  %v65 = vld [vmem:[%s1 + $0x98] sm:$0xf]
  %v66 = vld [vmem:[%s1 + $0x9c] sm:$0xf]
  %v67 = vld [vmem:[%s1 + $0xa0] sm:$0xf]
  %v68 = vld [vmem:[%s1 + $0xa4] sm:$0xf]
  %v69 = vld [vmem:[%s1 + $0xa8] sm:$0xf]
  %v70 = vld [vmem:[%s1 + $0xac] sm:$0xf]
  %v71 = vld [vmem:[%s1 + $0xb0] sm:$0xf]
  %v72 = vld [vmem:[%s1 + $0xb4] sm:$0xf]
  %v73 = vld [vmem:[%s1 + $0xb8] sm:$0xf]
  %v74 = vld [vmem:[%s1 + $0xbc] sm:$0xf]
  %v75 = vld [vmem:[%s1 + $0xc0] sm:$0xf]
  %v76 = vld [vmem:[%s1 + $0xc4] sm:$0xf]
  %v77 = vld [vmem:[%s1 + $0xc8] sm:$0xf]
  %v78 = vld [vmem:[%s1 + $0xcc] sm:$0xf]
  %v79 = vld [vmem:[%s1 + $0xd0] sm:$0xf]
  %v80 = vld [vmem:[%s1 + $0xd4] sm:$0xf]
  %v81 = vld [vmem:[%s1 + $0xd8] sm:$0xf]
  %v82 = vld [vmem:[%s1 + $0xdc] sm:$0xf]
  %v83 = vld [vmem:[%s1 + $0xe0] sm:$0xf]
  %v84 = vld [vmem:[%s1 + $0xe4] sm:$0xf]
  %v85 = vld [vmem:[%s1 + $0xe8] sm:$0xf]
  %v86 = vld [vmem:[%s1 + $0xec] sm:$0xf]
  %v87 = vld [vmem:[%s1 + $0xf0] sm:$0xf]
  %v88 = vld [vmem:[%s1 + $0xf4] sm:$0xf]
  %v89 = vld [vmem:[%s1 + $0xf8] sm:$0xf]
  %v90 = vld [vmem:[%s1 + $0xfc] sm:$0xf]
  %v91 = vld [vmem:[%s1 + $0x100] sm:$0xf]
  %v92 = vld [vmem:[%s1 + $0x104] sm:$0xf]
  %v93 = vld [vmem:[%s1 + $0x108] sm:$0xf]
  %v94 = vld [vmem:[%s1 + $0x10c] sm:$0xf]
  %v95 = vld [vmem:[%s1 + $0x110] sm:$0xf]
  %v96 = vld [vmem:[%s1 + $0x114] sm:$0xf]
  %v97 = vld [vmem:[%s1 + $0x118] sm:$0xf]
  %v98 = vld [vmem:[%s1 + $0x11c] sm:$0xf]
  %v99 = vld [vmem:[%s1 + $0x120] sm:$0xf]
  %v100 = vld [vmem:[%s1 + $0x124] sm:$0xf]
  %v101 = vld [vmem:[%s1 + $0x128] sm:$0xf]
  %v102 = vld [vmem:[%s2] sm:$0x1]
  %v104 = vlaneseq
  %v105 = vshrl.u32 %v104, 7
  %v106 = vsub.s32 0, %v105
  %v107 = vrot.slane %v102, %v106
  %v121 = vunpack.c.l.b16 %v15
  %v122 = vunpack.c.h.b16 %v15
  %v123 = vunpack.c.l.b16 %v16
  %v124 = vunpack.c.h.b16 %v16
  %v125 = vunpack.c.l.b16 %v17
  %v126 = vunpack.c.l.b16 %v18
  %v127 = vunpack.c.h.b16 %v18
  %v128 = vunpack.c.l.b16 %v19
  %v129 = vunpack.c.h.b16 %v19
  %v130 = vunpack.c.l.b16 %v20
  %v131 = vunpack.c.l.b16 %v21
  %v132 = vunpack.c.h.b16 %v21
  %v133 = vunpack.c.l.b16 %v22
  %v134 = vunpack.c.h.b16 %v22
  %v135 = vunpack.c.l.b16 %v23
  %v136 = vunpack.c.l.b16 %v24
  %v137 = vunpack.c.h.b16 %v24
  %v138 = vunpack.c.l.b16 %v25
  %v139 = vunpack.c.h.b16 %v25
  %v140 = vunpack.c.l.b16 %v26
  %v141 = vpack.c.b16 %v126, %v121
  %v142 = vpack.c.b16 %v127, %v122
  %v143 = vpack.c.b16 %v128, %v123
  %v144 = vpack.c.b16 %v129, %v124
  %v145 = vpack.c.b16 %v130, %v125
  %v146 = vpack.c.b16 %v136, %v131
  %v147 = vpack.c.b16 %v137, %v132
  %v148 = vpack.c.b16 %v138, %v133
  %v149 = vpack.c.b16 %v139, %v134
  %v150 = vpack.c.b16 %v140, %v135
  %v234 = vunpack.c.l.b16 %v27
  %v235 = vunpack.c.l.b16 %v28
  %v236 = vunpack.c.l.b16 %v29
  %v237 = vunpack.c.l.b16 %v30
  %v238 = vunpack.c.l.b16 %v31
  %v239 = vunpack.c.l.b16 %v32
  %v240 = vunpack.c.l.b16 %v33
  %v241 = vunpack.c.l.b16 %v34
  %v242 = vunpack.c.l.b16 %v35
  %v243 = vunpack.c.l.b16 %v36
  %v244 = vunpack.c.l.b16 %v37
  %v245 = vunpack.c.l.b16 %v38
  %v246 = vunpack.c.l.b16 %v39
  %v247 = vunpack.c.l.b16 %v40
  %v248 = vunpack.c.l.b16 %v41
  %v249 = vunpack.c.l.b16 %v42
  %v250 = vunpack.c.l.b16 %v43
  %v251 = vunpack.c.l.b16 %v44
  %v252 = vunpack.c.l.b16 %v45
  %v253 = vunpack.c.l.b16 %v46
  %v254 = vunpack.c.l.b16 %v47
  %v255 = vunpack.c.l.b16 %v48
  %v256 = vunpack.c.l.b16 %v49
  %v257 = vunpack.c.l.b16 %v50
  %v258 = vunpack.c.l.b16 %v51
  %v259 = vunpack.c.l.b16 %v52
  %v260 = vunpack.c.l.b16 %v53
  %v261 = vunpack.c.l.b16 %v54
  %v262 = vunpack.c.l.b16 %v55
  %v263 = vunpack.c.l.b16 %v56
  %v264 = vunpack.c.l.b16 %v57
  %v265 = vunpack.c.l.b16 %v58
  %v266 = vunpack.c.l.b16 %v59
  %v267 = vunpack.c.l.b16 %v60
  %v268 = vunpack.c.l.b16 %v61
  %v269 = vunpack.c.l.b16 %v62
  %v270 = vunpack.c.l.b16 %v63
  %v271 = vunpack.c.l.b16 %v64
  %v272 = vunpack.c.l.b16 %v65
  %v273 = vunpack.c.l.b16 %v66
  %v274 = vunpack.c.l.b16 %v67
  %v275 = vunpack.c.l.b16 %v68
  %v276 = vunpack.c.l.b16 %v69
  %v277 = vunpack.c.l.b16 %v70
  %v278 = vunpack.c.l.b16 %v71
  %v279 = vunpack.c.l.b16 %v72
  %v280 = vunpack.c.l.b16 %v73
  %v281 = vunpack.c.l.b16 %v74
  %v282 = vunpack.c.l.b16 %v75
  %v283 = vunpack.c.l.b16 %v76
  %v284 = vunpack.c.l.b16 %v77
  %v285 = vunpack.c.l.b16 %v78
  %v286 = vunpack.c.l.b16 %v79
  %v287 = vunpack.c.l.b16 %v80
  %v288 = vunpack.c.l.b16 %v81
  %v289 = vunpack.c.l.b16 %v82
  %v290 = vunpack.c.l.b16 %v83
  %v291 = vunpack.c.l.b16 %v84
  %v292 = vunpack.c.l.b16 %v85
  %v293 = vunpack.c.l.b16 %v86
  %v294 = vunpack.c.l.b16 %v87
  %v295 = vunpack.c.l.b16 %v88
  %v296 = vunpack.c.l.b16 %v89
  %v297 = vunpack.c.l.b16 %v90
  %v298 = vunpack.c.l.b16 %v91
  %v299 = vunpack.c.l.b16 %v92
  %v300 = vunpack.c.l.b16 %v93
  %v301 = vunpack.c.l.b16 %v94
  %v302 = vunpack.c.l.b16 %v95
  %v303 = vunpack.c.l.b16 %v96
  %v304 = vunpack.c.l.b16 %v97
  %v305 = vunpack.c.l.b16 %v98
  %v306 = vunpack.c.l.b16 %v99
  %v307 = vunpack.c.l.b16 %v100
  %v308 = vunpack.c.l.b16 %v101
  %v309 = vpack.c.b16 %v235, %v234
  %v310 = vpack.c.b16 %v237, %v236
  %v311 = vpack.c.b16 %v239, %v238
  %v312 = vpack.c.b16 %v241, %v240
  %v313 = vpack.c.b16 %v243, %v242
  %v314 = vpack.c.b16 %v245, %v244
  %v315 = vpack.c.b16 %v247, %v246
  %v316 = vpack.c.b16 %v249, %v248
  %v317 = vpack.c.b16 %v251, %v250
  %v318 = vpack.c.b16 %v253, %v252
  %v319 = vpack.c.b16 %v255, %v254
  %v320 = vpack.c.b16 %v257, %v256
  %v321 = vpack.c.b16 %v259, %v258
  %v322 = vpack.c.b16 %v261, %v260
  %v323 = vpack.c.b16 %v263, %v262
  %v324 = vpack.c.b16 %v265, %v264
  %v325 = vpack.c.b16 %v267, %v266
  %v326 = vpack.c.b16 %v269, %v268
  %v327 = vpack.c.b16 %v271, %v270
  %v328 = vpack.c.b16 %v273, %v272
  %v329 = vpack.c.b16 %v275, %v274
  %v330 = vpack.c.b16 %v277, %v276
  %v331 = vpack.c.b16 %v279, %v278
  %v332 = vpack.c.b16 %v281, %v280
  %v333 = vpack.c.b16 %v283, %v282
  %v334 = vpack.c.b16 %v285, %v284
  %v335 = vpack.c.b16 %v287, %v286
  %v336 = vpack.c.b16 %v289, %v288
  %v337 = vpack.c.b16 %v291, %v290
  %v338 = vpack.c.b16 %v293, %v292
  %v339 = vpack.c.b16 %v295, %v294
  %v340 = vpack.c.b16 %v297, %v296
  %v341 = vpack.c.b16 %v299, %v298
  %v342 = vpack.c.b16 %v301, %v300
  %v343 = vpack.c.b16 %v303, %v302
  %v344 = vpack.c.b16 %v305, %v304
  %v345 = vpack.c.b16 %v307, %v306
  %v346 = vpack.c.b16 %v308, %v308
  %vm384 = vcmask 719872
  %v386 = vsel %vm384, %v145, 0
  %v389 = vsel %vm384, %v150, 0
  %vm391 = vcmask 1043456
  %v393 = vsel %vm391, %v346, 0
  %395 = vmatprep.subr.bf16.mxu0 0
  %396 = vmatpush1.bf16.msra.mxu0 %v309
  %397 = vmatprep.subr.bf16.mxu0 0
  %398 = vmatpush1.bf16.msra.mxu0 %v310
  %399 = vmatprep.subr.bf16.mxu0 0
  %400 = vmatpush1.bf16.msra.mxu0 %v311
  %401 = vmatprep.subr.bf16.mxu0 0
  %402 = vmatpush1.bf16.msra.mxu0 %v312
  %403 = vmatprep.subr.bf16.mxu0 0
  %404 = vmatpush1.bf16.msra.mxu0 %v313
  %405 = vmatprep.subr.bf16.mxu0 0
  %406 = vmatpush1.bf16.msra.mxu0 %v314
  %407 = vmatprep.subr.bf16.mxu0 0
  %408 = vmatpush1.bf16.msra.mxu0 %v315
  %409 = vmatprep.subr.bf16.mxu0 0
  %410 = vmatpush1.bf16.msra.mxu0 %v316
  %411 = vmatprep.subr.bf16.mxu0 0
  %412 = vmatpush1.bf16.msra.mxu0 %v317
  %413 = vmatprep.subr.bf16.mxu0 0
  %414 = vmatpush1.bf16.msra.mxu0 %v318
  %415 = vmatprep.subr.bf16.mxu0 0
  %416 = vmatpush1.bf16.msra.mxu0 %v319
  %417 = vmatprep.subr.bf16.mxu0 0
  %418 = vmatpush1.bf16.msra.mxu0 %v320
  %419 = vmatprep.subr.bf16.mxu0 0
  %420 = vmatpush1.bf16.msra.mxu0 %v321
  %421 = vmatprep.subr.bf16.mxu0 0
  %422 = vmatpush1.bf16.msra.mxu0 %v322
  %423 = vmatprep.subr.bf16.mxu0 0
  %424 = vmatpush1.bf16.msra.mxu0 %v323
  %425 = vmatprep.subr.bf16.mxu0 0
  %426 = vmatpush1.bf16.msra.mxu0 %v324
  %427 = vmatprep.mubr.bf16.mxu0 %v142
  %428 = vmatmul.mubr.bf16.gmra.mrb[0].mxu0 %v141
  %v429 = vpop.f32.mrb[0].mxu0
  %v430 = vadd.f32 %v107, %v429
  %v431 = vpop.f32.mrb[0].mxu0
  %v432 = vpop.f32.mrb[0].mxu0
  %v433 = vadd.f32 %v107, %v432
  %v434 = vpop.f32.mrb[0].mxu0
  %435 = vmatprep.mubr.bf16.mxu0 %v147
  %436 = vmatmul.mubr.bf16.gmra.mrb[0].mxu0 %v146
  %v437 = vpop.f32.mrb[0].mxu0
  %v438 = vadd.f32 %v107, %v437
  %v439 = vpop.f32.mrb[0].mxu0
  %v440 = vpop.f32.mrb[0].mxu0
  %v441 = vadd.f32 %v107, %v440
  %v442 = vpop.f32.mrb[0].mxu0
  %443 = vdwg.mxu0
  %444 = vmatprep.subr.bf16.mxu0 0
  %445 = vmatpush1.bf16.msra.mxu0 %v325
  %446 = vmatprep.subr.bf16.mxu0 0
  %447 = vmatpush1.bf16.msra.mxu0 %v326
  %448 = vmatprep.subr.bf16.mxu0 0
  %449 = vmatpush1.bf16.msra.mxu0 %v327
  %450 = vmatprep.subr.bf16.mxu0 0
  %451 = vmatpush1.bf16.msra.mxu0 %v328
  %452 = vmatprep.subr.bf16.mxu0 0
  %453 = vmatpush1.bf16.msra.mxu0 %v329
  %454 = vmatprep.subr.bf16.mxu0 0
  %455 = vmatpush1.bf16.msra.mxu0 %v330
  %456 = vmatprep.subr.bf16.mxu0 0
  %457 = vmatpush1.bf16.msra.mxu0 %v331
  %458 = vmatprep.subr.bf16.mxu0 0
  %459 = vmatpush1.bf16.msra.mxu0 %v332
  %460 = vmatprep.subr.bf16.mxu0 0
  %461 = vmatpush1.bf16.msra.mxu0 %v333
  %462 = vmatprep.subr.bf16.mxu0 0
  %463 = vmatpush1.bf16.msra.mxu0 %v334
  %464 = vmatprep.subr.bf16.mxu0 0
  %465 = vmatpush1.bf16.msra.mxu0 %v335
  %466 = vmatprep.subr.bf16.mxu0 0
  %467 = vmatpush1.bf16.msra.mxu0 %v336
  %468 = vmatprep.subr.bf16.mxu0 0
  %469 = vmatpush1.bf16.msra.mxu0 %v337
  %470 = vmatprep.subr.bf16.mxu0 0
  %471 = vmatpush1.bf16.msra.mxu0 %v338
  %472 = vmatprep.subr.bf16.mxu0 0
  %473 = vmatpush1.bf16.msra.mxu0 %v339
  %474 = vmatprep.subr.bf16.mxu0 0
  %475 = vmatpush1.bf16.msra.mxu0 %v340
  %476 = vmatprep.mubr.bf16.mxu0 %v144
  %477 = vmatmul.mubr.bf16.gmra.mrb[0].mxu0 %v143
  %v478 = vpop.f32.mrb[0].mxu0
  %v479 = vadd.f32 %v430, %v478
  %v480 = vpop.f32.mrb[0].mxu0
  %v481 = vpop.f32.mrb[0].mxu0
  %v482 = vadd.f32 %v433, %v481
  %v483 = vpop.f32.mrb[0].mxu0
  %484 = vmatprep.mubr.bf16.mxu0 %v149
  %485 = vmatmul.mubr.bf16.gmra.mrb[0].mxu0 %v148
  %v486 = vpop.f32.mrb[0].mxu0
  %v487 = vadd.f32 %v438, %v486
  %v488 = vpop.f32.mrb[0].mxu0
  %v489 = vpop.f32.mrb[0].mxu0
  %v490 = vadd.f32 %v441, %v489
  %v491 = vpop.f32.mrb[0].mxu0
  %492 = vdwg.mxu0
  %493 = vmatprep.subr.bf16.mxu0 0
  %494 = vmatpush1.bf16.msra.mxu0 %v341
  %495 = vmatprep.subr.bf16.mxu0 0
  %496 = vmatpush1.bf16.msra.mxu0 %v342
  %497 = vmatprep.subr.bf16.mxu0 0
  %498 = vmatpush1.bf16.msra.mxu0 %v343
  %499 = vmatprep.subr.bf16.mxu0 0
  %500 = vmatpush1.bf16.msra.mxu0 %v344
  %501 = vmatprep.subr.bf16.mxu0 0
  %502 = vmatpush1.bf16.msra.mxu0 %v345
  %503 = vmatprep.subr.bf16.mxu0 0
  %504 = vmatpush1.bf16.msra.mxu0 %v393
  %505 = vmatprep.subr.bf16.mxu0 0
  %506 = vmatpush1.bf16.msra.mxu0 0
  %507 = vmatprep.subr.bf16.mxu0 0
  %508 = vmatpush1.bf16.msra.mxu0 0
  %509 = vmatprep.subr.bf16.mxu0 0
  %510 = vmatpush1.bf16.msra.mxu0 0
  %511 = vmatprep.subr.bf16.mxu0 0
  %512 = vmatpush1.bf16.msra.mxu0 0
  %513 = vmatprep.subr.bf16.mxu0 0
  %514 = vmatpush1.bf16.msra.mxu0 0
  %515 = vmatprep.subr.bf16.mxu0 0
  %516 = vmatpush1.bf16.msra.mxu0 0
  %517 = vmatprep.subr.bf16.mxu0 0
  %518 = vmatpush1.bf16.msra.mxu0 0
  %519 = vmatprep.subr.bf16.mxu0 0
  %520 = vmatpush1.bf16.msra.mxu0 0
  %521 = vmatprep.subr.bf16.mxu0 0
  %522 = vmatpush1.bf16.msra.mxu0 0
  %523 = vmatprep.subr.bf16.mxu0 0
  %524 = vmatpush1.bf16.msra.mxu0 0
  %525 = vmatprep.mubr.bf16.mxu0 0
  %526 = vmatmul.mubr.bf16.gmra.mrb[0].mxu0 %v386
  %v527 = vpop.f32.mrb[0].mxu0
  %v528 = vadd.f32 %v479, %v527
  %v529 = vpop.f32.mrb[0].mxu0
  %v530 = vpop.f32.mrb[0].mxu0
  %v531 = vadd.f32 %v482, %v530
  %v532 = vpop.f32.mrb[0].mxu0
  %533 = vmatprep.mubr.bf16.mxu0 0
  %534 = vmatmul.mubr.bf16.gmra.mrb[0].mxu0 %v389
  %v535 = vpop.f32.mrb[0].mxu0
  %v536 = vadd.f32 %v487, %v535
  %v537 = vpop.f32.mrb[0].mxu0
  %v538 = vpop.f32.mrb[0].mxu0
  %v539 = vadd.f32 %v490, %v538
  %v540 = vpop.f32.mrb[0].mxu0
  %541 = vdwg.mxu0
  %v542 = vmax.f32 %v528, 0.0
  %v543 = vmax.f32 %v531, 0.0
  %v544 = vmax.f32 %v536, 0.0
  %v545 = vmax.f32 %v539, 0.0
  %v546 = vpack.c.bf16 %v543, %v542
  %v547 = vpack.c.bf16 %v545, %v544
  %v550 = vunpack.c.l.b16 %v546
  %v551 = vunpack.c.h.b16 %v546
  %v552 = vunpack.c.l.b16 %v547
  %v553 = vunpack.c.h.b16 %v547
  %v554 = vpack.c.b16 %v550, %v550
  %v555 = vpack.c.b16 %v551, %v551
  %v556 = vpack.c.b16 %v552, %v552
  %v557 = vpack.c.b16 %v553, %v553
  %vm562 = vcmask 257024
  %563 = vst.msk [vmem:[%s3] sm:$0xf] %vm562, %v554
  %564 = vst.msk [vmem:[%s3 + $0x4] sm:$0xf] %vm562, %v555
  %565 = vst.msk [vmem:[%s3 + $0x8] sm:$0xf] %vm562, %v556
  %566 = vst.msk [vmem:[%s3 + $0xc] sm:$0xf] %vm562, %v557
  // Predicated region
  $region14: #{crowd_counter_forward.17} parent=0 // pred_check
    _
  $region15: #{crowd_counter_forward.17} parent=0 // pred_check_branch
    %568 = sbr.rel (0) target = $region17
  $region16: #{crowd_counter_forward.17} parent=0 // pred_region
    _
  $region17: #{crowd_counter_forward.17} parent=0 // pred_fallthru
    _
  // Predicated region
  $region18: #{crowd_counter_forward.17} parent=0 // pred_check
    _
  $region19: #{crowd_counter_forward.17} parent=0 // pred_check_branch
    %570 = sbr.rel (0) target = $region21
  $region20: #{crowd_counter_forward.17} parent=0 // pred_region
    _
  $region21: #{crowd_counter_forward.17} parent=0 // pred_fallthru
    _

// kernel: crowd_counter_forward.18
$region0: #{crowd_counter_forward.18}
  #allocation0 [shape = 'u32[]', space=smem, size = 0x4, offset = 0x4, fixed_abs, tag = 'smem constant byte address 0x4 - core index']
  #allocation1 [shape = 'u32[144,128]{1,0:T(1,128)}', space=vmem, size = 0x12000, scoped, tag = 'internal scratch']
  %s0 = inlined_call_operand.vmem [shape: bf16[128,216], index: 0, kind: input, shape index: {}]
  %s1 = inlined_call_operand.vmem [shape: bf16[216,64], index: 1, kind: input, shape index: {}]
  %s2 = inlined_call_operand.vmem [shape: f32[1,64], index: 2, kind: input, shape index: {}]
  %s3 = inlined_call_operand.vmem [shape: bf16[128,64], index: 3, kind: output, shape index: {}]
  %s4 = sld [smem:[#allocation0]]
  $region22: #{crowd_counter_forward.18} parent=0
    _
  %s6 = ssub.s32 1, %s4
  %s7 = scalar_select 0, %s6, %s4
  // Predicated region
  $region2: #{crowd_counter_forward.18} parent=0 // pred_check
    _
  $region3: #{crowd_counter_forward.18} parent=0 // pred_check_branch
    %9 = sbr.rel (0) target = $region5
  $region4: #{crowd_counter_forward.18} parent=0 // pred_region
    _
  $region5: #{crowd_counter_forward.18} parent=0 // pred_fallthru
    _
  // Predicated region
  $region6: #{crowd_counter_forward.18} parent=0 // pred_check
    _
  $region7: #{crowd_counter_forward.18} parent=0 // pred_check_branch
    %11 = sbr.rel (0) target = $region9
  $region8: #{crowd_counter_forward.18} parent=0 // pred_region
    _
  $region9: #{crowd_counter_forward.18} parent=0 // pred_fallthru
    _
  // Predicated region
  $region10: #{crowd_counter_forward.18} parent=0 // pred_check
    _
  $region11: #{crowd_counter_forward.18} parent=0 // pred_check_branch
    %13 = sbr.rel (0) target = $region13
  $region12: #{crowd_counter_forward.18} parent=0 // pred_region
    _
  $region13: #{crowd_counter_forward.18} parent=0 // pred_fallthru
    _
  %v15 = vld [vmem:[%s0] sm:$0xff]
  %v16 = vld [vmem:[%s0 + $0x8] sm:$0xff]
  %v17 = vld [vmem:[%s0 + $0x10] sm:$0xff]
  %v18 = vld [vmem:[%s0 + $0x18] sm:$0xff]
  %v19 = vld [vmem:[%s0 + $0x20] sm:$0xff]
  %v20 = vld [vmem:[%s0 + $0x28] sm:$0xff]
  %v21 = vld [vmem:[%s0 + $0x30] sm:$0xff]
  %v22 = vld [vmem:[%s0 + $0x38] sm:$0xff]
  %v23 = vld [vmem:[%s0 + $0x40] sm:$0xff]
  %v24 = vld [vmem:[%s0 + $0x48] sm:$0xff]
  %v25 = vld [vmem:[%s0 + $0x50] sm:$0xff]
  %v26 = vld [vmem:[%s0 + $0x58] sm:$0xff]
  %v27 = vld [vmem:[%s0 + $0x60] sm:$0xff]
  %v28 = vld [vmem:[%s0 + $0x68] sm:$0xff]
  %v29 = vld [vmem:[%s0 + $0x70] sm:$0xff]
  %v30 = vld [vmem:[%s0 + $0x78] sm:$0xff]
  %v31 = vld [vmem:[%s1] sm:$0xf]
  %v32 = vld [vmem:[%s1 + $0x4] sm:$0xf]
  %v33 = vld [vmem:[%s1 + $0x8] sm:$0xf]
  %v34 = vld [vmem:[%s1 + $0xc] sm:$0xf]
  %v35 = vld [vmem:[%s1 + $0x10] sm:$0xf]
  %v36 = vld [vmem:[%s1 + $0x14] sm:$0xf]
  %v37 = vld [vmem:[%s1 + $0x18] sm:$0xf]
  %v38 = vld [vmem:[%s1 + $0x1c] sm:$0xf]
  %v39 = vld [vmem:[%s1 + $0x20] sm:$0xf]
  %v40 = vld [vmem:[%s1 + $0x24] sm:$0xf]
  %v41 = vld [vmem:[%s1 + $0x28] sm:$0xf]
  %v42 = vld [vmem:[%s1 + $0x2c] sm:$0xf]
  %v43 = vld [vmem:[%s1 + $0x30] sm:$0xf]
  %v44 = vld [vmem:[%s1 + $0x34] sm:$0xf]
  %v45 = vld [vmem:[%s1 + $0x38] sm:$0xf]
  %v46 = vld [vmem:[%s1 + $0x3c] sm:$0xf]
  %v47 = vld [vmem:[%s1 + $0x40] sm:$0xf]
  %v48 = vld [vmem:[%s1 + $0x44] sm:$0xf]
  %v49 = vld [vmem:[%s1 + $0x48] sm:$0xf]
  %v50 = vld [vmem:[%s1 + $0x4c] sm:$0xf]
  %v51 = vld [vmem:[%s1 + $0x50] sm:$0xf]
  %v52 = vld [vmem:[%s1 + $0x54] sm:$0xf]
  %v53 = vld [vmem:[%s1 + $0x58] sm:$0xf]
  %v54 = vld [vmem:[%s1 + $0x5c] sm:$0xf]
  %v55 = vld [vmem:[%s1 + $0x60] sm:$0xf]
  %v56 = vld [vmem:[%s1 + $0x64] sm:$0xf]
  %v57 = vld [vmem:[%s1 + $0x68] sm:$0xf]
  %v58 = vld [vmem:[%s2] sm:$0x1]
  %v60 = vlaneseq
  %v61 = vshrl.u32 %v60, 7
  %v62 = vsub.s32 0, %v61
  %v63 = vrot.slane %v58, %v62
  %v81 = vunpack.c.l.b16 %v15
  %v82 = vunpack.c.h.b16 %v15
  %v83 = vunpack.c.l.b16 %v16
  %v84 = vunpack.c.h.b16 %v16
  %v85 = vunpack.c.l.b16 %v17
  %v86 = vunpack.c.h.b16 %v17
  %v87 = vunpack.c.l.b16 %v18
  %v88 = vunpack.c.h.b16 %v18
  %v89 = vunpack.c.l.b16 %v19
  %v90 = vunpack.c.h.b16 %v19
  %v91 = vunpack.c.l.b16 %v20
  %v92 = vunpack.c.h.b16 %v20
  %v93 = vunpack.c.l.b16 %v21
  %v94 = vunpack.c.h.b16 %v21
  %v95 = vunpack.c.l.b16 %v22
  %v96 = vunpack.c.h.b16 %v22
  %v97 = vunpack.c.l.b16 %v23
  %v98 = vunpack.c.h.b16 %v23
  %v99 = vunpack.c.l.b16 %v24
  %v100 = vunpack.c.h.b16 %v24
  %v101 = vunpack.c.l.b16 %v25
  %v102 = vunpack.c.h.b16 %v25
  %v103 = vunpack.c.l.b16 %v26
  %v104 = vunpack.c.h.b16 %v26
  %v105 = vunpack.c.l.b16 %v27
  %v106 = vunpack.c.h.b16 %v27
  %v107 = vunpack.c.l.b16 %v28
  %v108 = vunpack.c.h.b16 %v28
  %v109 = vunpack.c.l.b16 %v29
  %v110 = vunpack.c.h.b16 %v29
  %v111 = vunpack.c.l.b16 %v30
  %v112 = vunpack.c.h.b16 %v30
  %v113 = vpack.c.b16 %v83, %v81
  %v114 = vpack.c.b16 %v84, %v82
  %v115 = vpack.c.b16 %v87, %v85
  %v116 = vpack.c.b16 %v88, %v86
  %v117 = vpack.c.b16 %v91, %v89
  %v118 = vpack.c.b16 %v92, %v90
  %v119 = vpack.c.b16 %v95, %v93
  %v120 = vpack.c.b16 %v96, %v94
  %v121 = vpack.c.b16 %v99, %v97
  %v122 = vpack.c.b16 %v100, %v98
  %v123 = vpack.c.b16 %v103, %v101
  %v124 = vpack.c.b16 %v104, %v102
  %v125 = vpack.c.b16 %v107, %v105
  %v126 = vpack.c.b16 %v108, %v106
  %v127 = vpack.c.b16 %v111, %v109
  %v128 = vpack.c.b16 %v112, %v110
  %v164 = vunpack.c.l.b16 %v31
  %v165 = vunpack.c.l.b16 %v32
  %v166 = vunpack.c.l.b16 %v33
  %v167 = vunpack.c.l.b16 %v34
  %v168 = vunpack.c.l.b16 %v35
  %v169 = vunpack.c.l.b16 %v36
  %v170 = vunpack.c.l.b16 %v37
  %v171 = vunpack.c.l.b16 %v38
  %v172 = vunpack.c.l.b16 %v39
  %v173 = vunpack.c.l.b16 %v40
  %v174 = vunpack.c.l.b16 %v41
  %v175 = vunpack.c.l.b16 %v42
  %v176 = vunpack.c.l.b16 %v43
  %v177 = vunpack.c.l.b16 %v44
  %v178 = vunpack.c.l.b16 %v45
  %v179 = vunpack.c.l.b16 %v46
  %v180 = vunpack.c.l.b16 %v47
  %v181 = vunpack.c.l.b16 %v48
  %v182 = vunpack.c.l.b16 %v49
  %v183 = vunpack.c.l.b16 %v50
  %v184 = vunpack.c.l.b16 %v51
  %v185 = vunpack.c.l.b16 %v52
  %v186 = vunpack.c.l.b16 %v53
  %v187 = vunpack.c.l.b16 %v54
  %v188 = vunpack.c.l.b16 %v55
  %v189 = vunpack.c.l.b16 %v56
  %v190 = vunpack.c.l.b16 %v57
  %v191 = vpack.c.b16 %v165, %v164
  %v192 = vpack.c.b16 %v167, %v166
  %v193 = vpack.c.b16 %v169, %v168
  %v194 = vpack.c.b16 %v171, %v170
  %v195 = vpack.c.b16 %v173, %v172
  %v196 = vpack.c.b16 %v175, %v174
  %v197 = vpack.c.b16 %v177, %v176
  %v198 = vpack.c.b16 %v179, %v178
  %v199 = vpack.c.b16 %v181, %v180
  %v200 = vpack.c.b16 %v183, %v182
  %v201 = vpack.c.b16 %v185, %v184
  %v202 = vpack.c.b16 %v187, %v186
  %v203 = vpack.c.b16 %v189, %v188
  %v204 = vpack.c.b16 %v190, %v190
  %vm218 = vcmask 719872
  %v220 = vsel %vm218, %v114, 0
  %v223 = vsel %vm218, %v116, 0
  %v226 = vsel %vm218, %v118, 0
  %v229 = vsel %vm218, %v120, 0
  %v232 = vsel %vm218, %v122, 0
  %v235 = vsel %vm218, %v124, 0
  %v238 = vsel %vm218, %v126, 0
  %v241 = vsel %vm218, %v128, 0
  %vm243 = vcmask 1043456
  %v245 = vsel %vm243, %v204, 0
  %247 = vmatprep.subr.bf16.mxu0 0
  %248 = vmatpush1.bf16.msra.mxu0 %v191
  %249 = vmatprep.subr.bf16.mxu0 0
  %250 = vmatpush1.bf16.msra.mxu0 %v192
  %251 = vmatprep.subr.bf16.mxu0 0
  %252 = vmatpush1.bf16.msra.mxu0 %v193
  %253 = vmatprep.subr.bf16.mxu0 0
  %254 = vmatpush1.bf16.msra.mxu0 %v194
  %255 = vmatprep.subr.bf16.mxu0 0
  %256 = vmatpush1.bf16.msra.mxu0 %v195
  %257 = vmatprep.subr.bf16.mxu0 0
  %258 = vmatpush1.bf16.msra.mxu0 %v196
  %259 = vmatprep.subr.bf16.mxu0 0
  %260 = vmatpush1.bf16.msra.mxu0 %v197
  %261 = vmatprep.subr.bf16.mxu0 0
  %262 = vmatpush1.bf16.msra.mxu0 %v198
  %263 = vmatprep.subr.bf16.mxu0 0
  %264 = vmatpush1.bf16.msra.mxu0 %v199
  %265 = vmatprep.subr.bf16.mxu0 0
  %266 = vmatpush1.bf16.msra.mxu0 %v200
  %267 = vmatprep.subr.bf16.mxu0 0
  %268 = vmatpush1.bf16.msra.mxu0 %v201
  %269 = vmatprep.subr.bf16.mxu0 0
  %270 = vmatpush1.bf16.msra.mxu0 %v202
  %271 = vmatprep.subr.bf16.mxu0 0
  %272 = vmatpush1.bf16.msra.mxu0 %v203
  %273 = vmatprep.subr.bf16.mxu0 0
  %274 = vmatpush1.bf16.msra.mxu0 %v245
  %275 = vmatprep.subr.bf16.mxu0 0
  %276 = vmatpush1.bf16.msra.mxu0 0
  %277 = vmatprep.subr.bf16.mxu0 0
  %278 = vmatpush1.bf16.msra.mxu0 0
  %279 = vmatprep.mubr.bf16.mxu0 %v220
  %280 = vmatmul.mubr.bf16.gmra.mrb[0].mxu0 %v113
  %v281 = vpop.f32.mrb[0].mxu0
  %v282 = vadd.f32 %v63, %v281
  %v283 = vpop.f32.mrb[0].mxu0
  %v284 = vpop.f32.mrb[0].mxu0
  %v285 = vadd.f32 %v63, %v284
  %v286 = vpop.f32.mrb[0].mxu0
  %287 = vmatprep.mubr.bf16.mxu0 %v223
  %288 = vmatmul.mubr.bf16.gmra.mrb[0].mxu0 %v115
  %v289 = vpop.f32.mrb[0].mxu0
  %v290 = vadd.f32 %v63, %v289
  %v291 = vpop.f32.mrb[0].mxu0
  %v292 = vpop.f32.mrb[0].mxu0
  %v293 = vadd.f32 %v63, %v292
  %v294 = vpop.f32.mrb[0].mxu0
  %295 = vmatprep.mubr.bf16.mxu0 %v226
  %296 = vmatmul.mubr.bf16.gmra.mrb[0].mxu0 %v117
  %v297 = vpop.f32.mrb[0].mxu0
  %v298 = vadd.f32 %v63, %v297
  %v299 = vpop.f32.mrb[0].mxu0
  %v300 = vpop.f32.mrb[0].mxu0
  %v301 = vadd.f32 %v63, %v300
  %v302 = vpop.f32.mrb[0].mxu0
  %303 = vmatprep.mubr.bf16.mxu0 %v229
  %304 = vmatmul.mubr.bf16.gmra.mrb[0].mxu0 %v119
  %v305 = vpop.f32.mrb[0].mxu0
  %v306 = vadd.f32 %v63, %v305
  %v307 = vpop.f32.mrb[0].mxu0
  %v308 = vpop.f32.mrb[0].mxu0
  %v309 = vadd.f32 %v63, %v308
  %v310 = vpop.f32.mrb[0].mxu0
  %311 = vmatprep.mubr.bf16.mxu0 %v232
  %312 = vmatmul.mubr.bf16.gmra.mrb[0].mxu0 %v121
  %v313 = vpop.f32.mrb[0].mxu0
  %v314 = vadd.f32 %v63, %v313
  %v315 = vpop.f32.mrb[0].mxu0
  %v316 = vpop.f32.mrb[0].mxu0
  %v317 = vadd.f32 %v63, %v316
  %v318 = vpop.f32.mrb[0].mxu0
  %319 = vmatprep.mubr.bf16.mxu0 %v235
  %320 = vmatmul.mubr.bf16.gmra.mrb[0].mxu0 %v123
  %v321 = vpop.f32.mrb[0].mxu0
  %v322 = vadd.f32 %v63, %v321
  %v323 = vpop.f32.mrb[0].mxu0
  %v324 = vpop.f32.mrb[0].mxu0
  %v325 = vadd.f32 %v63, %v324
  %v326 = vpop.f32.mrb[0].mxu0
  %327 = vmatprep.mubr.bf16.mxu0 %v238
  %328 = vmatmul.mubr.bf16.gmra.mrb[0].mxu0 %v125
  %v329 = vpop.f32.mrb[0].mxu0
  %v330 = vadd.f32 %v63, %v329
  %v331 = vpop.f32.mrb[0].mxu0
  %v332 = vpop.f32.mrb[0].mxu0
  %v333 = vadd.f32 %v63, %v332
  %v334 = vpop.f32.mrb[0].mxu0
  %335 = vmatprep.mubr.bf16.mxu0 %v241
  %336 = vmatmul.mubr.bf16.gmra.mrb[0].mxu0 %v127
  %v337 = vpop.f32.mrb[0].mxu0
  %v338 = vadd.f32 %v63, %v337
  %v339 = vpop.f32.mrb[0].mxu0
  %v340 = vpop.f32.mrb[0].mxu0
  %v341 = vadd.f32 %v63, %v340
  %v342 = vpop.f32.mrb[0].mxu0
  %343 = vdwg.mxu0
  %v344 = vmax.f32 %v282, 0.0
  %v345 = vmax.f32 %v285, 0.0
  %v346 = vmax.f32 %v290, 0.0
  %v347 = vmax.f32 %v293, 0.0
  %v348 = vmax.f32 %v298, 0.0
  %v349 = vmax.f32 %v301, 0.0
  %v350 = vmax.f32 %v306, 0.0
  %v351 = vmax.f32 %v309, 0.0
  %v352 = vmax.f32 %v314, 0.0
  %v353 = vmax.f32 %v317, 0.0
  %v354 = vmax.f32 %v322, 0.0
  %v355 = vmax.f32 %v325, 0.0
  %v356 = vmax.f32 %v330, 0.0
  %v357 = vmax.f32 %v333, 0.0
  %v358 = vmax.f32 %v338, 0.0
  %v359 = vmax.f32 %v341, 0.0
  %v360 = vpack.c.bf16 %v345, %v344
  %v361 = vpack.c.bf16 %v347, %v346
  %v362 = vpack.c.bf16 %v349, %v348
  %v363 = vpack.c.bf16 %v351, %v350
  %v364 = vpack.c.bf16 %v353, %v352
  %v365 = vpack.c.bf16 %v355, %v354
  %v366 = vpack.c.bf16 %v357, %v356
  %v367 = vpack.c.bf16 %v359, %v358
  %v376 = vunpack.c.l.b16 %v360
  %v377 = vunpack.c.h.b16 %v360
  %v378 = vunpack.c.l.b16 %v361
  %v379 = vunpack.c.h.b16 %v361
  %v380 = vunpack.c.l.b16 %v362
  %v381 = vunpack.c.h.b16 %v362
  %v382 = vunpack.c.l.b16 %v363
  %v383 = vunpack.c.h.b16 %v363
  %v384 = vunpack.c.l.b16 %v364
  %v385 = vunpack.c.h.b16 %v364
  %v386 = vunpack.c.l.b16 %v365
  %v387 = vunpack.c.h.b16 %v365
  %v388 = vunpack.c.l.b16 %v366
  %v389 = vunpack.c.h.b16 %v366
  %v390 = vunpack.c.l.b16 %v367
  %v391 = vunpack.c.h.b16 %v367
  %v392 = vpack.c.b16 %v376, %v376
  %v393 = vpack.c.b16 %v377, %v377
  %v394 = vpack.c.b16 %v378, %v378
  %v395 = vpack.c.b16 %v379, %v379
  %v396 = vpack.c.b16 %v380, %v380
  %v397 = vpack.c.b16 %v381, %v381
  %v398 = vpack.c.b16 %v382, %v382
  %v399 = vpack.c.b16 %v383, %v383
  %v400 = vpack.c.b16 %v384, %v384
  %v401 = vpack.c.b16 %v385, %v385
  %v402 = vpack.c.b16 %v386, %v386
  %v403 = vpack.c.b16 %v387, %v387
  %v404 = vpack.c.b16 %v388, %v388
  %v405 = vpack.c.b16 %v389, %v389
  %v406 = vpack.c.b16 %v390, %v390
  %v407 = vpack.c.b16 %v391, %v391
  %vm424 = vcmask 519168
  %425 = vst.msk [vmem:[%s3] sm:$0xf] %vm424, %v392
  %426 = vst.msk [vmem:[%s3 + $0x4] sm:$0xf] %vm424, %v393
  %427 = vst.msk [vmem:[%s3 + $0x8] sm:$0xf] %vm424, %v394
  %428 = vst.msk [vmem:[%s3 + $0xc] sm:$0xf] %vm424, %v395
  %429 = vst.msk [vmem:[%s3 + $0x10] sm:$0xf] %vm424, %v396
  %430 = vst.msk [vmem:[%s3 + $0x14] sm:$0xf] %vm424, %v397
  %431 = vst.msk [vmem:[%s3 + $0x18] sm:$0xf] %vm424, %v398
  %432 = vst.msk [vmem:[%s3 + $0x1c] sm:$0xf] %vm424, %v399
  %433 = vst.msk [vmem:[%s3 + $0x20] sm:$0xf] %vm424, %v400
  %434 = vst.msk [vmem:[%s3 + $0x24] sm:$0xf] %vm424, %v401
  %435 = vst.msk [vmem:[%s3 + $0x28] sm:$0xf] %vm424, %v402
  %436 = vst.msk [vmem:[%s3 + $0x2c] sm:$0xf] %vm424, %v403
  %437 = vst.msk [vmem:[%s3 + $0x30] sm:$0xf] %vm424, %v404
  %438 = vst.msk [vmem:[%s3 + $0x34] sm:$0xf] %vm424, %v405
  %439 = vst.msk [vmem:[%s3 + $0x38] sm:$0xf] %vm424, %v406
  %440 = vst.msk [vmem:[%s3 + $0x3c] sm:$0xf] %vm424, %v407
  // Predicated region
  $region14: #{crowd_counter_forward.18} parent=0 // pred_check
    _
  $region15: #{crowd_counter_forward.18} parent=0 // pred_check_branch
    %442 = sbr.rel (0) target = $region17
  $region16: #{crowd_counter_forward.18} parent=0 // pred_region
    _
  $region17: #{crowd_counter_forward.18} parent=0 // pred_fallthru
    _
  // Predicated region
  $region18: #{crowd_counter_forward.18} parent=0 // pred_check
    _
  $region19: #{crowd_counter_forward.18} parent=0 // pred_check_branch
    %444 = sbr.rel (0) target = $region21
  $region20: #{crowd_counter_forward.18} parent=0 // pred_region
    _
  $region21: #{crowd_counter_forward.18} parent=0 // pred_fallthru
    _

// kernel: crowd_counter_forward.19
$region0: #{crowd_counter_forward.19}
  #allocation0 [shape = 'u32[]', space=smem, size = 0x4, offset = 0x4, fixed_abs, tag = 'smem constant byte address 0x4 - core index']
  #allocation1 [shape = 'u32[144,128]{1,0:T(1,128)}', space=vmem, size = 0x12000, scoped, tag = 'internal scratch']
  %s0 = inlined_call_operand.vmem [shape: bf16[32,432], index: 0, kind: input, shape index: {}]
  %s1 = inlined_call_operand.vmem [shape: bf16[432,32], index: 1, kind: input, shape index: {}]
  %s2 = inlined_call_operand.vmem [shape: f32[1,32], index: 2, kind: input, shape index: {}]
  %s3 = inlined_call_operand.vmem [shape: bf16[32,32], index: 3, kind: output, shape index: {}]
  %s4 = sld [smem:[#allocation0]]
  $region22: #{crowd_counter_forward.19} parent=0
    _
  %s6 = ssub.s32 1, %s4
  %s7 = scalar_select 0, %s6, %s4
  // Predicated region
  $region2: #{crowd_counter_forward.19} parent=0 // pred_check
    _
  $region3: #{crowd_counter_forward.19} parent=0 // pred_check_branch
    %9 = sbr.rel (0) target = $region5
  $region4: #{crowd_counter_forward.19} parent=0 // pred_region
    _
  $region5: #{crowd_counter_forward.19} parent=0 // pred_fallthru
    _
  // Predicated region
  $region6: #{crowd_counter_forward.19} parent=0 // pred_check
    _
  $region7: #{crowd_counter_forward.19} parent=0 // pred_check_branch
    %11 = sbr.rel (0) target = $region9
  $region8: #{crowd_counter_forward.19} parent=0 // pred_region
    _
  $region9: #{crowd_counter_forward.19} parent=0 // pred_fallthru
    _
  // Predicated region
  $region10: #{crowd_counter_forward.19} parent=0 // pred_check
    _
  $region11: #{crowd_counter_forward.19} parent=0 // pred_check_branch
    %13 = sbr.rel (0) target = $region13
  $region12: #{crowd_counter_forward.19} parent=0 // pred_region
    _
  $region13: #{crowd_counter_forward.19} parent=0 // pred_fallthru
    _
  %v15 = vld [vmem:[%s0] sm:$0xff]
  %v16 = vld [vmem:[%s0 + $0x8] sm:$0xff]
  %v17 = vld [vmem:[%s0 + $0x10] sm:$0xff]
  %v18 = vld [vmem:[%s0 + $0x18] sm:$0xff]
  %v19 = vld [vmem:[%s0 + $0x20] sm:$0xff]
  %v20 = vld [vmem:[%s0 + $0x28] sm:$0xff]
  %v21 = vld [vmem:[%s0 + $0x30] sm:$0xff]
  %v22 = vld [vmem:[%s0 + $0x38] sm:$0xff]
  %v23 = vld [vmem:[%s1] sm:$0xf]
  %v24 = vld [vmem:[%s1 + $0x4] sm:$0xf]
  %v25 = vld [vmem:[%s1 + $0x8] sm:$0xf]
  %v26 = vld [vmem:[%s1 + $0xc] sm:$0xf]
  %v27 = vld [vmem:[%s1 + $0x10] sm:$0xf]
  %v28 = vld [vmem:[%s1 + $0x14] sm:$0xf]
  %v29 = vld [vmem:[%s1 + $0x18] sm:$0xf]
  %v30 = vld [vmem:[%s1 + $0x1c] sm:$0xf]
  %v31 = vld [vmem:[%s1 + $0x20] sm:$0xf]
  %v32 = vld [vmem:[%s1 + $0x24] sm:$0xf]
  %v33 = vld [vmem:[%s1 + $0x28] sm:$0xf]
  %v34 = vld [vmem:[%s1 + $0x2c] sm:$0xf]
  %v35 = vld [vmem:[%s1 + $0x30] sm:$0xf]
  %v36 = vld [vmem:[%s1 + $0x34] sm:$0xf]
  %v37 = vld [vmem:[%s1 + $0x38] sm:$0xf]
  %v38 = vld [vmem:[%s1 + $0x3c] sm:$0xf]
  %v39 = vld [vmem:[%s1 + $0x40] sm:$0xf]
  %v40 = vld [vmem:[%s1 + $0x44] sm:$0xf]
  %v41 = vld [vmem:[%s1 + $0x48] sm:$0xf]
  %v42 = vld [vmem:[%s1 + $0x4c] sm:$0xf]
  %v43 = vld [vmem:[%s1 + $0x50] sm:$0xf]
  %v44 = vld [vmem:[%s1 + $0x54] sm:$0xf]
  %v45 = vld [vmem:[%s1 + $0x58] sm:$0xf]
  %v46 = vld [vmem:[%s1 + $0x5c] sm:$0xf]
  %v47 = vld [vmem:[%s1 + $0x60] sm:$0xf]
  %v48 = vld [vmem:[%s1 + $0x64] sm:$0xf]
  %v49 = vld [vmem:[%s1 + $0x68] sm:$0xf]
  %v50 = vld [vmem:[%s1 + $0x6c] sm:$0xf]
  %v51 = vld [vmem:[%s1 + $0x70] sm:$0xf]
  %v52 = vld [vmem:[%s1 + $0x74] sm:$0xf]
  %v53 = vld [vmem:[%s1 + $0x78] sm:$0xf]
  %v54 = vld [vmem:[%s1 + $0x7c] sm:$0xf]
  %v55 = vld [vmem:[%s1 + $0x80] sm:$0xf]
  %v56 = vld [vmem:[%s1 + $0x84] sm:$0xf]
  %v57 = vld [vmem:[%s1 + $0x88] sm:$0xf]
  %v58 = vld [vmem:[%s1 + $0x8c] sm:$0xf]
  %v59 = vld [vmem:[%s1 + $0x90] sm:$0xf]
  %v60 = vld [vmem:[%s1 + $0x94] sm:$0xf]
  %v61 = vld [vmem:[%s1 + $0x98] sm:$0xf]
  %v62 = vld [vmem:[%s1 + $0x9c] sm:$0xf]
  %v63 = vld [vmem:[%s1 + $0xa0] sm:$0xf]
  %v64 = vld [vmem:[%s1 + $0xa4] sm:$0xf]
  %v65 = vld [vmem:[%s1 + $0xa8] sm:$0xf]
  %v66 = vld [vmem:[%s1 + $0xac] sm:$0xf]
  %v67 = vld [vmem:[%s1 + $0xb0] sm:$0xf]
  %v68 = vld [vmem:[%s1 + $0xb4] sm:$0xf]
  %v69 = vld [vmem:[%s1 + $0xb8] sm:$0xf]
  %v70 = vld [vmem:[%s1 + $0xbc] sm:$0xf]
  %v71 = vld [vmem:[%s1 + $0xc0] sm:$0xf]
  %v72 = vld [vmem:[%s1 + $0xc4] sm:$0xf]
  %v73 = vld [vmem:[%s1 + $0xc8] sm:$0xf]
  %v74 = vld [vmem:[%s1 + $0xcc] sm:$0xf]
  %v75 = vld [vmem:[%s1 + $0xd0] sm:$0xf]
  %v76 = vld [vmem:[%s1 + $0xd4] sm:$0xf]
  %v77 = vld [vmem:[%s2] sm:$0x1]
  %v79 = vlaneseq
  %v80 = vshrl.u32 %v79, 7
  %v81 = vsub.s32 0, %v80
  %v82 = vrot.slane %v77, %v81
  %v92 = vunpack.c.l.b16 %v15
  %v93 = vunpack.c.h.b16 %v15
  %v94 = vunpack.c.l.b16 %v16
  %v95 = vunpack.c.h.b16 %v16
  %v96 = vunpack.c.l.b16 %v17
  %v97 = vunpack.c.h.b16 %v17
  %v98 = vunpack.c.l.b16 %v18
  %v99 = vunpack.c.h.b16 %v18
  %v100 = vunpack.c.l.b16 %v19
  %v101 = vunpack.c.h.b16 %v19
  %v102 = vunpack.c.l.b16 %v20
  %v103 = vunpack.c.h.b16 %v20
  %v104 = vunpack.c.l.b16 %v21
  %v105 = vunpack.c.h.b16 %v21
  %v106 = vunpack.c.l.b16 %v22
  %v107 = vunpack.c.h.b16 %v22
  %v108 = vpack.c.b16 %v96, %v92
  %v109 = vpack.c.b16 %v97, %v93
  %v110 = vpack.c.b16 %v98, %v94
  %v111 = vpack.c.b16 %v99, %v95
  %v112 = vpack.c.b16 %v104, %v100
  %v113 = vpack.c.b16 %v105, %v101
  %v114 = vpack.c.b16 %v106, %v102
  %v115 = vpack.c.b16 %v107, %v103
  %v176 = vunpack.c.l.b16 %v23
  %v177 = vunpack.c.l.b16 %v24
  %v178 = vunpack.c.l.b16 %v25
  %v179 = vunpack.c.l.b16 %v26
  %v180 = vunpack.c.l.b16 %v27
  %v181 = vunpack.c.l.b16 %v28
  %v182 = vunpack.c.l.b16 %v29
  %v183 = vunpack.c.l.b16 %v30
  %v184 = vunpack.c.l.b16 %v31
  %v185 = vunpack.c.l.b16 %v32
  %v186 = vunpack.c.l.b16 %v33
  %v187 = vunpack.c.l.b16 %v34
  %v188 = vunpack.c.l.b16 %v35
  %v189 = vunpack.c.l.b16 %v36
  %v190 = vunpack.c.l.b16 %v37
  %v191 = vunpack.c.l.b16 %v38
  %v192 = vunpack.c.l.b16 %v39
  %v193 = vunpack.c.l.b16 %v40
  %v194 = vunpack.c.l.b16 %v41
  %v195 = vunpack.c.l.b16 %v42
  %v196 = vunpack.c.l.b16 %v43
  %v197 = vunpack.c.l.b16 %v44
  %v198 = vunpack.c.l.b16 %v45
  %v199 = vunpack.c.l.b16 %v46
  %v200 = vunpack.c.l.b16 %v47
  %v201 = vunpack.c.l.b16 %v48
  %v202 = vunpack.c.l.b16 %v49
  %v203 = vunpack.c.l.b16 %v50
  %v204 = vunpack.c.l.b16 %v51
  %v205 = vunpack.c.l.b16 %v52
  %v206 = vunpack.c.l.b16 %v53
  %v207 = vunpack.c.l.b16 %v54
  %v208 = vunpack.c.l.b16 %v55
  %v209 = vunpack.c.l.b16 %v56
  %v210 = vunpack.c.l.b16 %v57
  %v211 = vunpack.c.l.b16 %v58
  %v212 = vunpack.c.l.b16 %v59
  %v213 = vunpack.c.l.b16 %v60
  %v214 = vunpack.c.l.b16 %v61
  %v215 = vunpack.c.l.b16 %v62
  %v216 = vunpack.c.l.b16 %v63
  %v217 = vunpack.c.l.b16 %v64
  %v218 = vunpack.c.l.b16 %v65
  %v219 = vunpack.c.l.b16 %v66
  %v220 = vunpack.c.l.b16 %v67
  %v221 = vunpack.c.l.b16 %v68
  %v222 = vunpack.c.l.b16 %v69
  %v223 = vunpack.c.l.b16 %v70
  %v224 = vunpack.c.l.b16 %v71
  %v225 = vunpack.c.l.b16 %v72
  %v226 = vunpack.c.l.b16 %v73
  %v227 = vunpack.c.l.b16 %v74
  %v228 = vunpack.c.l.b16 %v75
  %v229 = vunpack.c.l.b16 %v76
  %v230 = vpack.c.b16 %v177, %v176
  %v231 = vpack.c.b16 %v179, %v178
  %v232 = vpack.c.b16 %v181, %v180
  %v233 = vpack.c.b16 %v183, %v182
  %v234 = vpack.c.b16 %v185, %v184
  %v235 = vpack.c.b16 %v187, %v186
  %v236 = vpack.c.b16 %v189, %v188
  %v237 = vpack.c.b16 %v191, %v190
  %v238 = vpack.c.b16 %v193, %v192
  %v239 = vpack.c.b16 %v195, %v194
  %v240 = vpack.c.b16 %v197, %v196
  %v241 = vpack.c.b16 %v199, %v198
  %v242 = vpack.c.b16 %v201, %v200
  %v243 = vpack.c.b16 %v203, %v202
  %v244 = vpack.c.b16 %v205, %v204
  %v245 = vpack.c.b16 %v207, %v206
  %v246 = vpack.c.b16 %v209, %v208
  %v247 = vpack.c.b16 %v211, %v210
  %v248 = vpack.c.b16 %v213, %v212
  %v249 = vpack.c.b16 %v215, %v214
  %v250 = vpack.c.b16 %v217, %v216
  %v251 = vpack.c.b16 %v219, %v218
  %v252 = vpack.c.b16 %v221, %v220
  %v253 = vpack.c.b16 %v223, %v222
  %v254 = vpack.c.b16 %v225, %v224
  %v255 = vpack.c.b16 %v227, %v226
  %v256 = vpack.c.b16 %v229, %v228
  %vm284 = vcmask 392192
  %v286 = vsel %vm284, %v111, 0
  %v289 = vsel %vm284, %v115, 0
  %291 = vmatprep.subr.bf16.mxu0 0
  %292 = vmatpush1.bf16.msra.mxu0 %v230
  %293 = vmatprep.subr.bf16.mxu0 0
  %294 = vmatpush1.bf16.msra.mxu0 %v231
  %295 = vmatprep.subr.bf16.mxu0 0
  %296 = vmatpush1.bf16.msra.mxu0 %v232
  %297 = vmatprep.subr.bf16.mxu0 0
  %298 = vmatpush1.bf16.msra.mxu0 %v233
  %299 = vmatprep.subr.bf16.mxu0 0
  %300 = vmatpush1.bf16.msra.mxu0 %v234
  %301 = vmatprep.subr.bf16.mxu0 0
  %302 = vmatpush1.bf16.msra.mxu0 %v235
  %303 = vmatprep.subr.bf16.mxu0 0
  %304 = vmatpush1.bf16.msra.mxu0 %v236
  %305 = vmatprep.subr.bf16.mxu0 0
  %306 = vmatpush1.bf16.msra.mxu0 %v237
  %307 = vmatprep.subr.bf16.mxu0 0
  %308 = vmatpush1.bf16.msra.mxu0 %v238
  %309 = vmatprep.subr.bf16.mxu0 0
  %310 = vmatpush1.bf16.msra.mxu0 %v239
  %311 = vmatprep.subr.bf16.mxu0 0
  %312 = vmatpush1.bf16.msra.mxu0 %v240
  %313 = vmatprep.subr.bf16.mxu0 0
  %314 = vmatpush1.bf16.msra.mxu0 %v241
  %315 = vmatprep.subr.bf16.mxu0 0
  %316 = vmatpush1.bf16.msra.mxu0 %v242
  %317 = vmatprep.subr.bf16.mxu0 0
  %318 = vmatpush1.bf16.msra.mxu0 %v243
  %319 = vmatprep.subr.bf16.mxu0 0
  %320 = vmatpush1.bf16.msra.mxu0 %v244
  %321 = vmatprep.subr.bf16.mxu0 0
  %322 = vmatpush1.bf16.msra.mxu0 %v245
  %323 = vmatprep.mubr.bf16.mxu0 %v109
  %324 = vmatmul.mubr.bf16.gmra.mrb[0].mxu0 %v108
  %v325 = vpop.f32.mrb[0].mxu0
  %v326 = vadd.f32 %v82, %v325
  %v327 = vpop.f32.mrb[0].mxu0
  %v328 = vpop.f32.mrb[0].mxu0
  %v329 = vadd.f32 %v82, %v328
  %v330 = vpop.f32.mrb[0].mxu0
  %331 = vmatprep.mubr.bf16.mxu0 %v113
  %332 = vmatmul.mubr.bf16.gmra.mrb[0].mxu0 %v112
  %v333 = vpop.f32.mrb[0].mxu0
  %v334 = vadd.f32 %v82, %v333
  %v335 = vpop.f32.mrb[0].mxu0
  %v336 = vpop.f32.mrb[0].mxu0
  %v337 = vadd.f32 %v82, %v336
  %v338 = vpop.f32.mrb[0].mxu0
  %339 = vdwg.mxu0
  %340 = vmatprep.subr.bf16.mxu0 0
  %341 = vmatpush1.bf16.msra.mxu0 %v246
  %342 = vmatprep.subr.bf16.mxu0 0
  %343 = vmatpush1.bf16.msra.mxu0 %v247
  %344 = vmatprep.subr.bf16.mxu0 0
  %345 = vmatpush1.bf16.msra.mxu0 %v248
  %346 = vmatprep.subr.bf16.mxu0 0
  %347 = vmatpush1.bf16.msra.mxu0 %v249
  %348 = vmatprep.subr.bf16.mxu0 0
  %349 = vmatpush1.bf16.msra.mxu0 %v250
  %350 = vmatprep.subr.bf16.mxu0 0
  %351 = vmatpush1.bf16.msra.mxu0 %v251
  %352 = vmatprep.subr.bf16.mxu0 0
  %353 = vmatpush1.bf16.msra.mxu0 %v252
  %354 = vmatprep.subr.bf16.mxu0 0
  %355 = vmatpush1.bf16.msra.mxu0 %v253
  %356 = vmatprep.subr.bf16.mxu0 0
  %357 = vmatpush1.bf16.msra.mxu0 %v254
  %358 = vmatprep.subr.bf16.mxu0 0
  %359 = vmatpush1.bf16.msra.mxu0 %v255
  %360 = vmatprep.subr.bf16.mxu0 0
  %361 = vmatpush1.bf16.msra.mxu0 %v256
  %362 = vmatprep.subr.bf16.mxu0 0
  %363 = vmatpush1.bf16.msra.mxu0 0
  %364 = vmatprep.subr.bf16.mxu0 0
  %365 = vmatpush1.bf16.msra.mxu0 0
  %366 = vmatprep.subr.bf16.mxu0 0
  %367 = vmatpush1.bf16.msra.mxu0 0
  %368 = vmatprep.subr.bf16.mxu0 0
  %369 = vmatpush1.bf16.msra.mxu0 0
  %370 = vmatprep.subr.bf16.mxu0 0
  %371 = vmatpush1.bf16.msra.mxu0 0
  %372 = vmatprep.mubr.bf16.mxu0 %v286
  %373 = vmatmul.mubr.bf16.gmra.mrb[0].mxu0 %v110
  %v374 = vpop.f32.mrb[0].mxu0
  %v375 = vadd.f32 %v326, %v374
  %v376 = vpop.f32.mrb[0].mxu0
  %v377 = vpop.f32.mrb[0].mxu0
  %v378 = vadd.f32 %v329, %v377
  %v379 = vpop.f32.mrb[0].mxu0
  %380 = vmatprep.mubr.bf16.mxu0 %v289
  %381 = vmatmul.mubr.bf16.gmra.mrb[0].mxu0 %v114
  %v382 = vpop.f32.mrb[0].mxu0
  %v383 = vadd.f32 %v334, %v382
  %v384 = vpop.f32.mrb[0].mxu0
  %v385 = vpop.f32.mrb[0].mxu0
  %v386 = vadd.f32 %v337, %v385
  %v387 = vpop.f32.mrb[0].mxu0
  %388 = vdwg.mxu0
  %v389 = vmax.f32 %v375, 0.0
  %v390 = vmax.f32 %v378, 0.0
  %v391 = vmax.f32 %v383, 0.0
  %v392 = vmax.f32 %v386, 0.0
  %v393 = vpack.c.bf16 %v390, %v389
  %v394 = vpack.c.bf16 %v392, %v391
  %v397 = vunpack.c.l.b16 %v393
  %v398 = vunpack.c.h.b16 %v393
  %v399 = vunpack.c.l.b16 %v394
  %v400 = vunpack.c.h.b16 %v394
  %v401 = vpack.c.b16 %v397, %v397
  %v402 = vpack.c.b16 %v398, %v398
  %v403 = vpack.c.b16 %v399, %v399
  %v404 = vpack.c.b16 %v400, %v400
  %vm409 = vcmask 257024
  %410 = vst.msk [vmem:[%s3] sm:$0xf] %vm409, %v401
  %411 = vst.msk [vmem:[%s3 + $0x4] sm:$0xf] %vm409, %v402
  %412 = vst.msk [vmem:[%s3 + $0x8] sm:$0xf] %vm409, %v403
  %413 = vst.msk [vmem:[%s3 + $0xc] sm:$0xf] %vm409, %v404
  // Predicated region
  $region14: #{crowd_counter_forward.19} parent=0 // pred_check
    _
  $region15: #{crowd_counter_forward.19} parent=0 // pred_check_branch
    %415 = sbr.rel (0) target = $region17
  $region16: #{crowd_counter_forward.19} parent=0 // pred_region
    _
  $region17: #{crowd_counter_forward.19} parent=0 // pred_fallthru
    _
  // Predicated region
  $region18: #{crowd_counter_forward.19} parent=0 // pred_check
    _
  $region19: #{crowd_counter_forward.19} parent=0 // pred_check_branch
    %417 = sbr.rel (0) target = $region21
  $region20: #{crowd_counter_forward.19} parent=0 // pred_region
    _
  $region21: #{crowd_counter_forward.19} parent=0 // pred_fallthru
    _

// kernel: crowd_counter_forward.20
$region0: #{crowd_counter_forward.20}
  #allocation0 [shape = 'u32[]', space=smem, size = 0x4, offset = 0x4, fixed_abs, tag = 'smem constant byte address 0x4 - core index']
  #allocation1 [shape = 'u32[144,128]{1,0:T(1,128)}', space=vmem, size = 0x12000, scoped, tag = 'internal scratch']
  %s0 = inlined_call_operand.vmem [shape: bf16[32,216], index: 0, kind: input, shape index: {}]
  %s1 = inlined_call_operand.vmem [shape: bf16[216,32], index: 1, kind: input, shape index: {}]
  %s2 = inlined_call_operand.vmem [shape: f32[1,32], index: 2, kind: input, shape index: {}]
  %s3 = inlined_call_operand.vmem [shape: bf16[32,32], index: 3, kind: output, shape index: {}]
  %s4 = sld [smem:[#allocation0]]
  $region22: #{crowd_counter_forward.20} parent=0
    _
  %s6 = ssub.s32 1, %s4
  %s7 = scalar_select 0, %s6, %s4
  // Predicated region
  $region2: #{crowd_counter_forward.20} parent=0 // pred_check
    _
  $region3: #{crowd_counter_forward.20} parent=0 // pred_check_branch
    %9 = sbr.rel (0) target = $region5
  $region4: #{crowd_counter_forward.20} parent=0 // pred_region
    _
  $region5: #{crowd_counter_forward.20} parent=0 // pred_fallthru
    _
  // Predicated region
  $region6: #{crowd_counter_forward.20} parent=0 // pred_check
    _
  $region7: #{crowd_counter_forward.20} parent=0 // pred_check_branch
    %11 = sbr.rel (0) target = $region9
  $region8: #{crowd_counter_forward.20} parent=0 // pred_region
    _
  $region9: #{crowd_counter_forward.20} parent=0 // pred_fallthru
    _
  // Predicated region
  $region10: #{crowd_counter_forward.20} parent=0 // pred_check
    _
  $region11: #{crowd_counter_forward.20} parent=0 // pred_check_branch
    %13 = sbr.rel (0) target = $region13
  $region12: #{crowd_counter_forward.20} parent=0 // pred_region
    _
  $region13: #{crowd_counter_forward.20} parent=0 // pred_fallthru
    _
  %v15 = vld [vmem:[%s0] sm:$0xff]
  %v16 = vld [vmem:[%s0 + $0x8] sm:$0xff]
  %v17 = vld [vmem:[%s0 + $0x10] sm:$0xff]
  %v18 = vld [vmem:[%s0 + $0x18] sm:$0xff]
  %v19 = vld [vmem:[%s1] sm:$0xf]
  %v20 = vld [vmem:[%s1 + $0x4] sm:$0xf]
  %v21 = vld [vmem:[%s1 + $0x8] sm:$0xf]
  %v22 = vld [vmem:[%s1 + $0xc] sm:$0xf]
  %v23 = vld [vmem:[%s1 + $0x10] sm:$0xf]
  %v24 = vld [vmem:[%s1 + $0x14] sm:$0xf]
  %v25 = vld [vmem:[%s1 + $0x18] sm:$0xf]
  %v26 = vld [vmem:[%s1 + $0x1c] sm:$0xf]
  %v27 = vld [vmem:[%s1 + $0x20] sm:$0xf]
  %v28 = vld [vmem:[%s1 + $0x24] sm:$0xf]
  %v29 = vld [vmem:[%s1 + $0x28] sm:$0xf]
  %v30 = vld [vmem:[%s1 + $0x2c] sm:$0xf]
  %v31 = vld [vmem:[%s1 + $0x30] sm:$0xf]
  %v32 = vld [vmem:[%s1 + $0x34] sm:$0xf]
  %v33 = vld [vmem:[%s1 + $0x38] sm:$0xf]
  %v34 = vld [vmem:[%s1 + $0x3c] sm:$0xf]
  %v35 = vld [vmem:[%s1 + $0x40] sm:$0xf]
  %v36 = vld [vmem:[%s1 + $0x44] sm:$0xf]
  %v37 = vld [vmem:[%s1 + $0x48] sm:$0xf]
  %v38 = vld [vmem:[%s1 + $0x4c] sm:$0xf]
  %v39 = vld [vmem:[%s1 + $0x50] sm:$0xf]
  %v40 = vld [vmem:[%s1 + $0x54] sm:$0xf]
  %v41 = vld [vmem:[%s1 + $0x58] sm:$0xf]
  %v42 = vld [vmem:[%s1 + $0x5c] sm:$0xf]
  %v43 = vld [vmem:[%s1 + $0x60] sm:$0xf]
  %v44 = vld [vmem:[%s1 + $0x64] sm:$0xf]
  %v45 = vld [vmem:[%s1 + $0x68] sm:$0xf]
  %v46 = vld [vmem:[%s2] sm:$0x1]
  %v48 = vlaneseq
  %v49 = vshrl.u32 %v48, 7
  %v50 = vsub.s32 0, %v49
  %v51 = vrot.slane %v46, %v50
  %v57 = vunpack.c.l.b16 %v15
  %v58 = vunpack.c.h.b16 %v15
  %v59 = vunpack.c.l.b16 %v16
  %v60 = vunpack.c.h.b16 %v16
  %v61 = vunpack.c.l.b16 %v17
  %v62 = vunpack.c.h.b16 %v17
  %v63 = vunpack.c.l.b16 %v18
  %v64 = vunpack.c.h.b16 %v18
  %v65 = vpack.c.b16 %v59, %v57
  %v66 = vpack.c.b16 %v60, %v58
  %v67 = vpack.c.b16 %v63, %v61
  %v68 = vpack.c.b16 %v64, %v62
  %v98 = vunpack.c.l.b16 %v19
  %v99 = vunpack.c.l.b16 %v20
  %v100 = vunpack.c.l.b16 %v21
  %v101 = vunpack.c.l.b16 %v22
  %v102 = vunpack.c.l.b16 %v23
  %v103 = vunpack.c.l.b16 %v24
  %v104 = vunpack.c.l.b16 %v25
  %v105 = vunpack.c.l.b16 %v26
  %v106 = vunpack.c.l.b16 %v27
  %v107 = vunpack.c.l.b16 %v28
  %v108 = vunpack.c.l.b16 %v29
  %v109 = vunpack.c.l.b16 %v30
  %v110 = vunpack.c.l.b16 %v31
  %v111 = vunpack.c.l.b16 %v32
  %v112 = vunpack.c.l.b16 %v33
  %v113 = vunpack.c.l.b16 %v34
  %v114 = vunpack.c.l.b16 %v35
  %v115 = vunpack.c.l.b16 %v36
  %v116 = vunpack.c.l.b16 %v37
  %v117 = vunpack.c.l.b16 %v38
  %v118 = vunpack.c.l.b16 %v39
  %v119 = vunpack.c.l.b16 %v40
  %v120 = vunpack.c.l.b16 %v41
  %v121 = vunpack.c.l.b16 %v42
  %v122 = vunpack.c.l.b16 %v43
  %v123 = vunpack.c.l.b16 %v44
  %v124 = vunpack.c.l.b16 %v45
  %v125 = vpack.c.b16 %v99, %v98
  %v126 = vpack.c.b16 %v101, %v100
  %v127 = vpack.c.b16 %v103, %v102
  %v128 = vpack.c.b16 %v105, %v104
  %v129 = vpack.c.b16 %v107, %v106
  %v130 = vpack.c.b16 %v109, %v108
  %v131 = vpack.c.b16 %v111, %v110
  %v132 = vpack.c.b16 %v113, %v112
  %v133 = vpack.c.b16 %v115, %v114
  %v134 = vpack.c.b16 %v117, %v116
  %v135 = vpack.c.b16 %v119, %v118
  %v136 = vpack.c.b16 %v121, %v120
  %v137 = vpack.c.b16 %v123, %v122
  %v138 = vpack.c.b16 %v124, %v124
  %vm152 = vcmask 719872
  %v154 = vsel %vm152, %v66, 0
  %v157 = vsel %vm152, %v68, 0
  %vm159 = vcmask 1043456
  %v161 = vsel %vm159, %v138, 0
  %163 = vmatprep.subr.bf16.mxu0 0
  %164 = vmatpush1.bf16.msra.mxu0 %v125
  %165 = vmatprep.subr.bf16.mxu0 0
  %166 = vmatpush1.bf16.msra.mxu0 %v126
  %167 = vmatprep.subr.bf16.mxu0 0
  %168 = vmatpush1.bf16.msra.mxu0 %v127
  %169 = vmatprep.subr.bf16.mxu0 0
  %170 = vmatpush1.bf16.msra.mxu0 %v128
  %171 = vmatprep.subr.bf16.mxu0 0
  %172 = vmatpush1.bf16.msra.mxu0 %v129
  %173 = vmatprep.subr.bf16.mxu0 0
  %174 = vmatpush1.bf16.msra.mxu0 %v130
  %175 = vmatprep.subr.bf16.mxu0 0
  %176 = vmatpush1.bf16.msra.mxu0 %v131
  %177 = vmatprep.subr.bf16.mxu0 0
  %178 = vmatpush1.bf16.msra.mxu0 %v132
  %179 = vmatprep.subr.bf16.mxu0 0
  %180 = vmatpush1.bf16.msra.mxu0 %v133
  %181 = vmatprep.subr.bf16.mxu0 0
  %182 = vmatpush1.bf16.msra.mxu0 %v134
  %183 = vmatprep.subr.bf16.mxu0 0
  %184 = vmatpush1.bf16.msra.mxu0 %v135
  %185 = vmatprep.subr.bf16.mxu0 0
  %186 = vmatpush1.bf16.msra.mxu0 %v136
  %187 = vmatprep.subr.bf16.mxu0 0
  %188 = vmatpush1.bf16.msra.mxu0 %v137
  %189 = vmatprep.subr.bf16.mxu0 0
  %190 = vmatpush1.bf16.msra.mxu0 %v161
  %191 = vmatprep.subr.bf16.mxu0 0
  %192 = vmatpush1.bf16.msra.mxu0 0
  %193 = vmatprep.subr.bf16.mxu0 0
  %194 = vmatpush1.bf16.msra.mxu0 0
  %195 = vmatprep.mubr.bf16.mxu0 %v154
  %196 = vmatmul.mubr.bf16.gmra.mrb[0].mxu0 %v65
  %v197 = vpop.f32.mrb[0].mxu0
  %v198 = vadd.f32 %v51, %v197
  %v199 = vpop.f32.mrb[0].mxu0
  %v200 = vpop.f32.mrb[0].mxu0
  %v201 = vadd.f32 %v51, %v200
  %v202 = vpop.f32.mrb[0].mxu0
  %203 = vmatprep.mubr.bf16.mxu0 %v157
  %204 = vmatmul.mubr.bf16.gmra.mrb[0].mxu0 %v67
  %v205 = vpop.f32.mrb[0].mxu0
  %v206 = vadd.f32 %v51, %v205
  %v207 = vpop.f32.mrb[0].mxu0
  %v208 = vpop.f32.mrb[0].mxu0
  %v209 = vadd.f32 %v51, %v208
  %v210 = vpop.f32.mrb[0].mxu0
  %211 = vdwg.mxu0
  %v212 = vmax.f32 %v198, 0.0
  %v213 = vmax.f32 %v201, 0.0
  %v214 = vmax.f32 %v206, 0.0
  %v215 = vmax.f32 %v209, 0.0
  %v216 = vpack.c.bf16 %v213, %v212
  %v217 = vpack.c.bf16 %v215, %v214
  %v220 = vunpack.c.l.b16 %v216
  %v221 = vunpack.c.h.b16 %v216
  %v222 = vunpack.c.l.b16 %v217
  %v223 = vunpack.c.h.b16 %v217
  %v224 = vpack.c.b16 %v220, %v220
  %v225 = vpack.c.b16 %v221, %v221
  %v226 = vpack.c.b16 %v222, %v222
  %v227 = vpack.c.b16 %v223, %v223
  %vm232 = vcmask 257024
  %233 = vst.msk [vmem:[%s3] sm:$0xf] %vm232, %v224
  %234 = vst.msk [vmem:[%s3 + $0x4] sm:$0xf] %vm232, %v225
  %235 = vst.msk [vmem:[%s3 + $0x8] sm:$0xf] %vm232, %v226
  %236 = vst.msk [vmem:[%s3 + $0xc] sm:$0xf] %vm232, %v227
  // Predicated region
  $region14: #{crowd_counter_forward.20} parent=0 // pred_check
    _
  $region15: #{crowd_counter_forward.20} parent=0 // pred_check_branch
    %238 = sbr.rel (0) target = $region17
  $region16: #{crowd_counter_forward.20} parent=0 // pred_region
    _
  $region17: #{crowd_counter_forward.20} parent=0 // pred_fallthru
    _
  // Predicated region
  $region18: #{crowd_counter_forward.20} parent=0 // pred_check
    _
  $region19: #{crowd_counter_forward.20} parent=0 // pred_check_branch
    %240 = sbr.rel (0) target = $region21
  $region20: #{crowd_counter_forward.20} parent=0 // pred_region
    _
  $region21: #{crowd_counter_forward.20} parent=0 // pred_fallthru
    _

// kernel: crowd_counter_forward.21
$region0: #{crowd_counter_forward.21}
  #allocation0 [shape = 'u32[]', space=smem, size = 0x4, offset = 0x4, fixed_abs, tag = 'smem constant byte address 0x4 - core index']
  #allocation1 [shape = 'u32[144,128]{1,0:T(1,128)}', space=vmem, size = 0x12000, scoped, tag = 'internal scratch']
  #allocation2 [shape = 'f32[1,1]{1,0:T(1,128)S(6)}', space=smem, size = 0x200, scoped, tag = 'scoped memory for crowd_counter_forward.21']
  %s0 = inlined_call_operand.vmem [shape: bf16[2,30,4,4], index: 0, kind: input, shape index: {}]
  %s1 = inlined_call_operand.vmem [shape: f32[1,30,1,1], index: 1, kind: input, shape index: {}]
  %s2 = inlined_call_operand.<no memory space> [shape: f32[1,1], index: 2, kind: input, shape index: {}]
  %s3 = inlined_call_operand.vmem [shape: f32[2,4,4], index: 3, kind: output, shape index: {}]
  %s4 = sld [smem:[#allocation0]]
  $region45: #{crowd_counter_forward.21} parent=0
    _
  %s6 = ssub.s32 1, %s4
  %s7 = scalar_select 0, %s6, %s4
  %8 = sst [smem:[#allocation2]] %s2
  loop: start=0, step=1, limit=4
  $region2: #{crowd_counter_forward.21} parent=0 // loop_pre_header
    _
  $region3: #{crowd_counter_forward.21} parent=0 // loop_header
    %s10 = sphi 0, %s14
    %p11 = scmp.ge.s32.totalorder %s10, 4
    %s17 = sphi 0, %s29
    %s18 = sphi 0, %s25
    %s19 = sphi 0, %s17
    %s20 = sphi 0, %s18
    %s21 = sphi 0, %s19
    %s22 = sphi 0, %s20
    %s34 = sphi 0, %s36
    %s37 = sphi 0, %s34
    %s38 = sphi 0, %s37
    %s54 = sphi 0, %s38
    %s58 = sphi 0, %s58
    %s60 = sphi 0, %s58
    %s61 = sphi 0, %s60
    %s75 = sphi 0, %s61
    %s79 = sphi 0, %s79
    %s81 = sphi 0, %s79
    %s82 = sphi 0, %s81
    %s96 = sphi 0, %s82
    %s104 = sphi 0, %s106
    %s107 = sphi 0, %s104
    %s108 = sphi 0, %s107
    %s124 = sphi 0, %s108
  $region4: #{crowd_counter_forward.21} parent=0 // loop_header_branch
    %13 = sbr.rel (%p11) target = $region8
  $region5: #{crowd_counter_forward.21} parent=0 // loop_body
    %s15 = ssub.s32 %s10, 1
    %s16 = ssub.s32 %s10, 2
    %s23 = sadd.s32 1, %s18
    %p24 = scmp.ge.s32.totalorder %s23, 1
    %s25 = scalar_select %p24, 0, %s23
    %s26 = sadd.s32 1, %s17
    %s27 = scalar_select %p24, %s26, %s17
    %p28 = scmp.ge.s32.totalorder %s27, 2
    %s29 = scalar_select %p28, 0, %s27
    %s30 = ssub.s32 %s17, %s29
    %s31 = ssub.s32 %s18, %s25
    %s32 = sor.u32 %s30, %s31
    %p33 = scmp.eq.s32.totalorder %s32, 0
    %s35 = sadd.s32 %s34, 1
    %s36 = scalar_select %p33, %s34, %s35
    %p39 = pneg %p33
    %p40 = scmp.eq.s32.totalorder %s10, 1
    %p41 = por %p39, %p40
    %p42 = scmp.ne.s32.totalorder %s34, %s37
    %p43 = scmp.eq.s32.totalorder %s10, 0
    %p44 = por %p42, %p43
    %p45 = scmp.ne.s32.totalorder %s34, %s37
    %p46 = scmp.eq.s32.totalorder %s15, 1
    %p47 = por %p45, %p46
    %p48 = scmp.ne.s32.totalorder %s37, %s38
    %p49 = scmp.eq.s32.totalorder %s15, 0
    %p50 = por %p48, %p49
    %p51 = scmp.ne.s32.totalorder %s37, %s38
    %p52 = scmp.eq.s32.totalorder %s16, 1
    %p53 = por %p51, %p52
    %p55 = scmp.ne.s32.totalorder %s38, %s54
    %p56 = scmp.eq.s32.totalorder %s16, 0
    %p57 = por %p55, %p56
    %s59 = sadd.s32 %s58, 1
    %p62 = scmp.eq.s32.totalorder %s10, 1
    %p63 = scmp.ne.s32.totalorder %s58, %s60
    %p64 = scmp.eq.s32.totalorder %s10, 0
    %p65 = por %p63, %p64
    %p66 = scmp.ne.s32.totalorder %s58, %s60
    %p67 = scmp.eq.s32.totalorder %s15, 1
    %p68 = por %p66, %p67
    %p69 = scmp.ne.s32.totalorder %s60, %s61
    %p70 = scmp.eq.s32.totalorder %s15, 0
    %p71 = por %p69, %p70
    %p72 = scmp.ne.s32.totalorder %s60, %s61
    %p73 = scmp.eq.s32.totalorder %s16, 1
    %p74 = por %p72, %p73
    %p76 = scmp.ne.s32.totalorder %s61, %s75
    %p77 = scmp.eq.s32.totalorder %s16, 0
    %p78 = por %p76, %p77
    %s80 = sadd.s32 %s79, 1
    %p83 = scmp.eq.s32.totalorder %s10, 1
    %p84 = scmp.ne.s32.totalorder %s79, %s81
    %p85 = scmp.eq.s32.totalorder %s10, 0
    %p86 = por %p84, %p85
    %p87 = scmp.ne.s32.totalorder %s79, %s81
    %p88 = scmp.eq.s32.totalorder %s15, 1
    %p89 = por %p87, %p88
    %p90 = scmp.ne.s32.totalorder %s81, %s82
    %p91 = scmp.eq.s32.totalorder %s15, 0
    %p92 = por %p90, %p91
    %p93 = scmp.ne.s32.totalorder %s81, %s82
    %p94 = scmp.eq.s32.totalorder %s16, 1
    %p95 = por %p93, %p94
    %p97 = scmp.ne.s32.totalorder %s82, %s96
    %p98 = scmp.eq.s32.totalorder %s16, 0
    %p99 = por %p97, %p98
    %s100 = ssub.s32 %s17, %s29
    %s101 = ssub.s32 %s18, %s25
    %s102 = sor.u32 %s100, %s101
    %p103 = scmp.eq.s32.totalorder %s102, 0
    %s105 = sadd.s32 %s104, 1
    %s106 = scalar_select %p103, %s104, %s105
    %p109 = pneg %p103
    %p110 = scmp.eq.s32.totalorder %s10, 1
    %p111 = por %p109, %p110
    %p112 = scmp.ne.s32.totalorder %s104, %s107
    %p113 = scmp.eq.s32.totalorder %s10, 0
    %p114 = por %p112, %p113
    %p115 = scmp.ne.s32.totalorder %s104, %s107
    %p116 = scmp.eq.s32.totalorder %s15, 1
    %p117 = por %p115, %p116
    %p118 = scmp.ne.s32.totalorder %s107, %s108
    %p119 = scmp.eq.s32.totalorder %s15, 0
    %p120 = por %p118, %p119
    %p121 = scmp.ne.s32.totalorder %s107, %s108
    %p122 = scmp.eq.s32.totalorder %s16, 1
    %p123 = por %p121, %p122
    %p125 = scmp.ne.s32.totalorder %s108, %s124
    %p126 = scmp.eq.s32.totalorder %s16, 0
    %p127 = por %p125, %p126
    %p128 = scmp.le.s32.totalorder 1, %s10
    %p129 = scmp.lt.s32.totalorder %s10, 3
    %p130 = pnand %p128, %p129
    %p131 = pneg %p130
    // Predicated region
    $region9: #{crowd_counter_forward.21} parent=5 // pred_check
      _
    $region10: #{crowd_counter_forward.21} parent=5 // pred_check_branch
      %133 = sbr.rel (%p130) target = $region12
    $region11: #{crowd_counter_forward.21} parent=5 // pred_region
      %s134 = ssub.s32 %s10, 1
      // Predicated region
      $region13: #{crowd_counter_forward.21} parent=11 // pred_check
        %p135 = pneg %p71
      $region14: #{crowd_counter_forward.21} parent=11 // pred_check_branch
        %137 = sbr.rel (%p135) target = $region16
      $region15: #{crowd_counter_forward.21} parent=11 // pred_region
        _
      $region16: #{crowd_counter_forward.21} parent=11 // pred_fallthru
        _
      // Predicated region
      $region17: #{crowd_counter_forward.21} parent=11 // pred_check
        %p138 = pneg %p92
      $region18: #{crowd_counter_forward.21} parent=11 // pred_check_branch
        %140 = sbr.rel (%p138) target = $region20
      $region19: #{crowd_counter_forward.21} parent=11 // pred_region
        _
      $region20: #{crowd_counter_forward.21} parent=11 // pred_fallthru
        _
    $region12: #{crowd_counter_forward.21} parent=5 // pred_fallthru
      _
    %p141 = scmp.lt.s32.totalorder %s10, 2
    // Predicated region
    $region21: #{crowd_counter_forward.21} parent=5 // pred_check
      %p142 = pneg %p141
    $region22: #{crowd_counter_forward.21} parent=5 // pred_check_branch
      %144 = sbr.rel (%p142) target = $region24
    $region23: #{crowd_counter_forward.21} parent=5 // pred_region
      // Predicated region
      $region25: #{crowd_counter_forward.21} parent=23 // pred_check
        %p145 = pneg %p44
      $region26: #{crowd_counter_forward.21} parent=23 // pred_check_branch
        %147 = sbr.rel (%p145) target = $region28
      $region27: #{crowd_counter_forward.21} parent=23 // pred_region
        %p148 = scmp.lt.s32.totalorder %s17, 1
        %s149 = scalar_select %p148, %s17, 1
        %p150 = scmp.lt.s32.totalorder %s18, 0
        %s151 = scalar_select %p150, %s18, 0
        %s152 = smul.addr %s149, 30
        %s153 = sadd.s32 %s151, %s152
        %s154 = smul.addr %s153, 2
        %s155 = scalar_lea.vmem %s0, %s154
      $region28: #{crowd_counter_forward.21} parent=23 // pred_fallthru
        _
    $region24: #{crowd_counter_forward.21} parent=5 // pred_fallthru
      _
    %p156 = scmp.le.s32.totalorder 1, %s10
    %p157 = scmp.lt.s32.totalorder %s10, 3
    %p158 = pnand %p156, %p157
    %p159 = pneg %p158
    // Predicated region
    $region29: #{crowd_counter_forward.21} parent=5 // pred_check
      _
    $region30: #{crowd_counter_forward.21} parent=5 // pred_check_branch
      %161 = sbr.rel (%p158) target = $region32
    $region31: #{crowd_counter_forward.21} parent=5 // pred_region
      %s162 = ssub.s32 %s10, 1
      %p163 = scmp.lt.s32.totalorder %s19, 1
      %s164 = scalar_select %p163, %s19, 1
      %p165 = scmp.lt.s32.totalorder %s20, 0
      %s166 = scalar_select %p165, %s20, 0
      %s167 = smul.addr %s164, 30
      %s168 = sadd.s32 %s166, %s167
      %s169 = smul.addr %s168, 2
      %s170 = scalar_lea.vmem %s0, %s169
      %p171 = pneg %p50
      %p172 = pneg %p47
      %p173 = pneg %p71
      %p174 = pneg %p68
      %p175 = pneg %p92
      %p176 = pneg %p89
      %p177 = pneg %p120
      %p178 = pneg %p117
      %p179 = scmp.lt.s32.totalorder %s19, 1
      %s180 = scalar_select %p179, %s19, 1
      %p181 = scmp.lt.s32.totalorder %s20, 0
      %s182 = scalar_select %p181, %s20, 0
      %s183 = sadd.s32 %s182, %s180
      %s184 = smul.addr %s183, 4
      %s185 = scalar_lea.vmem %s3, %s184
      %p186 = scmp.lt.s32.totalorder %s19, 1
      %s187 = scalar_select %p186, %s19, 1
      %p188 = scmp.lt.s32.totalorder %s20, 0
      %s189 = scalar_select %p188, %s20, 0
      %s190 = smul.addr %s187, 30
      %s191 = sadd.s32 %s189, %s190
      %s192 = smul.addr %s191, 2
      %s193 = scalar_lea.vmem %s0, %s192
      %p194 = scmp.lt.s32.totalorder %s19, 1
      %s195 = scalar_select %p194, %s19, 1
      %p196 = scmp.lt.s32.totalorder %s20, 0
      %s197 = scalar_select %p196, %s20, 0
      %s198 = sadd.s32 %s197, %s195
      %s199 = smul.addr %s198, 4
      %s200 = scalar_lea.vmem %s3, %s199
      %v201 = vld [vmem:[%s193] sm:$0x3]
      %v202 = vld [vmem:[%s193 + $0x2] sm:$0x3]
      %v203 = vld [vmem:[%s193 + $0x4] sm:$0x3]
      %v204 = vld [vmem:[%s193 + $0x6] sm:$0x3]
      %v205 = vld [vmem:[%s193 + $0x8] sm:$0x3]
      %v206 = vld [vmem:[%s193 + $0xa] sm:$0x3]
      %v207 = vld [vmem:[%s193 + $0xc] sm:$0x3]
      %v208 = vld [vmem:[%s193 + $0xe] sm:$0x3]
      %v209 = vld [vmem:[%s193 + $0x10] sm:$0x3]
      %v210 = vld [vmem:[%s193 + $0x12] sm:$0x3]
      %v211 = vld [vmem:[%s193 + $0x14] sm:$0x3]
      %v212 = vld [vmem:[%s193 + $0x16] sm:$0x3]
      %v213 = vld [vmem:[%s193 + $0x18] sm:$0x3]
      %v214 = vld [vmem:[%s193 + $0x1a] sm:$0x3]
      %v215 = vld [vmem:[%s193 + $0x1c] sm:$0x3]
      %v216 = vld [vmem:[%s193 + $0x1e] sm:$0x3]
      %v217 = vld [vmem:[%s193 + $0x20] sm:$0x3]
      %v218 = vld [vmem:[%s193 + $0x22] sm:$0x3]
      %v219 = vld [vmem:[%s193 + $0x24] sm:$0x3]
      %v220 = vld [vmem:[%s193 + $0x26] sm:$0x3]
      %v221 = vld [vmem:[%s193 + $0x28] sm:$0x3]
      %v222 = vld [vmem:[%s193 + $0x2a] sm:$0x3]
      %v223 = vld [vmem:[%s193 + $0x2c] sm:$0x3]
      %v224 = vld [vmem:[%s193 + $0x2e] sm:$0x3]
      %v225 = vld [vmem:[%s193 + $0x30] sm:$0x3]
      %v226 = vld [vmem:[%s193 + $0x32] sm:$0x3]
      %v227 = vld [vmem:[%s193 + $0x34] sm:$0x3]
      %v228 = vld [vmem:[%s193 + $0x36] sm:$0x3]
      %v229 = vld [vmem:[%s193 + $0x38] sm:$0x3]
      %v230 = vld [vmem:[%s193 + $0x3a] sm:$0x3]
      %v231 = vunpack.c.l.bf16 %v201
      %v232 = vunpack.c.l.bf16 %v202
      %v233 = vunpack.c.l.bf16 %v203
      %v234 = vunpack.c.l.bf16 %v204
      %v235 = vunpack.c.l.bf16 %v205
      %v236 = vunpack.c.l.bf16 %v206
      %v237 = vunpack.c.l.bf16 %v207
      %v238 = vunpack.c.l.bf16 %v208
      %v239 = vunpack.c.l.bf16 %v209
      %v240 = vunpack.c.l.bf16 %v210
      %v241 = vunpack.c.l.bf16 %v211
      %v242 = vunpack.c.l.bf16 %v212
      %v243 = vunpack.c.l.bf16 %v213
      %v244 = vunpack.c.l.bf16 %v214
      %v245 = vunpack.c.l.bf16 %v215
      %v246 = vunpack.c.l.bf16 %v216
      %v247 = vunpack.c.l.bf16 %v217
      %v248 = vunpack.c.l.bf16 %v218
      %v249 = vunpack.c.l.bf16 %v219
      %v250 = vunpack.c.l.bf16 %v220
      %v251 = vunpack.c.l.bf16 %v221
      %v252 = vunpack.c.l.bf16 %v222
      %v253 = vunpack.c.l.bf16 %v223
      %v254 = vunpack.c.l.bf16 %v224
      %v255 = vunpack.c.l.bf16 %v225
      %v256 = vunpack.c.l.bf16 %v226
      %v257 = vunpack.c.l.bf16 %v227
      %v258 = vunpack.c.l.bf16 %v228
      %v259 = vunpack.c.l.bf16 %v229
      %v260 = vunpack.c.l.bf16 %v230
      %v261 = vld [vmem:[%s1] sm:$0x1]
      %v262 = vld [vmem:[%s1 + $0x1] sm:$0x1]
      %v263 = vld [vmem:[%s1 + $0x2] sm:$0x1]
      %v264 = vld [vmem:[%s1 + $0x3] sm:$0x1]
      %v265 = vld [vmem:[%s1 + $0x4] sm:$0x1]
      %v266 = vld [vmem:[%s1 + $0x5] sm:$0x1]
      %v267 = vld [vmem:[%s1 + $0x6] sm:$0x1]
      %v268 = vld [vmem:[%s1 + $0x7] sm:$0x1]
      %v269 = vld [vmem:[%s1 + $0x8] sm:$0x1]
      %v270 = vld [vmem:[%s1 + $0x9] sm:$0x1]
      %v271 = vld [vmem:[%s1 + $0xa] sm:$0x1]
      %v272 = vld [vmem:[%s1 + $0xb] sm:$0x1]
      %v273 = vld [vmem:[%s1 + $0xc] sm:$0x1]
      %v274 = vld [vmem:[%s1 + $0xd] sm:$0x1]
      %v275 = vld [vmem:[%s1 + $0xe] sm:$0x1]
      %v276 = vld [vmem:[%s1 + $0xf] sm:$0x1]
      %v277 = vld [vmem:[%s1 + $0x10] sm:$0x1]
      %v278 = vld [vmem:[%s1 + $0x11] sm:$0x1]
      %v279 = vld [vmem:[%s1 + $0x12] sm:$0x1]
      %v280 = vld [vmem:[%s1 + $0x13] sm:$0x1]
      %v281 = vld [vmem:[%s1 + $0x14] sm:$0x1]
      %v282 = vld [vmem:[%s1 + $0x15] sm:$0x1]
      %v283 = vld [vmem:[%s1 + $0x16] sm:$0x1]
      %v284 = vld [vmem:[%s1 + $0x17] sm:$0x1]
      %v285 = vld [vmem:[%s1 + $0x18] sm:$0x1]
      %v286 = vld [vmem:[%s1 + $0x19] sm:$0x1]
      %v287 = vld [vmem:[%s1 + $0x1a] sm:$0x1]
      %v288 = vld [vmem:[%s1 + $0x1b] sm:$0x1]
      %v289 = vld [vmem:[%s1 + $0x1c] sm:$0x1]
      %v290 = vld [vmem:[%s1 + $0x1d] sm:$0x1]
      %v321 = vlaneseq
      %v322 = vshrl.u32 %v321, 7
      %v323 = vsub.s32 0, %v322
      %v324 = vrot.slane %v261, %v323
      %v325 = vlaneseq
      %v326 = vshrl.u32 %v325, 7
      %v327 = vsub.s32 0, %v326
      %v328 = vrot.slane %v262, %v327
      %v329 = vlaneseq
      %v330 = vshrl.u32 %v329, 7
      %v331 = vsub.s32 0, %v330
      %v332 = vrot.slane %v263, %v331
      %v333 = vlaneseq
      %v334 = vshrl.u32 %v333, 7
      %v335 = vsub.s32 0, %v334
      %v336 = vrot.slane %v264, %v335
      %v337 = vlaneseq
      %v338 = vshrl.u32 %v337, 7
      %v339 = vsub.s32 0, %v338
      %v340 = vrot.slane %v265, %v339
      %v341 = vlaneseq
      %v342 = vshrl.u32 %v341, 7
      %v343 = vsub.s32 0, %v342
      %v344 = vrot.slane %v266, %v343
      %v345 = vlaneseq
      %v346 = vshrl.u32 %v345, 7
      %v347 = vsub.s32 0, %v346
      %v348 = vrot.slane %v267, %v347
      %v349 = vlaneseq
      %v350 = vshrl.u32 %v349, 7
      %v351 = vsub.s32 0, %v350
      %v352 = vrot.slane %v268, %v351
      %v353 = vlaneseq
      %v354 = vshrl.u32 %v353, 7
      %v355 = vsub.s32 0, %v354
      %v356 = vrot.slane %v269, %v355
      %v357 = vlaneseq
      %v358 = vshrl.u32 %v357, 7
      %v359 = vsub.s32 0, %v358
      %v360 = vrot.slane %v270, %v359
      %v361 = vlaneseq
      %v362 = vshrl.u32 %v361, 7
      %v363 = vsub.s32 0, %v362
      %v364 = vrot.slane %v271, %v363
      %v365 = vlaneseq
      %v366 = vshrl.u32 %v365, 7
      %v367 = vsub.s32 0, %v366
      %v368 = vrot.slane %v272, %v367
      %v369 = vlaneseq
      %v370 = vshrl.u32 %v369, 7
      %v371 = vsub.s32 0, %v370
      %v372 = vrot.slane %v273, %v371
      %v373 = vlaneseq
      %v374 = vshrl.u32 %v373, 7
      %v375 = vsub.s32 0, %v374
      %v376 = vrot.slane %v274, %v375
      %v377 = vlaneseq
      %v378 = vshrl.u32 %v377, 7
      %v379 = vsub.s32 0, %v378
      %v380 = vrot.slane %v275, %v379
      %v381 = vlaneseq
      %v382 = vshrl.u32 %v381, 7
      %v383 = vsub.s32 0, %v382
      %v384 = vrot.slane %v276, %v383
      %v385 = vlaneseq
      %v386 = vshrl.u32 %v385, 7
      %v387 = vsub.s32 0, %v386
      %v388 = vrot.slane %v277, %v387
      %v389 = vlaneseq
      %v390 = vshrl.u32 %v389, 7
      %v391 = vsub.s32 0, %v390
      %v392 = vrot.slane %v278, %v391
      %v393 = vlaneseq
      %v394 = vshrl.u32 %v393, 7
      %v395 = vsub.s32 0, %v394
      %v396 = vrot.slane %v279, %v395
      %v397 = vlaneseq
      %v398 = vshrl.u32 %v397, 7
      %v399 = vsub.s32 0, %v398
      %v400 = vrot.slane %v280, %v399
      %v401 = vlaneseq
      %v402 = vshrl.u32 %v401, 7
      %v403 = vsub.s32 0, %v402
      %v404 = vrot.slane %v281, %v403
      %v405 = vlaneseq
      %v406 = vshrl.u32 %v405, 7
      %v407 = vsub.s32 0, %v406
      %v408 = vrot.slane %v282, %v407
      %v409 = vlaneseq
      %v410 = vshrl.u32 %v409, 7
      %v411 = vsub.s32 0, %v410
      %v412 = vrot.slane %v283, %v411
      %v413 = vlaneseq
      %v414 = vshrl.u32 %v413, 7
      %v415 = vsub.s32 0, %v414
      %v416 = vrot.slane %v284, %v415
      %v417 = vlaneseq
      %v418 = vshrl.u32 %v417, 7
      %v419 = vsub.s32 0, %v418
      %v420 = vrot.slane %v285, %v419
      %v421 = vlaneseq
      %v422 = vshrl.u32 %v421, 7
      %v423 = vsub.s32 0, %v422
      %v424 = vrot.slane %v286, %v423
      %v425 = vlaneseq
      %v426 = vshrl.u32 %v425, 7
      %v427 = vsub.s32 0, %v426
      %v428 = vrot.slane %v287, %v427
      %v429 = vlaneseq
      %v430 = vshrl.u32 %v429, 7
      %v431 = vsub.s32 0, %v430
      %v432 = vrot.slane %v288, %v431
      %v433 = vlaneseq
      %v434 = vshrl.u32 %v433, 7
      %v435 = vsub.s32 0, %v434
      %v436 = vrot.slane %v289, %v435
      %v437 = vlaneseq
      %v438 = vshrl.u32 %v437, 7
      %v439 = vsub.s32 0, %v438
      %v440 = vrot.slane %v290, %v439
      %441 = vset.pattern.permute.xlu0 0
      %442 = vperm.xlu0 %441, %v324
      %v443 = vpop.permute.xlu0 %442
      %445 = vset.pattern.permute.xlu0 0
      %446 = vperm.xlu0 %445, %v328
      %v447 = vpop.permute.xlu0 %446
      %449 = vset.pattern.permute.xlu0 0
      %450 = vperm.xlu0 %449, %v332
      %v451 = vpop.permute.xlu0 %450
      %453 = vset.pattern.permute.xlu0 0
      %454 = vperm.xlu0 %453, %v336
      %v455 = vpop.permute.xlu0 %454
      %457 = vset.pattern.permute.xlu0 0
      %458 = vperm.xlu0 %457, %v340
      %v459 = vpop.permute.xlu0 %458
      %461 = vset.pattern.permute.xlu0 0
      %462 = vperm.xlu0 %461, %v344
      %v463 = vpop.permute.xlu0 %462
      %465 = vset.pattern.permute.xlu0 0
      %466 = vperm.xlu0 %465, %v348
      %v467 = vpop.permute.xlu0 %466
      %469 = vset.pattern.permute.xlu0 0
      %470 = vperm.xlu0 %469, %v352
      %v471 = vpop.permute.xlu0 %470
      %473 = vset.pattern.permute.xlu0 0
      %474 = vperm.xlu0 %473, %v356
      %v475 = vpop.permute.xlu0 %474
      %477 = vset.pattern.permute.xlu0 0
      %478 = vperm.xlu0 %477, %v360
      %v479 = vpop.permute.xlu0 %478
      %481 = vset.pattern.permute.xlu0 0
      %482 = vperm.xlu0 %481, %v364
      %v483 = vpop.permute.xlu0 %482
      %485 = vset.pattern.permute.xlu0 0
      %486 = vperm.xlu0 %485, %v368
      %v487 = vpop.permute.xlu0 %486
      %489 = vset.pattern.permute.xlu0 0
      %490 = vperm.xlu0 %489, %v372
      %v491 = vpop.permute.xlu0 %490
      %493 = vset.pattern.permute.xlu0 0
      %494 = vperm.xlu0 %493, %v376
      %v495 = vpop.permute.xlu0 %494
      %497 = vset.pattern.permute.xlu0 0
      %498 = vperm.xlu0 %497, %v380
      %v499 = vpop.permute.xlu0 %498
      %501 = vset.pattern.permute.xlu0 0
      %502 = vperm.xlu0 %501, %v384
      %v503 = vpop.permute.xlu0 %502
      %505 = vset.pattern.permute.xlu0 0
      %506 = vperm.xlu0 %505, %v388
      %v507 = vpop.permute.xlu0 %506
      %509 = vset.pattern.permute.xlu0 0
      %510 = vperm.xlu0 %509, %v392
      %v511 = vpop.permute.xlu0 %510
      %513 = vset.pattern.permute.xlu0 0
      %514 = vperm.xlu0 %513, %v396
      %v515 = vpop.permute.xlu0 %514
      %517 = vset.pattern.permute.xlu0 0
      %518 = vperm.xlu0 %517, %v400
      %v519 = vpop.permute.xlu0 %518
      %521 = vset.pattern.permute.xlu0 0
      %522 = vperm.xlu0 %521, %v404
      %v523 = vpop.permute.xlu0 %522
      %525 = vset.pattern.permute.xlu0 0
      %526 = vperm.xlu0 %525, %v408
      %v527 = vpop.permute.xlu0 %526
      %529 = vset.pattern.permute.xlu0 0
      %530 = vperm.xlu0 %529, %v412
      %v531 = vpop.permute.xlu0 %530
      %533 = vset.pattern.permute.xlu0 0
      %534 = vperm.xlu0 %533, %v416
      %v535 = vpop.permute.xlu0 %534
      %537 = vset.pattern.permute.xlu0 0
      %538 = vperm.xlu0 %537, %v420
      %v539 = vpop.permute.xlu0 %538
      %541 = vset.pattern.permute.xlu0 0
      %542 = vperm.xlu0 %541, %v424
      %v543 = vpop.permute.xlu0 %542
      %545 = vset.pattern.permute.xlu0 0
      %546 = vperm.xlu0 %545, %v428
      %v547 = vpop.permute.xlu0 %546
      %549 = vset.pattern.permute.xlu0 0
      %550 = vperm.xlu0 %549, %v432
      %v551 = vpop.permute.xlu0 %550
      %553 = vset.pattern.permute.xlu0 0
      %554 = vperm.xlu0 %553, %v436
      %v555 = vpop.permute.xlu0 %554
      %557 = vset.pattern.permute.xlu0 0
      %558 = vperm.xlu0 %557, %v440
      %v559 = vpop.permute.xlu0 %558
      %v561 = vmul.f32 %v231, %v443
      %v562 = vmul.f32 %v232, %v447
      %v563 = vmul.f32 %v233, %v451
      %v564 = vmul.f32 %v234, %v455
      %v565 = vmul.f32 %v235, %v459
      %v566 = vmul.f32 %v236, %v463
      %v567 = vmul.f32 %v237, %v467
      %v568 = vmul.f32 %v238, %v471
      %v569 = vmul.f32 %v239, %v475
      %v570 = vmul.f32 %v240, %v479
      %v571 = vmul.f32 %v241, %v483
      %v572 = vmul.f32 %v242, %v487
      %v573 = vmul.f32 %v243, %v491
      %v574 = vmul.f32 %v244, %v495
      %v575 = vmul.f32 %v245, %v499
      %v576 = vmul.f32 %v246, %v503
      %v577 = vmul.f32 %v247, %v507
      %v578 = vmul.f32 %v248, %v511
      %v579 = vmul.f32 %v249, %v515
      %v580 = vmul.f32 %v250, %v519
      %v581 = vmul.f32 %v251, %v523
      %v582 = vmul.f32 %v252, %v527
      %v583 = vmul.f32 %v253, %v531
      %v584 = vmul.f32 %v254, %v535
      %v585 = vmul.f32 %v255, %v539
      %v586 = vmul.f32 %v256, %v543
      %v587 = vmul.f32 %v257, %v547
      %v588 = vmul.f32 %v258, %v551
      %v589 = vmul.f32 %v259, %v555
      %v590 = vmul.f32 %v260, %v559
      %vm591 = vcmask 27648
      %v592 = vsel %vm591, %v561, 0.0
      %v593 = vsel %vm591, %v562, 0.0
      %v594 = vadd.f32 %v592, %v593
      %v595 = vsel %vm591, %v563, 0.0
      %v596 = vadd.f32 %v594, %v595
      %v597 = vsel %vm591, %v564, 0.0
      %v598 = vadd.f32 %v596, %v597
      %v599 = vsel %vm591, %v565, 0.0
      %v600 = vadd.f32 %v598, %v599
      %v601 = vsel %vm591, %v566, 0.0
      %v602 = vadd.f32 %v600, %v601
      %v603 = vsel %vm591, %v567, 0.0
      %v604 = vadd.f32 %v602, %v603
      %v605 = vsel %vm591, %v568, 0.0
      %v606 = vadd.f32 %v604, %v605
      %v607 = vsel %vm591, %v569, 0.0
      %v608 = vadd.f32 %v606, %v607
      %v609 = vsel %vm591, %v570, 0.0
      %v610 = vadd.f32 %v608, %v609
      %v611 = vsel %vm591, %v571, 0.0
      %v612 = vadd.f32 %v610, %v611
      %v613 = vsel %vm591, %v572, 0.0
      %v614 = vadd.f32 %v612, %v613
      %v615 = vsel %vm591, %v573, 0.0
      %v616 = vadd.f32 %v614, %v615
      %v617 = vsel %vm591, %v574, 0.0
      %v618 = vadd.f32 %v616, %v617
      %v619 = vsel %vm591, %v575, 0.0
      %v620 = vadd.f32 %v618, %v619
      %v621 = vsel %vm591, %v576, 0.0
      %v622 = vadd.f32 %v620, %v621
      %v623 = vsel %vm591, %v577, 0.0
      %v624 = vadd.f32 %v622, %v623
      %v625 = vsel %vm591, %v578, 0.0
      %v626 = vadd.f32 %v624, %v625
      %v627 = vsel %vm591, %v579, 0.0
      %v628 = vadd.f32 %v626, %v627
      %v629 = vsel %vm591, %v580, 0.0
      %v630 = vadd.f32 %v628, %v629
      %v631 = vsel %vm591, %v581, 0.0
      %v632 = vadd.f32 %v630, %v631
      %v633 = vsel %vm591, %v582, 0.0
      %v634 = vadd.f32 %v632, %v633
      %v635 = vsel %vm591, %v583, 0.0
      %v636 = vadd.f32 %v634, %v635
      %v637 = vsel %vm591, %v584, 0.0
      %v638 = vadd.f32 %v636, %v637
      %v639 = vsel %vm591, %v585, 0.0
      %v640 = vadd.f32 %v638, %v639
      %v641 = vsel %vm591, %v586, 0.0
      %v642 = vadd.f32 %v640, %v641
      %v643 = vsel %vm591, %v587, 0.0
      %v644 = vadd.f32 %v642, %v643
      %v645 = vsel %vm591, %v588, 0.0
      %v646 = vadd.f32 %v644, %v645
      %v647 = vsel %vm591, %v589, 0.0
      %v648 = vadd.f32 %v646, %v647
      %v649 = vsel %vm591, %v590, 0.0
      %v650 = vadd.f32 %v648, %v649
      %s651 = sld [smem:[#allocation2]]
      %v652 = vstv %s651
      %v653 = vadd.f32 %v650, %v652
      %v654 = vmax.f32 %v653, 0.0
      %655 = vst.msk [vmem:[%s200] sm:$0xf] %vm591, %v654
      %p656 = scmp.lt.s32.totalorder %s19, 1
      %s657 = scalar_select %p656, %s19, 1
      %p658 = scmp.lt.s32.totalorder %s20, 0
      %s659 = scalar_select %p658, %s20, 0
      %s660 = sadd.s32 %s659, %s657
      %s661 = smul.addr %s660, 4
      %s662 = scalar_lea.vmem %s3, %s661
      // Predicated region
      $region33: #{crowd_counter_forward.21} parent=31 // pred_check
        %p663 = pneg %p117
      $region34: #{crowd_counter_forward.21} parent=31 // pred_check_branch
        %665 = sbr.rel (%p663) target = $region36
      $region35: #{crowd_counter_forward.21} parent=31 // pred_region
        _
      $region36: #{crowd_counter_forward.21} parent=31 // pred_fallthru
        _
    $region32: #{crowd_counter_forward.21} parent=5 // pred_fallthru
      _
    %p666 = scmp.le.s32.totalorder 2, %s10
    // Predicated region
    $region37: #{crowd_counter_forward.21} parent=5 // pred_check
      %p667 = pneg %p666
    $region38: #{crowd_counter_forward.21} parent=5 // pred_check_branch
      %669 = sbr.rel (%p667) target = $region40
    $region39: #{crowd_counter_forward.21} parent=5 // pred_region
      %s670 = ssub.s32 %s10, 2
      // Predicated region
      $region41: #{crowd_counter_forward.21} parent=39 // pred_check
        %p671 = pneg %p123
      $region42: #{crowd_counter_forward.21} parent=39 // pred_check_branch
        %673 = sbr.rel (%p671) target = $region44
      $region43: #{crowd_counter_forward.21} parent=39 // pred_region
        %p674 = scmp.lt.s32.totalorder %s21, 1
        %s675 = scalar_select %p674, %s21, 1
        %p676 = scmp.lt.s32.totalorder %s22, 0
        %s677 = scalar_select %p676, %s22, 0
        %s678 = sadd.s32 %s677, %s675
        %s679 = smul.addr %s678, 4
        %s680 = scalar_lea.vmem %s3, %s679
      $region44: #{crowd_counter_forward.21} parent=39 // pred_fallthru
        _
    $region40: #{crowd_counter_forward.21} parent=5 // pred_fallthru
      _
  $region6: #{crowd_counter_forward.21} parent=0 // loop_footer
    %s14 = sadd.s32 1, %s10
  $region7: #{crowd_counter_forward.21} parent=0 // loop_footer_branch
    %9 = sbr.rel target = $region3
  $region8: #{crowd_counter_forward.21} parent=0 // loop_exit
    _

</llo_original>
